<compile_context>
chip_gen: v5e
topology: v5e:2x2
jax: 0.10.0
libtpu: 0.0.40
codegen_flags: <defaults>
</compile_context>

<pallas_src>
import functools
import math

import jax
import jax.numpy as jnp
from jax.experimental import pallas as pl
from jax.experimental.pallas import tpu as pltpu


# ----------------------------------------------------------------------------
# Helpers
# ----------------------------------------------------------------------------

def _padded_width(h, w):
    """Smallest Wp >= w + 2 such that h * Wp is a multiple of 128 (lane-dense out)."""
    step = 128 // math.gcd(h, 128)
    return ((w + 2 + step - 1) // step) * step


# ----------------------------------------------------------------------------
# Pallas kernels
# ----------------------------------------------------------------------------

def _conv3x3_body(wp, l, w_ref, s_ref, d_ref, b_ref, x_ref, n_ref, ns_ref):
    """Modulated + demodulated 3x3 'same' conv + scaled noise + bias + LeakyReLU(0.2).

    w_ref : (9, Cout, Cin) f32   conv weight, tap-major (t = dy*3 + dx)
    s_ref : (1, 1, Cin)    f32   per-sample style
    d_ref : (1, Cout, 1)   f32   per-sample demodulation 1/sigma (hoisted)
    b_ref : (Cout, 1)      f32   bias
    x_ref : (1, Cin, (H+3)*Wp) bf16  zero-padded input, spatial flattened (row stride Wp)
    n_ref : (1, 1, H*Wp)   bf16  noise (W padded to Wp)
    ns_ref: (1,) SMEM      f32   noise scale scalar
    Returns the f32 activation (Cout, H*Wp), kept in VMEM so callers can fuse more work.
    """
    wsd = d_ref[0] * s_ref[0]                                     # (Cout, Cin)
    acc = None
    for t in range(9):            # 9 accumulated MXU GEMMs on lane-shifted windows
        off = (t // 3) * wp + (t % 3)
        wtap = (w_ref[t] * wsd).astype(jnp.bfloat16)               # (Cout, Cin)
        part = jnp.dot(wtap, x_ref[0, :, pl.ds(off, l)],
                       preferred_element_type=jnp.float32)         # (Cout, L)
        acc = part if acc is None else acc + part
    acc = acc + ns_ref[0] * n_ref[0].astype(jnp.float32)           # scaled noise
    acc = acc + b_ref[...]                                         # bias
    return jnp.where(acc >= 0.0, acc, 0.2 * acc)                   # LeakyReLU(0.2)


def _modconv3x3_kernel(wp, l, w_ref, s_ref, d_ref, b_ref,
                       x_ref, n_ref, ns_ref, o_ref):
    xact = _conv3x3_body(wp, l, w_ref, s_ref, d_ref, b_ref, x_ref, n_ref, ns_ref)
    o_ref[0] = xact.astype(o_ref.dtype)


def _modconv3x3_rgb_kernel(wp, l, w_ref, s_ref, d_ref, b_ref,
                           wr_ref, sr_ref, br_ref,
                           x_ref, n_ref, ns_ref, o_ref, rgb_ref):
    xact = _conv3x3_body(wp, l, w_ref, s_ref, d_ref, b_ref, x_ref, n_ref, ns_ref)
    o_ref[0] = xact.astype(o_ref.dtype)
    # Fused toRGB: modulated 1x1 conv (demod=False) + bias + LeakyReLU, consuming the
    # activation still resident in VMEM (no HBM round trip, no extra kernel launch).
    wr = (wr_ref[...] * sr_ref[0]).astype(jnp.bfloat16)            # (3, Cout)
    rgb = jnp.dot(wr, xact.astype(jnp.bfloat16),
                  preferred_element_type=jnp.float32)              # (3, L)
    rgb = rgb + br_ref[...]
    rgb_ref[0] = jnp.where(rgb >= 0.0, rgb, 0.2 * rgb)


# ----------------------------------------------------------------------------
# Wrapper around pallas_call
# ----------------------------------------------------------------------------

def modulated_conv3x3(x, style, weight, bias, noise, noise_scale,
                      rgb_weight=None, rgb_style=None, rgb_bias=None):
    """Demodulated 3x3 conv + noise + bias + LeakyReLU, optionally fused with toRGB.

    x: [B,Cin,H,W], style: [B,Cin], weight: [Cout,Cin,3,3], bias: [Cout],
    noise: [B,1,H,W], noise_scale: [1].  Optional toRGB: rgb_weight [3,Cout],
    rgb_style [B,Cout] (already * weight_gain), rgb_bias [3].
    Returns x_out [B,Cout,H,W] bf16 (and rgb [B,3,H,W] f32 when fused).
    """
    B, Cin, H, W = x.shape
    Cout = weight.shape[0]
    fused = rgb_weight is not None
    Wp = _padded_width(H, W)
    L = H * Wp                      # multiple of 128 -> lane-dense stores
    Lin = (H + 3) * Wp

    weight = weight.astype(jnp.float32)
    style = style.astype(jnp.float32)

    # Activations / noise cross HBM as bf16 (half the DMA bytes); f32 math in-kernel.
    # Pad: (1,2) rows, (1, Wp-W-1) cols (right pad also rounds lanes up to 128k).
    xpf = jnp.pad(x.astype(jnp.bfloat16),
                  ((0, 0), (0, 0), (1, 2), (1, Wp - W - 1))).reshape(B, Cin, Lin)
    noise_p = jnp.pad(noise.astype(jnp.bfloat16),
                      ((0, 0), (0, 0), (0, 0), (0, Wp - W))).reshape(B, 1, L)

    # Weight as (9, Cout, Cin): w9[dy*3+dx] = weight[:, :, dy, dx]
    w9 = jnp.transpose(weight, (2, 3, 0, 1)).reshape(9, Cout, Cin)
    s3 = style.reshape(B, 1, Cin)
    # Demodulation coefficients hoisted out of the kernel (tiny [B, Cout]).
    wsq = jnp.sum(weight * weight, axis=(2, 3)).T                   # (Cin, Cout)
    dcoef = jax.lax.rsqrt((style * style) @ wsq + 1e-8).reshape(B, Cout, 1)
    b2 = bias.astype(jnp.float32).reshape(Cout, 1)
    ns = noise_scale.astype(jnp.float32).reshape(1)

    in_arrays = [w9, s3, dcoef, b2]
    in_specs = [
        pl.BlockSpec((9, Cout, Cin), lambda b: (0, 0, 0)),
        pl.BlockSpec((1, 1, Cin), lambda b: (b, 0, 0)),
        pl.BlockSpec((1, Cout, 1), lambda b: (b, 0, 0)),
        pl.BlockSpec((Cout, 1), lambda b: (0, 0)),
    ]
    if fused:
        wr = rgb_weight.astype(jnp.float32).reshape(3, Cout)
        sr = rgb_style.astype(jnp.float32).reshape(B, 1, Cout)
        br = rgb_bias.astype(jnp.float32).reshape(3, 1)
        in_arrays += [wr, sr, br]
        in_specs += [
            pl.BlockSpec((3, Cout), lambda b: (0, 0)),
            pl.BlockSpec((1, 1, Cout), lambda b: (b, 0, 0)),
            pl.BlockSpec((3, 1), lambda b: (0, 0)),
        ]
    in_arrays += [xpf, noise_p, ns]
    in_specs += [
        pl.BlockSpec((1, Cin, Lin), lambda b: (b, 0, 0)),
        pl.BlockSpec((1, 1, L), lambda b: (b, 0, 0)),
        pl.BlockSpec(memory_space=pltpu.MemorySpace.SMEM),
    ]

    if fused:
        kernel = functools.partial(_modconv3x3_rgb_kernel, Wp, L)
        out_shape = (jax.ShapeDtypeStruct((B, Cout, L), jnp.bfloat16),
                     jax.ShapeDtypeStruct((B, 3, L), jnp.float32))
        out_specs = (pl.BlockSpec((1, Cout, L), lambda b: (b, 0, 0)),
                     pl.BlockSpec((1, 3, L), lambda b: (b, 0, 0)))
    else:
        kernel = functools.partial(_modconv3x3_kernel, Wp, L)
        out_shape = jax.ShapeDtypeStruct((B, Cout, L), jnp.bfloat16)
        out_specs = pl.BlockSpec((1, Cout, L), lambda b: (b, 0, 0))

    # Scheduling hints: cost estimate + explicit VMEM budget with double-buffer headroom.
    flops = B * (2 * Cout * 9 * Cin * L + (2 * 3 * Cout * L if fused else 0))
    bytes_acc = (B * (Cin * Lin * 2 + L * 2 + Cout * L * 2 + (3 * L * 4 if fused else 0))
                 + 9 * Cout * Cin * 4)
    per_step = (Cin * Lin * 2 + L * 2 + Cout * L * 2 + 9 * Cout * Cin * 4
                + (3 * L * 4 if fused else 0))
    vmem_bytes = int(min(64 * 2 ** 20, max(32 * 2 ** 20, 2 * per_step + 6 * Cout * L * 4)))

    out = pl.pallas_call(
        kernel,
        grid=(B,),
        in_specs=in_specs,
        out_specs=out_specs,
        out_shape=out_shape,
        cost_estimate=pl.CostEstimate(flops=int(flops), transcendentals=0,
                                      bytes_accessed=int(bytes_acc)),
        compiler_params=pltpu.CompilerParams(
            dimension_semantics=("parallel",), vmem_limit_bytes=vmem_bytes),
    )(*in_arrays)

    if fused:
        x_out, rgb = out
        x_out = x_out.reshape(B, Cout, H, Wp)[:, :, :, :W]
        rgb = rgb.reshape(B, 3, H, Wp)[:, :, :, :W]
        return x_out, rgb
    return out.reshape(B, Cout, H, Wp)[:, :, :, :W]


# ----------------------------------------------------------------------------
# RGB upsample (plain XLA, per perf review: C=3 is too small for a kernel;
# fuses with the residual add at the call site)
# ----------------------------------------------------------------------------

def upfirdn_upsample2(rgb):
    """Upfirdn2d(up=2, filter=[1,3,3,1]/8, gain=4, pad=(2,1,2,1)) as a polyphase FIR."""
    B, C, H, W = rgb.shape
    rp = jnp.pad(rgb.astype(jnp.float32), ((0, 0), (0, 0), (1, 1), (1, 1)))
    rows = []
    for py in range(2):
        cols = []
        for px in range(2):
            acc = 0.0
            for ay in range(2):
                for ax in range(2):
                    cy = 0.25 if ay == py else 0.75
                    cx = 0.25 if ax == px else 0.75
                    acc = acc + (cy * cx) * rp[:, :, py + ay:py + ay + H,
                                               px + ax:px + ax + W]
            cols.append(acc)
        rows.append(jnp.stack(cols, axis=0))
    ph = jnp.stack(rows, axis=0)                                  # (py, px, B, C, H, W)
    return jnp.transpose(ph, (2, 3, 4, 0, 5, 1)).reshape(B, C, 2 * H, 2 * W)


# ----------------------------------------------------------------------------
# Module-level apply functions (pure functions of params)
# ----------------------------------------------------------------------------

def _fc_affine(w_lat, fc_w, fc_b):
    # FullyConnectedLayer: y = x @ (W / sqrt(in_features)).T + b  (bias_init=1.0)
    # tiny GEMM -> plain XLA per perf review (no dedicated pallas_call)
    in_f = fc_w.shape[1]
    return (w_lat.astype(jnp.float32) @ fc_w.T.astype(jnp.float32)) \
        * (1.0 / math.sqrt(in_f)) + fc_b.astype(jnp.float32)


def style_block_apply(p, x, w_lat, noise, *, up):
    if up:
        # TODO(synk): ModulatedConv(up=True) source not provided; the reference
        # transposed modulated conv + FIR blur is approximated by nearest 2x upsample
        # feeding the modulated 3x3 conv (same output-shape semantics).
        x = jnp.repeat(jnp.repeat(x, 2, axis=2), 2, axis=3)
    s = _fc_affine(w_lat, p["fc_w"], p["fc_b"])                    # (A) affine style
    return modulated_conv3x3(x, s, p["conv_w"], p["bias"], noise, p["scale_noise"])


def style_block_to_rgb_apply(p_sb, p_rgb, x, w_lat, noise):
    """StyleBlock (no up) with the following toRGB fused into the same kernel."""
    s = _fc_affine(w_lat, p_sb["fc_w"], p_sb["fc_b"])
    cin_rgb = p_rgb["conv_w"].shape[1]
    weight_gain = 1.0 / math.sqrt(cin_rgb)                         # 1/sqrt(in * 1^2)
    s_rgb = _fc_affine(w_lat, p_rgb["fc_w"], p_rgb["fc_b"]) * weight_gain
    return modulated_conv3x3(
        x, s, p_sb["conv_w"], p_sb["bias"], noise, p_sb["scale_noise"],
        rgb_weight=p_rgb["conv_w"].reshape(3, cin_rgb),
        rgb_style=s_rgb, rgb_bias=p_rgb["bias"])


def generator_forward(params, x, w, noise_list):
    x, rgb = style_block_to_rgb_apply(params["style_block_1"], params["to_rgb_1"],
                                      x, w[:, 0, :], noise_list[0][0])
    for i in range(1, len(params["blocks"]) + 1):
        blk = params["blocks"][i - 1]
        x = style_block_apply(blk["style_block1"], x, w[:, i, :], noise_list[i][0], up=True)
        x, new_rgb = style_block_to_rgb_apply(blk["style_block2"], blk["to_rgb"],
                                              x, w[:, i, :], noise_list[i][1])
        # TODO(synk): NetworkBending source not provided; empty transformation_dict => identity.
        rgb = new_rgb + upfirdn_upsample2(rgb)
    return rgb


# ----------------------------------------------------------------------------
# Deterministic parameter initialization (shapes from the module __init__)
# ----------------------------------------------------------------------------

def init_style_block(key, latent_dim, cin, cout):
    k1, k2, k3 = jax.random.split(key, 3)
    return dict(
        fc_w=jax.random.normal(k1, (cin, latent_dim), jnp.float32),
        fc_b=jnp.ones((cin,), jnp.float32),                        # bias_init=1.0
        conv_w=jax.random.normal(k2, (cout, cin, 3, 3), jnp.float32),
        bias=jax.random.normal(k3, (cout,), jnp.float32),
        scale_noise=jnp.zeros((1,), jnp.float32),
    )


def init_to_rgb(key, latent_dim, cin):
    k1, k2 = jax.random.split(key, 2)
    return dict(
        fc_w=jax.random.normal(k1, (cin, latent_dim), jnp.float32),
        fc_b=jnp.ones((cin,), jnp.float32),
        conv_w=jax.random.normal(k2, (3, cin, 1, 1), jnp.float32),
        bias=jnp.zeros((3,), jnp.float32),
    )


def init_generator(key, latent_dim, out_channels_list):
    n_blocks = len(out_channels_list)
    keys = jax.random.split(key, 2 + 3 * (n_blocks - 1))
    params = {
        "style_block_1": init_style_block(keys[0], latent_dim,
                                          out_channels_list[0], out_channels_list[0]),
        "to_rgb_1": init_to_rgb(keys[1], latent_dim, out_channels_list[0]),
        "blocks": [],
    }
    ki = 2
    for i in range(1, n_blocks):
        cin, cout = out_channels_list[i - 1], out_channels_list[i]
        params["blocks"].append(dict(
            style_block1=init_style_block(keys[ki], latent_dim, cin, cout),
            style_block2=init_style_block(keys[ki + 1], latent_dim, cout, cout),
            to_rgb=init_to_rgb(keys[ki + 2], latent_dim, cout),
        ))
        ki += 3
    return params


# ----------------------------------------------------------------------------
# Main
# ----------------------------------------------------------------------------

if __name__ == "__main__":
    B = 2
    max_log2_res = 4            # final image 16x16
    latent_dim = 32
    min_num_features, max_num_features = 8, 32

    out_channels_list = [min(max_num_features, min_num_features * 2 ** i)
                         for i in range(max_log2_res - 2, -1, -1)]        # [32, 16, 8]
    n_blocks = len(out_channels_list)

    params = init_generator(jax.random.PRNGKey(42), latent_dim, out_channels_list)

    key = jax.random.PRNGKey(0)
    keys = jax.random.split(key, 2 + n_blocks)
    x = jax.random.normal(keys[0], (B, out_channels_list[0], 4, 4), jnp.float32)
    w = jax.random.normal(keys[1], (B, n_blocks, latent_dim), jnp.float32)
    noise = [jax.random.normal(keys[2 + i], (2, B, 1, 2 ** (2 + i), 2 ** (2 + i)), jnp.float32)
             for i in range(n_blocks)]

    fwd = jax.jit(generator_forward)
    rgb = fwd(params, x, w, noise)
    rgb = jax.block_until_ready(rgb)
    assert rgb.shape == (B, 3, 2 ** max_log2_res, 2 ** max_log2_res), rgb.shape
    assert bool(jnp.all(jnp.isfinite(rgb)))
    print("KERNEL_OK")
</pallas_src>

<mosaic_0001>
module attributes {stable_mosaic.version = 11 : i64} {
  func.func @_modconv3x3_rgb_kernel(%arg0: i32, %arg1: memref<9x32x32xf32, #tpu.memory_space<vmem>>, %arg2: memref<1x1x32xf32, #tpu.memory_space<vmem>>, %arg3: memref<1x32x1xf32, #tpu.memory_space<vmem>>, %arg4: memref<32x1xf32, #tpu.memory_space<vmem>>, %arg5: memref<3x32xf32, #tpu.memory_space<vmem>>, %arg6: memref<1x1x32xf32, #tpu.memory_space<vmem>>, %arg7: memref<3x1xf32, #tpu.memory_space<vmem>>, %arg8: memref<1x32x224xbf16, #tpu.memory_space<vmem>>, %arg9: memref<1x1x128xbf16, #tpu.memory_space<vmem>>, %arg10: memref<1xf32, #tpu.memory_space<smem>>, %arg11: memref<1x32x128xbf16, #tpu.memory_space<vmem>>, %arg12: memref<1x3x128xf32, #tpu.memory_space<vmem>>) attributes {dimension_semantics = [#tpu.dimension_semantics<parallel>], iteration_bounds = array<i64: 2>, scalar_prefetch = 0 : i64, scratch_operands = 0 : i64, tpu.core_type = #tpu.core_type<tc>, window_params = [{pipeline_mode = #tpu.pipeline_mode<synchronous>, transform_indices = @transform_0, window_bounds = array<i64: 9, 32, 32>}, {transform_indices = @transform_1, window_bounds = array<i64: 1, 1, 32>}, {transform_indices = @transform_2, window_bounds = array<i64: 1, 32, 1>}, {pipeline_mode = #tpu.pipeline_mode<synchronous>, transform_indices = @transform_3, window_bounds = array<i64: 32, 1>}, {pipeline_mode = #tpu.pipeline_mode<synchronous>, transform_indices = @transform_4, window_bounds = array<i64: 3, 32>}, {transform_indices = @transform_5, window_bounds = array<i64: 1, 1, 32>}, {pipeline_mode = #tpu.pipeline_mode<synchronous>, transform_indices = @transform_6, window_bounds = array<i64: 3, 1>}, {transform_indices = @transform_7, window_bounds = array<i64: 1, 32, 224>}, {transform_indices = @transform_8, window_bounds = array<i64: 1, 1, 128>}, {transform_indices = @transform_9, window_bounds = array<i64: 1>}, {transform_indices = @transform_10, window_bounds = array<i64: 1, 32, 128>}, {transform_indices = @transform_11, window_bounds = array<i64: 1, 3, 128>}]} {
    %c0 = arith.constant 0 : index
    %c0_0 = arith.constant 0 : index
    %c0_1 = arith.constant 0 : index
    %0 = vector.load %arg3[%c0, %c0_0, %c0_1] : memref<1x32x1xf32, #tpu.memory_space<vmem>>, vector<1x32x1xf32>
    %1 = vector.shape_cast %0 : vector<1x32x1xf32> to vector<32x1xf32>
    %c0_2 = arith.constant 0 : index
    %c0_3 = arith.constant 0 : index
    %c0_4 = arith.constant 0 : index
    %2 = vector.load %arg2[%c0_2, %c0_3, %c0_4] : memref<1x1x32xf32, #tpu.memory_space<vmem>>, vector<1x1x32xf32>
    %3 = vector.shape_cast %2 : vector<1x1x32xf32> to vector<1x32xf32>
    %4 = vector.broadcast %1 : vector<32x1xf32> to vector<32x32xf32>
    %5 = vector.broadcast %3 : vector<1x32xf32> to vector<32x32xf32>
    %6 = arith.mulf %4, %5 : vector<32x32xf32>
    %c0_5 = arith.constant 0 : index
    %c0_6 = arith.constant 0 : index
    %c0_7 = arith.constant 0 : index
    %7 = vector.load %arg1[%c0_5, %c0_6, %c0_7] : memref<9x32x32xf32, #tpu.memory_space<vmem>>, vector<1x32x32xf32>
    %8 = vector.shape_cast %7 : vector<1x32x32xf32> to vector<32x32xf32>
    %9 = arith.mulf %8, %6 : vector<32x32xf32>
    %10 = arith.truncf %9 : vector<32x32xf32> to vector<32x32xbf16>
    %c0_8 = arith.constant 0 : index
    %c0_9 = arith.constant 0 : index
    %c0_10 = arith.constant 0 : index
    %11 = vector.load %arg8[%c0_8, %c0_9, %c0_10] : memref<1x32x224xbf16, #tpu.memory_space<vmem>>, vector<1x32x128xbf16>
    %12 = vector.shape_cast %11 : vector<1x32x128xbf16> to vector<32x128xbf16>
    %cst = arith.constant dense<0.000000e+00> : vector<32x128xf32>
    %13 = tpu.matmul %10, %12, %cst {dimension_numbers = #tpu.dot_dimension_numbers<[1], [0], [0], [1], [0, 0, 1, 1], [], []>} : vector<32x32xbf16>, vector<32x128xbf16>, vector<32x128xf32> -> vector<32x128xf32>
    %c1 = arith.constant 1 : index
    %c0_11 = arith.constant 0 : index
    %c0_12 = arith.constant 0 : index
    %14 = vector.load %arg1[%c1, %c0_11, %c0_12] : memref<9x32x32xf32, #tpu.memory_space<vmem>>, vector<1x32x32xf32>
    %15 = vector.shape_cast %14 : vector<1x32x32xf32> to vector<32x32xf32>
    %16 = arith.mulf %15, %6 : vector<32x32xf32>
    %17 = arith.truncf %16 : vector<32x32xf32> to vector<32x32xbf16>
    %c0_13 = arith.constant 0 : index
    %c0_14 = arith.constant 0 : index
    %c1_15 = arith.constant 1 : index
    %18 = vector.load %arg8[%c0_13, %c0_14, %c1_15] : memref<1x32x224xbf16, #tpu.memory_space<vmem>>, vector<1x32x128xbf16>
    %19 = vector.shape_cast %18 : vector<1x32x128xbf16> to vector<32x128xbf16>
    %cst_16 = arith.constant dense<0.000000e+00> : vector<32x128xf32>
    %20 = tpu.matmul %17, %19, %cst_16 {dimension_numbers = #tpu.dot_dimension_numbers<[1], [0], [0], [1], [0, 0, 1, 1], [], []>} : vector<32x32xbf16>, vector<32x128xbf16>, vector<32x128xf32> -> vector<32x128xf32>
    %21 = arith.addf %13, %20 : vector<32x128xf32>
    %c2 = arith.constant 2 : index
    %c0_17 = arith.constant 0 : index
    %c0_18 = arith.constant 0 : index
    %22 = vector.load %arg1[%c2, %c0_17, %c0_18] : memref<9x32x32xf32, #tpu.memory_space<vmem>>, vector<1x32x32xf32>
    %23 = vector.shape_cast %22 : vector<1x32x32xf32> to vector<32x32xf32>
    %24 = arith.mulf %23, %6 : vector<32x32xf32>
    %25 = arith.truncf %24 : vector<32x32xf32> to vector<32x32xbf16>
    %c0_19 = arith.constant 0 : index
    %c0_20 = arith.constant 0 : index
    %c2_21 = arith.constant 2 : index
    %26 = vector.load %arg8[%c0_19, %c0_20, %c2_21] : memref<1x32x224xbf16, #tpu.memory_space<vmem>>, vector<1x32x128xbf16>
    %27 = vector.shape_cast %26 : vector<1x32x128xbf16> to vector<32x128xbf16>
    %cst_22 = arith.constant dense<0.000000e+00> : vector<32x128xf32>
    %28 = tpu.matmul %25, %27, %cst_22 {dimension_numbers = #tpu.dot_dimension_numbers<[1], [0], [0], [1], [0, 0, 1, 1], [], []>} : vector<32x32xbf16>, vector<32x128xbf16>, vector<32x128xf32> -> vector<32x128xf32>
    %29 = arith.addf %21, %28 : vector<32x128xf32>
    %c3 = arith.constant 3 : index
    %c0_23 = arith.constant 0 : index
    %c0_24 = arith.constant 0 : index
    %30 = vector.load %arg1[%c3, %c0_23, %c0_24] : memref<9x32x32xf32, #tpu.memory_space<vmem>>, vector<1x32x32xf32>
    %31 = vector.shape_cast %30 : vector<1x32x32xf32> to vector<32x32xf32>
    %32 = arith.mulf %31, %6 : vector<32x32xf32>
    %33 = arith.truncf %32 : vector<32x32xf32> to vector<32x32xbf16>
    %c0_25 = arith.constant 0 : index
    %c0_26 = arith.constant 0 : index
    %c32 = arith.constant 32 : index
    %34 = vector.load %arg8[%c0_25, %c0_26, %c32] : memref<1x32x224xbf16, #tpu.memory_space<vmem>>, vector<1x32x128xbf16>
    %35 = vector.shape_cast %34 : vector<1x32x128xbf16> to vector<32x128xbf16>
    %cst_27 = arith.constant dense<0.000000e+00> : vector<32x128xf32>
    %36 = tpu.matmul %33, %35, %cst_27 {dimension_numbers = #tpu.dot_dimension_numbers<[1], [0], [0], [1], [0, 0, 1, 1], [], []>} : vector<32x32xbf16>, vector<32x128xbf16>, vector<32x128xf32> -> vector<32x128xf32>
    %37 = arith.addf %29, %36 : vector<32x128xf32>
    %c4 = arith.constant 4 : index
    %c0_28 = arith.constant 0 : index
    %c0_29 = arith.constant 0 : index
    %38 = vector.load %arg1[%c4, %c0_28, %c0_29] : memref<9x32x32xf32, #tpu.memory_space<vmem>>, vector<1x32x32xf32>
    %39 = vector.shape_cast %38 : vector<1x32x32xf32> to vector<32x32xf32>
    %40 = arith.mulf %39, %6 : vector<32x32xf32>
    %41 = arith.truncf %40 : vector<32x32xf32> to vector<32x32xbf16>
    %c0_30 = arith.constant 0 : index
    %c0_31 = arith.constant 0 : index
    %c33 = arith.constant 33 : index
    %42 = vector.load %arg8[%c0_30, %c0_31, %c33] : memref<1x32x224xbf16, #tpu.memory_space<vmem>>, vector<1x32x128xbf16>
    %43 = vector.shape_cast %42 : vector<1x32x128xbf16> to vector<32x128xbf16>
    %cst_32 = arith.constant dense<0.000000e+00> : vector<32x128xf32>
    %44 = tpu.matmul %41, %43, %cst_32 {dimension_numbers = #tpu.dot_dimension_numbers<[1], [0], [0], [1], [0, 0, 1, 1], [], []>} : vector<32x32xbf16>, vector<32x128xbf16>, vector<32x128xf32> -> vector<32x128xf32>
    %45 = arith.addf %37, %44 : vector<32x128xf32>
    %c5 = arith.constant 5 : index
    %c0_33 = arith.constant 0 : index
    %c0_34 = arith.constant 0 : index
    %46 = vector.load %arg1[%c5, %c0_33, %c0_34] : memref<9x32x32xf32, #tpu.memory_space<vmem>>, vector<1x32x32xf32>
    %47 = vector.shape_cast %46 : vector<1x32x32xf32> to vector<32x32xf32>
    %48 = arith.mulf %47, %6 : vector<32x32xf32>
    %49 = arith.truncf %48 : vector<32x32xf32> to vector<32x32xbf16>
    %c0_35 = arith.constant 0 : index
    %c0_36 = arith.constant 0 : index
    %c34 = arith.constant 34 : index
    %50 = vector.load %arg8[%c0_35, %c0_36, %c34] : memref<1x32x224xbf16, #tpu.memory_space<vmem>>, vector<1x32x128xbf16>
    %51 = vector.shape_cast %50 : vector<1x32x128xbf16> to vector<32x128xbf16>
    %cst_37 = arith.constant dense<0.000000e+00> : vector<32x128xf32>
    %52 = tpu.matmul %49, %51, %cst_37 {dimension_numbers = #tpu.dot_dimension_numbers<[1], [0], [0], [1], [0, 0, 1, 1], [], []>} : vector<32x32xbf16>, vector<32x128xbf16>, vector<32x128xf32> -> vector<32x128xf32>
    %53 = arith.addf %45, %52 : vector<32x128xf32>
    %c6 = arith.constant 6 : index
    %c0_38 = arith.constant 0 : index
    %c0_39 = arith.constant 0 : index
    %54 = vector.load %arg1[%c6, %c0_38, %c0_39] : memref<9x32x32xf32, #tpu.memory_space<vmem>>, vector<1x32x32xf32>
    %55 = vector.shape_cast %54 : vector<1x32x32xf32> to vector<32x32xf32>
    %56 = arith.mulf %55, %6 : vector<32x32xf32>
    %57 = arith.truncf %56 : vector<32x32xf32> to vector<32x32xbf16>
    %c0_40 = arith.constant 0 : index
    %c0_41 = arith.constant 0 : index
    %c64 = arith.constant 64 : index
    %58 = vector.load %arg8[%c0_40, %c0_41, %c64] : memref<1x32x224xbf16, #tpu.memory_space<vmem>>, vector<1x32x128xbf16>
    %59 = vector.shape_cast %58 : vector<1x32x128xbf16> to vector<32x128xbf16>
    %cst_42 = arith.constant dense<0.000000e+00> : vector<32x128xf32>
    %60 = tpu.matmul %57, %59, %cst_42 {dimension_numbers = #tpu.dot_dimension_numbers<[1], [0], [0], [1], [0, 0, 1, 1], [], []>} : vector<32x32xbf16>, vector<32x128xbf16>, vector<32x128xf32> -> vector<32x128xf32>
    %61 = arith.addf %53, %60 : vector<32x128xf32>
    %c7 = arith.constant 7 : index
    %c0_43 = arith.constant 0 : index
    %c0_44 = arith.constant 0 : index
    %62 = vector.load %arg1[%c7, %c0_43, %c0_44] : memref<9x32x32xf32, #tpu.memory_space<vmem>>, vector<1x32x32xf32>
    %63 = vector.shape_cast %62 : vector<1x32x32xf32> to vector<32x32xf32>
    %64 = arith.mulf %63, %6 : vector<32x32xf32>
    %65 = arith.truncf %64 : vector<32x32xf32> to vector<32x32xbf16>
    %c0_45 = arith.constant 0 : index
    %c0_46 = arith.constant 0 : index
    %c65 = arith.constant 65 : index
    %66 = vector.load %arg8[%c0_45, %c0_46, %c65] : memref<1x32x224xbf16, #tpu.memory_space<vmem>>, vector<1x32x128xbf16>
    %67 = vector.shape_cast %66 : vector<1x32x128xbf16> to vector<32x128xbf16>
    %cst_47 = arith.constant dense<0.000000e+00> : vector<32x128xf32>
    %68 = tpu.matmul %65, %67, %cst_47 {dimension_numbers = #tpu.dot_dimension_numbers<[1], [0], [0], [1], [0, 0, 1, 1], [], []>} : vector<32x32xbf16>, vector<32x128xbf16>, vector<32x128xf32> -> vector<32x128xf32>
    %69 = arith.addf %61, %68 : vector<32x128xf32>
    %c8 = arith.constant 8 : index
    %c0_48 = arith.constant 0 : index
    %c0_49 = arith.constant 0 : index
    %70 = vector.load %arg1[%c8, %c0_48, %c0_49] : memref<9x32x32xf32, #tpu.memory_space<vmem>>, vector<1x32x32xf32>
    %71 = vector.shape_cast %70 : vector<1x32x32xf32> to vector<32x32xf32>
    %72 = arith.mulf %71, %6 : vector<32x32xf32>
    %73 = arith.truncf %72 : vector<32x32xf32> to vector<32x32xbf16>
    %c0_50 = arith.constant 0 : index
    %c0_51 = arith.constant 0 : index
    %c66 = arith.constant 66 : index
    %74 = vector.load %arg8[%c0_50, %c0_51, %c66] : memref<1x32x224xbf16, #tpu.memory_space<vmem>>, vector<1x32x128xbf16>
    %75 = vector.shape_cast %74 : vector<1x32x128xbf16> to vector<32x128xbf16>
    %cst_52 = arith.constant dense<0.000000e+00> : vector<32x128xf32>
    %76 = tpu.matmul %73, %75, %cst_52 {dimension_numbers = #tpu.dot_dimension_numbers<[1], [0], [0], [1], [0, 0, 1, 1], [], []>} : vector<32x32xbf16>, vector<32x128xbf16>, vector<32x128xf32> -> vector<32x128xf32>
    %77 = arith.addf %69, %76 : vector<32x128xf32>
    %c0_53 = arith.constant 0 : index
    %78 = memref.load %arg10[%c0_53] : memref<1xf32, #tpu.memory_space<smem>>
    %c0_54 = arith.constant 0 : index
    %c0_55 = arith.constant 0 : index
    %c0_56 = arith.constant 0 : index
    %79 = vector.load %arg9[%c0_54, %c0_55, %c0_56] : memref<1x1x128xbf16, #tpu.memory_space<vmem>>, vector<1x1x128xbf16>
    %80 = vector.shape_cast %79 : vector<1x1x128xbf16> to vector<1x128xbf16>
    %81 = arith.extf %80 : vector<1x128xbf16> to vector<1x128xf32>
    %82 = vector.broadcast %78 : f32 to vector<1x128xf32>
    %83 = arith.mulf %82, %81 : vector<1x128xf32>
    %84 = vector.broadcast %83 : vector<1x128xf32> to vector<32x128xf32>
    %85 = arith.addf %77, %84 : vector<32x128xf32>
    %c0_57 = arith.constant 0 : index
    %c0_58 = arith.constant 0 : index
    %86 = vector.load %arg4[%c0_57, %c0_58] : memref<32x1xf32, #tpu.memory_space<vmem>>, vector<32x1xf32>
    %87 = vector.broadcast %86 : vector<32x1xf32> to vector<32x128xf32>
    %88 = arith.addf %85, %87 : vector<32x128xf32>
    %cst_59 = arith.constant 0.000000e+00 : f32
    %89 = vector.broadcast %cst_59 : f32 to vector<32x128xf32>
    %90 = arith.cmpf oge, %88, %89 : vector<32x128xf32>
    %cst_60 = arith.constant 2.000000e-01 : f32
    %91 = vector.broadcast %cst_60 : f32 to vector<32x128xf32>
    %92 = arith.mulf %91, %88 : vector<32x128xf32>
    %93 = arith.select %90, %88, %92 : vector<32x128xi1>, vector<32x128xf32>
    %94 = arith.truncf %93 : vector<32x128xf32> to vector<32x128xbf16>
    %c0_61 = arith.constant 0 : index
    %c0_62 = arith.constant 0 : index
    %c0_63 = arith.constant 0 : index
    %95 = vector.load %arg11[%c0_61, %c0_62, %c0_63] : memref<1x32x128xbf16, #tpu.memory_space<vmem>>, vector<1x32x128xbf16>
    %96 = vector.shape_cast %95 : vector<1x32x128xbf16> to vector<32x128xbf16>
    %97 = vector.shape_cast %94 : vector<32x128xbf16> to vector<1x32x128xbf16>
    tpu.vector_store %arg11[%c0_61, %c0_62, %c0_63], %97 {strides = array<i32>} : memref<1x32x128xbf16, #tpu.memory_space<vmem>>, vector<1x32x128xbf16>,
    %c0_64 = arith.constant 0 : index
    %c0_65 = arith.constant 0 : index
    %98 = vector.load %arg5[%c0_64, %c0_65] : memref<3x32xf32, #tpu.memory_space<vmem>>, vector<3x32xf32>
    %c0_66 = arith.constant 0 : index
    %c0_67 = arith.constant 0 : index
    %c0_68 = arith.constant 0 : index
    %99 = vector.load %arg6[%c0_66, %c0_67, %c0_68] : memref<1x1x32xf32, #tpu.memory_space<vmem>>, vector<1x1x32xf32>
    %100 = vector.shape_cast %99 : vector<1x1x32xf32> to vector<1x32xf32>
    %101 = vector.broadcast %100 : vector<1x32xf32> to vector<3x32xf32>
    %102 = arith.mulf %98, %101 : vector<3x32xf32>
    %103 = arith.truncf %102 : vector<3x32xf32> to vector<3x32xbf16>
    %104 = arith.truncf %93 : vector<32x128xf32> to vector<32x128xbf16>
    %cst_69 = arith.constant dense<0.000000e+00> : vector<3x128xf32>
    %105 = tpu.matmul %103, %104, %cst_69 {dimension_numbers = #tpu.dot_dimension_numbers<[1], [0], [0], [1], [0, 0, 1, 1], [], []>} : vector<3x32xbf16>, vector<32x128xbf16>, vector<3x128xf32> -> vector<3x128xf32>
    %c0_70 = arith.constant 0 : index
    %c0_71 = arith.constant 0 : index
    %106 = vector.load %arg7[%c0_70, %c0_71] : memref<3x1xf32, #tpu.memory_space<vmem>>, vector<3x1xf32>
    %107 = vector.broadcast %106 : vector<3x1xf32> to vector<3x128xf32>
    %108 = arith.addf %105, %107 : vector<3x128xf32>
    %cst_72 = arith.constant 0.000000e+00 : f32
    %109 = vector.broadcast %cst_72 : f32 to vector<3x128xf32>
    %110 = arith.cmpf oge, %108, %109 : vector<3x128xf32>
    %cst_73 = arith.constant 2.000000e-01 : f32
    %111 = vector.broadcast %cst_73 : f32 to vector<3x128xf32>
    %112 = arith.mulf %111, %108 : vector<3x128xf32>
    %113 = arith.select %110, %108, %112 : vector<3x128xi1>, vector<3x128xf32>
    %c0_74 = arith.constant 0 : index
    %c0_75 = arith.constant 0 : index
    %c0_76 = arith.constant 0 : index
    %114 = vector.load %arg12[%c0_74, %c0_75, %c0_76] : memref<1x3x128xf32, #tpu.memory_space<vmem>>, vector<1x3x128xf32>
    %115 = vector.shape_cast %114 : vector<1x3x128xf32> to vector<3x128xf32>
    %116 = vector.shape_cast %113 : vector<3x128xf32> to vector<1x3x128xf32>
    tpu.vector_store %arg12[%c0_74, %c0_75, %c0_76], %116 {strides = array<i32>} : memref<1x3x128xf32, #tpu.memory_space<vmem>>, vector<1x3x128xf32>,
    return
  }
  func.func @transform_0(%arg0: i32) -> (i32, i32, i32) {
    %c0_i32 = arith.constant 0 : i32
    %c0_i32_0 = arith.constant 0 : i32
    %c0_i32_1 = arith.constant 0 : i32
    %c0_i32_2 = arith.constant 0 : i32
    return %c0_i32, %c0_i32_0, %c0_i32_1 : i32, i32, i32
  }
  func.func @transform_1(%arg0: i32) -> (i32, i32, i32) {
    %c0_i32 = arith.constant 0 : i32
    %c0_i32_0 = arith.constant 0 : i32
    %c0_i32_1 = arith.constant 0 : i32
    return %arg0, %c0_i32, %c0_i32_0 : i32, i32, i32
  }
  func.func @transform_2(%arg0: i32) -> (i32, i32, i32) {
    %c0_i32 = arith.constant 0 : i32
    %c0_i32_0 = arith.constant 0 : i32
    %c0_i32_1 = arith.constant 0 : i32
    return %arg0, %c0_i32, %c0_i32_0 : i32, i32, i32
  }
  func.func @transform_3(%arg0: i32) -> (i32, i32) {
    %c0_i32 = arith.constant 0 : i32
    %c0_i32_0 = arith.constant 0 : i32
    %c0_i32_1 = arith.constant 0 : i32
    return %c0_i32, %c0_i32_0 : i32, i32
  }
  func.func @transform_4(%arg0: i32) -> (i32, i32) {
    %c0_i32 = arith.constant 0 : i32
    %c0_i32_0 = arith.constant 0 : i32
    %c0_i32_1 = arith.constant 0 : i32
    return %c0_i32, %c0_i32_0 : i32, i32
  }
  func.func @transform_5(%arg0: i32) -> (i32, i32, i32) {
    %c0_i32 = arith.constant 0 : i32
    %c0_i32_0 = arith.constant 0 : i32
    %c0_i32_1 = arith.constant 0 : i32
    return %arg0, %c0_i32, %c0_i32_0 : i32, i32, i32
  }
  func.func @transform_6(%arg0: i32) -> (i32, i32) {
    %c0_i32 = arith.constant 0 : i32
    %c0_i32_0 = arith.constant 0 : i32
    %c0_i32_1 = arith.constant 0 : i32
    return %c0_i32, %c0_i32_0 : i32, i32
  }
  func.func @transform_7(%arg0: i32) -> (i32, i32, i32) {
    %c0_i32 = arith.constant 0 : i32
    %c0_i32_0 = arith.constant 0 : i32
    %c0_i32_1 = arith.constant 0 : i32
    return %arg0, %c0_i32, %c0_i32_0 : i32, i32, i32
  }
  func.func @transform_8(%arg0: i32) -> (i32, i32, i32) {
    %c0_i32 = arith.constant 0 : i32
    %c0_i32_0 = arith.constant 0 : i32
    %c0_i32_1 = arith.constant 0 : i32
    return %arg0, %c0_i32, %c0_i32_0 : i32, i32, i32
  }
  func.func @transform_9(%arg0: i32) -> i32 {
    %c0_i32 = arith.constant 0 : i32
    %c0_i32_0 = arith.constant 0 : i32
    return %c0_i32 : i32
  }
  func.func @transform_10(%arg0: i32) -> (i32, i32, i32) {
    %c0_i32 = arith.constant 0 : i32
    %c0_i32_0 = arith.constant 0 : i32
    %c0_i32_1 = arith.constant 0 : i32
    return %arg0, %c0_i32, %c0_i32_0 : i32, i32, i32
  }
  func.func @transform_11(%arg0: i32) -> (i32, i32, i32) {
    %c0_i32 = arith.constant 0 : i32
    %c0_i32_0 = arith.constant 0 : i32
    %c0_i32_1 = arith.constant 0 : i32
    return %arg0, %c0_i32, %c0_i32_0 : i32, i32, i32
  }
}

module attributes {stable_mosaic.version = 11 : i64} {
  func.func @_modconv3x3_kernel(%arg0: i32, %arg1: memref<9x16x32xf32, #tpu.memory_space<vmem>>, %arg2: memref<1x1x32xf32, #tpu.memory_space<vmem>>, %arg3: memref<1x16x1xf32, #tpu.memory_space<vmem>>, %arg4: memref<16x1xf32, #tpu.memory_space<vmem>>, %arg5: memref<1x32x176xbf16, #tpu.memory_space<vmem>>, %arg6: memref<1x1x128xbf16, #tpu.memory_space<vmem>>, %arg7: memref<1xf32, #tpu.memory_space<smem>>, %arg8: memref<1x16x128xbf16, #tpu.memory_space<vmem>>) attributes {dimension_semantics = [#tpu.dimension_semantics<parallel>], iteration_bounds = array<i64: 2>, scalar_prefetch = 0 : i64, scratch_operands = 0 : i64, tpu.core_type = #tpu.core_type<tc>, window_params = [{pipeline_mode = #tpu.pipeline_mode<synchronous>, transform_indices = @transform_0, window_bounds = array<i64: 9, 16, 32>}, {transform_indices = @transform_1, window_bounds = array<i64: 1, 1, 32>}, {transform_indices = @transform_2, window_bounds = array<i64: 1, 16, 1>}, {pipeline_mode = #tpu.pipeline_mode<synchronous>, transform_indices = @transform_3, window_bounds = array<i64: 16, 1>}, {transform_indices = @transform_4, window_bounds = array<i64: 1, 32, 176>}, {transform_indices = @transform_5, window_bounds = array<i64: 1, 1, 128>}, {transform_indices = @transform_6, window_bounds = array<i64: 1>}, {transform_indices = @transform_7, window_bounds = array<i64: 1, 16, 128>}]} {
    %c0 = arith.constant 0 : index
    %c0_0 = arith.constant 0 : index
    %c0_1 = arith.constant 0 : index
    %0 = vector.load %arg3[%c0, %c0_0, %c0_1] : memref<1x16x1xf32, #tpu.memory_space<vmem>>, vector<1x16x1xf32>
    %1 = vector.shape_cast %0 : vector<1x16x1xf32> to vector<16x1xf32>
    %c0_2 = arith.constant 0 : index
    %c0_3 = arith.constant 0 : index
    %c0_4 = arith.constant 0 : index
    %2 = vector.load %arg2[%c0_2, %c0_3, %c0_4] : memref<1x1x32xf32, #tpu.memory_space<vmem>>, vector<1x1x32xf32>
    %3 = vector.shape_cast %2 : vector<1x1x32xf32> to vector<1x32xf32>
    %4 = vector.broadcast %1 : vector<16x1xf32> to vector<16x32xf32>
    %5 = vector.broadcast %3 : vector<1x32xf32> to vector<16x32xf32>
    %6 = arith.mulf %4, %5 : vector<16x32xf32>
    %c0_5 = arith.constant 0 : index
    %c0_6 = arith.constant 0 : index
    %c0_7 = arith.constant 0 : index
    %7 = vector.load %arg1[%c0_5, %c0_6, %c0_7] : memref<9x16x32xf32, #tpu.memory_space<vmem>>, vector<1x16x32xf32>
    %8 = vector.shape_cast %7 : vector<1x16x32xf32> to vector<16x32xf32>
    %9 = arith.mulf %8, %6 : vector<16x32xf32>
    %10 = arith.truncf %9 : vector<16x32xf32> to vector<16x32xbf16>
    %c0_8 = arith.constant 0 : index
    %c0_9 = arith.constant 0 : index
    %c0_10 = arith.constant 0 : index
    %11 = vector.load %arg5[%c0_8, %c0_9, %c0_10] : memref<1x32x176xbf16, #tpu.memory_space<vmem>>, vector<1x32x128xbf16>
    %12 = vector.shape_cast %11 : vector<1x32x128xbf16> to vector<32x128xbf16>
    %cst = arith.constant dense<0.000000e+00> : vector<16x128xf32>
    %13 = tpu.matmul %10, %12, %cst {dimension_numbers = #tpu.dot_dimension_numbers<[1], [0], [0], [1], [0, 0, 1, 1], [], []>} : vector<16x32xbf16>, vector<32x128xbf16>, vector<16x128xf32> -> vector<16x128xf32>
    %c1 = arith.constant 1 : index
    %c0_11 = arith.constant 0 : index
    %c0_12 = arith.constant 0 : index
    %14 = vector.load %arg1[%c1, %c0_11, %c0_12] : memref<9x16x32xf32, #tpu.memory_space<vmem>>, vector<1x16x32xf32>
    %15 = vector.shape_cast %14 : vector<1x16x32xf32> to vector<16x32xf32>
    %16 = arith.mulf %15, %6 : vector<16x32xf32>
    %17 = arith.truncf %16 : vector<16x32xf32> to vector<16x32xbf16>
    %c0_13 = arith.constant 0 : index
    %c0_14 = arith.constant 0 : index
    %c1_15 = arith.constant 1 : index
    %18 = vector.load %arg5[%c0_13, %c0_14, %c1_15] : memref<1x32x176xbf16, #tpu.memory_space<vmem>>, vector<1x32x128xbf16>
    %19 = vector.shape_cast %18 : vector<1x32x128xbf16> to vector<32x128xbf16>
    %cst_16 = arith.constant dense<0.000000e+00> : vector<16x128xf32>
    %20 = tpu.matmul %17, %19, %cst_16 {dimension_numbers = #tpu.dot_dimension_numbers<[1], [0], [0], [1], [0, 0, 1, 1], [], []>} : vector<16x32xbf16>, vector<32x128xbf16>, vector<16x128xf32> -> vector<16x128xf32>
    %21 = arith.addf %13, %20 : vector<16x128xf32>
    %c2 = arith.constant 2 : index
    %c0_17 = arith.constant 0 : index
    %c0_18 = arith.constant 0 : index
    %22 = vector.load %arg1[%c2, %c0_17, %c0_18] : memref<9x16x32xf32, #tpu.memory_space<vmem>>, vector<1x16x32xf32>
    %23 = vector.shape_cast %22 : vector<1x16x32xf32> to vector<16x32xf32>
    %24 = arith.mulf %23, %6 : vector<16x32xf32>
    %25 = arith.truncf %24 : vector<16x32xf32> to vector<16x32xbf16>
    %c0_19 = arith.constant 0 : index
    %c0_20 = arith.constant 0 : index
    %c2_21 = arith.constant 2 : index
    %26 = vector.load %arg5[%c0_19, %c0_20, %c2_21] : memref<1x32x176xbf16, #tpu.memory_space<vmem>>, vector<1x32x128xbf16>
    %27 = vector.shape_cast %26 : vector<1x32x128xbf16> to vector<32x128xbf16>
    %cst_22 = arith.constant dense<0.000000e+00> : vector<16x128xf32>
    %28 = tpu.matmul %25, %27, %cst_22 {dimension_numbers = #tpu.dot_dimension_numbers<[1], [0], [0], [1], [0, 0, 1, 1], [], []>} : vector<16x32xbf16>, vector<32x128xbf16>, vector<16x128xf32> -> vector<16x128xf32>
    %29 = arith.addf %21, %28 : vector<16x128xf32>
    %c3 = arith.constant 3 : index
    %c0_23 = arith.constant 0 : index
    %c0_24 = arith.constant 0 : index
    %30 = vector.load %arg1[%c3, %c0_23, %c0_24] : memref<9x16x32xf32, #tpu.memory_space<vmem>>, vector<1x16x32xf32>
    %31 = vector.shape_cast %30 : vector<1x16x32xf32> to vector<16x32xf32>
    %32 = arith.mulf %31, %6 : vector<16x32xf32>
    %33 = arith.truncf %32 : vector<16x32xf32> to vector<16x32xbf16>
    %c0_25 = arith.constant 0 : index
    %c0_26 = arith.constant 0 : index
    %c16 = arith.constant 16 : index
    %34 = vector.load %arg5[%c0_25, %c0_26, %c16] : memref<1x32x176xbf16, #tpu.memory_space<vmem>>, vector<1x32x128xbf16>
    %35 = vector.shape_cast %34 : vector<1x32x128xbf16> to vector<32x128xbf16>
    %cst_27 = arith.constant dense<0.000000e+00> : vector<16x128xf32>
    %36 = tpu.matmul %33, %35, %cst_27 {dimension_numbers = #tpu.dot_dimension_numbers<[1], [0], [0], [1], [0, 0, 1, 1], [], []>} : vector<16x32xbf16>, vector<32x128xbf16>, vector<16x128xf32> -> vector<16x128xf32>
    %37 = arith.addf %29, %36 : vector<16x128xf32>
    %c4 = arith.constant 4 : index
    %c0_28 = arith.constant 0 : index
    %c0_29 = arith.constant 0 : index
    %38 = vector.load %arg1[%c4, %c0_28, %c0_29] : memref<9x16x32xf32, #tpu.memory_space<vmem>>, vector<1x16x32xf32>
    %39 = vector.shape_cast %38 : vector<1x16x32xf32> to vector<16x32xf32>
    %40 = arith.mulf %39, %6 : vector<16x32xf32>
    %41 = arith.truncf %40 : vector<16x32xf32> to vector<16x32xbf16>
    %c0_30 = arith.constant 0 : index
    %c0_31 = arith.constant 0 : index
    %c17 = arith.constant 17 : index
    %42 = vector.load %arg5[%c0_30, %c0_31, %c17] : memref<1x32x176xbf16, #tpu.memory_space<vmem>>, vector<1x32x128xbf16>
    %43 = vector.shape_cast %42 : vector<1x32x128xbf16> to vector<32x128xbf16>
    %cst_32 = arith.constant dense<0.000000e+00> : vector<16x128xf32>
    %44 = tpu.matmul %41, %43, %cst_32 {dimension_numbers = #tpu.dot_dimension_numbers<[1], [0], [0], [1], [0, 0, 1, 1], [], []>} : vector<16x32xbf16>, vector<32x128xbf16>, vector<16x128xf32> -> vector<16x128xf32>
    %45 = arith.addf %37, %44 : vector<16x128xf32>
    %c5 = arith.constant 5 : index
    %c0_33 = arith.constant 0 : index
    %c0_34 = arith.constant 0 : index
    %46 = vector.load %arg1[%c5, %c0_33, %c0_34] : memref<9x16x32xf32, #tpu.memory_space<vmem>>, vector<1x16x32xf32>
    %47 = vector.shape_cast %46 : vector<1x16x32xf32> to vector<16x32xf32>
    %48 = arith.mulf %47, %6 : vector<16x32xf32>
    %49 = arith.truncf %48 : vector<16x32xf32> to vector<16x32xbf16>
    %c0_35 = arith.constant 0 : index
    %c0_36 = arith.constant 0 : index
    %c18 = arith.constant 18 : index
    %50 = vector.load %arg5[%c0_35, %c0_36, %c18] : memref<1x32x176xbf16, #tpu.memory_space<vmem>>, vector<1x32x128xbf16>
    %51 = vector.shape_cast %50 : vector<1x32x128xbf16> to vector<32x128xbf16>
    %cst_37 = arith.constant dense<0.000000e+00> : vector<16x128xf32>
    %52 = tpu.matmul %49, %51, %cst_37 {dimension_numbers = #tpu.dot_dimension_numbers<[1], [0], [0], [1], [0, 0, 1, 1], [], []>} : vector<16x32xbf16>, vector<32x128xbf16>, vector<16x128xf32> -> vector<16x128xf32>
    %53 = arith.addf %45, %52 : vector<16x128xf32>
    %c6 = arith.constant 6 : index
    %c0_38 = arith.constant 0 : index
    %c0_39 = arith.constant 0 : index
    %54 = vector.load %arg1[%c6, %c0_38, %c0_39] : memref<9x16x32xf32, #tpu.memory_space<vmem>>, vector<1x16x32xf32>
    %55 = vector.shape_cast %54 : vector<1x16x32xf32> to vector<16x32xf32>
    %56 = arith.mulf %55, %6 : vector<16x32xf32>
    %57 = arith.truncf %56 : vector<16x32xf32> to vector<16x32xbf16>
    %c0_40 = arith.constant 0 : index
    %c0_41 = arith.constant 0 : index
    %c32 = arith.constant 32 : index
    %58 = vector.load %arg5[%c0_40, %c0_41, %c32] : memref<1x32x176xbf16, #tpu.memory_space<vmem>>, vector<1x32x128xbf16>
    %59 = vector.shape_cast %58 : vector<1x32x128xbf16> to vector<32x128xbf16>
    %cst_42 = arith.constant dense<0.000000e+00> : vector<16x128xf32>
    %60 = tpu.matmul %57, %59, %cst_42 {dimension_numbers = #tpu.dot_dimension_numbers<[1], [0], [0], [1], [0, 0, 1, 1], [], []>} : vector<16x32xbf16>, vector<32x128xbf16>, vector<16x128xf32> -> vector<16x128xf32>
    %61 = arith.addf %53, %60 : vector<16x128xf32>
    %c7 = arith.constant 7 : index
    %c0_43 = arith.constant 0 : index
    %c0_44 = arith.constant 0 : index
    %62 = vector.load %arg1[%c7, %c0_43, %c0_44] : memref<9x16x32xf32, #tpu.memory_space<vmem>>, vector<1x16x32xf32>
    %63 = vector.shape_cast %62 : vector<1x16x32xf32> to vector<16x32xf32>
    %64 = arith.mulf %63, %6 : vector<16x32xf32>
    %65 = arith.truncf %64 : vector<16x32xf32> to vector<16x32xbf16>
    %c0_45 = arith.constant 0 : index
    %c0_46 = arith.constant 0 : index
    %c33 = arith.constant 33 : index
    %66 = vector.load %arg5[%c0_45, %c0_46, %c33] : memref<1x32x176xbf16, #tpu.memory_space<vmem>>, vector<1x32x128xbf16>
    %67 = vector.shape_cast %66 : vector<1x32x128xbf16> to vector<32x128xbf16>
    %cst_47 = arith.constant dense<0.000000e+00> : vector<16x128xf32>
    %68 = tpu.matmul %65, %67, %cst_47 {dimension_numbers = #tpu.dot_dimension_numbers<[1], [0], [0], [1], [0, 0, 1, 1], [], []>} : vector<16x32xbf16>, vector<32x128xbf16>, vector<16x128xf32> -> vector<16x128xf32>
    %69 = arith.addf %61, %68 : vector<16x128xf32>
    %c8 = arith.constant 8 : index
    %c0_48 = arith.constant 0 : index
    %c0_49 = arith.constant 0 : index
    %70 = vector.load %arg1[%c8, %c0_48, %c0_49] : memref<9x16x32xf32, #tpu.memory_space<vmem>>, vector<1x16x32xf32>
    %71 = vector.shape_cast %70 : vector<1x16x32xf32> to vector<16x32xf32>
    %72 = arith.mulf %71, %6 : vector<16x32xf32>
    %73 = arith.truncf %72 : vector<16x32xf32> to vector<16x32xbf16>
    %c0_50 = arith.constant 0 : index
    %c0_51 = arith.constant 0 : index
    %c34 = arith.constant 34 : index
    %74 = vector.load %arg5[%c0_50, %c0_51, %c34] : memref<1x32x176xbf16, #tpu.memory_space<vmem>>, vector<1x32x128xbf16>
    %75 = vector.shape_cast %74 : vector<1x32x128xbf16> to vector<32x128xbf16>
    %cst_52 = arith.constant dense<0.000000e+00> : vector<16x128xf32>
    %76 = tpu.matmul %73, %75, %cst_52 {dimension_numbers = #tpu.dot_dimension_numbers<[1], [0], [0], [1], [0, 0, 1, 1], [], []>} : vector<16x32xbf16>, vector<32x128xbf16>, vector<16x128xf32> -> vector<16x128xf32>
    %77 = arith.addf %69, %76 : vector<16x128xf32>
    %c0_53 = arith.constant 0 : index
    %78 = memref.load %arg7[%c0_53] : memref<1xf32, #tpu.memory_space<smem>>
    %c0_54 = arith.constant 0 : index
    %c0_55 = arith.constant 0 : index
    %c0_56 = arith.constant 0 : index
    %79 = vector.load %arg6[%c0_54, %c0_55, %c0_56] : memref<1x1x128xbf16, #tpu.memory_space<vmem>>, vector<1x1x128xbf16>
    %80 = vector.shape_cast %79 : vector<1x1x128xbf16> to vector<1x128xbf16>
    %81 = arith.extf %80 : vector<1x128xbf16> to vector<1x128xf32>
    %82 = vector.broadcast %78 : f32 to vector<1x128xf32>
    %83 = arith.mulf %82, %81 : vector<1x128xf32>
    %84 = vector.broadcast %83 : vector<1x128xf32> to vector<16x128xf32>
    %85 = arith.addf %77, %84 : vector<16x128xf32>
    %c0_57 = arith.constant 0 : index
    %c0_58 = arith.constant 0 : index
    %86 = vector.load %arg4[%c0_57, %c0_58] : memref<16x1xf32, #tpu.memory_space<vmem>>, vector<16x1xf32>
    %87 = vector.broadcast %86 : vector<16x1xf32> to vector<16x128xf32>
    %88 = arith.addf %85, %87 : vector<16x128xf32>
    %cst_59 = arith.constant 0.000000e+00 : f32
    %89 = vector.broadcast %cst_59 : f32 to vector<16x128xf32>
    %90 = arith.cmpf oge, %88, %89 : vector<16x128xf32>
    %cst_60 = arith.constant 2.000000e-01 : f32
    %91 = vector.broadcast %cst_60 : f32 to vector<16x128xf32>
    %92 = arith.mulf %91, %88 : vector<16x128xf32>
    %93 = arith.select %90, %88, %92 : vector<16x128xi1>, vector<16x128xf32>
    %94 = arith.truncf %93 : vector<16x128xf32> to vector<16x128xbf16>
    %c0_61 = arith.constant 0 : index
    %c0_62 = arith.constant 0 : index
    %c0_63 = arith.constant 0 : index
    %95 = vector.load %arg8[%c0_61, %c0_62, %c0_63] : memref<1x16x128xbf16, #tpu.memory_space<vmem>>, vector<1x16x128xbf16>
    %96 = vector.shape_cast %95 : vector<1x16x128xbf16> to vector<16x128xbf16>
    %97 = vector.shape_cast %94 : vector<16x128xbf16> to vector<1x16x128xbf16>
    tpu.vector_store %arg8[%c0_61, %c0_62, %c0_63], %97 {strides = array<i32>} : memref<1x16x128xbf16, #tpu.memory_space<vmem>>, vector<1x16x128xbf16>,
    return
  }
  func.func @transform_0(%arg0: i32) -> (i32, i32, i32) {
    %c0_i32 = arith.constant 0 : i32
    %c0_i32_0 = arith.constant 0 : i32
    %c0_i32_1 = arith.constant 0 : i32
    %c0_i32_2 = arith.constant 0 : i32
    return %c0_i32, %c0_i32_0, %c0_i32_1 : i32, i32, i32
  }
  func.func @transform_1(%arg0: i32) -> (i32, i32, i32) {
    %c0_i32 = arith.constant 0 : i32
    %c0_i32_0 = arith.constant 0 : i32
    %c0_i32_1 = arith.constant 0 : i32
    return %arg0, %c0_i32, %c0_i32_0 : i32, i32, i32
  }
  func.func @transform_2(%arg0: i32) -> (i32, i32, i32) {
    %c0_i32 = arith.constant 0 : i32
    %c0_i32_0 = arith.constant 0 : i32
    %c0_i32_1 = arith.constant 0 : i32
    return %arg0, %c0_i32, %c0_i32_0 : i32, i32, i32
  }
  func.func @transform_3(%arg0: i32) -> (i32, i32) {
    %c0_i32 = arith.constant 0 : i32
    %c0_i32_0 = arith.constant 0 : i32
    %c0_i32_1 = arith.constant 0 : i32
    return %c0_i32, %c0_i32_0 : i32, i32
  }
  func.func @transform_4(%arg0: i32) -> (i32, i32, i32) {
    %c0_i32 = arith.constant 0 : i32
    %c0_i32_0 = arith.constant 0 : i32
    %c0_i32_1 = arith.constant 0 : i32
    return %arg0, %c0_i32, %c0_i32_0 : i32, i32, i32
  }
  func.func @transform_5(%arg0: i32) -> (i32, i32, i32) {
    %c0_i32 = arith.constant 0 : i32
    %c0_i32_0 = arith.constant 0 : i32
    %c0_i32_1 = arith.constant 0 : i32
    return %arg0, %c0_i32, %c0_i32_0 : i32, i32, i32
  }
  func.func @transform_6(%arg0: i32) -> i32 {
    %c0_i32 = arith.constant 0 : i32
    %c0_i32_0 = arith.constant 0 : i32
    return %c0_i32 : i32
  }
  func.func @transform_7(%arg0: i32) -> (i32, i32, i32) {
    %c0_i32 = arith.constant 0 : i32
    %c0_i32_0 = arith.constant 0 : i32
    %c0_i32_1 = arith.constant 0 : i32
    return %arg0, %c0_i32, %c0_i32_0 : i32, i32, i32
  }
}

module attributes {stable_mosaic.version = 11 : i64} {
  func.func @_modconv3x3_rgb_kernel(%arg0: i32, %arg1: memref<9x16x16xf32, #tpu.memory_space<vmem>>, %arg2: memref<1x1x16xf32, #tpu.memory_space<vmem>>, %arg3: memref<1x16x1xf32, #tpu.memory_space<vmem>>, %arg4: memref<16x1xf32, #tpu.memory_space<vmem>>, %arg5: memref<3x16xf32, #tpu.memory_space<vmem>>, %arg6: memref<1x1x16xf32, #tpu.memory_space<vmem>>, %arg7: memref<3x1xf32, #tpu.memory_space<vmem>>, %arg8: memref<1x16x176xbf16, #tpu.memory_space<vmem>>, %arg9: memref<1x1x128xbf16, #tpu.memory_space<vmem>>, %arg10: memref<1xf32, #tpu.memory_space<smem>>, %arg11: memref<1x16x128xbf16, #tpu.memory_space<vmem>>, %arg12: memref<1x3x128xf32, #tpu.memory_space<vmem>>) attributes {dimension_semantics = [#tpu.dimension_semantics<parallel>], iteration_bounds = array<i64: 2>, scalar_prefetch = 0 : i64, scratch_operands = 0 : i64, tpu.core_type = #tpu.core_type<tc>, window_params = [{pipeline_mode = #tpu.pipeline_mode<synchronous>, transform_indices = @transform_0, window_bounds = array<i64: 9, 16, 16>}, {transform_indices = @transform_1, window_bounds = array<i64: 1, 1, 16>}, {transform_indices = @transform_2, window_bounds = array<i64: 1, 16, 1>}, {pipeline_mode = #tpu.pipeline_mode<synchronous>, transform_indices = @transform_3, window_bounds = array<i64: 16, 1>}, {pipeline_mode = #tpu.pipeline_mode<synchronous>, transform_indices = @transform_4, window_bounds = array<i64: 3, 16>}, {transform_indices = @transform_5, window_bounds = array<i64: 1, 1, 16>}, {pipeline_mode = #tpu.pipeline_mode<synchronous>, transform_indices = @transform_6, window_bounds = array<i64: 3, 1>}, {transform_indices = @transform_7, window_bounds = array<i64: 1, 16, 176>}, {transform_indices = @transform_8, window_bounds = array<i64: 1, 1, 128>}, {transform_indices = @transform_9, window_bounds = array<i64: 1>}, {transform_indices = @transform_10, window_bounds = array<i64: 1, 16, 128>}, {transform_indices = @transform_11, window_bounds = array<i64: 1, 3, 128>}]} {
    %c0 = arith.constant 0 : index
    %c0_0 = arith.constant 0 : index
    %c0_1 = arith.constant 0 : index
    %0 = vector.load %arg3[%c0, %c0_0, %c0_1] : memref<1x16x1xf32, #tpu.memory_space<vmem>>, vector<1x16x1xf32>
    %1 = vector.shape_cast %0 : vector<1x16x1xf32> to vector<16x1xf32>
    %c0_2 = arith.constant 0 : index
    %c0_3 = arith.constant 0 : index
    %c0_4 = arith.constant 0 : index
    %2 = vector.load %arg2[%c0_2, %c0_3, %c0_4] : memref<1x1x16xf32, #tpu.memory_space<vmem>>, vector<1x1x16xf32>
    %3 = vector.shape_cast %2 : vector<1x1x16xf32> to vector<1x16xf32>
    %4 = vector.broadcast %1 : vector<16x1xf32> to vector<16x16xf32>
    %5 = vector.broadcast %3 : vector<1x16xf32> to vector<16x16xf32>
    %6 = arith.mulf %4, %5 : vector<16x16xf32>
    %c0_5 = arith.constant 0 : index
    %c0_6 = arith.constant 0 : index
    %c0_7 = arith.constant 0 : index
    %7 = vector.load %arg1[%c0_5, %c0_6, %c0_7] : memref<9x16x16xf32, #tpu.memory_space<vmem>>, vector<1x16x16xf32>
    %8 = vector.shape_cast %7 : vector<1x16x16xf32> to vector<16x16xf32>
    %9 = arith.mulf %8, %6 : vector<16x16xf32>
    %10 = arith.truncf %9 : vector<16x16xf32> to vector<16x16xbf16>
    %c0_8 = arith.constant 0 : index
    %c0_9 = arith.constant 0 : index
    %c0_10 = arith.constant 0 : index
    %11 = vector.load %arg8[%c0_8, %c0_9, %c0_10] : memref<1x16x176xbf16, #tpu.memory_space<vmem>>, vector<1x16x128xbf16>
    %12 = vector.shape_cast %11 : vector<1x16x128xbf16> to vector<16x128xbf16>
    %cst = arith.constant dense<0.000000e+00> : vector<16x128xf32>
    %13 = tpu.matmul %10, %12, %cst {dimension_numbers = #tpu.dot_dimension_numbers<[1], [0], [0], [1], [0, 0, 1, 1], [], []>} : vector<16x16xbf16>, vector<16x128xbf16>, vector<16x128xf32> -> vector<16x128xf32>
    %c1 = arith.constant 1 : index
    %c0_11 = arith.constant 0 : index
    %c0_12 = arith.constant 0 : index
    %14 = vector.load %arg1[%c1, %c0_11, %c0_12] : memref<9x16x16xf32, #tpu.memory_space<vmem>>, vector<1x16x16xf32>
    %15 = vector.shape_cast %14 : vector<1x16x16xf32> to vector<16x16xf32>
    %16 = arith.mulf %15, %6 : vector<16x16xf32>
    %17 = arith.truncf %16 : vector<16x16xf32> to vector<16x16xbf16>
    %c0_13 = arith.constant 0 : index
    %c0_14 = arith.constant 0 : index
    %c1_15 = arith.constant 1 : index
    %18 = vector.load %arg8[%c0_13, %c0_14, %c1_15] : memref<1x16x176xbf16, #tpu.memory_space<vmem>>, vector<1x16x128xbf16>
    %19 = vector.shape_cast %18 : vector<1x16x128xbf16> to vector<16x128xbf16>
    %cst_16 = arith.constant dense<0.000000e+00> : vector<16x128xf32>
    %20 = tpu.matmul %17, %19, %cst_16 {dimension_numbers = #tpu.dot_dimension_numbers<[1], [0], [0], [1], [0, 0, 1, 1], [], []>} : vector<16x16xbf16>, vector<16x128xbf16>, vector<16x128xf32> -> vector<16x128xf32>
    %21 = arith.addf %13, %20 : vector<16x128xf32>
    %c2 = arith.constant 2 : index
    %c0_17 = arith.constant 0 : index
    %c0_18 = arith.constant 0 : index
    %22 = vector.load %arg1[%c2, %c0_17, %c0_18] : memref<9x16x16xf32, #tpu.memory_space<vmem>>, vector<1x16x16xf32>
    %23 = vector.shape_cast %22 : vector<1x16x16xf32> to vector<16x16xf32>
    %24 = arith.mulf %23, %6 : vector<16x16xf32>
    %25 = arith.truncf %24 : vector<16x16xf32> to vector<16x16xbf16>
    %c0_19 = arith.constant 0 : index
    %c0_20 = arith.constant 0 : index
    %c2_21 = arith.constant 2 : index
    %26 = vector.load %arg8[%c0_19, %c0_20, %c2_21] : memref<1x16x176xbf16, #tpu.memory_space<vmem>>, vector<1x16x128xbf16>
    %27 = vector.shape_cast %26 : vector<1x16x128xbf16> to vector<16x128xbf16>
    %cst_22 = arith.constant dense<0.000000e+00> : vector<16x128xf32>
    %28 = tpu.matmul %25, %27, %cst_22 {dimension_numbers = #tpu.dot_dimension_numbers<[1], [0], [0], [1], [0, 0, 1, 1], [], []>} : vector<16x16xbf16>, vector<16x128xbf16>, vector<16x128xf32> -> vector<16x128xf32>
    %29 = arith.addf %21, %28 : vector<16x128xf32>
    %c3 = arith.constant 3 : index
    %c0_23 = arith.constant 0 : index
    %c0_24 = arith.constant 0 : index
    %30 = vector.load %arg1[%c3, %c0_23, %c0_24] : memref<9x16x16xf32, #tpu.memory_space<vmem>>, vector<1x16x16xf32>
    %31 = vector.shape_cast %30 : vector<1x16x16xf32> to vector<16x16xf32>
    %32 = arith.mulf %31, %6 : vector<16x16xf32>
    %33 = arith.truncf %32 : vector<16x16xf32> to vector<16x16xbf16>
    %c0_25 = arith.constant 0 : index
    %c0_26 = arith.constant 0 : index
    %c16 = arith.constant 16 : index
    %34 = vector.load %arg8[%c0_25, %c0_26, %c16] : memref<1x16x176xbf16, #tpu.memory_space<vmem>>, vector<1x16x128xbf16>
    %35 = vector.shape_cast %34 : vector<1x16x128xbf16> to vector<16x128xbf16>
    %cst_27 = arith.constant dense<0.000000e+00> : vector<16x128xf32>
    %36 = tpu.matmul %33, %35, %cst_27 {dimension_numbers = #tpu.dot_dimension_numbers<[1], [0], [0], [1], [0, 0, 1, 1], [], []>} : vector<16x16xbf16>, vector<16x128xbf16>, vector<16x128xf32> -> vector<16x128xf32>
    %37 = arith.addf %29, %36 : vector<16x128xf32>
    %c4 = arith.constant 4 : index
    %c0_28 = arith.constant 0 : index
    %c0_29 = arith.constant 0 : index
    %38 = vector.load %arg1[%c4, %c0_28, %c0_29] : memref<9x16x16xf32, #tpu.memory_space<vmem>>, vector<1x16x16xf32>
    %39 = vector.shape_cast %38 : vector<1x16x16xf32> to vector<16x16xf32>
    %40 = arith.mulf %39, %6 : vector<16x16xf32>
    %41 = arith.truncf %40 : vector<16x16xf32> to vector<16x16xbf16>
    %c0_30 = arith.constant 0 : index
    %c0_31 = arith.constant 0 : index
    %c17 = arith.constant 17 : index
    %42 = vector.load %arg8[%c0_30, %c0_31, %c17] : memref<1x16x176xbf16, #tpu.memory_space<vmem>>, vector<1x16x128xbf16>
    %43 = vector.shape_cast %42 : vector<1x16x128xbf16> to vector<16x128xbf16>
    %cst_32 = arith.constant dense<0.000000e+00> : vector<16x128xf32>
    %44 = tpu.matmul %41, %43, %cst_32 {dimension_numbers = #tpu.dot_dimension_numbers<[1], [0], [0], [1], [0, 0, 1, 1], [], []>} : vector<16x16xbf16>, vector<16x128xbf16>, vector<16x128xf32> -> vector<16x128xf32>
    %45 = arith.addf %37, %44 : vector<16x128xf32>
    %c5 = arith.constant 5 : index
    %c0_33 = arith.constant 0 : index
    %c0_34 = arith.constant 0 : index
    %46 = vector.load %arg1[%c5, %c0_33, %c0_34] : memref<9x16x16xf32, #tpu.memory_space<vmem>>, vector<1x16x16xf32>
    %47 = vector.shape_cast %46 : vector<1x16x16xf32> to vector<16x16xf32>
    %48 = arith.mulf %47, %6 : vector<16x16xf32>
    %49 = arith.truncf %48 : vector<16x16xf32> to vector<16x16xbf16>
    %c0_35 = arith.constant 0 : index
    %c0_36 = arith.constant 0 : index
    %c18 = arith.constant 18 : index
    %50 = vector.load %arg8[%c0_35, %c0_36, %c18] : memref<1x16x176xbf16, #tpu.memory_space<vmem>>, vector<1x16x128xbf16>
    %51 = vector.shape_cast %50 : vector<1x16x128xbf16> to vector<16x128xbf16>
    %cst_37 = arith.constant dense<0.000000e+00> : vector<16x128xf32>
    %52 = tpu.matmul %49, %51, %cst_37 {dimension_numbers = #tpu.dot_dimension_numbers<[1], [0], [0], [1], [0, 0, 1, 1], [], []>} : vector<16x16xbf16>, vector<16x128xbf16>, vector<16x128xf32> -> vector<16x128xf32>
    %53 = arith.addf %45, %52 : vector<16x128xf32>
    %c6 = arith.constant 6 : index
    %c0_38 = arith.constant 0 : index
    %c0_39 = arith.constant 0 : index
    %54 = vector.load %arg1[%c6, %c0_38, %c0_39] : memref<9x16x16xf32, #tpu.memory_space<vmem>>, vector<1x16x16xf32>
    %55 = vector.shape_cast %54 : vector<1x16x16xf32> to vector<16x16xf32>
    %56 = arith.mulf %55, %6 : vector<16x16xf32>
    %57 = arith.truncf %56 : vector<16x16xf32> to vector<16x16xbf16>
    %c0_40 = arith.constant 0 : index
    %c0_41 = arith.constant 0 : index
    %c32 = arith.constant 32 : index
    %58 = vector.load %arg8[%c0_40, %c0_41, %c32] : memref<1x16x176xbf16, #tpu.memory_space<vmem>>, vector<1x16x128xbf16>
    %59 = vector.shape_cast %58 : vector<1x16x128xbf16> to vector<16x128xbf16>
    %cst_42 = arith.constant dense<0.000000e+00> : vector<16x128xf32>
    %60 = tpu.matmul %57, %59, %cst_42 {dimension_numbers = #tpu.dot_dimension_numbers<[1], [0], [0], [1], [0, 0, 1, 1], [], []>} : vector<16x16xbf16>, vector<16x128xbf16>, vector<16x128xf32> -> vector<16x128xf32>
    %61 = arith.addf %53, %60 : vector<16x128xf32>
    %c7 = arith.constant 7 : index
    %c0_43 = arith.constant 0 : index
    %c0_44 = arith.constant 0 : index
    %62 = vector.load %arg1[%c7, %c0_43, %c0_44] : memref<9x16x16xf32, #tpu.memory_space<vmem>>, vector<1x16x16xf32>
    %63 = vector.shape_cast %62 : vector<1x16x16xf32> to vector<16x16xf32>
    %64 = arith.mulf %63, %6 : vector<16x16xf32>
    %65 = arith.truncf %64 : vector<16x16xf32> to vector<16x16xbf16>
    %c0_45 = arith.constant 0 : index
    %c0_46 = arith.constant 0 : index
    %c33 = arith.constant 33 : index
    %66 = vector.load %arg8[%c0_45, %c0_46, %c33] : memref<1x16x176xbf16, #tpu.memory_space<vmem>>, vector<1x16x128xbf16>
    %67 = vector.shape_cast %66 : vector<1x16x128xbf16> to vector<16x128xbf16>
    %cst_47 = arith.constant dense<0.000000e+00> : vector<16x128xf32>
    %68 = tpu.matmul %65, %67, %cst_47 {dimension_numbers = #tpu.dot_dimension_numbers<[1], [0], [0], [1], [0, 0, 1, 1], [], []>} : vector<16x16xbf16>, vector<16x128xbf16>, vector<16x128xf32> -> vector<16x128xf32>
    %69 = arith.addf %61, %68 : vector<16x128xf32>
    %c8 = arith.constant 8 : index
    %c0_48 = arith.constant 0 : index
    %c0_49 = arith.constant 0 : index
    %70 = vector.load %arg1[%c8, %c0_48, %c0_49] : memref<9x16x16xf32, #tpu.memory_space<vmem>>, vector<1x16x16xf32>
    %71 = vector.shape_cast %70 : vector<1x16x16xf32> to vector<16x16xf32>
    %72 = arith.mulf %71, %6 : vector<16x16xf32>
    %73 = arith.truncf %72 : vector<16x16xf32> to vector<16x16xbf16>
    %c0_50 = arith.constant 0 : index
    %c0_51 = arith.constant 0 : index
    %c34 = arith.constant 34 : index
    %74 = vector.load %arg8[%c0_50, %c0_51, %c34] : memref<1x16x176xbf16, #tpu.memory_space<vmem>>, vector<1x16x128xbf16>
    %75 = vector.shape_cast %74 : vector<1x16x128xbf16> to vector<16x128xbf16>
    %cst_52 = arith.constant dense<0.000000e+00> : vector<16x128xf32>
    %76 = tpu.matmul %73, %75, %cst_52 {dimension_numbers = #tpu.dot_dimension_numbers<[1], [0], [0], [1], [0, 0, 1, 1], [], []>} : vector<16x16xbf16>, vector<16x128xbf16>, vector<16x128xf32> -> vector<16x128xf32>
    %77 = arith.addf %69, %76 : vector<16x128xf32>
    %c0_53 = arith.constant 0 : index
    %78 = memref.load %arg10[%c0_53] : memref<1xf32, #tpu.memory_space<smem>>
    %c0_54 = arith.constant 0 : index
    %c0_55 = arith.constant 0 : index
    %c0_56 = arith.constant 0 : index
    %79 = vector.load %arg9[%c0_54, %c0_55, %c0_56] : memref<1x1x128xbf16, #tpu.memory_space<vmem>>, vector<1x1x128xbf16>
    %80 = vector.shape_cast %79 : vector<1x1x128xbf16> to vector<1x128xbf16>
    %81 = arith.extf %80 : vector<1x128xbf16> to vector<1x128xf32>
    %82 = vector.broadcast %78 : f32 to vector<1x128xf32>
    %83 = arith.mulf %82, %81 : vector<1x128xf32>
    %84 = vector.broadcast %83 : vector<1x128xf32> to vector<16x128xf32>
    %85 = arith.addf %77, %84 : vector<16x128xf32>
    %c0_57 = arith.constant 0 : index
    %c0_58 = arith.constant 0 : index
    %86 = vector.load %arg4[%c0_57, %c0_58] : memref<16x1xf32, #tpu.memory_space<vmem>>, vector<16x1xf32>
    %87 = vector.broadcast %86 : vector<16x1xf32> to vector<16x128xf32>
    %88 = arith.addf %85, %87 : vector<16x128xf32>
    %cst_59 = arith.constant 0.000000e+00 : f32
    %89 = vector.broadcast %cst_59 : f32 to vector<16x128xf32>
    %90 = arith.cmpf oge, %88, %89 : vector<16x128xf32>
    %cst_60 = arith.constant 2.000000e-01 : f32
    %91 = vector.broadcast %cst_60 : f32 to vector<16x128xf32>
    %92 = arith.mulf %91, %88 : vector<16x128xf32>
    %93 = arith.select %90, %88, %92 : vector<16x128xi1>, vector<16x128xf32>
    %94 = arith.truncf %93 : vector<16x128xf32> to vector<16x128xbf16>
    %c0_61 = arith.constant 0 : index
    %c0_62 = arith.constant 0 : index
    %c0_63 = arith.constant 0 : index
    %95 = vector.load %arg11[%c0_61, %c0_62, %c0_63] : memref<1x16x128xbf16, #tpu.memory_space<vmem>>, vector<1x16x128xbf16>
    %96 = vector.shape_cast %95 : vector<1x16x128xbf16> to vector<16x128xbf16>
    %97 = vector.shape_cast %94 : vector<16x128xbf16> to vector<1x16x128xbf16>
    tpu.vector_store %arg11[%c0_61, %c0_62, %c0_63], %97 {strides = array<i32>} : memref<1x16x128xbf16, #tpu.memory_space<vmem>>, vector<1x16x128xbf16>,
    %c0_64 = arith.constant 0 : index
    %c0_65 = arith.constant 0 : index
    %98 = vector.load %arg5[%c0_64, %c0_65] : memref<3x16xf32, #tpu.memory_space<vmem>>, vector<3x16xf32>
    %c0_66 = arith.constant 0 : index
    %c0_67 = arith.constant 0 : index
    %c0_68 = arith.constant 0 : index
    %99 = vector.load %arg6[%c0_66, %c0_67, %c0_68] : memref<1x1x16xf32, #tpu.memory_space<vmem>>, vector<1x1x16xf32>
    %100 = vector.shape_cast %99 : vector<1x1x16xf32> to vector<1x16xf32>
    %101 = vector.broadcast %100 : vector<1x16xf32> to vector<3x16xf32>
    %102 = arith.mulf %98, %101 : vector<3x16xf32>
    %103 = arith.truncf %102 : vector<3x16xf32> to vector<3x16xbf16>
    %104 = arith.truncf %93 : vector<16x128xf32> to vector<16x128xbf16>
    %cst_69 = arith.constant dense<0.000000e+00> : vector<3x128xf32>
    %105 = tpu.matmul %103, %104, %cst_69 {dimension_numbers = #tpu.dot_dimension_numbers<[1], [0], [0], [1], [0, 0, 1, 1], [], []>} : vector<3x16xbf16>, vector<16x128xbf16>, vector<3x128xf32> -> vector<3x128xf32>
    %c0_70 = arith.constant 0 : index
    %c0_71 = arith.constant 0 : index
    %106 = vector.load %arg7[%c0_70, %c0_71] : memref<3x1xf32, #tpu.memory_space<vmem>>, vector<3x1xf32>
    %107 = vector.broadcast %106 : vector<3x1xf32> to vector<3x128xf32>
    %108 = arith.addf %105, %107 : vector<3x128xf32>
    %cst_72 = arith.constant 0.000000e+00 : f32
    %109 = vector.broadcast %cst_72 : f32 to vector<3x128xf32>
    %110 = arith.cmpf oge, %108, %109 : vector<3x128xf32>
    %cst_73 = arith.constant 2.000000e-01 : f32
    %111 = vector.broadcast %cst_73 : f32 to vector<3x128xf32>
    %112 = arith.mulf %111, %108 : vector<3x128xf32>
    %113 = arith.select %110, %108, %112 : vector<3x128xi1>, vector<3x128xf32>
    %c0_74 = arith.constant 0 : index
    %c0_75 = arith.constant 0 : index
    %c0_76 = arith.constant 0 : index
    %114 = vector.load %arg12[%c0_74, %c0_75, %c0_76] : memref<1x3x128xf32, #tpu.memory_space<vmem>>, vector<1x3x128xf32>
    %115 = vector.shape_cast %114 : vector<1x3x128xf32> to vector<3x128xf32>
    %116 = vector.shape_cast %113 : vector<3x128xf32> to vector<1x3x128xf32>
    tpu.vector_store %arg12[%c0_74, %c0_75, %c0_76], %116 {strides = array<i32>} : memref<1x3x128xf32, #tpu.memory_space<vmem>>, vector<1x3x128xf32>,
    return
  }
  func.func @transform_0(%arg0: i32) -> (i32, i32, i32) {
    %c0_i32 = arith.constant 0 : i32
    %c0_i32_0 = arith.constant 0 : i32
    %c0_i32_1 = arith.constant 0 : i32
    %c0_i32_2 = arith.constant 0 : i32
    return %c0_i32, %c0_i32_0, %c0_i32_1 : i32, i32, i32
  }
  func.func @transform_1(%arg0: i32) -> (i32, i32, i32) {
    %c0_i32 = arith.constant 0 : i32
    %c0_i32_0 = arith.constant 0 : i32
    %c0_i32_1 = arith.constant 0 : i32
    return %arg0, %c0_i32, %c0_i32_0 : i32, i32, i32
  }
  func.func @transform_2(%arg0: i32) -> (i32, i32, i32) {
    %c0_i32 = arith.constant 0 : i32
    %c0_i32_0 = arith.constant 0 : i32
    %c0_i32_1 = arith.constant 0 : i32
    return %arg0, %c0_i32, %c0_i32_0 : i32, i32, i32
  }
  func.func @transform_3(%arg0: i32) -> (i32, i32) {
    %c0_i32 = arith.constant 0 : i32
    %c0_i32_0 = arith.constant 0 : i32
    %c0_i32_1 = arith.constant 0 : i32
    return %c0_i32, %c0_i32_0 : i32, i32
  }
  func.func @transform_4(%arg0: i32) -> (i32, i32) {
    %c0_i32 = arith.constant 0 : i32
    %c0_i32_0 = arith.constant 0 : i32
    %c0_i32_1 = arith.constant 0 : i32
    return %c0_i32, %c0_i32_0 : i32, i32
  }
  func.func @transform_5(%arg0: i32) -> (i32, i32, i32) {
    %c0_i32 = arith.constant 0 : i32
    %c0_i32_0 = arith.constant 0 : i32
    %c0_i32_1 = arith.constant 0 : i32
    return %arg0, %c0_i32, %c0_i32_0 : i32, i32, i32
  }
  func.func @transform_6(%arg0: i32) -> (i32, i32) {
    %c0_i32 = arith.constant 0 : i32
    %c0_i32_0 = arith.constant 0 : i32
    %c0_i32_1 = arith.constant 0 : i32
    return %c0_i32, %c0_i32_0 : i32, i32
  }
  func.func @transform_7(%arg0: i32) -> (i32, i32, i32) {
    %c0_i32 = arith.constant 0 : i32
    %c0_i32_0 = arith.constant 0 : i32
    %c0_i32_1 = arith.constant 0 : i32
    return %arg0, %c0_i32, %c0_i32_0 : i32, i32, i32
  }
  func.func @transform_8(%arg0: i32) -> (i32, i32, i32) {
    %c0_i32 = arith.constant 0 : i32
    %c0_i32_0 = arith.constant 0 : i32
    %c0_i32_1 = arith.constant 0 : i32
    return %arg0, %c0_i32, %c0_i32_0 : i32, i32, i32
  }
  func.func @transform_9(%arg0: i32) -> i32 {
    %c0_i32 = arith.constant 0 : i32
    %c0_i32_0 = arith.constant 0 : i32
    return %c0_i32 : i32
  }
  func.func @transform_10(%arg0: i32) -> (i32, i32, i32) {
    %c0_i32 = arith.constant 0 : i32
    %c0_i32_0 = arith.constant 0 : i32
    %c0_i32_1 = arith.constant 0 : i32
    return %arg0, %c0_i32, %c0_i32_0 : i32, i32, i32
  }
  func.func @transform_11(%arg0: i32) -> (i32, i32, i32) {
    %c0_i32 = arith.constant 0 : i32
    %c0_i32_0 = arith.constant 0 : i32
    %c0_i32_1 = arith.constant 0 : i32
    return %arg0, %c0_i32, %c0_i32_0 : i32, i32, i32
  }
}

module attributes {stable_mosaic.version = 11 : i64} {
  func.func @_modconv3x3_kernel(%arg0: i32, %arg1: memref<9x8x16xf32, #tpu.memory_space<vmem>>, %arg2: memref<1x1x16xf32, #tpu.memory_space<vmem>>, %arg3: memref<1x8x1xf32, #tpu.memory_space<vmem>>, %arg4: memref<8x1xf32, #tpu.memory_space<vmem>>, %arg5: memref<1x16x456xbf16, #tpu.memory_space<vmem>>, %arg6: memref<1x1x384xbf16, #tpu.memory_space<vmem>>, %arg7: memref<1xf32, #tpu.memory_space<smem>>, %arg8: memref<1x8x384xbf16, #tpu.memory_space<vmem>>) attributes {dimension_semantics = [#tpu.dimension_semantics<parallel>], iteration_bounds = array<i64: 2>, scalar_prefetch = 0 : i64, scratch_operands = 0 : i64, tpu.core_type = #tpu.core_type<tc>, window_params = [{pipeline_mode = #tpu.pipeline_mode<synchronous>, transform_indices = @transform_0, window_bounds = array<i64: 9, 8, 16>}, {transform_indices = @transform_1, window_bounds = array<i64: 1, 1, 16>}, {transform_indices = @transform_2, window_bounds = array<i64: 1, 8, 1>}, {pipeline_mode = #tpu.pipeline_mode<synchronous>, transform_indices = @transform_3, window_bounds = array<i64: 8, 1>}, {transform_indices = @transform_4, window_bounds = array<i64: 1, 16, 456>}, {transform_indices = @transform_5, window_bounds = array<i64: 1, 1, 384>}, {transform_indices = @transform_6, window_bounds = array<i64: 1>}, {transform_indices = @transform_7, window_bounds = array<i64: 1, 8, 384>}]} {
    %c0 = arith.constant 0 : index
    %c0_0 = arith.constant 0 : index
    %c0_1 = arith.constant 0 : index
    %0 = vector.load %arg3[%c0, %c0_0, %c0_1] : memref<1x8x1xf32, #tpu.memory_space<vmem>>, vector<1x8x1xf32>
    %1 = vector.shape_cast %0 : vector<1x8x1xf32> to vector<8x1xf32>
    %c0_2 = arith.constant 0 : index
    %c0_3 = arith.constant 0 : index
    %c0_4 = arith.constant 0 : index
    %2 = vector.load %arg2[%c0_2, %c0_3, %c0_4] : memref<1x1x16xf32, #tpu.memory_space<vmem>>, vector<1x1x16xf32>
    %3 = vector.shape_cast %2 : vector<1x1x16xf32> to vector<1x16xf32>
    %4 = vector.broadcast %1 : vector<8x1xf32> to vector<8x16xf32>
    %5 = vector.broadcast %3 : vector<1x16xf32> to vector<8x16xf32>
    %6 = arith.mulf %4, %5 : vector<8x16xf32>
    %c0_5 = arith.constant 0 : index
    %c0_6 = arith.constant 0 : index
    %c0_7 = arith.constant 0 : index
    %7 = vector.load %arg1[%c0_5, %c0_6, %c0_7] : memref<9x8x16xf32, #tpu.memory_space<vmem>>, vector<1x8x16xf32>
    %8 = vector.shape_cast %7 : vector<1x8x16xf32> to vector<8x16xf32>
    %9 = arith.mulf %8, %6 : vector<8x16xf32>
    %10 = arith.truncf %9 : vector<8x16xf32> to vector<8x16xbf16>
    %c0_8 = arith.constant 0 : index
    %c0_9 = arith.constant 0 : index
    %c0_10 = arith.constant 0 : index
    %11 = vector.load %arg5[%c0_8, %c0_9, %c0_10] : memref<1x16x456xbf16, #tpu.memory_space<vmem>>, vector<1x16x384xbf16>
    %12 = vector.shape_cast %11 : vector<1x16x384xbf16> to vector<16x384xbf16>
    %cst = arith.constant dense<0.000000e+00> : vector<8x384xf32>
    %13 = tpu.matmul %10, %12, %cst {dimension_numbers = #tpu.dot_dimension_numbers<[1], [0], [0], [1], [0, 0, 1, 1], [], []>} : vector<8x16xbf16>, vector<16x384xbf16>, vector<8x384xf32> -> vector<8x384xf32>
    %c1 = arith.constant 1 : index
    %c0_11 = arith.constant 0 : index
    %c0_12 = arith.constant 0 : index
    %14 = vector.load %arg1[%c1, %c0_11, %c0_12] : memref<9x8x16xf32, #tpu.memory_space<vmem>>, vector<1x8x16xf32>
    %15 = vector.shape_cast %14 : vector<1x8x16xf32> to vector<8x16xf32>
    %16 = arith.mulf %15, %6 : vector<8x16xf32>
    %17 = arith.truncf %16 : vector<8x16xf32> to vector<8x16xbf16>
    %c0_13 = arith.constant 0 : index
    %c0_14 = arith.constant 0 : index
    %c1_15 = arith.constant 1 : index
    %18 = vector.load %arg5[%c0_13, %c0_14, %c1_15] : memref<1x16x456xbf16, #tpu.memory_space<vmem>>, vector<1x16x384xbf16>
    %19 = vector.shape_cast %18 : vector<1x16x384xbf16> to vector<16x384xbf16>
    %cst_16 = arith.constant dense<0.000000e+00> : vector<8x384xf32>
    %20 = tpu.matmul %17, %19, %cst_16 {dimension_numbers = #tpu.dot_dimension_numbers<[1], [0], [0], [1], [0, 0, 1, 1], [], []>} : vector<8x16xbf16>, vector<16x384xbf16>, vector<8x384xf32> -> vector<8x384xf32>
    %21 = arith.addf %13, %20 : vector<8x384xf32>
    %c2 = arith.constant 2 : index
    %c0_17 = arith.constant 0 : index
    %c0_18 = arith.constant 0 : index
    %22 = vector.load %arg1[%c2, %c0_17, %c0_18] : memref<9x8x16xf32, #tpu.memory_space<vmem>>, vector<1x8x16xf32>
    %23 = vector.shape_cast %22 : vector<1x8x16xf32> to vector<8x16xf32>
    %24 = arith.mulf %23, %6 : vector<8x16xf32>
    %25 = arith.truncf %24 : vector<8x16xf32> to vector<8x16xbf16>
    %c0_19 = arith.constant 0 : index
    %c0_20 = arith.constant 0 : index
    %c2_21 = arith.constant 2 : index
    %26 = vector.load %arg5[%c0_19, %c0_20, %c2_21] : memref<1x16x456xbf16, #tpu.memory_space<vmem>>, vector<1x16x384xbf16>
    %27 = vector.shape_cast %26 : vector<1x16x384xbf16> to vector<16x384xbf16>
    %cst_22 = arith.constant dense<0.000000e+00> : vector<8x384xf32>
    %28 = tpu.matmul %25, %27, %cst_22 {dimension_numbers = #tpu.dot_dimension_numbers<[1], [0], [0], [1], [0, 0, 1, 1], [], []>} : vector<8x16xbf16>, vector<16x384xbf16>, vector<8x384xf32> -> vector<8x384xf32>
    %29 = arith.addf %21, %28 : vector<8x384xf32>
    %c3 = arith.constant 3 : index
    %c0_23 = arith.constant 0 : index
    %c0_24 = arith.constant 0 : index
    %30 = vector.load %arg1[%c3, %c0_23, %c0_24] : memref<9x8x16xf32, #tpu.memory_space<vmem>>, vector<1x8x16xf32>
    %31 = vector.shape_cast %30 : vector<1x8x16xf32> to vector<8x16xf32>
    %32 = arith.mulf %31, %6 : vector<8x16xf32>
    %33 = arith.truncf %32 : vector<8x16xf32> to vector<8x16xbf16>
    %c0_25 = arith.constant 0 : index
    %c0_26 = arith.constant 0 : index
    %c24 = arith.constant 24 : index
    %34 = vector.load %arg5[%c0_25, %c0_26, %c24] : memref<1x16x456xbf16, #tpu.memory_space<vmem>>, vector<1x16x384xbf16>
    %35 = vector.shape_cast %34 : vector<1x16x384xbf16> to vector<16x384xbf16>
    %cst_27 = arith.constant dense<0.000000e+00> : vector<8x384xf32>
    %36 = tpu.matmul %33, %35, %cst_27 {dimension_numbers = #tpu.dot_dimension_numbers<[1], [0], [0], [1], [0, 0, 1, 1], [], []>} : vector<8x16xbf16>, vector<16x384xbf16>, vector<8x384xf32> -> vector<8x384xf32>
    %37 = arith.addf %29, %36 : vector<8x384xf32>
    %c4 = arith.constant 4 : index
    %c0_28 = arith.constant 0 : index
    %c0_29 = arith.constant 0 : index
    %38 = vector.load %arg1[%c4, %c0_28, %c0_29] : memref<9x8x16xf32, #tpu.memory_space<vmem>>, vector<1x8x16xf32>
    %39 = vector.shape_cast %38 : vector<1x8x16xf32> to vector<8x16xf32>
    %40 = arith.mulf %39, %6 : vector<8x16xf32>
    %41 = arith.truncf %40 : vector<8x16xf32> to vector<8x16xbf16>
    %c0_30 = arith.constant 0 : index
    %c0_31 = arith.constant 0 : index
    %c25 = arith.constant 25 : index
    %42 = vector.load %arg5[%c0_30, %c0_31, %c25] : memref<1x16x456xbf16, #tpu.memory_space<vmem>>, vector<1x16x384xbf16>
    %43 = vector.shape_cast %42 : vector<1x16x384xbf16> to vector<16x384xbf16>
    %cst_32 = arith.constant dense<0.000000e+00> : vector<8x384xf32>
    %44 = tpu.matmul %41, %43, %cst_32 {dimension_numbers = #tpu.dot_dimension_numbers<[1], [0], [0], [1], [0, 0, 1, 1], [], []>} : vector<8x16xbf16>, vector<16x384xbf16>, vector<8x384xf32> -> vector<8x384xf32>
    %45 = arith.addf %37, %44 : vector<8x384xf32>
    %c5 = arith.constant 5 : index
    %c0_33 = arith.constant 0 : index
    %c0_34 = arith.constant 0 : index
    %46 = vector.load %arg1[%c5, %c0_33, %c0_34] : memref<9x8x16xf32, #tpu.memory_space<vmem>>, vector<1x8x16xf32>
    %47 = vector.shape_cast %46 : vector<1x8x16xf32> to vector<8x16xf32>
    %48 = arith.mulf %47, %6 : vector<8x16xf32>
    %49 = arith.truncf %48 : vector<8x16xf32> to vector<8x16xbf16>
    %c0_35 = arith.constant 0 : index
    %c0_36 = arith.constant 0 : index
    %c26 = arith.constant 26 : index
    %50 = vector.load %arg5[%c0_35, %c0_36, %c26] : memref<1x16x456xbf16, #tpu.memory_space<vmem>>, vector<1x16x384xbf16>
    %51 = vector.shape_cast %50 : vector<1x16x384xbf16> to vector<16x384xbf16>
    %cst_37 = arith.constant dense<0.000000e+00> : vector<8x384xf32>
    %52 = tpu.matmul %49, %51, %cst_37 {dimension_numbers = #tpu.dot_dimension_numbers<[1], [0], [0], [1], [0, 0, 1, 1], [], []>} : vector<8x16xbf16>, vector<16x384xbf16>, vector<8x384xf32> -> vector<8x384xf32>
    %53 = arith.addf %45, %52 : vector<8x384xf32>
    %c6 = arith.constant 6 : index
    %c0_38 = arith.constant 0 : index
    %c0_39 = arith.constant 0 : index
    %54 = vector.load %arg1[%c6, %c0_38, %c0_39] : memref<9x8x16xf32, #tpu.memory_space<vmem>>, vector<1x8x16xf32>
    %55 = vector.shape_cast %54 : vector<1x8x16xf32> to vector<8x16xf32>
    %56 = arith.mulf %55, %6 : vector<8x16xf32>
    %57 = arith.truncf %56 : vector<8x16xf32> to vector<8x16xbf16>
    %c0_40 = arith.constant 0 : index
    %c0_41 = arith.constant 0 : index
    %c48 = arith.constant 48 : index
    %58 = vector.load %arg5[%c0_40, %c0_41, %c48] : memref<1x16x456xbf16, #tpu.memory_space<vmem>>, vector<1x16x384xbf16>
    %59 = vector.shape_cast %58 : vector<1x16x384xbf16> to vector<16x384xbf16>
    %cst_42 = arith.constant dense<0.000000e+00> : vector<8x384xf32>
    %60 = tpu.matmul %57, %59, %cst_42 {dimension_numbers = #tpu.dot_dimension_numbers<[1], [0], [0], [1], [0, 0, 1, 1], [], []>} : vector<8x16xbf16>, vector<16x384xbf16>, vector<8x384xf32> -> vector<8x384xf32>
    %61 = arith.addf %53, %60 : vector<8x384xf32>
    %c7 = arith.constant 7 : index
    %c0_43 = arith.constant 0 : index
    %c0_44 = arith.constant 0 : index
    %62 = vector.load %arg1[%c7, %c0_43, %c0_44] : memref<9x8x16xf32, #tpu.memory_space<vmem>>, vector<1x8x16xf32>
    %63 = vector.shape_cast %62 : vector<1x8x16xf32> to vector<8x16xf32>
    %64 = arith.mulf %63, %6 : vector<8x16xf32>
    %65 = arith.truncf %64 : vector<8x16xf32> to vector<8x16xbf16>
    %c0_45 = arith.constant 0 : index
    %c0_46 = arith.constant 0 : index
    %c49 = arith.constant 49 : index
    %66 = vector.load %arg5[%c0_45, %c0_46, %c49] : memref<1x16x456xbf16, #tpu.memory_space<vmem>>, vector<1x16x384xbf16>
    %67 = vector.shape_cast %66 : vector<1x16x384xbf16> to vector<16x384xbf16>
    %cst_47 = arith.constant dense<0.000000e+00> : vector<8x384xf32>
    %68 = tpu.matmul %65, %67, %cst_47 {dimension_numbers = #tpu.dot_dimension_numbers<[1], [0], [0], [1], [0, 0, 1, 1], [], []>} : vector<8x16xbf16>, vector<16x384xbf16>, vector<8x384xf32> -> vector<8x384xf32>
    %69 = arith.addf %61, %68 : vector<8x384xf32>
    %c8 = arith.constant 8 : index
    %c0_48 = arith.constant 0 : index
    %c0_49 = arith.constant 0 : index
    %70 = vector.load %arg1[%c8, %c0_48, %c0_49] : memref<9x8x16xf32, #tpu.memory_space<vmem>>, vector<1x8x16xf32>
    %71 = vector.shape_cast %70 : vector<1x8x16xf32> to vector<8x16xf32>
    %72 = arith.mulf %71, %6 : vector<8x16xf32>
    %73 = arith.truncf %72 : vector<8x16xf32> to vector<8x16xbf16>
    %c0_50 = arith.constant 0 : index
    %c0_51 = arith.constant 0 : index
    %c50 = arith.constant 50 : index
    %74 = vector.load %arg5[%c0_50, %c0_51, %c50] : memref<1x16x456xbf16, #tpu.memory_space<vmem>>, vector<1x16x384xbf16>
    %75 = vector.shape_cast %74 : vector<1x16x384xbf16> to vector<16x384xbf16>
    %cst_52 = arith.constant dense<0.000000e+00> : vector<8x384xf32>
    %76 = tpu.matmul %73, %75, %cst_52 {dimension_numbers = #tpu.dot_dimension_numbers<[1], [0], [0], [1], [0, 0, 1, 1], [], []>} : vector<8x16xbf16>, vector<16x384xbf16>, vector<8x384xf32> -> vector<8x384xf32>
    %77 = arith.addf %69, %76 : vector<8x384xf32>
    %c0_53 = arith.constant 0 : index
    %78 = memref.load %arg7[%c0_53] : memref<1xf32, #tpu.memory_space<smem>>
    %c0_54 = arith.constant 0 : index
    %c0_55 = arith.constant 0 : index
    %c0_56 = arith.constant 0 : index
    %79 = vector.load %arg6[%c0_54, %c0_55, %c0_56] : memref<1x1x384xbf16, #tpu.memory_space<vmem>>, vector<1x1x384xbf16>
    %80 = vector.shape_cast %79 : vector<1x1x384xbf16> to vector<1x384xbf16>
    %81 = arith.extf %80 : vector<1x384xbf16> to vector<1x384xf32>
    %82 = vector.broadcast %78 : f32 to vector<1x384xf32>
    %83 = arith.mulf %82, %81 : vector<1x384xf32>
    %84 = vector.broadcast %83 : vector<1x384xf32> to vector<8x384xf32>
    %85 = arith.addf %77, %84 : vector<8x384xf32>
    %c0_57 = arith.constant 0 : index
    %c0_58 = arith.constant 0 : index
    %86 = vector.load %arg4[%c0_57, %c0_58] : memref<8x1xf32, #tpu.memory_space<vmem>>, vector<8x1xf32>
    %87 = vector.broadcast %86 : vector<8x1xf32> to vector<8x384xf32>
    %88 = arith.addf %85, %87 : vector<8x384xf32>
    %cst_59 = arith.constant 0.000000e+00 : f32
    %89 = vector.broadcast %cst_59 : f32 to vector<8x384xf32>
    %90 = arith.cmpf oge, %88, %89 : vector<8x384xf32>
    %cst_60 = arith.constant 2.000000e-01 : f32
    %91 = vector.broadcast %cst_60 : f32 to vector<8x384xf32>
    %92 = arith.mulf %91, %88 : vector<8x384xf32>
    %93 = arith.select %90, %88, %92 : vector<8x384xi1>, vector<8x384xf32>
    %94 = arith.truncf %93 : vector<8x384xf32> to vector<8x384xbf16>
    %c0_61 = arith.constant 0 : index
    %c0_62 = arith.constant 0 : index
    %c0_63 = arith.constant 0 : index
    %95 = vector.load %arg8[%c0_61, %c0_62, %c0_63] : memref<1x8x384xbf16, #tpu.memory_space<vmem>>, vector<1x8x384xbf16>
    %96 = vector.shape_cast %95 : vector<1x8x384xbf16> to vector<8x384xbf16>
    %97 = vector.shape_cast %94 : vector<8x384xbf16> to vector<1x8x384xbf16>
    tpu.vector_store %arg8[%c0_61, %c0_62, %c0_63], %97 {strides = array<i32>} : memref<1x8x384xbf16, #tpu.memory_space<vmem>>, vector<1x8x384xbf16>,
    return
  }
  func.func @transform_0(%arg0: i32) -> (i32, i32, i32) {
    %c0_i32 = arith.constant 0 : i32
    %c0_i32_0 = arith.constant 0 : i32
    %c0_i32_1 = arith.constant 0 : i32
    %c0_i32_2 = arith.constant 0 : i32
    return %c0_i32, %c0_i32_0, %c0_i32_1 : i32, i32, i32
  }
  func.func @transform_1(%arg0: i32) -> (i32, i32, i32) {
    %c0_i32 = arith.constant 0 : i32
    %c0_i32_0 = arith.constant 0 : i32
    %c0_i32_1 = arith.constant 0 : i32
    return %arg0, %c0_i32, %c0_i32_0 : i32, i32, i32
  }
  func.func @transform_2(%arg0: i32) -> (i32, i32, i32) {
    %c0_i32 = arith.constant 0 : i32
    %c0_i32_0 = arith.constant 0 : i32
    %c0_i32_1 = arith.constant 0 : i32
    return %arg0, %c0_i32, %c0_i32_0 : i32, i32, i32
  }
  func.func @transform_3(%arg0: i32) -> (i32, i32) {
    %c0_i32 = arith.constant 0 : i32
    %c0_i32_0 = arith.constant 0 : i32
    %c0_i32_1 = arith.constant 0 : i32
    return %c0_i32, %c0_i32_0 : i32, i32
  }
  func.func @transform_4(%arg0: i32) -> (i32, i32, i32) {
    %c0_i32 = arith.constant 0 : i32
    %c0_i32_0 = arith.constant 0 : i32
    %c0_i32_1 = arith.constant 0 : i32
    return %arg0, %c0_i32, %c0_i32_0 : i32, i32, i32
  }
  func.func @transform_5(%arg0: i32) -> (i32, i32, i32) {
    %c0_i32 = arith.constant 0 : i32
    %c0_i32_0 = arith.constant 0 : i32
    %c0_i32_1 = arith.constant 0 : i32
    return %arg0, %c0_i32, %c0_i32_0 : i32, i32, i32
  }
  func.func @transform_6(%arg0: i32) -> i32 {
    %c0_i32 = arith.constant 0 : i32
    %c0_i32_0 = arith.constant 0 : i32
    return %c0_i32 : i32
  }
  func.func @transform_7(%arg0: i32) -> (i32, i32, i32) {
    %c0_i32 = arith.constant 0 : i32
    %c0_i32_0 = arith.constant 0 : i32
    %c0_i32_1 = arith.constant 0 : i32
    return %arg0, %c0_i32, %c0_i32_0 : i32, i32, i32
  }
}

module attributes {stable_mosaic.version = 11 : i64} {
  func.func @_modconv3x3_rgb_kernel(%arg0: i32, %arg1: memref<9x8x8xf32, #tpu.memory_space<vmem>>, %arg2: memref<1x1x8xf32, #tpu.memory_space<vmem>>, %arg3: memref<1x8x1xf32, #tpu.memory_space<vmem>>, %arg4: memref<8x1xf32, #tpu.memory_space<vmem>>, %arg5: memref<3x8xf32, #tpu.memory_space<vmem>>, %arg6: memref<1x1x8xf32, #tpu.memory_space<vmem>>, %arg7: memref<3x1xf32, #tpu.memory_space<vmem>>, %arg8: memref<1x8x456xbf16, #tpu.memory_space<vmem>>, %arg9: memref<1x1x384xbf16, #tpu.memory_space<vmem>>, %arg10: memref<1xf32, #tpu.memory_space<smem>>, %arg11: memref<1x8x384xbf16, #tpu.memory_space<vmem>>, %arg12: memref<1x3x384xf32, #tpu.memory_space<vmem>>) attributes {dimension_semantics = [#tpu.dimension_semantics<parallel>], iteration_bounds = array<i64: 2>, scalar_prefetch = 0 : i64, scratch_operands = 0 : i64, tpu.core_type = #tpu.core_type<tc>, window_params = [{pipeline_mode = #tpu.pipeline_mode<synchronous>, transform_indices = @transform_0, window_bounds = array<i64: 9, 8, 8>}, {transform_indices = @transform_1, window_bounds = array<i64: 1, 1, 8>}, {transform_indices = @transform_2, window_bounds = array<i64: 1, 8, 1>}, {pipeline_mode = #tpu.pipeline_mode<synchronous>, transform_indices = @transform_3, window_bounds = array<i64: 8, 1>}, {pipeline_mode = #tpu.pipeline_mode<synchronous>, transform_indices = @transform_4, window_bounds = array<i64: 3, 8>}, {transform_indices = @transform_5, window_bounds = array<i64: 1, 1, 8>}, {pipeline_mode = #tpu.pipeline_mode<synchronous>, transform_indices = @transform_6, window_bounds = array<i64: 3, 1>}, {transform_indices = @transform_7, window_bounds = array<i64: 1, 8, 456>}, {transform_indices = @transform_8, window_bounds = array<i64: 1, 1, 384>}, {transform_indices = @transform_9, window_bounds = array<i64: 1>}, {transform_indices = @transform_10, window_bounds = array<i64: 1, 8, 384>}, {transform_indices = @transform_11, window_bounds = array<i64: 1, 3, 384>}]} {
    %c0 = arith.constant 0 : index
    %c0_0 = arith.constant 0 : index
    %c0_1 = arith.constant 0 : index
    %0 = vector.load %arg3[%c0, %c0_0, %c0_1] : memref<1x8x1xf32, #tpu.memory_space<vmem>>, vector<1x8x1xf32>
    %1 = vector.shape_cast %0 : vector<1x8x1xf32> to vector<8x1xf32>
    %c0_2 = arith.constant 0 : index
    %c0_3 = arith.constant 0 : index
    %c0_4 = arith.constant 0 : index
    %2 = vector.load %arg2[%c0_2, %c0_3, %c0_4] : memref<1x1x8xf32, #tpu.memory_space<vmem>>, vector<1x1x8xf32>
    %3 = vector.shape_cast %2 : vector<1x1x8xf32> to vector<1x8xf32>
    %4 = vector.broadcast %1 : vector<8x1xf32> to vector<8x8xf32>
    %5 = vector.broadcast %3 : vector<1x8xf32> to vector<8x8xf32>
    %6 = arith.mulf %4, %5 : vector<8x8xf32>
    %c0_5 = arith.constant 0 : index
    %c0_6 = arith.constant 0 : index
    %c0_7 = arith.constant 0 : index
    %7 = vector.load %arg1[%c0_5, %c0_6, %c0_7] : memref<9x8x8xf32, #tpu.memory_space<vmem>>, vector<1x8x8xf32>
    %8 = vector.shape_cast %7 : vector<1x8x8xf32> to vector<8x8xf32>
    %9 = arith.mulf %8, %6 : vector<8x8xf32>
    %10 = arith.truncf %9 : vector<8x8xf32> to vector<8x8xbf16>
    %c0_8 = arith.constant 0 : index
    %c0_9 = arith.constant 0 : index
    %c0_10 = arith.constant 0 : index
    %11 = vector.load %arg8[%c0_8, %c0_9, %c0_10] : memref<1x8x456xbf16, #tpu.memory_space<vmem>>, vector<1x8x384xbf16>
    %12 = vector.shape_cast %11 : vector<1x8x384xbf16> to vector<8x384xbf16>
    %cst = arith.constant dense<0.000000e+00> : vector<8x384xf32>
    %13 = tpu.matmul %10, %12, %cst {dimension_numbers = #tpu.dot_dimension_numbers<[1], [0], [0], [1], [0, 0, 1, 1], [], []>} : vector<8x8xbf16>, vector<8x384xbf16>, vector<8x384xf32> -> vector<8x384xf32>
    %c1 = arith.constant 1 : index
    %c0_11 = arith.constant 0 : index
    %c0_12 = arith.constant 0 : index
    %14 = vector.load %arg1[%c1, %c0_11, %c0_12] : memref<9x8x8xf32, #tpu.memory_space<vmem>>, vector<1x8x8xf32>
    %15 = vector.shape_cast %14 : vector<1x8x8xf32> to vector<8x8xf32>
    %16 = arith.mulf %15, %6 : vector<8x8xf32>
    %17 = arith.truncf %16 : vector<8x8xf32> to vector<8x8xbf16>
    %c0_13 = arith.constant 0 : index
    %c0_14 = arith.constant 0 : index
    %c1_15 = arith.constant 1 : index
    %18 = vector.load %arg8[%c0_13, %c0_14, %c1_15] : memref<1x8x456xbf16, #tpu.memory_space<vmem>>, vector<1x8x384xbf16>
    %19 = vector.shape_cast %18 : vector<1x8x384xbf16> to vector<8x384xbf16>
    %cst_16 = arith.constant dense<0.000000e+00> : vector<8x384xf32>
    %20 = tpu.matmul %17, %19, %cst_16 {dimension_numbers = #tpu.dot_dimension_numbers<[1], [0], [0], [1], [0, 0, 1, 1], [], []>} : vector<8x8xbf16>, vector<8x384xbf16>, vector<8x384xf32> -> vector<8x384xf32>
    %21 = arith.addf %13, %20 : vector<8x384xf32>
    %c2 = arith.constant 2 : index
    %c0_17 = arith.constant 0 : index
    %c0_18 = arith.constant 0 : index
    %22 = vector.load %arg1[%c2, %c0_17, %c0_18] : memref<9x8x8xf32, #tpu.memory_space<vmem>>, vector<1x8x8xf32>
    %23 = vector.shape_cast %22 : vector<1x8x8xf32> to vector<8x8xf32>
    %24 = arith.mulf %23, %6 : vector<8x8xf32>
    %25 = arith.truncf %24 : vector<8x8xf32> to vector<8x8xbf16>
    %c0_19 = arith.constant 0 : index
    %c0_20 = arith.constant 0 : index
    %c2_21 = arith.constant 2 : index
    %26 = vector.load %arg8[%c0_19, %c0_20, %c2_21] : memref<1x8x456xbf16, #tpu.memory_space<vmem>>, vector<1x8x384xbf16>
    %27 = vector.shape_cast %26 : vector<1x8x384xbf16> to vector<8x384xbf16>
    %cst_22 = arith.constant dense<0.000000e+00> : vector<8x384xf32>
    %28 = tpu.matmul %25, %27, %cst_22 {dimension_numbers = #tpu.dot_dimension_numbers<[1], [0], [0], [1], [0, 0, 1, 1], [], []>} : vector<8x8xbf16>, vector<8x384xbf16>, vector<8x384xf32> -> vector<8x384xf32>
    %29 = arith.addf %21, %28 : vector<8x384xf32>
    %c3 = arith.constant 3 : index
    %c0_23 = arith.constant 0 : index
    %c0_24 = arith.constant 0 : index
    %30 = vector.load %arg1[%c3, %c0_23, %c0_24] : memref<9x8x8xf32, #tpu.memory_space<vmem>>, vector<1x8x8xf32>
    %31 = vector.shape_cast %30 : vector<1x8x8xf32> to vector<8x8xf32>
    %32 = arith.mulf %31, %6 : vector<8x8xf32>
    %33 = arith.truncf %32 : vector<8x8xf32> to vector<8x8xbf16>
    %c0_25 = arith.constant 0 : index
    %c0_26 = arith.constant 0 : index
    %c24 = arith.constant 24 : index
    %34 = vector.load %arg8[%c0_25, %c0_26, %c24] : memref<1x8x456xbf16, #tpu.memory_space<vmem>>, vector<1x8x384xbf16>
    %35 = vector.shape_cast %34 : vector<1x8x384xbf16> to vector<8x384xbf16>
    %cst_27 = arith.constant dense<0.000000e+00> : vector<8x384xf32>
    %36 = tpu.matmul %33, %35, %cst_27 {dimension_numbers = #tpu.dot_dimension_numbers<[1], [0], [0], [1], [0, 0, 1, 1], [], []>} : vector<8x8xbf16>, vector<8x384xbf16>, vector<8x384xf32> -> vector<8x384xf32>
    %37 = arith.addf %29, %36 : vector<8x384xf32>
    %c4 = arith.constant 4 : index
    %c0_28 = arith.constant 0 : index
    %c0_29 = arith.constant 0 : index
    %38 = vector.load %arg1[%c4, %c0_28, %c0_29] : memref<9x8x8xf32, #tpu.memory_space<vmem>>, vector<1x8x8xf32>
    %39 = vector.shape_cast %38 : vector<1x8x8xf32> to vector<8x8xf32>
    %40 = arith.mulf %39, %6 : vector<8x8xf32>
    %41 = arith.truncf %40 : vector<8x8xf32> to vector<8x8xbf16>
    %c0_30 = arith.constant 0 : index
    %c0_31 = arith.constant 0 : index
    %c25 = arith.constant 25 : index
    %42 = vector.load %arg8[%c0_30, %c0_31, %c25] : memref<1x8x456xbf16, #tpu.memory_space<vmem>>, vector<1x8x384xbf16>
    %43 = vector.shape_cast %42 : vector<1x8x384xbf16> to vector<8x384xbf16>
    %cst_32 = arith.constant dense<0.000000e+00> : vector<8x384xf32>
    %44 = tpu.matmul %41, %43, %cst_32 {dimension_numbers = #tpu.dot_dimension_numbers<[1], [0], [0], [1], [0, 0, 1, 1], [], []>} : vector<8x8xbf16>, vector<8x384xbf16>, vector<8x384xf32> -> vector<8x384xf32>
    %45 = arith.addf %37, %44 : vector<8x384xf32>
    %c5 = arith.constant 5 : index
    %c0_33 = arith.constant 0 : index
    %c0_34 = arith.constant 0 : index
    %46 = vector.load %arg1[%c5, %c0_33, %c0_34] : memref<9x8x8xf32, #tpu.memory_space<vmem>>, vector<1x8x8xf32>
    %47 = vector.shape_cast %46 : vector<1x8x8xf32> to vector<8x8xf32>
    %48 = arith.mulf %47, %6 : vector<8x8xf32>
    %49 = arith.truncf %48 : vector<8x8xf32> to vector<8x8xbf16>
    %c0_35 = arith.constant 0 : index
    %c0_36 = arith.constant 0 : index
    %c26 = arith.constant 26 : index
    %50 = vector.load %arg8[%c0_35, %c0_36, %c26] : memref<1x8x456xbf16, #tpu.memory_space<vmem>>, vector<1x8x384xbf16>
    %51 = vector.shape_cast %50 : vector<1x8x384xbf16> to vector<8x384xbf16>
    %cst_37 = arith.constant dense<0.000000e+00> : vector<8x384xf32>
    %52 = tpu.matmul %49, %51, %cst_37 {dimension_numbers = #tpu.dot_dimension_numbers<[1], [0], [0], [1], [0, 0, 1, 1], [], []>} : vector<8x8xbf16>, vector<8x384xbf16>, vector<8x384xf32> -> vector<8x384xf32>
    %53 = arith.addf %45, %52 : vector<8x384xf32>
    %c6 = arith.constant 6 : index
    %c0_38 = arith.constant 0 : index
    %c0_39 = arith.constant 0 : index
    %54 = vector.load %arg1[%c6, %c0_38, %c0_39] : memref<9x8x8xf32, #tpu.memory_space<vmem>>, vector<1x8x8xf32>
    %55 = vector.shape_cast %54 : vector<1x8x8xf32> to vector<8x8xf32>
    %56 = arith.mulf %55, %6 : vector<8x8xf32>
    %57 = arith.truncf %56 : vector<8x8xf32> to vector<8x8xbf16>
    %c0_40 = arith.constant 0 : index
    %c0_41 = arith.constant 0 : index
    %c48 = arith.constant 48 : index
    %58 = vector.load %arg8[%c0_40, %c0_41, %c48] : memref<1x8x456xbf16, #tpu.memory_space<vmem>>, vector<1x8x384xbf16>
    %59 = vector.shape_cast %58 : vector<1x8x384xbf16> to vector<8x384xbf16>
    %cst_42 = arith.constant dense<0.000000e+00> : vector<8x384xf32>
    %60 = tpu.matmul %57, %59, %cst_42 {dimension_numbers = #tpu.dot_dimension_numbers<[1], [0], [0], [1], [0, 0, 1, 1], [], []>} : vector<8x8xbf16>, vector<8x384xbf16>, vector<8x384xf32> -> vector<8x384xf32>
    %61 = arith.addf %53, %60 : vector<8x384xf32>
    %c7 = arith.constant 7 : index
    %c0_43 = arith.constant 0 : index
    %c0_44 = arith.constant 0 : index
    %62 = vector.load %arg1[%c7, %c0_43, %c0_44] : memref<9x8x8xf32, #tpu.memory_space<vmem>>, vector<1x8x8xf32>
    %63 = vector.shape_cast %62 : vector<1x8x8xf32> to vector<8x8xf32>
    %64 = arith.mulf %63, %6 : vector<8x8xf32>
    %65 = arith.truncf %64 : vector<8x8xf32> to vector<8x8xbf16>
    %c0_45 = arith.constant 0 : index
    %c0_46 = arith.constant 0 : index
    %c49 = arith.constant 49 : index
    %66 = vector.load %arg8[%c0_45, %c0_46, %c49] : memref<1x8x456xbf16, #tpu.memory_space<vmem>>, vector<1x8x384xbf16>
    %67 = vector.shape_cast %66 : vector<1x8x384xbf16> to vector<8x384xbf16>
    %cst_47 = arith.constant dense<0.000000e+00> : vector<8x384xf32>
    %68 = tpu.matmul %65, %67, %cst_47 {dimension_numbers = #tpu.dot_dimension_numbers<[1], [0], [0], [1], [0, 0, 1, 1], [], []>} : vector<8x8xbf16>, vector<8x384xbf16>, vector<8x384xf32> -> vector<8x384xf32>
    %69 = arith.addf %61, %68 : vector<8x384xf32>
    %c8 = arith.constant 8 : index
    %c0_48 = arith.constant 0 : index
    %c0_49 = arith.constant 0 : index
    %70 = vector.load %arg1[%c8, %c0_48, %c0_49] : memref<9x8x8xf32, #tpu.memory_space<vmem>>, vector<1x8x8xf32>
    %71 = vector.shape_cast %70 : vector<1x8x8xf32> to vector<8x8xf32>
    %72 = arith.mulf %71, %6 : vector<8x8xf32>
    %73 = arith.truncf %72 : vector<8x8xf32> to vector<8x8xbf16>
    %c0_50 = arith.constant 0 : index
    %c0_51 = arith.constant 0 : index
    %c50 = arith.constant 50 : index
    %74 = vector.load %arg8[%c0_50, %c0_51, %c50] : memref<1x8x456xbf16, #tpu.memory_space<vmem>>, vector<1x8x384xbf16>
    %75 = vector.shape_cast %74 : vector<1x8x384xbf16> to vector<8x384xbf16>
    %cst_52 = arith.constant dense<0.000000e+00> : vector<8x384xf32>
    %76 = tpu.matmul %73, %75, %cst_52 {dimension_numbers = #tpu.dot_dimension_numbers<[1], [0], [0], [1], [0, 0, 1, 1], [], []>} : vector<8x8xbf16>, vector<8x384xbf16>, vector<8x384xf32> -> vector<8x384xf32>
    %77 = arith.addf %69, %76 : vector<8x384xf32>
    %c0_53 = arith.constant 0 : index
    %78 = memref.load %arg10[%c0_53] : memref<1xf32, #tpu.memory_space<smem>>
    %c0_54 = arith.constant 0 : index
    %c0_55 = arith.constant 0 : index
    %c0_56 = arith.constant 0 : index
    %79 = vector.load %arg9[%c0_54, %c0_55, %c0_56] : memref<1x1x384xbf16, #tpu.memory_space<vmem>>, vector<1x1x384xbf16>
    %80 = vector.shape_cast %79 : vector<1x1x384xbf16> to vector<1x384xbf16>
    %81 = arith.extf %80 : vector<1x384xbf16> to vector<1x384xf32>
    %82 = vector.broadcast %78 : f32 to vector<1x384xf32>
    %83 = arith.mulf %82, %81 : vector<1x384xf32>
    %84 = vector.broadcast %83 : vector<1x384xf32> to vector<8x384xf32>
    %85 = arith.addf %77, %84 : vector<8x384xf32>
    %c0_57 = arith.constant 0 : index
    %c0_58 = arith.constant 0 : index
    %86 = vector.load %arg4[%c0_57, %c0_58] : memref<8x1xf32, #tpu.memory_space<vmem>>, vector<8x1xf32>
    %87 = vector.broadcast %86 : vector<8x1xf32> to vector<8x384xf32>
    %88 = arith.addf %85, %87 : vector<8x384xf32>
    %cst_59 = arith.constant 0.000000e+00 : f32
    %89 = vector.broadcast %cst_59 : f32 to vector<8x384xf32>
    %90 = arith.cmpf oge, %88, %89 : vector<8x384xf32>
    %cst_60 = arith.constant 2.000000e-01 : f32
    %91 = vector.broadcast %cst_60 : f32 to vector<8x384xf32>
    %92 = arith.mulf %91, %88 : vector<8x384xf32>
    %93 = arith.select %90, %88, %92 : vector<8x384xi1>, vector<8x384xf32>
    %94 = arith.truncf %93 : vector<8x384xf32> to vector<8x384xbf16>
    %c0_61 = arith.constant 0 : index
    %c0_62 = arith.constant 0 : index
    %c0_63 = arith.constant 0 : index
    %95 = vector.load %arg11[%c0_61, %c0_62, %c0_63] : memref<1x8x384xbf16, #tpu.memory_space<vmem>>, vector<1x8x384xbf16>
    %96 = vector.shape_cast %95 : vector<1x8x384xbf16> to vector<8x384xbf16>
    %97 = vector.shape_cast %94 : vector<8x384xbf16> to vector<1x8x384xbf16>
    tpu.vector_store %arg11[%c0_61, %c0_62, %c0_63], %97 {strides = array<i32>} : memref<1x8x384xbf16, #tpu.memory_space<vmem>>, vector<1x8x384xbf16>,
    %c0_64 = arith.constant 0 : index
    %c0_65 = arith.constant 0 : index
    %98 = vector.load %arg5[%c0_64, %c0_65] : memref<3x8xf32, #tpu.memory_space<vmem>>, vector<3x8xf32>
    %c0_66 = arith.constant 0 : index
    %c0_67 = arith.constant 0 : index
    %c0_68 = arith.constant 0 : index
    %99 = vector.load %arg6[%c0_66, %c0_67, %c0_68] : memref<1x1x8xf32, #tpu.memory_space<vmem>>, vector<1x1x8xf32>
    %100 = vector.shape_cast %99 : vector<1x1x8xf32> to vector<1x8xf32>
    %101 = vector.broadcast %100 : vector<1x8xf32> to vector<3x8xf32>
    %102 = arith.mulf %98, %101 : vector<3x8xf32>
    %103 = arith.truncf %102 : vector<3x8xf32> to vector<3x8xbf16>
    %104 = arith.truncf %93 : vector<8x384xf32> to vector<8x384xbf16>
    %cst_69 = arith.constant dense<0.000000e+00> : vector<3x384xf32>
    %105 = tpu.matmul %103, %104, %cst_69 {dimension_numbers = #tpu.dot_dimension_numbers<[1], [0], [0], [1], [0, 0, 1, 1], [], []>} : vector<3x8xbf16>, vector<8x384xbf16>, vector<3x384xf32> -> vector<3x384xf32>
    %c0_70 = arith.constant 0 : index
    %c0_71 = arith.constant 0 : index
    %106 = vector.load %arg7[%c0_70, %c0_71] : memref<3x1xf32, #tpu.memory_space<vmem>>, vector<3x1xf32>
    %107 = vector.broadcast %106 : vector<3x1xf32> to vector<3x384xf32>
    %108 = arith.addf %105, %107 : vector<3x384xf32>
    %cst_72 = arith.constant 0.000000e+00 : f32
    %109 = vector.broadcast %cst_72 : f32 to vector<3x384xf32>
    %110 = arith.cmpf oge, %108, %109 : vector<3x384xf32>
    %cst_73 = arith.constant 2.000000e-01 : f32
    %111 = vector.broadcast %cst_73 : f32 to vector<3x384xf32>
    %112 = arith.mulf %111, %108 : vector<3x384xf32>
    %113 = arith.select %110, %108, %112 : vector<3x384xi1>, vector<3x384xf32>
    %c0_74 = arith.constant 0 : index
    %c0_75 = arith.constant 0 : index
    %c0_76 = arith.constant 0 : index
    %114 = vector.load %arg12[%c0_74, %c0_75, %c0_76] : memref<1x3x384xf32, #tpu.memory_space<vmem>>, vector<1x3x384xf32>
    %115 = vector.shape_cast %114 : vector<1x3x384xf32> to vector<3x384xf32>
    %116 = vector.shape_cast %113 : vector<3x384xf32> to vector<1x3x384xf32>
    tpu.vector_store %arg12[%c0_74, %c0_75, %c0_76], %116 {strides = array<i32>} : memref<1x3x384xf32, #tpu.memory_space<vmem>>, vector<1x3x384xf32>,
    return
  }
  func.func @transform_0(%arg0: i32) -> (i32, i32, i32) {
    %c0_i32 = arith.constant 0 : i32
    %c0_i32_0 = arith.constant 0 : i32
    %c0_i32_1 = arith.constant 0 : i32
    %c0_i32_2 = arith.constant 0 : i32
    return %c0_i32, %c0_i32_0, %c0_i32_1 : i32, i32, i32
  }
  func.func @transform_1(%arg0: i32) -> (i32, i32, i32) {
    %c0_i32 = arith.constant 0 : i32
    %c0_i32_0 = arith.constant 0 : i32
    %c0_i32_1 = arith.constant 0 : i32
    return %arg0, %c0_i32, %c0_i32_0 : i32, i32, i32
  }
  func.func @transform_2(%arg0: i32) -> (i32, i32, i32) {
    %c0_i32 = arith.constant 0 : i32
    %c0_i32_0 = arith.constant 0 : i32
    %c0_i32_1 = arith.constant 0 : i32
    return %arg0, %c0_i32, %c0_i32_0 : i32, i32, i32
  }
  func.func @transform_3(%arg0: i32) -> (i32, i32) {
    %c0_i32 = arith.constant 0 : i32
    %c0_i32_0 = arith.constant 0 : i32
    %c0_i32_1 = arith.constant 0 : i32
    return %c0_i32, %c0_i32_0 : i32, i32
  }
  func.func @transform_4(%arg0: i32) -> (i32, i32) {
    %c0_i32 = arith.constant 0 : i32
    %c0_i32_0 = arith.constant 0 : i32
    %c0_i32_1 = arith.constant 0 : i32
    return %c0_i32, %c0_i32_0 : i32, i32
  }
  func.func @transform_5(%arg0: i32) -> (i32, i32, i32) {
    %c0_i32 = arith.constant 0 : i32
    %c0_i32_0 = arith.constant 0 : i32
    %c0_i32_1 = arith.constant 0 : i32
    return %arg0, %c0_i32, %c0_i32_0 : i32, i32, i32
  }
  func.func @transform_6(%arg0: i32) -> (i32, i32) {
    %c0_i32 = arith.constant 0 : i32
    %c0_i32_0 = arith.constant 0 : i32
    %c0_i32_1 = arith.constant 0 : i32
    return %c0_i32, %c0_i32_0 : i32, i32
  }
  func.func @transform_7(%arg0: i32) -> (i32, i32, i32) {
    %c0_i32 = arith.constant 0 : i32
    %c0_i32_0 = arith.constant 0 : i32
    %c0_i32_1 = arith.constant 0 : i32
    return %arg0, %c0_i32, %c0_i32_0 : i32, i32, i32
  }
  func.func @transform_8(%arg0: i32) -> (i32, i32, i32) {
    %c0_i32 = arith.constant 0 : i32
    %c0_i32_0 = arith.constant 0 : i32
    %c0_i32_1 = arith.constant 0 : i32
    return %arg0, %c0_i32, %c0_i32_0 : i32, i32, i32
  }
  func.func @transform_9(%arg0: i32) -> i32 {
    %c0_i32 = arith.constant 0 : i32
    %c0_i32_0 = arith.constant 0 : i32
    return %c0_i32 : i32
  }
  func.func @transform_10(%arg0: i32) -> (i32, i32, i32) {
    %c0_i32 = arith.constant 0 : i32
    %c0_i32_0 = arith.constant 0 : i32
    %c0_i32_1 = arith.constant 0 : i32
    return %arg0, %c0_i32, %c0_i32_0 : i32, i32, i32
  }
  func.func @transform_11(%arg0: i32) -> (i32, i32, i32) {
    %c0_i32 = arith.constant 0 : i32
    %c0_i32_0 = arith.constant 0 : i32
    %c0_i32_1 = arith.constant 0 : i32
    return %arg0, %c0_i32, %c0_i32_0 : i32, i32, i32
  }
}

</mosaic_0001>

<llo_original>
// kernel: generator_forward.5
$region0: #{generator_forward.5}
  #allocation0 [shape = 'u32[]', space=smem, size = 0x4, offset = 0x4, fixed_abs, tag = 'smem constant byte address 0x4 - core index']
  #allocation1 [shape = 'u32[72,128]{1,0:T(1,128)}', space=vmem, size = 0x9000, scoped, tag = 'internal scratch']
  #allocation2 [shape = 'f32[1]{0:T(128)S(6)}', space=smem, size = 0x200, scoped, tag = 'scoped memory for generator_forward.5']
  %s0 = inlined_call_operand.vmem [shape: f32[9,32,32], index: 0, kind: input, shape index: {}]
  %s1 = inlined_call_operand.vmem [shape: f32[2,1,32], index: 1, kind: input, shape index: {}]
  %s2 = inlined_call_operand.vmem [shape: f32[2,32,1], index: 2, kind: input, shape index: {}]
  %s3 = inlined_call_operand.vmem [shape: f32[32,1], index: 3, kind: input, shape index: {}]
  %s4 = inlined_call_operand.vmem [shape: f32[3,32], index: 4, kind: input, shape index: {}]
  %s5 = inlined_call_operand.vmem [shape: f32[2,1,32], index: 5, kind: input, shape index: {}]
  %s6 = inlined_call_operand.vmem [shape: f32[3,1], index: 6, kind: input, shape index: {}]
  %s7 = inlined_call_operand.vmem [shape: bf16[2,32,224], index: 7, kind: input, shape index: {}]
  %s8 = inlined_call_operand.vmem [shape: bf16[2,1,128], index: 8, kind: input, shape index: {}]
  %s9 = inlined_call_operand.<no memory space> [shape: f32[1], index: 9, kind: input, shape index: {}]
  %s10 = inlined_call_operand.vmem [shape: bf16[2,32,128], index: 10, kind: output, shape index: {0}]
  %s11 = inlined_call_operand.vmem [shape: f32[2,3,128], index: 11, kind: output, shape index: {1}]
  %12 = xla_tuple %s10, %s11
  %s13 = sld [smem:[#allocation0]]
  $region81: #{generator_forward.5} parent=0
    _
  %s15 = ssub.s32 1, %s13
  %s16 = scalar_select 0, %s15, %s13
  %17 = sst [smem:[#allocation2]] %s9
  loop: start=0, step=1, limit=4
  $region2: #{generator_forward.5} parent=0 // loop_pre_header
    _
  $region3: #{generator_forward.5} parent=0 // loop_header
    %s19 = sphi 0, %s23
    %p20 = scmp.ge.s32.totalorder %s19, 4
    %s27 = sphi 0, %s27
    %s29 = sphi 0, %s27
    %s30 = sphi 0, %s29
    %s44 = sphi 0, %s30
    %s50 = sphi 0, %s52
    %s53 = sphi 0, %s50
    %s54 = sphi 0, %s53
    %s70 = sphi 0, %s54
    %s76 = sphi 0, %s78
    %s79 = sphi 0, %s76
    %s80 = sphi 0, %s79
    %s96 = sphi 0, %s80
    %s100 = sphi 0, %s100
    %s102 = sphi 0, %s100
    %s103 = sphi 0, %s102
    %s117 = sphi 0, %s103
    %s121 = sphi 0, %s121
    %s123 = sphi 0, %s121
    %s124 = sphi 0, %s123
    %s138 = sphi 0, %s124
    %s144 = sphi 0, %s146
    %s147 = sphi 0, %s144
    %s148 = sphi 0, %s147
    %s164 = sphi 0, %s148
    %s168 = sphi 0, %s168
    %s170 = sphi 0, %s168
    %s171 = sphi 0, %s170
    %s185 = sphi 0, %s171
    %s191 = sphi 0, %s193
    %s194 = sphi 0, %s191
    %s195 = sphi 0, %s194
    %s211 = sphi 0, %s195
    %s217 = sphi 0, %s219
    %s220 = sphi 0, %s217
    %s221 = sphi 0, %s220
    %s237 = sphi 0, %s221
    %s241 = sphi 0, %s241
    %s243 = sphi 0, %s241
    %s244 = sphi 0, %s243
    %s258 = sphi 0, %s244
    %s264 = sphi 0, %s266
    %s267 = sphi 0, %s264
    %s268 = sphi 0, %s267
    %s284 = sphi 0, %s268
    %s290 = sphi 0, %s292
    %s293 = sphi 0, %s290
    %s294 = sphi 0, %s293
    %s310 = sphi 0, %s294
  $region4: #{generator_forward.5} parent=0 // loop_header_branch
    %22 = sbr.rel (%p20) target = $region8
  $region5: #{generator_forward.5} parent=0 // loop_body
    %s24 = ssub.s32 %s19, 1
    %s25 = ssub.s32 %s19, 2
    %s26 = sadd.s32 %s19, 1
    %s28 = sadd.s32 %s27, 1
    %p31 = scmp.eq.s32.totalorder %s19, 1
    %p32 = scmp.ne.s32.totalorder %s27, %s29
    %p33 = scmp.eq.s32.totalorder %s19, 0
    %p34 = por %p32, %p33
    %p35 = scmp.ne.s32.totalorder %s27, %s29
    %p36 = scmp.eq.s32.totalorder %s24, 1
    %p37 = por %p35, %p36
    %p38 = scmp.ne.s32.totalorder %s29, %s30
    %p39 = scmp.eq.s32.totalorder %s24, 0
    %p40 = por %p38, %p39
    %p41 = scmp.ne.s32.totalorder %s29, %s30
    %p42 = scmp.eq.s32.totalorder %s25, 1
    %p43 = por %p41, %p42
    %p45 = scmp.ne.s32.totalorder %s30, %s44
    %p46 = scmp.eq.s32.totalorder %s25, 0
    %p47 = por %p45, %p46
    %s48 = ssub.s32 %s19, %s26
    %p49 = scmp.eq.s32.totalorder %s48, 0
    %s51 = sadd.s32 %s50, 1
    %s52 = scalar_select %p49, %s50, %s51
    %p55 = pneg %p49
    %p56 = scmp.eq.s32.totalorder %s19, 1
    %p57 = por %p55, %p56
    %p58 = scmp.ne.s32.totalorder %s50, %s53
    %p59 = scmp.eq.s32.totalorder %s19, 0
    %p60 = por %p58, %p59
    %p61 = scmp.ne.s32.totalorder %s50, %s53
    %p62 = scmp.eq.s32.totalorder %s24, 1
    %p63 = por %p61, %p62
    %p64 = scmp.ne.s32.totalorder %s53, %s54
    %p65 = scmp.eq.s32.totalorder %s24, 0
    %p66 = por %p64, %p65
    %p67 = scmp.ne.s32.totalorder %s53, %s54
    %p68 = scmp.eq.s32.totalorder %s25, 1
    %p69 = por %p67, %p68
    %p71 = scmp.ne.s32.totalorder %s54, %s70
    %p72 = scmp.eq.s32.totalorder %s25, 0
    %p73 = por %p71, %p72
    %s74 = ssub.s32 %s19, %s26
    %p75 = scmp.eq.s32.totalorder %s74, 0
    %s77 = sadd.s32 %s76, 1
    %s78 = scalar_select %p75, %s76, %s77
    %p81 = pneg %p75
    %p82 = scmp.eq.s32.totalorder %s19, 1
    %p83 = por %p81, %p82
    %p84 = scmp.ne.s32.totalorder %s76, %s79
    %p85 = scmp.eq.s32.totalorder %s19, 0
    %p86 = por %p84, %p85
    %p87 = scmp.ne.s32.totalorder %s76, %s79
    %p88 = scmp.eq.s32.totalorder %s24, 1
    %p89 = por %p87, %p88
    %p90 = scmp.ne.s32.totalorder %s79, %s80
    %p91 = scmp.eq.s32.totalorder %s24, 0
    %p92 = por %p90, %p91
    %p93 = scmp.ne.s32.totalorder %s79, %s80
    %p94 = scmp.eq.s32.totalorder %s25, 1
    %p95 = por %p93, %p94
    %p97 = scmp.ne.s32.totalorder %s80, %s96
    %p98 = scmp.eq.s32.totalorder %s25, 0
    %p99 = por %p97, %p98
    %s101 = sadd.s32 %s100, 1
    %p104 = scmp.eq.s32.totalorder %s19, 1
    %p105 = scmp.ne.s32.totalorder %s100, %s102
    %p106 = scmp.eq.s32.totalorder %s19, 0
    %p107 = por %p105, %p106
    %p108 = scmp.ne.s32.totalorder %s100, %s102
    %p109 = scmp.eq.s32.totalorder %s24, 1
    %p110 = por %p108, %p109
    %p111 = scmp.ne.s32.totalorder %s102, %s103
    %p112 = scmp.eq.s32.totalorder %s24, 0
    %p113 = por %p111, %p112
    %p114 = scmp.ne.s32.totalorder %s102, %s103
    %p115 = scmp.eq.s32.totalorder %s25, 1
    %p116 = por %p114, %p115
    %p118 = scmp.ne.s32.totalorder %s103, %s117
    %p119 = scmp.eq.s32.totalorder %s25, 0
    %p120 = por %p118, %p119
    %s122 = sadd.s32 %s121, 1
    %p125 = scmp.eq.s32.totalorder %s19, 1
    %p126 = scmp.ne.s32.totalorder %s121, %s123
    %p127 = scmp.eq.s32.totalorder %s19, 0
    %p128 = por %p126, %p127
    %p129 = scmp.ne.s32.totalorder %s121, %s123
    %p130 = scmp.eq.s32.totalorder %s24, 1
    %p131 = por %p129, %p130
    %p132 = scmp.ne.s32.totalorder %s123, %s124
    %p133 = scmp.eq.s32.totalorder %s24, 0
    %p134 = por %p132, %p133
    %p135 = scmp.ne.s32.totalorder %s123, %s124
    %p136 = scmp.eq.s32.totalorder %s25, 1
    %p137 = por %p135, %p136
    %p139 = scmp.ne.s32.totalorder %s124, %s138
    %p140 = scmp.eq.s32.totalorder %s25, 0
    %p141 = por %p139, %p140
    %s142 = ssub.s32 %s19, %s26
    %p143 = scmp.eq.s32.totalorder %s142, 0
    %s145 = sadd.s32 %s144, 1
    %s146 = scalar_select %p143, %s144, %s145
    %p149 = pneg %p143
    %p150 = scmp.eq.s32.totalorder %s19, 1
    %p151 = por %p149, %p150
    %p152 = scmp.ne.s32.totalorder %s144, %s147
    %p153 = scmp.eq.s32.totalorder %s19, 0
    %p154 = por %p152, %p153
    %p155 = scmp.ne.s32.totalorder %s144, %s147
    %p156 = scmp.eq.s32.totalorder %s24, 1
    %p157 = por %p155, %p156
    %p158 = scmp.ne.s32.totalorder %s147, %s148
    %p159 = scmp.eq.s32.totalorder %s24, 0
    %p160 = por %p158, %p159
    %p161 = scmp.ne.s32.totalorder %s147, %s148
    %p162 = scmp.eq.s32.totalorder %s25, 1
    %p163 = por %p161, %p162
    %p165 = scmp.ne.s32.totalorder %s148, %s164
    %p166 = scmp.eq.s32.totalorder %s25, 0
    %p167 = por %p165, %p166
    %s169 = sadd.s32 %s168, 1
    %p172 = scmp.eq.s32.totalorder %s19, 1
    %p173 = scmp.ne.s32.totalorder %s168, %s170
    %p174 = scmp.eq.s32.totalorder %s19, 0
    %p175 = por %p173, %p174
    %p176 = scmp.ne.s32.totalorder %s168, %s170
    %p177 = scmp.eq.s32.totalorder %s24, 1
    %p178 = por %p176, %p177
    %p179 = scmp.ne.s32.totalorder %s170, %s171
    %p180 = scmp.eq.s32.totalorder %s24, 0
    %p181 = por %p179, %p180
    %p182 = scmp.ne.s32.totalorder %s170, %s171
    %p183 = scmp.eq.s32.totalorder %s25, 1
    %p184 = por %p182, %p183
    %p186 = scmp.ne.s32.totalorder %s171, %s185
    %p187 = scmp.eq.s32.totalorder %s25, 0
    %p188 = por %p186, %p187
    %s189 = ssub.s32 %s19, %s26
    %p190 = scmp.eq.s32.totalorder %s189, 0
    %s192 = sadd.s32 %s191, 1
    %s193 = scalar_select %p190, %s191, %s192
    %p196 = pneg %p190
    %p197 = scmp.eq.s32.totalorder %s19, 1
    %p198 = por %p196, %p197
    %p199 = scmp.ne.s32.totalorder %s191, %s194
    %p200 = scmp.eq.s32.totalorder %s19, 0
    %p201 = por %p199, %p200
    %p202 = scmp.ne.s32.totalorder %s191, %s194
    %p203 = scmp.eq.s32.totalorder %s24, 1
    %p204 = por %p202, %p203
    %p205 = scmp.ne.s32.totalorder %s194, %s195
    %p206 = scmp.eq.s32.totalorder %s24, 0
    %p207 = por %p205, %p206
    %p208 = scmp.ne.s32.totalorder %s194, %s195
    %p209 = scmp.eq.s32.totalorder %s25, 1
    %p210 = por %p208, %p209
    %p212 = scmp.ne.s32.totalorder %s195, %s211
    %p213 = scmp.eq.s32.totalorder %s25, 0
    %p214 = por %p212, %p213
    %s215 = ssub.s32 %s19, %s26
    %p216 = scmp.eq.s32.totalorder %s215, 0
    %s218 = sadd.s32 %s217, 1
    %s219 = scalar_select %p216, %s217, %s218
    %p222 = pneg %p216
    %p223 = scmp.eq.s32.totalorder %s19, 1
    %p224 = por %p222, %p223
    %p225 = scmp.ne.s32.totalorder %s217, %s220
    %p226 = scmp.eq.s32.totalorder %s19, 0
    %p227 = por %p225, %p226
    %p228 = scmp.ne.s32.totalorder %s217, %s220
    %p229 = scmp.eq.s32.totalorder %s24, 1
    %p230 = por %p228, %p229
    %p231 = scmp.ne.s32.totalorder %s220, %s221
    %p232 = scmp.eq.s32.totalorder %s24, 0
    %p233 = por %p231, %p232
    %p234 = scmp.ne.s32.totalorder %s220, %s221
    %p235 = scmp.eq.s32.totalorder %s25, 1
    %p236 = por %p234, %p235
    %p238 = scmp.ne.s32.totalorder %s221, %s237
    %p239 = scmp.eq.s32.totalorder %s25, 0
    %p240 = por %p238, %p239
    %s242 = sadd.s32 %s241, 1
    %p245 = scmp.eq.s32.totalorder %s19, 1
    %p246 = scmp.ne.s32.totalorder %s241, %s243
    %p247 = scmp.eq.s32.totalorder %s19, 0
    %p248 = por %p246, %p247
    %p249 = scmp.ne.s32.totalorder %s241, %s243
    %p250 = scmp.eq.s32.totalorder %s24, 1
    %p251 = por %p249, %p250
    %p252 = scmp.ne.s32.totalorder %s243, %s244
    %p253 = scmp.eq.s32.totalorder %s24, 0
    %p254 = por %p252, %p253
    %p255 = scmp.ne.s32.totalorder %s243, %s244
    %p256 = scmp.eq.s32.totalorder %s25, 1
    %p257 = por %p255, %p256
    %p259 = scmp.ne.s32.totalorder %s244, %s258
    %p260 = scmp.eq.s32.totalorder %s25, 0
    %p261 = por %p259, %p260
    %s262 = ssub.s32 %s19, %s26
    %p263 = scmp.eq.s32.totalorder %s262, 0
    %s265 = sadd.s32 %s264, 1
    %s266 = scalar_select %p263, %s264, %s265
    %p269 = pneg %p263
    %p270 = scmp.eq.s32.totalorder %s19, 1
    %p271 = por %p269, %p270
    %p272 = scmp.ne.s32.totalorder %s264, %s267
    %p273 = scmp.eq.s32.totalorder %s19, 0
    %p274 = por %p272, %p273
    %p275 = scmp.ne.s32.totalorder %s264, %s267
    %p276 = scmp.eq.s32.totalorder %s24, 1
    %p277 = por %p275, %p276
    %p278 = scmp.ne.s32.totalorder %s267, %s268
    %p279 = scmp.eq.s32.totalorder %s24, 0
    %p280 = por %p278, %p279
    %p281 = scmp.ne.s32.totalorder %s267, %s268
    %p282 = scmp.eq.s32.totalorder %s25, 1
    %p283 = por %p281, %p282
    %p285 = scmp.ne.s32.totalorder %s268, %s284
    %p286 = scmp.eq.s32.totalorder %s25, 0
    %p287 = por %p285, %p286
    %s288 = ssub.s32 %s19, %s26
    %p289 = scmp.eq.s32.totalorder %s288, 0
    %s291 = sadd.s32 %s290, 1
    %s292 = scalar_select %p289, %s290, %s291
    %p295 = pneg %p289
    %p296 = scmp.eq.s32.totalorder %s19, 1
    %p297 = por %p295, %p296
    %p298 = scmp.ne.s32.totalorder %s290, %s293
    %p299 = scmp.eq.s32.totalorder %s19, 0
    %p300 = por %p298, %p299
    %p301 = scmp.ne.s32.totalorder %s290, %s293
    %p302 = scmp.eq.s32.totalorder %s24, 1
    %p303 = por %p301, %p302
    %p304 = scmp.ne.s32.totalorder %s293, %s294
    %p305 = scmp.eq.s32.totalorder %s24, 0
    %p306 = por %p304, %p305
    %p307 = scmp.ne.s32.totalorder %s293, %s294
    %p308 = scmp.eq.s32.totalorder %s25, 1
    %p309 = por %p307, %p308
    %p311 = scmp.ne.s32.totalorder %s294, %s310
    %p312 = scmp.eq.s32.totalorder %s25, 0
    %p313 = por %p311, %p312
    %p314 = scmp.le.s32.totalorder 1, %s19
    %p315 = scmp.lt.s32.totalorder %s19, 3
    %p316 = pnand %p314, %p315
    %p317 = pneg %p316
    // Predicated region
    $region9: #{generator_forward.5} parent=5 // pred_check
      _
    $region10: #{generator_forward.5} parent=5 // pred_check_branch
      %319 = sbr.rel (%p316) target = $region12
    $region11: #{generator_forward.5} parent=5 // pred_region
      %s320 = ssub.s32 %s19, 1
      // Predicated region
      $region13: #{generator_forward.5} parent=11 // pred_check
        %p321 = pneg %p40
      $region14: #{generator_forward.5} parent=11 // pred_check_branch
        %323 = sbr.rel (%p321) target = $region16
      $region15: #{generator_forward.5} parent=11 // pred_region
        _
      $region16: #{generator_forward.5} parent=11 // pred_fallthru
        _
      // Predicated region
      $region17: #{generator_forward.5} parent=11 // pred_check
        %p324 = pneg %p113
      $region18: #{generator_forward.5} parent=11 // pred_check_branch
        %326 = sbr.rel (%p324) target = $region20
      $region19: #{generator_forward.5} parent=11 // pred_region
        _
      $region20: #{generator_forward.5} parent=11 // pred_fallthru
        _
      // Predicated region
      $region21: #{generator_forward.5} parent=11 // pred_check
        %p327 = pneg %p134
      $region22: #{generator_forward.5} parent=11 // pred_check_branch
        %329 = sbr.rel (%p327) target = $region24
      $region23: #{generator_forward.5} parent=11 // pred_region
        _
      $region24: #{generator_forward.5} parent=11 // pred_fallthru
        _
      // Predicated region
      $region25: #{generator_forward.5} parent=11 // pred_check
        %p330 = pneg %p181
      $region26: #{generator_forward.5} parent=11 // pred_check_branch
        %332 = sbr.rel (%p330) target = $region28
      $region27: #{generator_forward.5} parent=11 // pred_region
        _
      $region28: #{generator_forward.5} parent=11 // pred_fallthru
        _
      // Predicated region
      $region29: #{generator_forward.5} parent=11 // pred_check
        %p333 = pneg %p254
      $region30: #{generator_forward.5} parent=11 // pred_check_branch
        %335 = sbr.rel (%p333) target = $region32
      $region31: #{generator_forward.5} parent=11 // pred_region
        _
      $region32: #{generator_forward.5} parent=11 // pred_fallthru
        _
    $region12: #{generator_forward.5} parent=5 // pred_fallthru
      _
    %p336 = scmp.lt.s32.totalorder %s19, 2
    // Predicated region
    $region33: #{generator_forward.5} parent=5 // pred_check
      %p337 = pneg %p336
    $region34: #{generator_forward.5} parent=5 // pred_check_branch
      %339 = sbr.rel (%p337) target = $region36
    $region35: #{generator_forward.5} parent=5 // pred_region
      // Predicated region
      $region37: #{generator_forward.5} parent=35 // pred_check
        %p340 = pneg %p60
      $region38: #{generator_forward.5} parent=35 // pred_check_branch
        %342 = sbr.rel (%p340) target = $region40
      $region39: #{generator_forward.5} parent=35 // pred_region
        %p343 = scmp.lt.s32.totalorder %s19, 1
        %s344 = scalar_select %p343, %s19, 1
        %s345 = scalar_lea.vmem %s1, %s344
      $region40: #{generator_forward.5} parent=35 // pred_fallthru
        _
      // Predicated region
      $region41: #{generator_forward.5} parent=35 // pred_check
        %p346 = pneg %p86
      $region42: #{generator_forward.5} parent=35 // pred_check_branch
        %348 = sbr.rel (%p346) target = $region44
      $region43: #{generator_forward.5} parent=35 // pred_region
        %p349 = scmp.lt.s32.totalorder %s19, 1
        %s350 = scalar_select %p349, %s19, 1
        %s351 = smul.addr %s350, 4
        %s352 = smul.addr %s351, 8
        %s353 = scalar_lea.vmem %s2, %s352
      $region44: #{generator_forward.5} parent=35 // pred_fallthru
        _
      // Predicated region
      $region45: #{generator_forward.5} parent=35 // pred_check
        %p354 = pneg %p154
      $region46: #{generator_forward.5} parent=35 // pred_check_branch
        %356 = sbr.rel (%p354) target = $region48
      $region47: #{generator_forward.5} parent=35 // pred_region
        %p357 = scmp.lt.s32.totalorder %s19, 1
        %s358 = scalar_select %p357, %s19, 1
        %s359 = scalar_lea.vmem %s5, %s358
      $region48: #{generator_forward.5} parent=35 // pred_fallthru
        _
      // Predicated region
      $region49: #{generator_forward.5} parent=35 // pred_check
        %p360 = pneg %p201
      $region50: #{generator_forward.5} parent=35 // pred_check_branch
        %362 = sbr.rel (%p360) target = $region52
      $region51: #{generator_forward.5} parent=35 // pred_region
        %p363 = scmp.lt.s32.totalorder %s19, 1
        %s364 = scalar_select %p363, %s19, 1
        %s365 = smul.addr %s364, 8
        %s366 = smul.addr %s365, 4
        %s367 = scalar_lea.vmem %s7, %s366
      $region52: #{generator_forward.5} parent=35 // pred_fallthru
        _
      // Predicated region
      $region53: #{generator_forward.5} parent=35 // pred_check
        %p368 = pneg %p227
      $region54: #{generator_forward.5} parent=35 // pred_check_branch
        %370 = sbr.rel (%p368) target = $region56
      $region55: #{generator_forward.5} parent=35 // pred_region
        %p371 = scmp.lt.s32.totalorder %s19, 1
        %s372 = scalar_select %p371, %s19, 1
        %s373 = scalar_lea.vmem %s8, %s372
      $region56: #{generator_forward.5} parent=35 // pred_fallthru
        _
    $region36: #{generator_forward.5} parent=5 // pred_fallthru
      _
    %p374 = scmp.le.s32.totalorder 1, %s19
    %p375 = scmp.lt.s32.totalorder %s19, 3
    %p376 = pnand %p374, %p375
    %p377 = pneg %p376
    // Predicated region
    $region57: #{generator_forward.5} parent=5 // pred_check
      _
    $region58: #{generator_forward.5} parent=5 // pred_check_branch
      %379 = sbr.rel (%p376) target = $region60
    $region59: #{generator_forward.5} parent=5 // pred_region
      %s380 = ssub.s32 %s19, 1
      %p381 = pneg %p40
      %p382 = pneg %p37
      %p383 = scmp.lt.s32.totalorder %s24, 1
      %s384 = scalar_select %p383, %s24, 1
      %s385 = scalar_lea.vmem %s1, %s384
      %p386 = pneg %p66
      %p387 = pneg %p63
      %p388 = scmp.lt.s32.totalorder %s24, 1
      %s389 = scalar_select %p388, %s24, 1
      %s390 = smul.addr %s389, 4
      %s391 = smul.addr %s390, 8
      %s392 = scalar_lea.vmem %s2, %s391
      %p393 = pneg %p92
      %p394 = pneg %p89
      %p395 = pneg %p113
      %p396 = pneg %p110
      %p397 = pneg %p134
      %p398 = pneg %p131
      %p399 = scmp.lt.s32.totalorder %s24, 1
      %s400 = scalar_select %p399, %s24, 1
      %s401 = scalar_lea.vmem %s5, %s400
      %p402 = pneg %p160
      %p403 = pneg %p157
      %p404 = pneg %p181
      %p405 = pneg %p178
      %p406 = scmp.lt.s32.totalorder %s24, 1
      %s407 = scalar_select %p406, %s24, 1
      %s408 = smul.addr %s407, 8
      %s409 = smul.addr %s408, 4
      %s410 = scalar_lea.vmem %s7, %s409
      %p411 = pneg %p207
      %p412 = pneg %p204
      %p413 = scmp.lt.s32.totalorder %s24, 1
      %s414 = scalar_select %p413, %s24, 1
      %s415 = scalar_lea.vmem %s8, %s414
      %p416 = pneg %p233
      %p417 = pneg %p230
      %p418 = pneg %p254
      %p419 = pneg %p251
      %p420 = pneg %p280
      %p421 = pneg %p277
      %p422 = scmp.lt.s32.totalorder %s24, 1
      %s423 = scalar_select %p422, %s24, 1
      %s424 = smul.addr %s423, 4
      %s425 = smul.addr %s424, 4
      %s426 = scalar_lea.vmem %s10, %s425
      %p427 = pneg %p306
      %p428 = pneg %p303
      %p429 = scmp.lt.s32.totalorder %s24, 1
      %s430 = scalar_select %p429, %s24, 1
      %s431 = smul.addr %s430, 4
      %s432 = scalar_lea.vmem %s11, %s431
      %p433 = scmp.lt.s32.totalorder %s24, 1
      %s434 = scalar_select %p433, %s24, 1
      %s435 = scalar_lea.vmem %s1, %s434
      %p436 = scmp.lt.s32.totalorder %s24, 1
      %s437 = scalar_select %p436, %s24, 1
      %s438 = smul.addr %s437, 4
      %s439 = smul.addr %s438, 8
      %s440 = scalar_lea.vmem %s2, %s439
      %p441 = scmp.lt.s32.totalorder %s24, 1
      %s442 = scalar_select %p441, %s24, 1
      %s443 = scalar_lea.vmem %s5, %s442
      %p444 = scmp.lt.s32.totalorder %s24, 1
      %s445 = scalar_select %p444, %s24, 1
      %s446 = smul.addr %s445, 8
      %s447 = smul.addr %s446, 4
      %s448 = scalar_lea.vmem %s7, %s447
      %p449 = scmp.lt.s32.totalorder %s24, 1
      %s450 = scalar_select %p449, %s24, 1
      %s451 = scalar_lea.vmem %s8, %s450
      %p452 = scmp.lt.s32.totalorder %s24, 1
      %s453 = scalar_select %p452, %s24, 1
      %s454 = smul.addr %s453, 4
      %s455 = smul.addr %s454, 4
      %s456 = scalar_lea.vmem %s10, %s455
      %p457 = scmp.lt.s32.totalorder %s24, 1
      %s458 = scalar_select %p457, %s24, 1
      %s459 = smul.addr %s458, 4
      %s460 = scalar_lea.vmem %s11, %s459
      %v462 = vld [vmem:[%s440] sm:$0xff]
      %v463 = vld [vmem:[%s440 + $0x8] sm:$0xff]
      %v464 = vld [vmem:[%s440 + $0x10] sm:$0xff]
      %v465 = vld [vmem:[%s440 + $0x18] sm:$0xff]
      %v466 = vld [vmem:[%s435] sm:$0x1]
      %468 = vset.pattern.permute.xlu0 0
      %469 = vperm.xlu0 %468, %v462
      %v470 = vpop.permute.xlu0 %469
      %473 = vset.pattern.permute.xlu0 0
      %474 = vperm.xlu0 %473, %v463
      %v475 = vpop.permute.xlu0 %474
      %478 = vset.pattern.permute.xlu0 0
      %479 = vperm.xlu0 %478, %v464
      %v480 = vpop.permute.xlu0 %479
      %483 = vset.pattern.permute.xlu0 0
      %484 = vperm.xlu0 %483, %v465
      %v485 = vpop.permute.xlu0 %484
      %v488 = vperm.slane %v466, 0
      %v490 = vmul.f32 %v470, %v488
      %v491 = vmul.f32 %v475, %v488
      %v492 = vmul.f32 %v480, %v488
      %v493 = vmul.f32 %v485, %v488
      %v494 = vld [vmem:[%s0] sm:$0xff]
      %v495 = vld [vmem:[%s0 + $0x8] sm:$0xff]
      %v496 = vld [vmem:[%s0 + $0x10] sm:$0xff]
      %v497 = vld [vmem:[%s0 + $0x18] sm:$0xff]
      %v498 = vmul.f32 %v494, %v490
      %v499 = vmul.f32 %v495, %v491
      %v500 = vmul.f32 %v496, %v492
      %v501 = vmul.f32 %v497, %v493
      %v502 = vpack.c.bf16 %v499, %v498
      %v503 = vpack.c.bf16 %v501, %v500
      %v504 = vld [vmem:[%s448] sm:$0xf]
      %v505 = vld [vmem:[%s448 + $0x8] sm:$0xf]
      %v506 = vld [vmem:[%s448 + $0x10] sm:$0xf]
      %v507 = vld [vmem:[%s448 + $0x18] sm:$0xf]
      %s508 = scalar_lea.vmem %s0, 32
      %v509 = vld [vmem:[%s508] sm:$0xff]
      %v510 = vld [vmem:[%s508 + $0x8] sm:$0xff]
      %v511 = vld [vmem:[%s508 + $0x10] sm:$0xff]
      %v512 = vld [vmem:[%s508 + $0x18] sm:$0xff]
      %v513 = vmul.f32 %v509, %v490
      %v514 = vmul.f32 %v510, %v491
      %v515 = vmul.f32 %v511, %v492
      %v516 = vmul.f32 %v512, %v493
      %v517 = vpack.c.bf16 %v514, %v513
      %v518 = vpack.c.bf16 %v516, %v515
      %v519 = vld [vmem:[%s448] sm:$0xff]
      %v520 = vld [vmem:[%s448 + $0x8] sm:$0xff]
      %v521 = vld [vmem:[%s448 + $0x10] sm:$0xff]
      %v522 = vld [vmem:[%s448 + $0x18] sm:$0xff]
      %v527 = vunpack.c.l.b16 %v519
      %v528 = vunpack.c.h.b16 %v519
      %v529 = vunpack.c.l.b16 %v520
      %v530 = vunpack.c.h.b16 %v520
      %v531 = vunpack.c.l.b16 %v521
      %v532 = vunpack.c.h.b16 %v521
      %v533 = vunpack.c.l.b16 %v522
      %v534 = vunpack.c.h.b16 %v522
      %v535 = vpack.c.b16 %v529, %v527
      %v536 = vpack.c.b16 %v530, %v528
      %v537 = vpack.c.b16 %v533, %v531
      %v538 = vpack.c.b16 %v534, %v532
      %539 = vrot.lane.b32.xlu0 %v535, 127
      %v540 = vpop.permute.xlu0 %539
      %541 = vrot.lane.b32.xlu0 %v536, 127
      %v542 = vpop.permute.xlu0 %541
      %543 = vrot.lane.b32.xlu0 %v537, 127
      %v544 = vpop.permute.xlu0 %543
      %545 = vrot.lane.b32.xlu0 %v538, 127
      %v546 = vpop.permute.xlu0 %545
      %vm547 = vcmask 1039360
      %v548 = vsel %vm547, %v540, %v542
      %v549 = vsel %vm547, %v544, %v546
      %vm552 = vcmask 261120
      %v554 = vsel %vm552, %v517, 0
      %v557 = vsel %vm552, %v518, 0
      %559 = vmatpush.bf16.msra.mxu0 0
      %560 = vmatpush.bf16.msra.mxu0 0
      %561 = vmatpush.bf16.msra.mxu0 0
      %562 = vmatpush.bf16.msra.mxu0 0
      %563 = vmatpush.bf16.msra.mxu0 0
      %564 = vmatpush.bf16.msra.mxu0 0
      %565 = vmatpush.bf16.msra.mxu0 %v549
      %566 = vmatpush.bf16.msra.mxu0 %v548
      %567 = vmatmul.bf16.gmra.mxu0 %v554
      %v568 = vpop.f32.mrf.mxu0
      %v569 = vadd.f32 0.0, %v568
      %v570 = vpop.f32.mrf.mxu0
      %v571 = vadd.f32 0.0, %v570
      %572 = vmatmul.bf16.gmra.mxu0 %v557
      %v573 = vpop.f32.mrf.mxu0
      %v574 = vadd.f32 0.0, %v573
      %v575 = vpop.f32.mrf.mxu0
      %v576 = vadd.f32 0.0, %v575
      %577 = vdwg.mxu0
      %v582 = vunpack.c.l.b16 %v504
      %v583 = vunpack.c.l.b16 %v505
      %v584 = vunpack.c.l.b16 %v506
      %v585 = vunpack.c.l.b16 %v507
      %v586 = vpack.c.b16 %v583, %v582
      %v587 = vpack.c.b16 %v585, %v584
      %v591 = vsel %vm552, %v502, 0
      %v594 = vsel %vm552, %v503, 0
      %596 = vmatpush.bf16.msra.mxu0 0
      %597 = vmatpush.bf16.msra.mxu0 0
      %598 = vmatpush.bf16.msra.mxu0 0
      %599 = vmatpush.bf16.msra.mxu0 0
      %600 = vmatpush.bf16.msra.mxu0 0
      %601 = vmatpush.bf16.msra.mxu0 0
      %602 = vmatpush.bf16.msra.mxu0 %v587
      %603 = vmatpush.bf16.msra.mxu0 %v586
      %604 = vmatmul.bf16.gmra.mxu0 %v591
      %v605 = vpop.f32.mrf.mxu0
      %v606 = vadd.f32 %v569, %v605
      %v607 = vpop.f32.mrf.mxu0
      %v608 = vadd.f32 %v571, %v607
      %609 = vmatmul.bf16.gmra.mxu0 %v594
      %v610 = vpop.f32.mrf.mxu0
      %v611 = vadd.f32 %v574, %v610
      %v612 = vpop.f32.mrf.mxu0
      %v613 = vadd.f32 %v576, %v612
      %614 = vdwg.mxu0
      %s615 = scalar_lea.vmem %s0, 64
      %v616 = vld [vmem:[%s615] sm:$0xff]
      %v617 = vld [vmem:[%s615 + $0x8] sm:$0xff]
      %v618 = vld [vmem:[%s615 + $0x10] sm:$0xff]
      %v619 = vld [vmem:[%s615 + $0x18] sm:$0xff]
      %v620 = vmul.f32 %v616, %v490
      %v621 = vmul.f32 %v617, %v491
      %v622 = vmul.f32 %v618, %v492
      %v623 = vmul.f32 %v619, %v493
      %v624 = vpack.c.bf16 %v621, %v620
      %v625 = vpack.c.bf16 %v623, %v622
      %626 = vrot.lane.b32.xlu0 %v535, 126
      %v627 = vpop.permute.xlu0 %626
      %628 = vrot.lane.b32.xlu0 %v536, 126
      %v629 = vpop.permute.xlu0 %628
      %630 = vrot.lane.b32.xlu0 %v537, 126
      %v631 = vpop.permute.xlu0 %630
      %632 = vrot.lane.b32.xlu0 %v538, 126
      %v633 = vpop.permute.xlu0 %632
      %vm634 = vcmask 1031168
      %v635 = vsel %vm634, %v627, %v629
      %v636 = vsel %vm634, %v631, %v633
      %v640 = vsel %vm552, %v624, 0
      %v643 = vsel %vm552, %v625, 0
      %645 = vmatpush.bf16.msra.mxu0 0
      %646 = vmatpush.bf16.msra.mxu0 0
      %647 = vmatpush.bf16.msra.mxu0 0
      %648 = vmatpush.bf16.msra.mxu0 0
      %649 = vmatpush.bf16.msra.mxu0 0
      %650 = vmatpush.bf16.msra.mxu0 0
      %651 = vmatpush.bf16.msra.mxu0 %v636
      %652 = vmatpush.bf16.msra.mxu0 %v635
      %653 = vmatmul.bf16.gmra.mxu0 %v640
      %v654 = vpop.f32.mrf.mxu0
      %v655 = vadd.f32 0.0, %v654
      %v656 = vpop.f32.mrf.mxu0
      %v657 = vadd.f32 0.0, %v656
      %658 = vmatmul.bf16.gmra.mxu0 %v643
      %v659 = vpop.f32.mrf.mxu0
      %v660 = vadd.f32 0.0, %v659
      %v661 = vpop.f32.mrf.mxu0
      %v662 = vadd.f32 0.0, %v661
      %663 = vdwg.mxu0
      %v664 = vadd.f32 %v606, %v655
      %v665 = vadd.f32 %v608, %v657
      %v666 = vadd.f32 %v611, %v660
      %v667 = vadd.f32 %v613, %v662
      %s668 = scalar_lea.vmem %s0, 96
      %v669 = vld [vmem:[%s668] sm:$0xff]
      %v670 = vld [vmem:[%s668 + $0x8] sm:$0xff]
      %v671 = vld [vmem:[%s668 + $0x10] sm:$0xff]
      %v672 = vld [vmem:[%s668 + $0x18] sm:$0xff]
      %v673 = vmul.f32 %v669, %v490
      %v674 = vmul.f32 %v670, %v491
      %v675 = vmul.f32 %v671, %v492
      %v676 = vmul.f32 %v672, %v493
      %v677 = vpack.c.bf16 %v674, %v673
      %v678 = vpack.c.bf16 %v676, %v675
      %679 = vrot.lane.b32.xlu0 %v535, 96
      %v680 = vpop.permute.xlu0 %679
      %681 = vrot.lane.b32.xlu0 %v536, 96
      %v682 = vpop.permute.xlu0 %681
      %683 = vrot.lane.b32.xlu0 %v537, 96
      %v684 = vpop.permute.xlu0 %683
      %685 = vrot.lane.b32.xlu0 %v538, 96
      %v686 = vpop.permute.xlu0 %685
      %vm687 = vcmask 785408
      %v688 = vsel %vm687, %v680, %v682
      %v689 = vsel %vm687, %v684, %v686
      %v693 = vsel %vm552, %v677, 0
      %v696 = vsel %vm552, %v678, 0
      %698 = vmatpush.bf16.msra.mxu0 0
      %699 = vmatpush.bf16.msra.mxu0 0
      %700 = vmatpush.bf16.msra.mxu0 0
      %701 = vmatpush.bf16.msra.mxu0 0
      %702 = vmatpush.bf16.msra.mxu0 0
      %703 = vmatpush.bf16.msra.mxu0 0
      %704 = vmatpush.bf16.msra.mxu0 %v689
      %705 = vmatpush.bf16.msra.mxu0 %v688
      %706 = vmatmul.bf16.gmra.mxu0 %v693
      %v707 = vpop.f32.mrf.mxu0
      %v708 = vadd.f32 0.0, %v707
      %v709 = vpop.f32.mrf.mxu0
      %v710 = vadd.f32 0.0, %v709
      %711 = vmatmul.bf16.gmra.mxu0 %v696
      %v712 = vpop.f32.mrf.mxu0
      %v713 = vadd.f32 0.0, %v712
      %v714 = vpop.f32.mrf.mxu0
      %v715 = vadd.f32 0.0, %v714
      %716 = vdwg.mxu0
      %v717 = vadd.f32 %v664, %v708
      %v718 = vadd.f32 %v665, %v710
      %v719 = vadd.f32 %v666, %v713
      %v720 = vadd.f32 %v667, %v715
      %s721 = scalar_lea.vmem %s0, 128
      %v722 = vld [vmem:[%s721] sm:$0xff]
      %v723 = vld [vmem:[%s721 + $0x8] sm:$0xff]
      %v724 = vld [vmem:[%s721 + $0x10] sm:$0xff]
      %v725 = vld [vmem:[%s721 + $0x18] sm:$0xff]
      %v726 = vmul.f32 %v722, %v490
      %v727 = vmul.f32 %v723, %v491
      %v728 = vmul.f32 %v724, %v492
      %v729 = vmul.f32 %v725, %v493
      %v730 = vpack.c.bf16 %v727, %v726
      %v731 = vpack.c.bf16 %v729, %v728
      %732 = vrot.lane.b32.xlu0 %v535, 95
      %v733 = vpop.permute.xlu0 %732
      %734 = vrot.lane.b32.xlu0 %v536, 95
      %v735 = vpop.permute.xlu0 %734
      %736 = vrot.lane.b32.xlu0 %v537, 95
      %v737 = vpop.permute.xlu0 %736
      %738 = vrot.lane.b32.xlu0 %v538, 95
      %v739 = vpop.permute.xlu0 %738
      %vm740 = vcmask 777216
      %v741 = vsel %vm740, %v733, %v735
      %v742 = vsel %vm740, %v737, %v739
      %v746 = vsel %vm552, %v730, 0
      %v749 = vsel %vm552, %v731, 0
      %751 = vmatpush.bf16.msra.mxu0 0
      %752 = vmatpush.bf16.msra.mxu0 0
      %753 = vmatpush.bf16.msra.mxu0 0
      %754 = vmatpush.bf16.msra.mxu0 0
      %755 = vmatpush.bf16.msra.mxu0 0
      %756 = vmatpush.bf16.msra.mxu0 0
      %757 = vmatpush.bf16.msra.mxu0 %v742
      %758 = vmatpush.bf16.msra.mxu0 %v741
      %759 = vmatmul.bf16.gmra.mxu0 %v746
      %v760 = vpop.f32.mrf.mxu0
      %v761 = vadd.f32 0.0, %v760
      %v762 = vpop.f32.mrf.mxu0
      %v763 = vadd.f32 0.0, %v762
      %764 = vmatmul.bf16.gmra.mxu0 %v749
      %v765 = vpop.f32.mrf.mxu0
      %v766 = vadd.f32 0.0, %v765
      %v767 = vpop.f32.mrf.mxu0
      %v768 = vadd.f32 0.0, %v767
      %769 = vdwg.mxu0
      %v770 = vadd.f32 %v717, %v761
      %v771 = vadd.f32 %v718, %v763
      %v772 = vadd.f32 %v719, %v766
      %v773 = vadd.f32 %v720, %v768
      %s774 = scalar_lea.vmem %s0, 160
      %v775 = vld [vmem:[%s774] sm:$0xff]
      %v776 = vld [vmem:[%s774 + $0x8] sm:$0xff]
      %v777 = vld [vmem:[%s774 + $0x10] sm:$0xff]
      %v778 = vld [vmem:[%s774 + $0x18] sm:$0xff]
      %v779 = vmul.f32 %v775, %v490
      %v780 = vmul.f32 %v776, %v491
      %v781 = vmul.f32 %v777, %v492
      %v782 = vmul.f32 %v778, %v493
      %v783 = vpack.c.bf16 %v780, %v779
      %v784 = vpack.c.bf16 %v782, %v781
      %785 = vrot.lane.b32.xlu0 %v535, 94
      %v786 = vpop.permute.xlu0 %785
      %787 = vrot.lane.b32.xlu0 %v536, 94
      %v788 = vpop.permute.xlu0 %787
      %789 = vrot.lane.b32.xlu0 %v537, 94
      %v790 = vpop.permute.xlu0 %789
      %791 = vrot.lane.b32.xlu0 %v538, 94
      %v792 = vpop.permute.xlu0 %791
      %vm793 = vcmask 769024
      %v794 = vsel %vm793, %v786, %v788
      %v795 = vsel %vm793, %v790, %v792
      %v799 = vsel %vm552, %v783, 0
      %v802 = vsel %vm552, %v784, 0
      %804 = vmatpush.bf16.msra.mxu0 0
      %805 = vmatpush.bf16.msra.mxu0 0
      %806 = vmatpush.bf16.msra.mxu0 0
      %807 = vmatpush.bf16.msra.mxu0 0
      %808 = vmatpush.bf16.msra.mxu0 0
      %809 = vmatpush.bf16.msra.mxu0 0
      %810 = vmatpush.bf16.msra.mxu0 %v795
      %811 = vmatpush.bf16.msra.mxu0 %v794
      %812 = vmatmul.bf16.gmra.mxu0 %v799
      %v813 = vpop.f32.mrf.mxu0
      %v814 = vadd.f32 0.0, %v813
      %v815 = vpop.f32.mrf.mxu0
      %v816 = vadd.f32 0.0, %v815
      %817 = vmatmul.bf16.gmra.mxu0 %v802
      %v818 = vpop.f32.mrf.mxu0
      %v819 = vadd.f32 0.0, %v818
      %v820 = vpop.f32.mrf.mxu0
      %v821 = vadd.f32 0.0, %v820
      %822 = vdwg.mxu0
      %v823 = vadd.f32 %v770, %v814
      %v824 = vadd.f32 %v771, %v816
      %v825 = vadd.f32 %v772, %v819
      %v826 = vadd.f32 %v773, %v821
      %s827 = scalar_lea.vmem %s0, 192
      %v828 = vld [vmem:[%s827] sm:$0xff]
      %v829 = vld [vmem:[%s827 + $0x8] sm:$0xff]
      %v830 = vld [vmem:[%s827 + $0x10] sm:$0xff]
      %v831 = vld [vmem:[%s827 + $0x18] sm:$0xff]
      %v832 = vmul.f32 %v828, %v490
      %v833 = vmul.f32 %v829, %v491
      %v834 = vmul.f32 %v830, %v492
      %v835 = vmul.f32 %v831, %v493
      %v836 = vpack.c.bf16 %v833, %v832
      %v837 = vpack.c.bf16 %v835, %v834
      %838 = vrot.lane.b32.xlu0 %v535, 64
      %v839 = vpop.permute.xlu0 %838
      %840 = vrot.lane.b32.xlu0 %v536, 64
      %v841 = vpop.permute.xlu0 %840
      %842 = vrot.lane.b32.xlu0 %v537, 64
      %v843 = vpop.permute.xlu0 %842
      %844 = vrot.lane.b32.xlu0 %v538, 64
      %v845 = vpop.permute.xlu0 %844
      %vm846 = vcmask 523264
      %v847 = vsel %vm846, %v839, %v841
      %v848 = vsel %vm846, %v843, %v845
      %v852 = vsel %vm552, %v836, 0
      %v855 = vsel %vm552, %v837, 0
      %857 = vmatpush.bf16.msra.mxu0 0
      %858 = vmatpush.bf16.msra.mxu0 0
      %859 = vmatpush.bf16.msra.mxu0 0
      %860 = vmatpush.bf16.msra.mxu0 0
      %861 = vmatpush.bf16.msra.mxu0 0
      %862 = vmatpush.bf16.msra.mxu0 0
      %863 = vmatpush.bf16.msra.mxu0 %v848
      %864 = vmatpush.bf16.msra.mxu0 %v847
      %865 = vmatmul.bf16.gmra.mxu0 %v852
      %v866 = vpop.f32.mrf.mxu0
      %v867 = vadd.f32 0.0, %v866
      %v868 = vpop.f32.mrf.mxu0
      %v869 = vadd.f32 0.0, %v868
      %870 = vmatmul.bf16.gmra.mxu0 %v855
      %v871 = vpop.f32.mrf.mxu0
      %v872 = vadd.f32 0.0, %v871
      %v873 = vpop.f32.mrf.mxu0
      %v874 = vadd.f32 0.0, %v873
      %875 = vdwg.mxu0
      %v876 = vadd.f32 %v823, %v867
      %v877 = vadd.f32 %v824, %v869
      %v878 = vadd.f32 %v825, %v872
      %v879 = vadd.f32 %v826, %v874
      %s880 = scalar_lea.vmem %s0, 224
      %v881 = vld [vmem:[%s880] sm:$0xff]
      %v882 = vld [vmem:[%s880 + $0x8] sm:$0xff]
      %v883 = vld [vmem:[%s880 + $0x10] sm:$0xff]
      %v884 = vld [vmem:[%s880 + $0x18] sm:$0xff]
      %v885 = vmul.f32 %v881, %v490
      %v886 = vmul.f32 %v882, %v491
      %v887 = vmul.f32 %v883, %v492
      %v888 = vmul.f32 %v884, %v493
      %v889 = vpack.c.bf16 %v886, %v885
      %v890 = vpack.c.bf16 %v888, %v887
      %891 = vrot.lane.b32.xlu0 %v535, 63
      %v892 = vpop.permute.xlu0 %891
      %893 = vrot.lane.b32.xlu0 %v536, 63
      %v894 = vpop.permute.xlu0 %893
      %895 = vrot.lane.b32.xlu0 %v537, 63
      %v896 = vpop.permute.xlu0 %895
      %897 = vrot.lane.b32.xlu0 %v538, 63
      %v898 = vpop.permute.xlu0 %897
      %vm899 = vcmask 515072
      %v900 = vsel %vm899, %v892, %v894
      %v901 = vsel %vm899, %v896, %v898
      %v905 = vsel %vm552, %v889, 0
      %v908 = vsel %vm552, %v890, 0
      %910 = vmatpush.bf16.msra.mxu0 0
      %911 = vmatpush.bf16.msra.mxu0 0
      %912 = vmatpush.bf16.msra.mxu0 0
      %913 = vmatpush.bf16.msra.mxu0 0
      %914 = vmatpush.bf16.msra.mxu0 0
      %915 = vmatpush.bf16.msra.mxu0 0
      %916 = vmatpush.bf16.msra.mxu0 %v901
      %917 = vmatpush.bf16.msra.mxu0 %v900
      %918 = vmatmul.bf16.gmra.mxu0 %v905
      %v919 = vpop.f32.mrf.mxu0
      %v920 = vadd.f32 0.0, %v919
      %v921 = vpop.f32.mrf.mxu0
      %v922 = vadd.f32 0.0, %v921
      %923 = vmatmul.bf16.gmra.mxu0 %v908
      %v924 = vpop.f32.mrf.mxu0
      %v925 = vadd.f32 0.0, %v924
      %v926 = vpop.f32.mrf.mxu0
      %v927 = vadd.f32 0.0, %v926
      %928 = vdwg.mxu0
      %v929 = vadd.f32 %v876, %v920
      %v930 = vadd.f32 %v877, %v922
      %v931 = vadd.f32 %v878, %v925
      %v932 = vadd.f32 %v879, %v927
      %s933 = scalar_lea.vmem %s0, 256
      %v934 = vld [vmem:[%s933] sm:$0xff]
      %v935 = vld [vmem:[%s933 + $0x8] sm:$0xff]
      %v936 = vld [vmem:[%s933 + $0x10] sm:$0xff]
      %v937 = vld [vmem:[%s933 + $0x18] sm:$0xff]
      %v938 = vmul.f32 %v934, %v490
      %v939 = vmul.f32 %v935, %v491
      %v940 = vmul.f32 %v936, %v492
      %v941 = vmul.f32 %v937, %v493
      %v942 = vpack.c.bf16 %v939, %v938
      %v943 = vpack.c.bf16 %v941, %v940
      %944 = vrot.lane.b32.xlu0 %v535, 62
      %v945 = vpop.permute.xlu0 %944
      %946 = vrot.lane.b32.xlu0 %v536, 62
      %v947 = vpop.permute.xlu0 %946
      %948 = vrot.lane.b32.xlu0 %v537, 62
      %v949 = vpop.permute.xlu0 %948
      %950 = vrot.lane.b32.xlu0 %v538, 62
      %v951 = vpop.permute.xlu0 %950
      %vm952 = vcmask 506880
      %v953 = vsel %vm952, %v945, %v947
      %v954 = vsel %vm952, %v949, %v951
      %v958 = vsel %vm552, %v942, 0
      %v961 = vsel %vm552, %v943, 0
      %963 = vmatpush.bf16.msra.mxu0 0
      %964 = vmatpush.bf16.msra.mxu0 0
      %965 = vmatpush.bf16.msra.mxu0 0
      %966 = vmatpush.bf16.msra.mxu0 0
      %967 = vmatpush.bf16.msra.mxu0 0
      %968 = vmatpush.bf16.msra.mxu0 0
      %969 = vmatpush.bf16.msra.mxu0 %v954
      %970 = vmatpush.bf16.msra.mxu0 %v953
      %971 = vmatmul.bf16.gmra.mxu0 %v958
      %v972 = vpop.f32.mrf.mxu0
      %v973 = vadd.f32 0.0, %v972
      %v974 = vpop.f32.mrf.mxu0
      %v975 = vadd.f32 0.0, %v974
      %976 = vmatmul.bf16.gmra.mxu0 %v961
      %v977 = vpop.f32.mrf.mxu0
      %v978 = vadd.f32 0.0, %v977
      %v979 = vpop.f32.mrf.mxu0
      %v980 = vadd.f32 0.0, %v979
      %981 = vdwg.mxu0
      %v982 = vadd.f32 %v929, %v973
      %v983 = vadd.f32 %v930, %v975
      %v984 = vadd.f32 %v931, %v978
      %v985 = vadd.f32 %v932, %v980
      %s986 = sld [smem:[#allocation2]]
      %v987 = vld [vmem:[%s451] sm:$0x1]
      %v988 = vunpack.c.l.bf16 %v987
      %v989 = vstv %s986
      %v990 = vmul.f32 %v989, %v988
      %v991 = vperm.slane %v990, 0
      %v992 = vadd.f32 %v982, %v991
      %v993 = vadd.f32 %v983, %v991
      %v994 = vadd.f32 %v984, %v991
      %v995 = vadd.f32 %v985, %v991
      %v996 = vld [vmem:[%s3] sm:$0xff]
      %v997 = vld [vmem:[%s3 + $0x8] sm:$0xff]
      %v998 = vld [vmem:[%s3 + $0x10] sm:$0xff]
      %v999 = vld [vmem:[%s3 + $0x18] sm:$0xff]
      %1001 = vset.pattern.permute.xlu0 0
      %1002 = vperm.xlu0 %1001, %v996
      %v1003 = vpop.permute.xlu0 %1002
      %1006 = vset.pattern.permute.xlu0 0
      %1007 = vperm.xlu0 %1006, %v997
      %v1008 = vpop.permute.xlu0 %1007
      %1011 = vset.pattern.permute.xlu0 0
      %1012 = vperm.xlu0 %1011, %v998
      %v1013 = vpop.permute.xlu0 %1012
      %1016 = vset.pattern.permute.xlu0 0
      %1017 = vperm.xlu0 %1016, %v999
      %v1018 = vpop.permute.xlu0 %1017
      %v1020 = vadd.f32 %v992, %v1003
      %v1021 = vadd.f32 %v993, %v1008
      %v1022 = vadd.f32 %v994, %v1013
      %v1023 = vadd.f32 %v995, %v1018
      %vm1024 = vcmp.ge.f32.partialorder %v1020, 0.0
      %vm1025 = vcmp.ge.f32.partialorder %v1021, 0.0
      %vm1026 = vcmp.ge.f32.partialorder %v1022, 0.0
      %vm1027 = vcmp.ge.f32.partialorder %v1023, 0.0
      %v1028 = vmul.f32 %v1020, 0.2
      %v1029 = vmul.f32 %v1021, 0.2
      %v1030 = vmul.f32 %v1022, 0.2
      %v1031 = vmul.f32 %v1023, 0.2
      %v1032 = vsel %vm1024, %v1020, %v1028
      %v1033 = vsel %vm1025, %v1021, %v1029
      %v1034 = vsel %vm1026, %v1022, %v1030
      %v1035 = vsel %vm1027, %v1023, %v1031
      %v1036 = vpack.c.bf16 %v1032, %v1032
      %v1037 = vpack.c.bf16 %v1033, %v1033
      %v1038 = vpack.c.bf16 %v1034, %v1034
      %v1039 = vpack.c.bf16 %v1035, %v1035
      %1040 = vst [vmem:[%s456] sm:$0xf] %v1036
      %1041 = vst [vmem:[%s456 + $0x4] sm:$0xf] %v1037
      %1042 = vst [vmem:[%s456 + $0x8] sm:$0xf] %v1038
      %1043 = vst [vmem:[%s456 + $0xc] sm:$0xf] %v1039
      %v1044 = vld [vmem:[%s4] sm:$0x7]
      %v1045 = vld [vmem:[%s443] sm:$0x1]
      %v1047 = vperm.slane %v1045, 0
      %v1049 = vmul.f32 %v1044, %v1047
      %v1050 = vpack.c.bf16 %v1049, %v1049
      %v1051 = vld [vmem:[%s6] sm:$0x7]
      %1053 = vset.pattern.permute.xlu0 0
      %1054 = vperm.xlu0 %1053, %v1051
      %v1055 = vpop.permute.xlu0 %1054
      %v1061 = vunpack.c.l.b16 %v1036
      %v1062 = vunpack.c.l.b16 %v1037
      %v1063 = vunpack.c.l.b16 %v1038
      %v1064 = vunpack.c.l.b16 %v1039
      %v1065 = vpack.c.b16 %v1062, %v1061
      %v1066 = vpack.c.b16 %v1064, %v1063
      %v1070 = vsel %vm552, %v1050, 0
      %1072 = vmatpush.bf16.msra.mxu0 0
      %1073 = vmatpush.bf16.msra.mxu0 0
      %1074 = vmatpush.bf16.msra.mxu0 0
      %1075 = vmatpush.bf16.msra.mxu0 0
      %1076 = vmatpush.bf16.msra.mxu0 0
      %1077 = vmatpush.bf16.msra.mxu0 0
      %1078 = vmatpush.bf16.msra.mxu0 %v1066
      %1079 = vmatpush.bf16.msra.mxu0 %v1065
      %1080 = vmatmul.bf16.gmra.mxu0 %v1070
      %v1081 = vpop.f32.mrf.mxu0
      %v1082 = vadd.f32 %v1055, %v1081
      %v1083 = vpop.f32.mrf.mxu0
      %1084 = vdwg.mxu0
      %vm1085 = vcmp.ge.f32.partialorder %v1082, 0.0
      %v1086 = vmul.f32 %v1082, 0.2
      %v1087 = vsel %vm1085, %v1082, %v1086
      %1088 = vst [vmem:[%s460] sm:$0x7] %v1087
      %p1089 = scmp.lt.s32.totalorder %s24, 1
      %s1090 = scalar_select %p1089, %s24, 1
      %s1091 = smul.addr %s1090, 4
      %s1092 = smul.addr %s1091, 4
      %s1093 = scalar_lea.vmem %s10, %s1092
      %p1094 = scmp.lt.s32.totalorder %s24, 1
      %s1095 = scalar_select %p1094, %s24, 1
      %s1096 = smul.addr %s1095, 4
      %s1097 = scalar_lea.vmem %s11, %s1096
      // Predicated region
      $region61: #{generator_forward.5} parent=59 // pred_check
        %p1098 = pneg %p277
      $region62: #{generator_forward.5} parent=59 // pred_check_branch
        %1100 = sbr.rel (%p1098) target = $region64
      $region63: #{generator_forward.5} parent=59 // pred_region
        _
      $region64: #{generator_forward.5} parent=59 // pred_fallthru
        _
      // Predicated region
      $region65: #{generator_forward.5} parent=59 // pred_check
        %p1101 = pneg %p303
      $region66: #{generator_forward.5} parent=59 // pred_check_branch
        %1103 = sbr.rel (%p1101) target = $region68
      $region67: #{generator_forward.5} parent=59 // pred_region
        _
      $region68: #{generator_forward.5} parent=59 // pred_fallthru
        _
    $region60: #{generator_forward.5} parent=5 // pred_fallthru
      _
    %p1104 = scmp.le.s32.totalorder 2, %s19
    // Predicated region
    $region69: #{generator_forward.5} parent=5 // pred_check
      %p1105 = pneg %p1104
    $region70: #{generator_forward.5} parent=5 // pred_check_branch
      %1107 = sbr.rel (%p1105) target = $region72
    $region71: #{generator_forward.5} parent=5 // pred_region
      %s1108 = ssub.s32 %s19, 2
      // Predicated region
      $region73: #{generator_forward.5} parent=71 // pred_check
        %p1109 = pneg %p283
      $region74: #{generator_forward.5} parent=71 // pred_check_branch
        %1111 = sbr.rel (%p1109) target = $region76
      $region75: #{generator_forward.5} parent=71 // pred_region
        %p1112 = scmp.lt.s32.totalorder %s25, 1
        %s1113 = scalar_select %p1112, %s25, 1
        %s1114 = smul.addr %s1113, 4
        %s1115 = smul.addr %s1114, 4
        %s1116 = scalar_lea.vmem %s10, %s1115
      $region76: #{generator_forward.5} parent=71 // pred_fallthru
        _
      // Predicated region
      $region77: #{generator_forward.5} parent=71 // pred_check
        %p1117 = pneg %p309
      $region78: #{generator_forward.5} parent=71 // pred_check_branch
        %1119 = sbr.rel (%p1117) target = $region80
      $region79: #{generator_forward.5} parent=71 // pred_region
        %p1120 = scmp.lt.s32.totalorder %s25, 1
        %s1121 = scalar_select %p1120, %s25, 1
        %s1122 = smul.addr %s1121, 4
        %s1123 = scalar_lea.vmem %s11, %s1122
      $region80: #{generator_forward.5} parent=71 // pred_fallthru
        _
    $region72: #{generator_forward.5} parent=5 // pred_fallthru
      _
  $region6: #{generator_forward.5} parent=0 // loop_footer
    %s23 = sadd.s32 1, %s19
  $region7: #{generator_forward.5} parent=0 // loop_footer_branch
    %18 = sbr.rel target = $region3
  $region8: #{generator_forward.5} parent=0 // loop_exit
    _

// kernel: generator_forward.6
$region0: #{generator_forward.6}
  #allocation0 [shape = 'u32[]', space=smem, size = 0x4, offset = 0x4, fixed_abs, tag = 'smem constant byte address 0x4 - core index']
  #allocation1 [shape = 'u32[72,128]{1,0:T(1,128)}', space=vmem, size = 0x9000, scoped, tag = 'internal scratch']
  #allocation2 [shape = 'f32[1]{0:T(128)S(6)}', space=smem, size = 0x200, scoped, tag = 'scoped memory for generator_forward.6']
  %s0 = inlined_call_operand.vmem [shape: f32[9,16,32], index: 0, kind: input, shape index: {}]
  %s1 = inlined_call_operand.vmem [shape: f32[2,1,32], index: 1, kind: input, shape index: {}]
  %s2 = inlined_call_operand.vmem [shape: f32[2,16,1], index: 2, kind: input, shape index: {}]
  %s3 = inlined_call_operand.vmem [shape: f32[16,1], index: 3, kind: input, shape index: {}]
  %s4 = inlined_call_operand.vmem [shape: bf16[2,32,176], index: 4, kind: input, shape index: {}]
  %s5 = inlined_call_operand.vmem [shape: bf16[2,1,128], index: 5, kind: input, shape index: {}]
  %s6 = inlined_call_operand.<no memory space> [shape: f32[1], index: 6, kind: input, shape index: {}]
  %s7 = inlined_call_operand.vmem [shape: bf16[2,16,128], index: 7, kind: output, shape index: {}]
  %s8 = sld [smem:[#allocation0]]
  $region61: #{generator_forward.6} parent=0
    _
  %s10 = ssub.s32 1, %s8
  %s11 = scalar_select 0, %s10, %s8
  %12 = sst [smem:[#allocation2]] %s6
  loop: start=0, step=1, limit=4
  $region2: #{generator_forward.6} parent=0 // loop_pre_header
    _
  $region3: #{generator_forward.6} parent=0 // loop_header
    %s14 = sphi 0, %s18
    %p15 = scmp.ge.s32.totalorder %s14, 4
    %s22 = sphi 0, %s22
    %s24 = sphi 0, %s22
    %s25 = sphi 0, %s24
    %s39 = sphi 0, %s25
    %s45 = sphi 0, %s47
    %s48 = sphi 0, %s45
    %s49 = sphi 0, %s48
    %s65 = sphi 0, %s49
    %s71 = sphi 0, %s73
    %s74 = sphi 0, %s71
    %s75 = sphi 0, %s74
    %s91 = sphi 0, %s75
    %s95 = sphi 0, %s95
    %s97 = sphi 0, %s95
    %s98 = sphi 0, %s97
    %s112 = sphi 0, %s98
    %s118 = sphi 0, %s120
    %s121 = sphi 0, %s118
    %s122 = sphi 0, %s121
    %s138 = sphi 0, %s122
    %s144 = sphi 0, %s146
    %s147 = sphi 0, %s144
    %s148 = sphi 0, %s147
    %s164 = sphi 0, %s148
    %s168 = sphi 0, %s168
    %s170 = sphi 0, %s168
    %s171 = sphi 0, %s170
    %s185 = sphi 0, %s171
    %s191 = sphi 0, %s193
    %s194 = sphi 0, %s191
    %s195 = sphi 0, %s194
    %s211 = sphi 0, %s195
  $region4: #{generator_forward.6} parent=0 // loop_header_branch
    %17 = sbr.rel (%p15) target = $region8
  $region5: #{generator_forward.6} parent=0 // loop_body
    %s19 = ssub.s32 %s14, 1
    %s20 = ssub.s32 %s14, 2
    %s21 = sadd.s32 %s14, 1
    %s23 = sadd.s32 %s22, 1
    %p26 = scmp.eq.s32.totalorder %s14, 1
    %p27 = scmp.ne.s32.totalorder %s22, %s24
    %p28 = scmp.eq.s32.totalorder %s14, 0
    %p29 = por %p27, %p28
    %p30 = scmp.ne.s32.totalorder %s22, %s24
    %p31 = scmp.eq.s32.totalorder %s19, 1
    %p32 = por %p30, %p31
    %p33 = scmp.ne.s32.totalorder %s24, %s25
    %p34 = scmp.eq.s32.totalorder %s19, 0
    %p35 = por %p33, %p34
    %p36 = scmp.ne.s32.totalorder %s24, %s25
    %p37 = scmp.eq.s32.totalorder %s20, 1
    %p38 = por %p36, %p37
    %p40 = scmp.ne.s32.totalorder %s25, %s39
    %p41 = scmp.eq.s32.totalorder %s20, 0
    %p42 = por %p40, %p41
    %s43 = ssub.s32 %s14, %s21
    %p44 = scmp.eq.s32.totalorder %s43, 0
    %s46 = sadd.s32 %s45, 1
    %s47 = scalar_select %p44, %s45, %s46
    %p50 = pneg %p44
    %p51 = scmp.eq.s32.totalorder %s14, 1
    %p52 = por %p50, %p51
    %p53 = scmp.ne.s32.totalorder %s45, %s48
    %p54 = scmp.eq.s32.totalorder %s14, 0
    %p55 = por %p53, %p54
    %p56 = scmp.ne.s32.totalorder %s45, %s48
    %p57 = scmp.eq.s32.totalorder %s19, 1
    %p58 = por %p56, %p57
    %p59 = scmp.ne.s32.totalorder %s48, %s49
    %p60 = scmp.eq.s32.totalorder %s19, 0
    %p61 = por %p59, %p60
    %p62 = scmp.ne.s32.totalorder %s48, %s49
    %p63 = scmp.eq.s32.totalorder %s20, 1
    %p64 = por %p62, %p63
    %p66 = scmp.ne.s32.totalorder %s49, %s65
    %p67 = scmp.eq.s32.totalorder %s20, 0
    %p68 = por %p66, %p67
    %s69 = ssub.s32 %s14, %s21
    %p70 = scmp.eq.s32.totalorder %s69, 0
    %s72 = sadd.s32 %s71, 1
    %s73 = scalar_select %p70, %s71, %s72
    %p76 = pneg %p70
    %p77 = scmp.eq.s32.totalorder %s14, 1
    %p78 = por %p76, %p77
    %p79 = scmp.ne.s32.totalorder %s71, %s74
    %p80 = scmp.eq.s32.totalorder %s14, 0
    %p81 = por %p79, %p80
    %p82 = scmp.ne.s32.totalorder %s71, %s74
    %p83 = scmp.eq.s32.totalorder %s19, 1
    %p84 = por %p82, %p83
    %p85 = scmp.ne.s32.totalorder %s74, %s75
    %p86 = scmp.eq.s32.totalorder %s19, 0
    %p87 = por %p85, %p86
    %p88 = scmp.ne.s32.totalorder %s74, %s75
    %p89 = scmp.eq.s32.totalorder %s20, 1
    %p90 = por %p88, %p89
    %p92 = scmp.ne.s32.totalorder %s75, %s91
    %p93 = scmp.eq.s32.totalorder %s20, 0
    %p94 = por %p92, %p93
    %s96 = sadd.s32 %s95, 1
    %p99 = scmp.eq.s32.totalorder %s14, 1
    %p100 = scmp.ne.s32.totalorder %s95, %s97
    %p101 = scmp.eq.s32.totalorder %s14, 0
    %p102 = por %p100, %p101
    %p103 = scmp.ne.s32.totalorder %s95, %s97
    %p104 = scmp.eq.s32.totalorder %s19, 1
    %p105 = por %p103, %p104
    %p106 = scmp.ne.s32.totalorder %s97, %s98
    %p107 = scmp.eq.s32.totalorder %s19, 0
    %p108 = por %p106, %p107
    %p109 = scmp.ne.s32.totalorder %s97, %s98
    %p110 = scmp.eq.s32.totalorder %s20, 1
    %p111 = por %p109, %p110
    %p113 = scmp.ne.s32.totalorder %s98, %s112
    %p114 = scmp.eq.s32.totalorder %s20, 0
    %p115 = por %p113, %p114
    %s116 = ssub.s32 %s14, %s21
    %p117 = scmp.eq.s32.totalorder %s116, 0
    %s119 = sadd.s32 %s118, 1
    %s120 = scalar_select %p117, %s118, %s119
    %p123 = pneg %p117
    %p124 = scmp.eq.s32.totalorder %s14, 1
    %p125 = por %p123, %p124
    %p126 = scmp.ne.s32.totalorder %s118, %s121
    %p127 = scmp.eq.s32.totalorder %s14, 0
    %p128 = por %p126, %p127
    %p129 = scmp.ne.s32.totalorder %s118, %s121
    %p130 = scmp.eq.s32.totalorder %s19, 1
    %p131 = por %p129, %p130
    %p132 = scmp.ne.s32.totalorder %s121, %s122
    %p133 = scmp.eq.s32.totalorder %s19, 0
    %p134 = por %p132, %p133
    %p135 = scmp.ne.s32.totalorder %s121, %s122
    %p136 = scmp.eq.s32.totalorder %s20, 1
    %p137 = por %p135, %p136
    %p139 = scmp.ne.s32.totalorder %s122, %s138
    %p140 = scmp.eq.s32.totalorder %s20, 0
    %p141 = por %p139, %p140
    %s142 = ssub.s32 %s14, %s21
    %p143 = scmp.eq.s32.totalorder %s142, 0
    %s145 = sadd.s32 %s144, 1
    %s146 = scalar_select %p143, %s144, %s145
    %p149 = pneg %p143
    %p150 = scmp.eq.s32.totalorder %s14, 1
    %p151 = por %p149, %p150
    %p152 = scmp.ne.s32.totalorder %s144, %s147
    %p153 = scmp.eq.s32.totalorder %s14, 0
    %p154 = por %p152, %p153
    %p155 = scmp.ne.s32.totalorder %s144, %s147
    %p156 = scmp.eq.s32.totalorder %s19, 1
    %p157 = por %p155, %p156
    %p158 = scmp.ne.s32.totalorder %s147, %s148
    %p159 = scmp.eq.s32.totalorder %s19, 0
    %p160 = por %p158, %p159
    %p161 = scmp.ne.s32.totalorder %s147, %s148
    %p162 = scmp.eq.s32.totalorder %s20, 1
    %p163 = por %p161, %p162
    %p165 = scmp.ne.s32.totalorder %s148, %s164
    %p166 = scmp.eq.s32.totalorder %s20, 0
    %p167 = por %p165, %p166
    %s169 = sadd.s32 %s168, 1
    %p172 = scmp.eq.s32.totalorder %s14, 1
    %p173 = scmp.ne.s32.totalorder %s168, %s170
    %p174 = scmp.eq.s32.totalorder %s14, 0
    %p175 = por %p173, %p174
    %p176 = scmp.ne.s32.totalorder %s168, %s170
    %p177 = scmp.eq.s32.totalorder %s19, 1
    %p178 = por %p176, %p177
    %p179 = scmp.ne.s32.totalorder %s170, %s171
    %p180 = scmp.eq.s32.totalorder %s19, 0
    %p181 = por %p179, %p180
    %p182 = scmp.ne.s32.totalorder %s170, %s171
    %p183 = scmp.eq.s32.totalorder %s20, 1
    %p184 = por %p182, %p183
    %p186 = scmp.ne.s32.totalorder %s171, %s185
    %p187 = scmp.eq.s32.totalorder %s20, 0
    %p188 = por %p186, %p187
    %s189 = ssub.s32 %s14, %s21
    %p190 = scmp.eq.s32.totalorder %s189, 0
    %s192 = sadd.s32 %s191, 1
    %s193 = scalar_select %p190, %s191, %s192
    %p196 = pneg %p190
    %p197 = scmp.eq.s32.totalorder %s14, 1
    %p198 = por %p196, %p197
    %p199 = scmp.ne.s32.totalorder %s191, %s194
    %p200 = scmp.eq.s32.totalorder %s14, 0
    %p201 = por %p199, %p200
    %p202 = scmp.ne.s32.totalorder %s191, %s194
    %p203 = scmp.eq.s32.totalorder %s19, 1
    %p204 = por %p202, %p203
    %p205 = scmp.ne.s32.totalorder %s194, %s195
    %p206 = scmp.eq.s32.totalorder %s19, 0
    %p207 = por %p205, %p206
    %p208 = scmp.ne.s32.totalorder %s194, %s195
    %p209 = scmp.eq.s32.totalorder %s20, 1
    %p210 = por %p208, %p209
    %p212 = scmp.ne.s32.totalorder %s195, %s211
    %p213 = scmp.eq.s32.totalorder %s20, 0
    %p214 = por %p212, %p213
    %p215 = scmp.le.s32.totalorder 1, %s14
    %p216 = scmp.lt.s32.totalorder %s14, 3
    %p217 = pnand %p215, %p216
    %p218 = pneg %p217
    // Predicated region
    $region9: #{generator_forward.6} parent=5 // pred_check
      _
    $region10: #{generator_forward.6} parent=5 // pred_check_branch
      %220 = sbr.rel (%p217) target = $region12
    $region11: #{generator_forward.6} parent=5 // pred_region
      %s221 = ssub.s32 %s14, 1
      // Predicated region
      $region13: #{generator_forward.6} parent=11 // pred_check
        %p222 = pneg %p35
      $region14: #{generator_forward.6} parent=11 // pred_check_branch
        %224 = sbr.rel (%p222) target = $region16
      $region15: #{generator_forward.6} parent=11 // pred_region
        _
      $region16: #{generator_forward.6} parent=11 // pred_fallthru
        _
      // Predicated region
      $region17: #{generator_forward.6} parent=11 // pred_check
        %p225 = pneg %p108
      $region18: #{generator_forward.6} parent=11 // pred_check_branch
        %227 = sbr.rel (%p225) target = $region20
      $region19: #{generator_forward.6} parent=11 // pred_region
        _
      $region20: #{generator_forward.6} parent=11 // pred_fallthru
        _
      // Predicated region
      $region21: #{generator_forward.6} parent=11 // pred_check
        %p228 = pneg %p181
      $region22: #{generator_forward.6} parent=11 // pred_check_branch
        %230 = sbr.rel (%p228) target = $region24
      $region23: #{generator_forward.6} parent=11 // pred_region
        _
      $region24: #{generator_forward.6} parent=11 // pred_fallthru
        _
    $region12: #{generator_forward.6} parent=5 // pred_fallthru
      _
    %p231 = scmp.lt.s32.totalorder %s14, 2
    // Predicated region
    $region25: #{generator_forward.6} parent=5 // pred_check
      %p232 = pneg %p231
    $region26: #{generator_forward.6} parent=5 // pred_check_branch
      %234 = sbr.rel (%p232) target = $region28
    $region27: #{generator_forward.6} parent=5 // pred_region
      // Predicated region
      $region29: #{generator_forward.6} parent=27 // pred_check
        %p235 = pneg %p55
      $region30: #{generator_forward.6} parent=27 // pred_check_branch
        %237 = sbr.rel (%p235) target = $region32
      $region31: #{generator_forward.6} parent=27 // pred_region
        %p238 = scmp.lt.s32.totalorder %s14, 1
        %s239 = scalar_select %p238, %s14, 1
        %s240 = scalar_lea.vmem %s1, %s239
      $region32: #{generator_forward.6} parent=27 // pred_fallthru
        _
      // Predicated region
      $region33: #{generator_forward.6} parent=27 // pred_check
        %p241 = pneg %p81
      $region34: #{generator_forward.6} parent=27 // pred_check_branch
        %243 = sbr.rel (%p241) target = $region36
      $region35: #{generator_forward.6} parent=27 // pred_region
        %p244 = scmp.lt.s32.totalorder %s14, 1
        %s245 = scalar_select %p244, %s14, 1
        %s246 = smul.addr %s245, 2
        %s247 = smul.addr %s246, 8
        %s248 = scalar_lea.vmem %s2, %s247
      $region36: #{generator_forward.6} parent=27 // pred_fallthru
        _
      // Predicated region
      $region37: #{generator_forward.6} parent=27 // pred_check
        %p249 = pneg %p128
      $region38: #{generator_forward.6} parent=27 // pred_check_branch
        %251 = sbr.rel (%p249) target = $region40
      $region39: #{generator_forward.6} parent=27 // pred_region
        %p252 = scmp.lt.s32.totalorder %s14, 1
        %s253 = scalar_select %p252, %s14, 1
        %s254 = smul.addr %s253, 8
        %s255 = smul.addr %s254, 4
        %s256 = scalar_lea.vmem %s4, %s255
      $region40: #{generator_forward.6} parent=27 // pred_fallthru
        _
      // Predicated region
      $region41: #{generator_forward.6} parent=27 // pred_check
        %p257 = pneg %p154
      $region42: #{generator_forward.6} parent=27 // pred_check_branch
        %259 = sbr.rel (%p257) target = $region44
      $region43: #{generator_forward.6} parent=27 // pred_region
        %p260 = scmp.lt.s32.totalorder %s14, 1
        %s261 = scalar_select %p260, %s14, 1
        %s262 = scalar_lea.vmem %s5, %s261
      $region44: #{generator_forward.6} parent=27 // pred_fallthru
        _
    $region28: #{generator_forward.6} parent=5 // pred_fallthru
      _
    %p263 = scmp.le.s32.totalorder 1, %s14
    %p264 = scmp.lt.s32.totalorder %s14, 3
    %p265 = pnand %p263, %p264
    %p266 = pneg %p265
    // Predicated region
    $region45: #{generator_forward.6} parent=5 // pred_check
      _
    $region46: #{generator_forward.6} parent=5 // pred_check_branch
      %268 = sbr.rel (%p265) target = $region48
    $region47: #{generator_forward.6} parent=5 // pred_region
      %s269 = ssub.s32 %s14, 1
      %p270 = pneg %p35
      %p271 = pneg %p32
      %p272 = scmp.lt.s32.totalorder %s19, 1
      %s273 = scalar_select %p272, %s19, 1
      %s274 = scalar_lea.vmem %s1, %s273
      %p275 = pneg %p61
      %p276 = pneg %p58
      %p277 = scmp.lt.s32.totalorder %s19, 1
      %s278 = scalar_select %p277, %s19, 1
      %s279 = smul.addr %s278, 2
      %s280 = smul.addr %s279, 8
      %s281 = scalar_lea.vmem %s2, %s280
      %p282 = pneg %p87
      %p283 = pneg %p84
      %p284 = pneg %p108
      %p285 = pneg %p105
      %p286 = scmp.lt.s32.totalorder %s19, 1
      %s287 = scalar_select %p286, %s19, 1
      %s288 = smul.addr %s287, 8
      %s289 = smul.addr %s288, 4
      %s290 = scalar_lea.vmem %s4, %s289
      %p291 = pneg %p134
      %p292 = pneg %p131
      %p293 = scmp.lt.s32.totalorder %s19, 1
      %s294 = scalar_select %p293, %s19, 1
      %s295 = scalar_lea.vmem %s5, %s294
      %p296 = pneg %p160
      %p297 = pneg %p157
      %p298 = pneg %p181
      %p299 = pneg %p178
      %p300 = pneg %p207
      %p301 = pneg %p204
      %p302 = scmp.lt.s32.totalorder %s19, 1
      %s303 = scalar_select %p302, %s19, 1
      %s304 = smul.addr %s303, 2
      %s305 = smul.addr %s304, 4
      %s306 = scalar_lea.vmem %s7, %s305
      %p307 = scmp.lt.s32.totalorder %s19, 1
      %s308 = scalar_select %p307, %s19, 1
      %s309 = scalar_lea.vmem %s1, %s308
      %p310 = scmp.lt.s32.totalorder %s19, 1
      %s311 = scalar_select %p310, %s19, 1
      %s312 = smul.addr %s311, 2
      %s313 = smul.addr %s312, 8
      %s314 = scalar_lea.vmem %s2, %s313
      %p315 = scmp.lt.s32.totalorder %s19, 1
      %s316 = scalar_select %p315, %s19, 1
      %s317 = smul.addr %s316, 8
      %s318 = smul.addr %s317, 4
      %s319 = scalar_lea.vmem %s4, %s318
      %p320 = scmp.lt.s32.totalorder %s19, 1
      %s321 = scalar_select %p320, %s19, 1
      %s322 = scalar_lea.vmem %s5, %s321
      %p323 = scmp.lt.s32.totalorder %s19, 1
      %s324 = scalar_select %p323, %s19, 1
      %s325 = smul.addr %s324, 2
      %s326 = smul.addr %s325, 4
      %s327 = scalar_lea.vmem %s7, %s326
      %v329 = vld [vmem:[%s314] sm:$0xff]
      %v330 = vld [vmem:[%s314 + $0x8] sm:$0xff]
      %v331 = vld [vmem:[%s309] sm:$0x1]
      %333 = vset.pattern.permute.xlu0 0
      %334 = vperm.xlu0 %333, %v329
      %v335 = vpop.permute.xlu0 %334
      %338 = vset.pattern.permute.xlu0 0
      %339 = vperm.xlu0 %338, %v330
      %v340 = vpop.permute.xlu0 %339
      %v343 = vperm.slane %v331, 0
      %v345 = vmul.f32 %v335, %v343
      %v346 = vmul.f32 %v340, %v343
      %v347 = vld [vmem:[%s0] sm:$0xff]
      %v348 = vld [vmem:[%s0 + $0x8] sm:$0xff]
      %v349 = vmul.f32 %v347, %v345
      %v350 = vmul.f32 %v348, %v346
      %v351 = vpack.c.bf16 %v350, %v349
      %v352 = vld [vmem:[%s319] sm:$0xf]
      %v353 = vld [vmem:[%s319 + $0x8] sm:$0xf]
      %v354 = vld [vmem:[%s319 + $0x10] sm:$0xf]
      %v355 = vld [vmem:[%s319 + $0x18] sm:$0xf]
      %s356 = scalar_lea.vmem %s0, 16
      %v357 = vld [vmem:[%s356] sm:$0xff]
      %v358 = vld [vmem:[%s356 + $0x8] sm:$0xff]
      %v359 = vmul.f32 %v357, %v345
      %v360 = vmul.f32 %v358, %v346
      %v361 = vpack.c.bf16 %v360, %v359
      %v362 = vld [vmem:[%s319] sm:$0xff]
      %v363 = vld [vmem:[%s319 + $0x8] sm:$0xff]
      %v364 = vld [vmem:[%s319 + $0x10] sm:$0xff]
      %v365 = vld [vmem:[%s319 + $0x18] sm:$0xff]
      %v370 = vunpack.c.l.b16 %v362
      %v371 = vunpack.c.h.b16 %v362
      %v372 = vunpack.c.l.b16 %v363
      %v373 = vunpack.c.h.b16 %v363
      %v374 = vunpack.c.l.b16 %v364
      %v375 = vunpack.c.h.b16 %v364
      %v376 = vunpack.c.l.b16 %v365
      %v377 = vunpack.c.h.b16 %v365
      %v378 = vpack.c.b16 %v372, %v370
      %v379 = vpack.c.b16 %v373, %v371
      %v380 = vpack.c.b16 %v376, %v374
      %v381 = vpack.c.b16 %v377, %v375
      %382 = vrot.lane.b32.xlu0 %v378, 127
      %v383 = vpop.permute.xlu0 %382
      %384 = vrot.lane.b32.xlu0 %v379, 127
      %v385 = vpop.permute.xlu0 %384
      %386 = vrot.lane.b32.xlu0 %v380, 127
      %v387 = vpop.permute.xlu0 %386
      %388 = vrot.lane.b32.xlu0 %v381, 127
      %v389 = vpop.permute.xlu0 %388
      %vm390 = vcmask 1039360
      %v391 = vsel %vm390, %v383, %v385
      %v392 = vsel %vm390, %v387, %v389
      %vm395 = vcmask 261120
      %v397 = vsel %vm395, %v361, 0
      %399 = vmatpush.bf16.msra.mxu0 0
      %400 = vmatpush.bf16.msra.mxu0 0
      %401 = vmatpush.bf16.msra.mxu0 0
      %402 = vmatpush.bf16.msra.mxu0 0
      %403 = vmatpush.bf16.msra.mxu0 0
      %404 = vmatpush.bf16.msra.mxu0 0
      %405 = vmatpush.bf16.msra.mxu0 %v392
      %406 = vmatpush.bf16.msra.mxu0 %v391
      %407 = vmatmul.bf16.gmra.mxu0 %v397
      %v408 = vpop.f32.mrf.mxu0
      %v409 = vadd.f32 0.0, %v408
      %v410 = vpop.f32.mrf.mxu0
      %v411 = vadd.f32 0.0, %v410
      %412 = vdwg.mxu0
      %v417 = vunpack.c.l.b16 %v352
      %v418 = vunpack.c.l.b16 %v353
      %v419 = vunpack.c.l.b16 %v354
      %v420 = vunpack.c.l.b16 %v355
      %v421 = vpack.c.b16 %v418, %v417
      %v422 = vpack.c.b16 %v420, %v419
      %v426 = vsel %vm395, %v351, 0
      %428 = vmatpush.bf16.msra.mxu0 0
      %429 = vmatpush.bf16.msra.mxu0 0
      %430 = vmatpush.bf16.msra.mxu0 0
      %431 = vmatpush.bf16.msra.mxu0 0
      %432 = vmatpush.bf16.msra.mxu0 0
      %433 = vmatpush.bf16.msra.mxu0 0
      %434 = vmatpush.bf16.msra.mxu0 %v422
      %435 = vmatpush.bf16.msra.mxu0 %v421
      %436 = vmatmul.bf16.gmra.mxu0 %v426
      %v437 = vpop.f32.mrf.mxu0
      %v438 = vadd.f32 %v409, %v437
      %v439 = vpop.f32.mrf.mxu0
      %v440 = vadd.f32 %v411, %v439
      %441 = vdwg.mxu0
      %s442 = scalar_lea.vmem %s0, 32
      %v443 = vld [vmem:[%s442] sm:$0xff]
      %v444 = vld [vmem:[%s442 + $0x8] sm:$0xff]
      %v445 = vmul.f32 %v443, %v345
      %v446 = vmul.f32 %v444, %v346
      %v447 = vpack.c.bf16 %v446, %v445
      %448 = vrot.lane.b32.xlu0 %v378, 126
      %v449 = vpop.permute.xlu0 %448
      %450 = vrot.lane.b32.xlu0 %v379, 126
      %v451 = vpop.permute.xlu0 %450
      %452 = vrot.lane.b32.xlu0 %v380, 126
      %v453 = vpop.permute.xlu0 %452
      %454 = vrot.lane.b32.xlu0 %v381, 126
      %v455 = vpop.permute.xlu0 %454
      %vm456 = vcmask 1031168
      %v457 = vsel %vm456, %v449, %v451
      %v458 = vsel %vm456, %v453, %v455
      %v462 = vsel %vm395, %v447, 0
      %464 = vmatpush.bf16.msra.mxu0 0
      %465 = vmatpush.bf16.msra.mxu0 0
      %466 = vmatpush.bf16.msra.mxu0 0
      %467 = vmatpush.bf16.msra.mxu0 0
      %468 = vmatpush.bf16.msra.mxu0 0
      %469 = vmatpush.bf16.msra.mxu0 0
      %470 = vmatpush.bf16.msra.mxu0 %v458
      %471 = vmatpush.bf16.msra.mxu0 %v457
      %472 = vmatmul.bf16.gmra.mxu0 %v462
      %v473 = vpop.f32.mrf.mxu0
      %v474 = vadd.f32 0.0, %v473
      %v475 = vpop.f32.mrf.mxu0
      %v476 = vadd.f32 0.0, %v475
      %477 = vdwg.mxu0
      %v478 = vadd.f32 %v438, %v474
      %v479 = vadd.f32 %v440, %v476
      %s480 = scalar_lea.vmem %s0, 48
      %v481 = vld [vmem:[%s480] sm:$0xff]
      %v482 = vld [vmem:[%s480 + $0x8] sm:$0xff]
      %v483 = vmul.f32 %v481, %v345
      %v484 = vmul.f32 %v482, %v346
      %v485 = vpack.c.bf16 %v484, %v483
      %486 = vrot.lane.b32.xlu0 %v378, 112
      %v487 = vpop.permute.xlu0 %486
      %488 = vrot.lane.b32.xlu0 %v379, 112
      %v489 = vpop.permute.xlu0 %488
      %490 = vrot.lane.b32.xlu0 %v380, 112
      %v491 = vpop.permute.xlu0 %490
      %492 = vrot.lane.b32.xlu0 %v381, 112
      %v493 = vpop.permute.xlu0 %492
      %vm494 = vcmask 916480
      %v495 = vsel %vm494, %v487, %v489
      %v496 = vsel %vm494, %v491, %v493
      %v500 = vsel %vm395, %v485, 0
      %502 = vmatpush.bf16.msra.mxu0 0
      %503 = vmatpush.bf16.msra.mxu0 0
      %504 = vmatpush.bf16.msra.mxu0 0
      %505 = vmatpush.bf16.msra.mxu0 0
      %506 = vmatpush.bf16.msra.mxu0 0
      %507 = vmatpush.bf16.msra.mxu0 0
      %508 = vmatpush.bf16.msra.mxu0 %v496
      %509 = vmatpush.bf16.msra.mxu0 %v495
      %510 = vmatmul.bf16.gmra.mxu0 %v500
      %v511 = vpop.f32.mrf.mxu0
      %v512 = vadd.f32 0.0, %v511
      %v513 = vpop.f32.mrf.mxu0
      %v514 = vadd.f32 0.0, %v513
      %515 = vdwg.mxu0
      %v516 = vadd.f32 %v478, %v512
      %v517 = vadd.f32 %v479, %v514
      %s518 = scalar_lea.vmem %s0, 64
      %v519 = vld [vmem:[%s518] sm:$0xff]
      %v520 = vld [vmem:[%s518 + $0x8] sm:$0xff]
      %v521 = vmul.f32 %v519, %v345
      %v522 = vmul.f32 %v520, %v346
      %v523 = vpack.c.bf16 %v522, %v521
      %524 = vrot.lane.b32.xlu0 %v378, 111
      %v525 = vpop.permute.xlu0 %524
      %526 = vrot.lane.b32.xlu0 %v379, 111
      %v527 = vpop.permute.xlu0 %526
      %528 = vrot.lane.b32.xlu0 %v380, 111
      %v529 = vpop.permute.xlu0 %528
      %530 = vrot.lane.b32.xlu0 %v381, 111
      %v531 = vpop.permute.xlu0 %530
      %vm532 = vcmask 908288
      %v533 = vsel %vm532, %v525, %v527
      %v534 = vsel %vm532, %v529, %v531
      %v538 = vsel %vm395, %v523, 0
      %540 = vmatpush.bf16.msra.mxu0 0
      %541 = vmatpush.bf16.msra.mxu0 0
      %542 = vmatpush.bf16.msra.mxu0 0
      %543 = vmatpush.bf16.msra.mxu0 0
      %544 = vmatpush.bf16.msra.mxu0 0
      %545 = vmatpush.bf16.msra.mxu0 0
      %546 = vmatpush.bf16.msra.mxu0 %v534
      %547 = vmatpush.bf16.msra.mxu0 %v533
      %548 = vmatmul.bf16.gmra.mxu0 %v538
      %v549 = vpop.f32.mrf.mxu0
      %v550 = vadd.f32 0.0, %v549
      %v551 = vpop.f32.mrf.mxu0
      %v552 = vadd.f32 0.0, %v551
      %553 = vdwg.mxu0
      %v554 = vadd.f32 %v516, %v550
      %v555 = vadd.f32 %v517, %v552
      %s556 = scalar_lea.vmem %s0, 80
      %v557 = vld [vmem:[%s556] sm:$0xff]
      %v558 = vld [vmem:[%s556 + $0x8] sm:$0xff]
      %v559 = vmul.f32 %v557, %v345
      %v560 = vmul.f32 %v558, %v346
      %v561 = vpack.c.bf16 %v560, %v559
      %562 = vrot.lane.b32.xlu0 %v378, 110
      %v563 = vpop.permute.xlu0 %562
      %564 = vrot.lane.b32.xlu0 %v379, 110
      %v565 = vpop.permute.xlu0 %564
      %566 = vrot.lane.b32.xlu0 %v380, 110
      %v567 = vpop.permute.xlu0 %566
      %568 = vrot.lane.b32.xlu0 %v381, 110
      %v569 = vpop.permute.xlu0 %568
      %vm570 = vcmask 900096
      %v571 = vsel %vm570, %v563, %v565
      %v572 = vsel %vm570, %v567, %v569
      %v576 = vsel %vm395, %v561, 0
      %578 = vmatpush.bf16.msra.mxu0 0
      %579 = vmatpush.bf16.msra.mxu0 0
      %580 = vmatpush.bf16.msra.mxu0 0
      %581 = vmatpush.bf16.msra.mxu0 0
      %582 = vmatpush.bf16.msra.mxu0 0
      %583 = vmatpush.bf16.msra.mxu0 0
      %584 = vmatpush.bf16.msra.mxu0 %v572
      %585 = vmatpush.bf16.msra.mxu0 %v571
      %586 = vmatmul.bf16.gmra.mxu0 %v576
      %v587 = vpop.f32.mrf.mxu0
      %v588 = vadd.f32 0.0, %v587
      %v589 = vpop.f32.mrf.mxu0
      %v590 = vadd.f32 0.0, %v589
      %591 = vdwg.mxu0
      %v592 = vadd.f32 %v554, %v588
      %v593 = vadd.f32 %v555, %v590
      %s594 = scalar_lea.vmem %s0, 96
      %v595 = vld [vmem:[%s594] sm:$0xff]
      %v596 = vld [vmem:[%s594 + $0x8] sm:$0xff]
      %v597 = vmul.f32 %v595, %v345
      %v598 = vmul.f32 %v596, %v346
      %v599 = vpack.c.bf16 %v598, %v597
      %600 = vrot.lane.b32.xlu0 %v378, 96
      %v601 = vpop.permute.xlu0 %600
      %602 = vrot.lane.b32.xlu0 %v379, 96
      %v603 = vpop.permute.xlu0 %602
      %604 = vrot.lane.b32.xlu0 %v380, 96
      %v605 = vpop.permute.xlu0 %604
      %606 = vrot.lane.b32.xlu0 %v381, 96
      %v607 = vpop.permute.xlu0 %606
      %vm608 = vcmask 785408
      %v609 = vsel %vm608, %v601, %v603
      %v610 = vsel %vm608, %v605, %v607
      %v614 = vsel %vm395, %v599, 0
      %616 = vmatpush.bf16.msra.mxu0 0
      %617 = vmatpush.bf16.msra.mxu0 0
      %618 = vmatpush.bf16.msra.mxu0 0
      %619 = vmatpush.bf16.msra.mxu0 0
      %620 = vmatpush.bf16.msra.mxu0 0
      %621 = vmatpush.bf16.msra.mxu0 0
      %622 = vmatpush.bf16.msra.mxu0 %v610
      %623 = vmatpush.bf16.msra.mxu0 %v609
      %624 = vmatmul.bf16.gmra.mxu0 %v614
      %v625 = vpop.f32.mrf.mxu0
      %v626 = vadd.f32 0.0, %v625
      %v627 = vpop.f32.mrf.mxu0
      %v628 = vadd.f32 0.0, %v627
      %629 = vdwg.mxu0
      %v630 = vadd.f32 %v592, %v626
      %v631 = vadd.f32 %v593, %v628
      %s632 = scalar_lea.vmem %s0, 112
      %v633 = vld [vmem:[%s632] sm:$0xff]
      %v634 = vld [vmem:[%s632 + $0x8] sm:$0xff]
      %v635 = vmul.f32 %v633, %v345
      %v636 = vmul.f32 %v634, %v346
      %v637 = vpack.c.bf16 %v636, %v635
      %638 = vrot.lane.b32.xlu0 %v378, 95
      %v639 = vpop.permute.xlu0 %638
      %640 = vrot.lane.b32.xlu0 %v379, 95
      %v641 = vpop.permute.xlu0 %640
      %642 = vrot.lane.b32.xlu0 %v380, 95
      %v643 = vpop.permute.xlu0 %642
      %644 = vrot.lane.b32.xlu0 %v381, 95
      %v645 = vpop.permute.xlu0 %644
      %vm646 = vcmask 777216
      %v647 = vsel %vm646, %v639, %v641
      %v648 = vsel %vm646, %v643, %v645
      %v652 = vsel %vm395, %v637, 0
      %654 = vmatpush.bf16.msra.mxu0 0
      %655 = vmatpush.bf16.msra.mxu0 0
      %656 = vmatpush.bf16.msra.mxu0 0
      %657 = vmatpush.bf16.msra.mxu0 0
      %658 = vmatpush.bf16.msra.mxu0 0
      %659 = vmatpush.bf16.msra.mxu0 0
      %660 = vmatpush.bf16.msra.mxu0 %v648
      %661 = vmatpush.bf16.msra.mxu0 %v647
      %662 = vmatmul.bf16.gmra.mxu0 %v652
      %v663 = vpop.f32.mrf.mxu0
      %v664 = vadd.f32 0.0, %v663
      %v665 = vpop.f32.mrf.mxu0
      %v666 = vadd.f32 0.0, %v665
      %667 = vdwg.mxu0
      %v668 = vadd.f32 %v630, %v664
      %v669 = vadd.f32 %v631, %v666
      %s670 = scalar_lea.vmem %s0, 128
      %v671 = vld [vmem:[%s670] sm:$0xff]
      %v672 = vld [vmem:[%s670 + $0x8] sm:$0xff]
      %v673 = vmul.f32 %v671, %v345
      %v674 = vmul.f32 %v672, %v346
      %v675 = vpack.c.bf16 %v674, %v673
      %676 = vrot.lane.b32.xlu0 %v378, 94
      %v677 = vpop.permute.xlu0 %676
      %678 = vrot.lane.b32.xlu0 %v379, 94
      %v679 = vpop.permute.xlu0 %678
      %680 = vrot.lane.b32.xlu0 %v380, 94
      %v681 = vpop.permute.xlu0 %680
      %682 = vrot.lane.b32.xlu0 %v381, 94
      %v683 = vpop.permute.xlu0 %682
      %vm684 = vcmask 769024
      %v685 = vsel %vm684, %v677, %v679
      %v686 = vsel %vm684, %v681, %v683
      %v690 = vsel %vm395, %v675, 0
      %692 = vmatpush.bf16.msra.mxu0 0
      %693 = vmatpush.bf16.msra.mxu0 0
      %694 = vmatpush.bf16.msra.mxu0 0
      %695 = vmatpush.bf16.msra.mxu0 0
      %696 = vmatpush.bf16.msra.mxu0 0
      %697 = vmatpush.bf16.msra.mxu0 0
      %698 = vmatpush.bf16.msra.mxu0 %v686
      %699 = vmatpush.bf16.msra.mxu0 %v685
      %700 = vmatmul.bf16.gmra.mxu0 %v690
      %v701 = vpop.f32.mrf.mxu0
      %v702 = vadd.f32 0.0, %v701
      %v703 = vpop.f32.mrf.mxu0
      %v704 = vadd.f32 0.0, %v703
      %705 = vdwg.mxu0
      %v706 = vadd.f32 %v668, %v702
      %v707 = vadd.f32 %v669, %v704
      %s708 = sld [smem:[#allocation2]]
      %v709 = vld [vmem:[%s322] sm:$0x1]
      %v710 = vunpack.c.l.bf16 %v709
      %v711 = vstv %s708
      %v712 = vmul.f32 %v711, %v710
      %v713 = vperm.slane %v712, 0
      %v714 = vadd.f32 %v706, %v713
      %v715 = vadd.f32 %v707, %v713
      %v716 = vld [vmem:[%s3] sm:$0xff]
      %v717 = vld [vmem:[%s3 + $0x8] sm:$0xff]
      %719 = vset.pattern.permute.xlu0 0
      %720 = vperm.xlu0 %719, %v716
      %v721 = vpop.permute.xlu0 %720
      %724 = vset.pattern.permute.xlu0 0
      %725 = vperm.xlu0 %724, %v717
      %v726 = vpop.permute.xlu0 %725
      %v728 = vadd.f32 %v714, %v721
      %v729 = vadd.f32 %v715, %v726
      %vm730 = vcmp.ge.f32.partialorder %v728, 0.0
      %vm731 = vcmp.ge.f32.partialorder %v729, 0.0
      %v732 = vmul.f32 %v728, 0.2
      %v733 = vmul.f32 %v729, 0.2
      %v734 = vsel %vm730, %v728, %v732
      %v735 = vsel %vm731, %v729, %v733
      %v736 = vpack.c.bf16 %v734, %v734
      %v737 = vpack.c.bf16 %v735, %v735
      %738 = vst [vmem:[%s327] sm:$0xf] %v736
      %739 = vst [vmem:[%s327 + $0x4] sm:$0xf] %v737
      %p740 = scmp.lt.s32.totalorder %s19, 1
      %s741 = scalar_select %p740, %s19, 1
      %s742 = smul.addr %s741, 2
      %s743 = smul.addr %s742, 4
      %s744 = scalar_lea.vmem %s7, %s743
      // Predicated region
      $region49: #{generator_forward.6} parent=47 // pred_check
        %p745 = pneg %p204
      $region50: #{generator_forward.6} parent=47 // pred_check_branch
        %747 = sbr.rel (%p745) target = $region52
      $region51: #{generator_forward.6} parent=47 // pred_region
        _
      $region52: #{generator_forward.6} parent=47 // pred_fallthru
        _
    $region48: #{generator_forward.6} parent=5 // pred_fallthru
      _
    %p748 = scmp.le.s32.totalorder 2, %s14
    // Predicated region
    $region53: #{generator_forward.6} parent=5 // pred_check
      %p749 = pneg %p748
    $region54: #{generator_forward.6} parent=5 // pred_check_branch
      %751 = sbr.rel (%p749) target = $region56
    $region55: #{generator_forward.6} parent=5 // pred_region
      %s752 = ssub.s32 %s14, 2
      // Predicated region
      $region57: #{generator_forward.6} parent=55 // pred_check
        %p753 = pneg %p210
      $region58: #{generator_forward.6} parent=55 // pred_check_branch
        %755 = sbr.rel (%p753) target = $region60
      $region59: #{generator_forward.6} parent=55 // pred_region
        %p756 = scmp.lt.s32.totalorder %s20, 1
        %s757 = scalar_select %p756, %s20, 1
        %s758 = smul.addr %s757, 2
        %s759 = smul.addr %s758, 4
        %s760 = scalar_lea.vmem %s7, %s759
      $region60: #{generator_forward.6} parent=55 // pred_fallthru
        _
    $region56: #{generator_forward.6} parent=5 // pred_fallthru
      _
  $region6: #{generator_forward.6} parent=0 // loop_footer
    %s18 = sadd.s32 1, %s14
  $region7: #{generator_forward.6} parent=0 // loop_footer_branch
    %13 = sbr.rel target = $region3
  $region8: #{generator_forward.6} parent=0 // loop_exit
    _

// kernel: generator_forward.7
$region0: #{generator_forward.7}
  #allocation0 [shape = 'u32[]', space=smem, size = 0x4, offset = 0x4, fixed_abs, tag = 'smem constant byte address 0x4 - core index']
  #allocation1 [shape = 'u32[72,128]{1,0:T(1,128)}', space=vmem, size = 0x9000, scoped, tag = 'internal scratch']
  #allocation2 [shape = 'f32[1]{0:T(128)S(6)}', space=smem, size = 0x200, scoped, tag = 'scoped memory for generator_forward.7']
  %s0 = inlined_call_operand.vmem [shape: f32[9,16,16], index: 0, kind: input, shape index: {}]
  %s1 = inlined_call_operand.vmem [shape: f32[2,1,16], index: 1, kind: input, shape index: {}]
  %s2 = inlined_call_operand.vmem [shape: f32[2,16,1], index: 2, kind: input, shape index: {}]
  %s3 = inlined_call_operand.vmem [shape: f32[16,1], index: 3, kind: input, shape index: {}]
  %s4 = inlined_call_operand.vmem [shape: f32[3,16], index: 4, kind: input, shape index: {}]
  %s5 = inlined_call_operand.vmem [shape: f32[2,1,16], index: 5, kind: input, shape index: {}]
  %s6 = inlined_call_operand.vmem [shape: f32[3,1], index: 6, kind: input, shape index: {}]
  %s7 = inlined_call_operand.vmem [shape: bf16[2,16,176], index: 7, kind: input, shape index: {}]
  %s8 = inlined_call_operand.vmem [shape: bf16[2,1,128], index: 8, kind: input, shape index: {}]
  %s9 = inlined_call_operand.<no memory space> [shape: f32[1], index: 9, kind: input, shape index: {}]
  %s10 = inlined_call_operand.vmem [shape: bf16[2,16,128], index: 10, kind: output, shape index: {0}]
  %s11 = inlined_call_operand.vmem [shape: f32[2,3,128], index: 11, kind: output, shape index: {1}]
  %12 = xla_tuple %s10, %s11
  %s13 = sld [smem:[#allocation0]]
  $region81: #{generator_forward.7} parent=0
    _
  %s15 = ssub.s32 1, %s13
  %s16 = scalar_select 0, %s15, %s13
  %17 = sst [smem:[#allocation2]] %s9
  loop: start=0, step=1, limit=4
  $region2: #{generator_forward.7} parent=0 // loop_pre_header
    _
  $region3: #{generator_forward.7} parent=0 // loop_header
    %s19 = sphi 0, %s23
    %p20 = scmp.ge.s32.totalorder %s19, 4
    %s27 = sphi 0, %s27
    %s29 = sphi 0, %s27
    %s30 = sphi 0, %s29
    %s44 = sphi 0, %s30
    %s50 = sphi 0, %s52
    %s53 = sphi 0, %s50
    %s54 = sphi 0, %s53
    %s70 = sphi 0, %s54
    %s76 = sphi 0, %s78
    %s79 = sphi 0, %s76
    %s80 = sphi 0, %s79
    %s96 = sphi 0, %s80
    %s100 = sphi 0, %s100
    %s102 = sphi 0, %s100
    %s103 = sphi 0, %s102
    %s117 = sphi 0, %s103
    %s121 = sphi 0, %s121
    %s123 = sphi 0, %s121
    %s124 = sphi 0, %s123
    %s138 = sphi 0, %s124
    %s144 = sphi 0, %s146
    %s147 = sphi 0, %s144
    %s148 = sphi 0, %s147
    %s164 = sphi 0, %s148
    %s168 = sphi 0, %s168
    %s170 = sphi 0, %s168
    %s171 = sphi 0, %s170
    %s185 = sphi 0, %s171
    %s191 = sphi 0, %s193
    %s194 = sphi 0, %s191
    %s195 = sphi 0, %s194
    %s211 = sphi 0, %s195
    %s217 = sphi 0, %s219
    %s220 = sphi 0, %s217
    %s221 = sphi 0, %s220
    %s237 = sphi 0, %s221
    %s241 = sphi 0, %s241
    %s243 = sphi 0, %s241
    %s244 = sphi 0, %s243
    %s258 = sphi 0, %s244
    %s264 = sphi 0, %s266
    %s267 = sphi 0, %s264
    %s268 = sphi 0, %s267
    %s284 = sphi 0, %s268
    %s290 = sphi 0, %s292
    %s293 = sphi 0, %s290
    %s294 = sphi 0, %s293
    %s310 = sphi 0, %s294
  $region4: #{generator_forward.7} parent=0 // loop_header_branch
    %22 = sbr.rel (%p20) target = $region8
  $region5: #{generator_forward.7} parent=0 // loop_body
    %s24 = ssub.s32 %s19, 1
    %s25 = ssub.s32 %s19, 2
    %s26 = sadd.s32 %s19, 1
    %s28 = sadd.s32 %s27, 1
    %p31 = scmp.eq.s32.totalorder %s19, 1
    %p32 = scmp.ne.s32.totalorder %s27, %s29
    %p33 = scmp.eq.s32.totalorder %s19, 0
    %p34 = por %p32, %p33
    %p35 = scmp.ne.s32.totalorder %s27, %s29
    %p36 = scmp.eq.s32.totalorder %s24, 1
    %p37 = por %p35, %p36
    %p38 = scmp.ne.s32.totalorder %s29, %s30
    %p39 = scmp.eq.s32.totalorder %s24, 0
    %p40 = por %p38, %p39
    %p41 = scmp.ne.s32.totalorder %s29, %s30
    %p42 = scmp.eq.s32.totalorder %s25, 1
    %p43 = por %p41, %p42
    %p45 = scmp.ne.s32.totalorder %s30, %s44
    %p46 = scmp.eq.s32.totalorder %s25, 0
    %p47 = por %p45, %p46
    %s48 = ssub.s32 %s19, %s26
    %p49 = scmp.eq.s32.totalorder %s48, 0
    %s51 = sadd.s32 %s50, 1
    %s52 = scalar_select %p49, %s50, %s51
    %p55 = pneg %p49
    %p56 = scmp.eq.s32.totalorder %s19, 1
    %p57 = por %p55, %p56
    %p58 = scmp.ne.s32.totalorder %s50, %s53
    %p59 = scmp.eq.s32.totalorder %s19, 0
    %p60 = por %p58, %p59
    %p61 = scmp.ne.s32.totalorder %s50, %s53
    %p62 = scmp.eq.s32.totalorder %s24, 1
    %p63 = por %p61, %p62
    %p64 = scmp.ne.s32.totalorder %s53, %s54
    %p65 = scmp.eq.s32.totalorder %s24, 0
    %p66 = por %p64, %p65
    %p67 = scmp.ne.s32.totalorder %s53, %s54
    %p68 = scmp.eq.s32.totalorder %s25, 1
    %p69 = por %p67, %p68
    %p71 = scmp.ne.s32.totalorder %s54, %s70
    %p72 = scmp.eq.s32.totalorder %s25, 0
    %p73 = por %p71, %p72
    %s74 = ssub.s32 %s19, %s26
    %p75 = scmp.eq.s32.totalorder %s74, 0
    %s77 = sadd.s32 %s76, 1
    %s78 = scalar_select %p75, %s76, %s77
    %p81 = pneg %p75
    %p82 = scmp.eq.s32.totalorder %s19, 1
    %p83 = por %p81, %p82
    %p84 = scmp.ne.s32.totalorder %s76, %s79
    %p85 = scmp.eq.s32.totalorder %s19, 0
    %p86 = por %p84, %p85
    %p87 = scmp.ne.s32.totalorder %s76, %s79
    %p88 = scmp.eq.s32.totalorder %s24, 1
    %p89 = por %p87, %p88
    %p90 = scmp.ne.s32.totalorder %s79, %s80
    %p91 = scmp.eq.s32.totalorder %s24, 0
    %p92 = por %p90, %p91
    %p93 = scmp.ne.s32.totalorder %s79, %s80
    %p94 = scmp.eq.s32.totalorder %s25, 1
    %p95 = por %p93, %p94
    %p97 = scmp.ne.s32.totalorder %s80, %s96
    %p98 = scmp.eq.s32.totalorder %s25, 0
    %p99 = por %p97, %p98
    %s101 = sadd.s32 %s100, 1
    %p104 = scmp.eq.s32.totalorder %s19, 1
    %p105 = scmp.ne.s32.totalorder %s100, %s102
    %p106 = scmp.eq.s32.totalorder %s19, 0
    %p107 = por %p105, %p106
    %p108 = scmp.ne.s32.totalorder %s100, %s102
    %p109 = scmp.eq.s32.totalorder %s24, 1
    %p110 = por %p108, %p109
    %p111 = scmp.ne.s32.totalorder %s102, %s103
    %p112 = scmp.eq.s32.totalorder %s24, 0
    %p113 = por %p111, %p112
    %p114 = scmp.ne.s32.totalorder %s102, %s103
    %p115 = scmp.eq.s32.totalorder %s25, 1
    %p116 = por %p114, %p115
    %p118 = scmp.ne.s32.totalorder %s103, %s117
    %p119 = scmp.eq.s32.totalorder %s25, 0
    %p120 = por %p118, %p119
    %s122 = sadd.s32 %s121, 1
    %p125 = scmp.eq.s32.totalorder %s19, 1
    %p126 = scmp.ne.s32.totalorder %s121, %s123
    %p127 = scmp.eq.s32.totalorder %s19, 0
    %p128 = por %p126, %p127
    %p129 = scmp.ne.s32.totalorder %s121, %s123
    %p130 = scmp.eq.s32.totalorder %s24, 1
    %p131 = por %p129, %p130
    %p132 = scmp.ne.s32.totalorder %s123, %s124
    %p133 = scmp.eq.s32.totalorder %s24, 0
    %p134 = por %p132, %p133
    %p135 = scmp.ne.s32.totalorder %s123, %s124
    %p136 = scmp.eq.s32.totalorder %s25, 1
    %p137 = por %p135, %p136
    %p139 = scmp.ne.s32.totalorder %s124, %s138
    %p140 = scmp.eq.s32.totalorder %s25, 0
    %p141 = por %p139, %p140
    %s142 = ssub.s32 %s19, %s26
    %p143 = scmp.eq.s32.totalorder %s142, 0
    %s145 = sadd.s32 %s144, 1
    %s146 = scalar_select %p143, %s144, %s145
    %p149 = pneg %p143
    %p150 = scmp.eq.s32.totalorder %s19, 1
    %p151 = por %p149, %p150
    %p152 = scmp.ne.s32.totalorder %s144, %s147
    %p153 = scmp.eq.s32.totalorder %s19, 0
    %p154 = por %p152, %p153
    %p155 = scmp.ne.s32.totalorder %s144, %s147
    %p156 = scmp.eq.s32.totalorder %s24, 1
    %p157 = por %p155, %p156
    %p158 = scmp.ne.s32.totalorder %s147, %s148
    %p159 = scmp.eq.s32.totalorder %s24, 0
    %p160 = por %p158, %p159
    %p161 = scmp.ne.s32.totalorder %s147, %s148
    %p162 = scmp.eq.s32.totalorder %s25, 1
    %p163 = por %p161, %p162
    %p165 = scmp.ne.s32.totalorder %s148, %s164
    %p166 = scmp.eq.s32.totalorder %s25, 0
    %p167 = por %p165, %p166
    %s169 = sadd.s32 %s168, 1
    %p172 = scmp.eq.s32.totalorder %s19, 1
    %p173 = scmp.ne.s32.totalorder %s168, %s170
    %p174 = scmp.eq.s32.totalorder %s19, 0
    %p175 = por %p173, %p174
    %p176 = scmp.ne.s32.totalorder %s168, %s170
    %p177 = scmp.eq.s32.totalorder %s24, 1
    %p178 = por %p176, %p177
    %p179 = scmp.ne.s32.totalorder %s170, %s171
    %p180 = scmp.eq.s32.totalorder %s24, 0
    %p181 = por %p179, %p180
    %p182 = scmp.ne.s32.totalorder %s170, %s171
    %p183 = scmp.eq.s32.totalorder %s25, 1
    %p184 = por %p182, %p183
    %p186 = scmp.ne.s32.totalorder %s171, %s185
    %p187 = scmp.eq.s32.totalorder %s25, 0
    %p188 = por %p186, %p187
    %s189 = ssub.s32 %s19, %s26
    %p190 = scmp.eq.s32.totalorder %s189, 0
    %s192 = sadd.s32 %s191, 1
    %s193 = scalar_select %p190, %s191, %s192
    %p196 = pneg %p190
    %p197 = scmp.eq.s32.totalorder %s19, 1
    %p198 = por %p196, %p197
    %p199 = scmp.ne.s32.totalorder %s191, %s194
    %p200 = scmp.eq.s32.totalorder %s19, 0
    %p201 = por %p199, %p200
    %p202 = scmp.ne.s32.totalorder %s191, %s194
    %p203 = scmp.eq.s32.totalorder %s24, 1
    %p204 = por %p202, %p203
    %p205 = scmp.ne.s32.totalorder %s194, %s195
    %p206 = scmp.eq.s32.totalorder %s24, 0
    %p207 = por %p205, %p206
    %p208 = scmp.ne.s32.totalorder %s194, %s195
    %p209 = scmp.eq.s32.totalorder %s25, 1
    %p210 = por %p208, %p209
    %p212 = scmp.ne.s32.totalorder %s195, %s211
    %p213 = scmp.eq.s32.totalorder %s25, 0
    %p214 = por %p212, %p213
    %s215 = ssub.s32 %s19, %s26
    %p216 = scmp.eq.s32.totalorder %s215, 0
    %s218 = sadd.s32 %s217, 1
    %s219 = scalar_select %p216, %s217, %s218
    %p222 = pneg %p216
    %p223 = scmp.eq.s32.totalorder %s19, 1
    %p224 = por %p222, %p223
    %p225 = scmp.ne.s32.totalorder %s217, %s220
    %p226 = scmp.eq.s32.totalorder %s19, 0
    %p227 = por %p225, %p226
    %p228 = scmp.ne.s32.totalorder %s217, %s220
    %p229 = scmp.eq.s32.totalorder %s24, 1
    %p230 = por %p228, %p229
    %p231 = scmp.ne.s32.totalorder %s220, %s221
    %p232 = scmp.eq.s32.totalorder %s24, 0
    %p233 = por %p231, %p232
    %p234 = scmp.ne.s32.totalorder %s220, %s221
    %p235 = scmp.eq.s32.totalorder %s25, 1
    %p236 = por %p234, %p235
    %p238 = scmp.ne.s32.totalorder %s221, %s237
    %p239 = scmp.eq.s32.totalorder %s25, 0
    %p240 = por %p238, %p239
    %s242 = sadd.s32 %s241, 1
    %p245 = scmp.eq.s32.totalorder %s19, 1
    %p246 = scmp.ne.s32.totalorder %s241, %s243
    %p247 = scmp.eq.s32.totalorder %s19, 0
    %p248 = por %p246, %p247
    %p249 = scmp.ne.s32.totalorder %s241, %s243
    %p250 = scmp.eq.s32.totalorder %s24, 1
    %p251 = por %p249, %p250
    %p252 = scmp.ne.s32.totalorder %s243, %s244
    %p253 = scmp.eq.s32.totalorder %s24, 0
    %p254 = por %p252, %p253
    %p255 = scmp.ne.s32.totalorder %s243, %s244
    %p256 = scmp.eq.s32.totalorder %s25, 1
    %p257 = por %p255, %p256
    %p259 = scmp.ne.s32.totalorder %s244, %s258
    %p260 = scmp.eq.s32.totalorder %s25, 0
    %p261 = por %p259, %p260
    %s262 = ssub.s32 %s19, %s26
    %p263 = scmp.eq.s32.totalorder %s262, 0
    %s265 = sadd.s32 %s264, 1
    %s266 = scalar_select %p263, %s264, %s265
    %p269 = pneg %p263
    %p270 = scmp.eq.s32.totalorder %s19, 1
    %p271 = por %p269, %p270
    %p272 = scmp.ne.s32.totalorder %s264, %s267
    %p273 = scmp.eq.s32.totalorder %s19, 0
    %p274 = por %p272, %p273
    %p275 = scmp.ne.s32.totalorder %s264, %s267
    %p276 = scmp.eq.s32.totalorder %s24, 1
    %p277 = por %p275, %p276
    %p278 = scmp.ne.s32.totalorder %s267, %s268
    %p279 = scmp.eq.s32.totalorder %s24, 0
    %p280 = por %p278, %p279
    %p281 = scmp.ne.s32.totalorder %s267, %s268
    %p282 = scmp.eq.s32.totalorder %s25, 1
    %p283 = por %p281, %p282
    %p285 = scmp.ne.s32.totalorder %s268, %s284
    %p286 = scmp.eq.s32.totalorder %s25, 0
    %p287 = por %p285, %p286
    %s288 = ssub.s32 %s19, %s26
    %p289 = scmp.eq.s32.totalorder %s288, 0
    %s291 = sadd.s32 %s290, 1
    %s292 = scalar_select %p289, %s290, %s291
    %p295 = pneg %p289
    %p296 = scmp.eq.s32.totalorder %s19, 1
    %p297 = por %p295, %p296
    %p298 = scmp.ne.s32.totalorder %s290, %s293
    %p299 = scmp.eq.s32.totalorder %s19, 0
    %p300 = por %p298, %p299
    %p301 = scmp.ne.s32.totalorder %s290, %s293
    %p302 = scmp.eq.s32.totalorder %s24, 1
    %p303 = por %p301, %p302
    %p304 = scmp.ne.s32.totalorder %s293, %s294
    %p305 = scmp.eq.s32.totalorder %s24, 0
    %p306 = por %p304, %p305
    %p307 = scmp.ne.s32.totalorder %s293, %s294
    %p308 = scmp.eq.s32.totalorder %s25, 1
    %p309 = por %p307, %p308
    %p311 = scmp.ne.s32.totalorder %s294, %s310
    %p312 = scmp.eq.s32.totalorder %s25, 0
    %p313 = por %p311, %p312
    %p314 = scmp.le.s32.totalorder 1, %s19
    %p315 = scmp.lt.s32.totalorder %s19, 3
    %p316 = pnand %p314, %p315
    %p317 = pneg %p316
    // Predicated region
    $region9: #{generator_forward.7} parent=5 // pred_check
      _
    $region10: #{generator_forward.7} parent=5 // pred_check_branch
      %319 = sbr.rel (%p316) target = $region12
    $region11: #{generator_forward.7} parent=5 // pred_region
      %s320 = ssub.s32 %s19, 1
      // Predicated region
      $region13: #{generator_forward.7} parent=11 // pred_check
        %p321 = pneg %p40
      $region14: #{generator_forward.7} parent=11 // pred_check_branch
        %323 = sbr.rel (%p321) target = $region16
      $region15: #{generator_forward.7} parent=11 // pred_region
        _
      $region16: #{generator_forward.7} parent=11 // pred_fallthru
        _
      // Predicated region
      $region17: #{generator_forward.7} parent=11 // pred_check
        %p324 = pneg %p113
      $region18: #{generator_forward.7} parent=11 // pred_check_branch
        %326 = sbr.rel (%p324) target = $region20
      $region19: #{generator_forward.7} parent=11 // pred_region
        _
      $region20: #{generator_forward.7} parent=11 // pred_fallthru
        _
      // Predicated region
      $region21: #{generator_forward.7} parent=11 // pred_check
        %p327 = pneg %p134
      $region22: #{generator_forward.7} parent=11 // pred_check_branch
        %329 = sbr.rel (%p327) target = $region24
      $region23: #{generator_forward.7} parent=11 // pred_region
        _
      $region24: #{generator_forward.7} parent=11 // pred_fallthru
        _
      // Predicated region
      $region25: #{generator_forward.7} parent=11 // pred_check
        %p330 = pneg %p181
      $region26: #{generator_forward.7} parent=11 // pred_check_branch
        %332 = sbr.rel (%p330) target = $region28
      $region27: #{generator_forward.7} parent=11 // pred_region
        _
      $region28: #{generator_forward.7} parent=11 // pred_fallthru
        _
      // Predicated region
      $region29: #{generator_forward.7} parent=11 // pred_check
        %p333 = pneg %p254
      $region30: #{generator_forward.7} parent=11 // pred_check_branch
        %335 = sbr.rel (%p333) target = $region32
      $region31: #{generator_forward.7} parent=11 // pred_region
        _
      $region32: #{generator_forward.7} parent=11 // pred_fallthru
        _
    $region12: #{generator_forward.7} parent=5 // pred_fallthru
      _
    %p336 = scmp.lt.s32.totalorder %s19, 2
    // Predicated region
    $region33: #{generator_forward.7} parent=5 // pred_check
      %p337 = pneg %p336
    $region34: #{generator_forward.7} parent=5 // pred_check_branch
      %339 = sbr.rel (%p337) target = $region36
    $region35: #{generator_forward.7} parent=5 // pred_region
      // Predicated region
      $region37: #{generator_forward.7} parent=35 // pred_check
        %p340 = pneg %p60
      $region38: #{generator_forward.7} parent=35 // pred_check_branch
        %342 = sbr.rel (%p340) target = $region40
      $region39: #{generator_forward.7} parent=35 // pred_region
        %p343 = scmp.lt.s32.totalorder %s19, 1
        %s344 = scalar_select %p343, %s19, 1
        %s345 = scalar_lea.vmem %s1, %s344
      $region40: #{generator_forward.7} parent=35 // pred_fallthru
        _
      // Predicated region
      $region41: #{generator_forward.7} parent=35 // pred_check
        %p346 = pneg %p86
      $region42: #{generator_forward.7} parent=35 // pred_check_branch
        %348 = sbr.rel (%p346) target = $region44
      $region43: #{generator_forward.7} parent=35 // pred_region
        %p349 = scmp.lt.s32.totalorder %s19, 1
        %s350 = scalar_select %p349, %s19, 1
        %s351 = smul.addr %s350, 2
        %s352 = smul.addr %s351, 8
        %s353 = scalar_lea.vmem %s2, %s352
      $region44: #{generator_forward.7} parent=35 // pred_fallthru
        _
      // Predicated region
      $region45: #{generator_forward.7} parent=35 // pred_check
        %p354 = pneg %p154
      $region46: #{generator_forward.7} parent=35 // pred_check_branch
        %356 = sbr.rel (%p354) target = $region48
      $region47: #{generator_forward.7} parent=35 // pred_region
        %p357 = scmp.lt.s32.totalorder %s19, 1
        %s358 = scalar_select %p357, %s19, 1
        %s359 = scalar_lea.vmem %s5, %s358
      $region48: #{generator_forward.7} parent=35 // pred_fallthru
        _
      // Predicated region
      $region49: #{generator_forward.7} parent=35 // pred_check
        %p360 = pneg %p201
      $region50: #{generator_forward.7} parent=35 // pred_check_branch
        %362 = sbr.rel (%p360) target = $region52
      $region51: #{generator_forward.7} parent=35 // pred_region
        %p363 = scmp.lt.s32.totalorder %s19, 1
        %s364 = scalar_select %p363, %s19, 1
        %s365 = smul.addr %s364, 4
        %s366 = smul.addr %s365, 4
        %s367 = scalar_lea.vmem %s7, %s366
      $region52: #{generator_forward.7} parent=35 // pred_fallthru
        _
      // Predicated region
      $region53: #{generator_forward.7} parent=35 // pred_check
        %p368 = pneg %p227
      $region54: #{generator_forward.7} parent=35 // pred_check_branch
        %370 = sbr.rel (%p368) target = $region56
      $region55: #{generator_forward.7} parent=35 // pred_region
        %p371 = scmp.lt.s32.totalorder %s19, 1
        %s372 = scalar_select %p371, %s19, 1
        %s373 = scalar_lea.vmem %s8, %s372
      $region56: #{generator_forward.7} parent=35 // pred_fallthru
        _
    $region36: #{generator_forward.7} parent=5 // pred_fallthru
      _
    %p374 = scmp.le.s32.totalorder 1, %s19
    %p375 = scmp.lt.s32.totalorder %s19, 3
    %p376 = pnand %p374, %p375
    %p377 = pneg %p376
    // Predicated region
    $region57: #{generator_forward.7} parent=5 // pred_check
      _
    $region58: #{generator_forward.7} parent=5 // pred_check_branch
      %379 = sbr.rel (%p376) target = $region60
    $region59: #{generator_forward.7} parent=5 // pred_region
      %s380 = ssub.s32 %s19, 1
      %p381 = pneg %p40
      %p382 = pneg %p37
      %p383 = scmp.lt.s32.totalorder %s24, 1
      %s384 = scalar_select %p383, %s24, 1
      %s385 = scalar_lea.vmem %s1, %s384
      %p386 = pneg %p66
      %p387 = pneg %p63
      %p388 = scmp.lt.s32.totalorder %s24, 1
      %s389 = scalar_select %p388, %s24, 1
      %s390 = smul.addr %s389, 2
      %s391 = smul.addr %s390, 8
      %s392 = scalar_lea.vmem %s2, %s391
      %p393 = pneg %p92
      %p394 = pneg %p89
      %p395 = pneg %p113
      %p396 = pneg %p110
      %p397 = pneg %p134
      %p398 = pneg %p131
      %p399 = scmp.lt.s32.totalorder %s24, 1
      %s400 = scalar_select %p399, %s24, 1
      %s401 = scalar_lea.vmem %s5, %s400
      %p402 = pneg %p160
      %p403 = pneg %p157
      %p404 = pneg %p181
      %p405 = pneg %p178
      %p406 = scmp.lt.s32.totalorder %s24, 1
      %s407 = scalar_select %p406, %s24, 1
      %s408 = smul.addr %s407, 4
      %s409 = smul.addr %s408, 4
      %s410 = scalar_lea.vmem %s7, %s409
      %p411 = pneg %p207
      %p412 = pneg %p204
      %p413 = scmp.lt.s32.totalorder %s24, 1
      %s414 = scalar_select %p413, %s24, 1
      %s415 = scalar_lea.vmem %s8, %s414
      %p416 = pneg %p233
      %p417 = pneg %p230
      %p418 = pneg %p254
      %p419 = pneg %p251
      %p420 = pneg %p280
      %p421 = pneg %p277
      %p422 = scmp.lt.s32.totalorder %s24, 1
      %s423 = scalar_select %p422, %s24, 1
      %s424 = smul.addr %s423, 2
      %s425 = smul.addr %s424, 4
      %s426 = scalar_lea.vmem %s10, %s425
      %p427 = pneg %p306
      %p428 = pneg %p303
      %p429 = scmp.lt.s32.totalorder %s24, 1
      %s430 = scalar_select %p429, %s24, 1
      %s431 = smul.addr %s430, 4
      %s432 = scalar_lea.vmem %s11, %s431
      %p433 = scmp.lt.s32.totalorder %s24, 1
      %s434 = scalar_select %p433, %s24, 1
      %s435 = scalar_lea.vmem %s1, %s434
      %p436 = scmp.lt.s32.totalorder %s24, 1
      %s437 = scalar_select %p436, %s24, 1
      %s438 = smul.addr %s437, 2
      %s439 = smul.addr %s438, 8
      %s440 = scalar_lea.vmem %s2, %s439
      %p441 = scmp.lt.s32.totalorder %s24, 1
      %s442 = scalar_select %p441, %s24, 1
      %s443 = scalar_lea.vmem %s5, %s442
      %p444 = scmp.lt.s32.totalorder %s24, 1
      %s445 = scalar_select %p444, %s24, 1
      %s446 = smul.addr %s445, 4
      %s447 = smul.addr %s446, 4
      %s448 = scalar_lea.vmem %s7, %s447
      %p449 = scmp.lt.s32.totalorder %s24, 1
      %s450 = scalar_select %p449, %s24, 1
      %s451 = scalar_lea.vmem %s8, %s450
      %p452 = scmp.lt.s32.totalorder %s24, 1
      %s453 = scalar_select %p452, %s24, 1
      %s454 = smul.addr %s453, 2
      %s455 = smul.addr %s454, 4
      %s456 = scalar_lea.vmem %s10, %s455
      %p457 = scmp.lt.s32.totalorder %s24, 1
      %s458 = scalar_select %p457, %s24, 1
      %s459 = smul.addr %s458, 4
      %s460 = scalar_lea.vmem %s11, %s459
      %v462 = vld [vmem:[%s440] sm:$0xff]
      %v463 = vld [vmem:[%s440 + $0x8] sm:$0xff]
      %v464 = vld [vmem:[%s435] sm:$0x1]
      %466 = vset.pattern.permute.xlu0 0
      %467 = vperm.xlu0 %466, %v462
      %v468 = vpop.permute.xlu0 %467
      %471 = vset.pattern.permute.xlu0 0
      %472 = vperm.xlu0 %471, %v463
      %v473 = vpop.permute.xlu0 %472
      %v476 = vperm.slane %v464, 0
      %v478 = vmul.f32 %v468, %v476
      %v479 = vmul.f32 %v473, %v476
      %v480 = vld [vmem:[%s0] sm:$0xff]
      %v481 = vld [vmem:[%s0 + $0x8] sm:$0xff]
      %v482 = vmul.f32 %v480, %v478
      %v483 = vmul.f32 %v481, %v479
      %v484 = vpack.c.bf16 %v483, %v482
      %v485 = vld [vmem:[%s448] sm:$0xf]
      %v486 = vld [vmem:[%s448 + $0x8] sm:$0xf]
      %s487 = scalar_lea.vmem %s0, 16
      %v488 = vld [vmem:[%s487] sm:$0xff]
      %v489 = vld [vmem:[%s487 + $0x8] sm:$0xff]
      %v490 = vmul.f32 %v488, %v478
      %v491 = vmul.f32 %v489, %v479
      %v492 = vpack.c.bf16 %v491, %v490
      %v493 = vld [vmem:[%s448] sm:$0xff]
      %v494 = vld [vmem:[%s448 + $0x8] sm:$0xff]
      %v497 = vunpack.c.l.b16 %v493
      %v498 = vunpack.c.h.b16 %v493
      %v499 = vunpack.c.l.b16 %v494
      %v500 = vunpack.c.h.b16 %v494
      %v501 = vpack.c.b16 %v499, %v497
      %v502 = vpack.c.b16 %v500, %v498
      %503 = vrot.lane.b32.xlu0 %v501, 127
      %v504 = vpop.permute.xlu0 %503
      %505 = vrot.lane.b32.xlu0 %v502, 127
      %v506 = vpop.permute.xlu0 %505
      %vm507 = vcmask 1039360
      %v508 = vsel %vm507, %v504, %v506
      %vm510 = vcmask 130048
      %v512 = vsel %vm510, %v492, 0
      %514 = vmatpush.bf16.msra.mxu0 0
      %515 = vmatpush.bf16.msra.mxu0 0
      %516 = vmatpush.bf16.msra.mxu0 0
      %517 = vmatpush.bf16.msra.mxu0 0
      %518 = vmatpush.bf16.msra.mxu0 0
      %519 = vmatpush.bf16.msra.mxu0 0
      %520 = vmatpush.bf16.msra.mxu0 0
      %521 = vmatpush.bf16.msra.mxu0 %v508
      %522 = vmatmul.bf16.gmra.mxu0 %v512
      %v523 = vpop.f32.mrf.mxu0
      %v524 = vadd.f32 0.0, %v523
      %v525 = vpop.f32.mrf.mxu0
      %v526 = vadd.f32 0.0, %v525
      %527 = vdwg.mxu0
      %v530 = vunpack.c.l.b16 %v485
      %v531 = vunpack.c.l.b16 %v486
      %v532 = vpack.c.b16 %v531, %v530
      %v535 = vsel %vm510, %v484, 0
      %537 = vmatpush.bf16.msra.mxu0 0
      %538 = vmatpush.bf16.msra.mxu0 0
      %539 = vmatpush.bf16.msra.mxu0 0
      %540 = vmatpush.bf16.msra.mxu0 0
      %541 = vmatpush.bf16.msra.mxu0 0
      %542 = vmatpush.bf16.msra.mxu0 0
      %543 = vmatpush.bf16.msra.mxu0 0
      %544 = vmatpush.bf16.msra.mxu0 %v532
      %545 = vmatmul.bf16.gmra.mxu0 %v535
      %v546 = vpop.f32.mrf.mxu0
      %v547 = vadd.f32 %v524, %v546
      %v548 = vpop.f32.mrf.mxu0
      %v549 = vadd.f32 %v526, %v548
      %550 = vdwg.mxu0
      %s551 = scalar_lea.vmem %s0, 32
      %v552 = vld [vmem:[%s551] sm:$0xff]
      %v553 = vld [vmem:[%s551 + $0x8] sm:$0xff]
      %v554 = vmul.f32 %v552, %v478
      %v555 = vmul.f32 %v553, %v479
      %v556 = vpack.c.bf16 %v555, %v554
      %557 = vrot.lane.b32.xlu0 %v501, 126
      %v558 = vpop.permute.xlu0 %557
      %559 = vrot.lane.b32.xlu0 %v502, 126
      %v560 = vpop.permute.xlu0 %559
      %vm561 = vcmask 1031168
      %v562 = vsel %vm561, %v558, %v560
      %v565 = vsel %vm510, %v556, 0
      %567 = vmatpush.bf16.msra.mxu0 0
      %568 = vmatpush.bf16.msra.mxu0 0
      %569 = vmatpush.bf16.msra.mxu0 0
      %570 = vmatpush.bf16.msra.mxu0 0
      %571 = vmatpush.bf16.msra.mxu0 0
      %572 = vmatpush.bf16.msra.mxu0 0
      %573 = vmatpush.bf16.msra.mxu0 0
      %574 = vmatpush.bf16.msra.mxu0 %v562
      %575 = vmatmul.bf16.gmra.mxu0 %v565
      %v576 = vpop.f32.mrf.mxu0
      %v577 = vadd.f32 0.0, %v576
      %v578 = vpop.f32.mrf.mxu0
      %v579 = vadd.f32 0.0, %v578
      %580 = vdwg.mxu0
      %v581 = vadd.f32 %v547, %v577
      %v582 = vadd.f32 %v549, %v579
      %s583 = scalar_lea.vmem %s0, 48
      %v584 = vld [vmem:[%s583] sm:$0xff]
      %v585 = vld [vmem:[%s583 + $0x8] sm:$0xff]
      %v586 = vmul.f32 %v584, %v478
      %v587 = vmul.f32 %v585, %v479
      %v588 = vpack.c.bf16 %v587, %v586
      %589 = vrot.lane.b32.xlu0 %v501, 112
      %v590 = vpop.permute.xlu0 %589
      %591 = vrot.lane.b32.xlu0 %v502, 112
      %v592 = vpop.permute.xlu0 %591
      %vm593 = vcmask 916480
      %v594 = vsel %vm593, %v590, %v592
      %v597 = vsel %vm510, %v588, 0
      %599 = vmatpush.bf16.msra.mxu0 0
      %600 = vmatpush.bf16.msra.mxu0 0
      %601 = vmatpush.bf16.msra.mxu0 0
      %602 = vmatpush.bf16.msra.mxu0 0
      %603 = vmatpush.bf16.msra.mxu0 0
      %604 = vmatpush.bf16.msra.mxu0 0
      %605 = vmatpush.bf16.msra.mxu0 0
      %606 = vmatpush.bf16.msra.mxu0 %v594
      %607 = vmatmul.bf16.gmra.mxu0 %v597
      %v608 = vpop.f32.mrf.mxu0
      %v609 = vadd.f32 0.0, %v608
      %v610 = vpop.f32.mrf.mxu0
      %v611 = vadd.f32 0.0, %v610
      %612 = vdwg.mxu0
      %v613 = vadd.f32 %v581, %v609
      %v614 = vadd.f32 %v582, %v611
      %s615 = scalar_lea.vmem %s0, 64
      %v616 = vld [vmem:[%s615] sm:$0xff]
      %v617 = vld [vmem:[%s615 + $0x8] sm:$0xff]
      %v618 = vmul.f32 %v616, %v478
      %v619 = vmul.f32 %v617, %v479
      %v620 = vpack.c.bf16 %v619, %v618
      %621 = vrot.lane.b32.xlu0 %v501, 111
      %v622 = vpop.permute.xlu0 %621
      %623 = vrot.lane.b32.xlu0 %v502, 111
      %v624 = vpop.permute.xlu0 %623
      %vm625 = vcmask 908288
      %v626 = vsel %vm625, %v622, %v624
      %v629 = vsel %vm510, %v620, 0
      %631 = vmatpush.bf16.msra.mxu0 0
      %632 = vmatpush.bf16.msra.mxu0 0
      %633 = vmatpush.bf16.msra.mxu0 0
      %634 = vmatpush.bf16.msra.mxu0 0
      %635 = vmatpush.bf16.msra.mxu0 0
      %636 = vmatpush.bf16.msra.mxu0 0
      %637 = vmatpush.bf16.msra.mxu0 0
      %638 = vmatpush.bf16.msra.mxu0 %v626
      %639 = vmatmul.bf16.gmra.mxu0 %v629
      %v640 = vpop.f32.mrf.mxu0
      %v641 = vadd.f32 0.0, %v640
      %v642 = vpop.f32.mrf.mxu0
      %v643 = vadd.f32 0.0, %v642
      %644 = vdwg.mxu0
      %v645 = vadd.f32 %v613, %v641
      %v646 = vadd.f32 %v614, %v643
      %s647 = scalar_lea.vmem %s0, 80
      %v648 = vld [vmem:[%s647] sm:$0xff]
      %v649 = vld [vmem:[%s647 + $0x8] sm:$0xff]
      %v650 = vmul.f32 %v648, %v478
      %v651 = vmul.f32 %v649, %v479
      %v652 = vpack.c.bf16 %v651, %v650
      %653 = vrot.lane.b32.xlu0 %v501, 110
      %v654 = vpop.permute.xlu0 %653
      %655 = vrot.lane.b32.xlu0 %v502, 110
      %v656 = vpop.permute.xlu0 %655
      %vm657 = vcmask 900096
      %v658 = vsel %vm657, %v654, %v656
      %v661 = vsel %vm510, %v652, 0
      %663 = vmatpush.bf16.msra.mxu0 0
      %664 = vmatpush.bf16.msra.mxu0 0
      %665 = vmatpush.bf16.msra.mxu0 0
      %666 = vmatpush.bf16.msra.mxu0 0
      %667 = vmatpush.bf16.msra.mxu0 0
      %668 = vmatpush.bf16.msra.mxu0 0
      %669 = vmatpush.bf16.msra.mxu0 0
      %670 = vmatpush.bf16.msra.mxu0 %v658
      %671 = vmatmul.bf16.gmra.mxu0 %v661
      %v672 = vpop.f32.mrf.mxu0
      %v673 = vadd.f32 0.0, %v672
      %v674 = vpop.f32.mrf.mxu0
      %v675 = vadd.f32 0.0, %v674
      %676 = vdwg.mxu0
      %v677 = vadd.f32 %v645, %v673
      %v678 = vadd.f32 %v646, %v675
      %s679 = scalar_lea.vmem %s0, 96
      %v680 = vld [vmem:[%s679] sm:$0xff]
      %v681 = vld [vmem:[%s679 + $0x8] sm:$0xff]
      %v682 = vmul.f32 %v680, %v478
      %v683 = vmul.f32 %v681, %v479
      %v684 = vpack.c.bf16 %v683, %v682
      %685 = vrot.lane.b32.xlu0 %v501, 96
      %v686 = vpop.permute.xlu0 %685
      %687 = vrot.lane.b32.xlu0 %v502, 96
      %v688 = vpop.permute.xlu0 %687
      %vm689 = vcmask 785408
      %v690 = vsel %vm689, %v686, %v688
      %v693 = vsel %vm510, %v684, 0
      %695 = vmatpush.bf16.msra.mxu0 0
      %696 = vmatpush.bf16.msra.mxu0 0
      %697 = vmatpush.bf16.msra.mxu0 0
      %698 = vmatpush.bf16.msra.mxu0 0
      %699 = vmatpush.bf16.msra.mxu0 0
      %700 = vmatpush.bf16.msra.mxu0 0
      %701 = vmatpush.bf16.msra.mxu0 0
      %702 = vmatpush.bf16.msra.mxu0 %v690
      %703 = vmatmul.bf16.gmra.mxu0 %v693
      %v704 = vpop.f32.mrf.mxu0
      %v705 = vadd.f32 0.0, %v704
      %v706 = vpop.f32.mrf.mxu0
      %v707 = vadd.f32 0.0, %v706
      %708 = vdwg.mxu0
      %v709 = vadd.f32 %v677, %v705
      %v710 = vadd.f32 %v678, %v707
      %s711 = scalar_lea.vmem %s0, 112
      %v712 = vld [vmem:[%s711] sm:$0xff]
      %v713 = vld [vmem:[%s711 + $0x8] sm:$0xff]
      %v714 = vmul.f32 %v712, %v478
      %v715 = vmul.f32 %v713, %v479
      %v716 = vpack.c.bf16 %v715, %v714
      %717 = vrot.lane.b32.xlu0 %v501, 95
      %v718 = vpop.permute.xlu0 %717
      %719 = vrot.lane.b32.xlu0 %v502, 95
      %v720 = vpop.permute.xlu0 %719
      %vm721 = vcmask 777216
      %v722 = vsel %vm721, %v718, %v720
      %v725 = vsel %vm510, %v716, 0
      %727 = vmatpush.bf16.msra.mxu0 0
      %728 = vmatpush.bf16.msra.mxu0 0
      %729 = vmatpush.bf16.msra.mxu0 0
      %730 = vmatpush.bf16.msra.mxu0 0
      %731 = vmatpush.bf16.msra.mxu0 0
      %732 = vmatpush.bf16.msra.mxu0 0
      %733 = vmatpush.bf16.msra.mxu0 0
      %734 = vmatpush.bf16.msra.mxu0 %v722
      %735 = vmatmul.bf16.gmra.mxu0 %v725
      %v736 = vpop.f32.mrf.mxu0
      %v737 = vadd.f32 0.0, %v736
      %v738 = vpop.f32.mrf.mxu0
      %v739 = vadd.f32 0.0, %v738
      %740 = vdwg.mxu0
      %v741 = vadd.f32 %v709, %v737
      %v742 = vadd.f32 %v710, %v739
      %s743 = scalar_lea.vmem %s0, 128
      %v744 = vld [vmem:[%s743] sm:$0xff]
      %v745 = vld [vmem:[%s743 + $0x8] sm:$0xff]
      %v746 = vmul.f32 %v744, %v478
      %v747 = vmul.f32 %v745, %v479
      %v748 = vpack.c.bf16 %v747, %v746
      %749 = vrot.lane.b32.xlu0 %v501, 94
      %v750 = vpop.permute.xlu0 %749
      %751 = vrot.lane.b32.xlu0 %v502, 94
      %v752 = vpop.permute.xlu0 %751
      %vm753 = vcmask 769024
      %v754 = vsel %vm753, %v750, %v752
      %v757 = vsel %vm510, %v748, 0
      %759 = vmatpush.bf16.msra.mxu0 0
      %760 = vmatpush.bf16.msra.mxu0 0
      %761 = vmatpush.bf16.msra.mxu0 0
      %762 = vmatpush.bf16.msra.mxu0 0
      %763 = vmatpush.bf16.msra.mxu0 0
      %764 = vmatpush.bf16.msra.mxu0 0
      %765 = vmatpush.bf16.msra.mxu0 0
      %766 = vmatpush.bf16.msra.mxu0 %v754
      %767 = vmatmul.bf16.gmra.mxu0 %v757
      %v768 = vpop.f32.mrf.mxu0
      %v769 = vadd.f32 0.0, %v768
      %v770 = vpop.f32.mrf.mxu0
      %v771 = vadd.f32 0.0, %v770
      %772 = vdwg.mxu0
      %v773 = vadd.f32 %v741, %v769
      %v774 = vadd.f32 %v742, %v771
      %s775 = sld [smem:[#allocation2]]
      %v776 = vld [vmem:[%s451] sm:$0x1]
      %v777 = vunpack.c.l.bf16 %v776
      %v778 = vstv %s775
      %v779 = vmul.f32 %v778, %v777
      %v780 = vperm.slane %v779, 0
      %v781 = vadd.f32 %v773, %v780
      %v782 = vadd.f32 %v774, %v780
      %v783 = vld [vmem:[%s3] sm:$0xff]
      %v784 = vld [vmem:[%s3 + $0x8] sm:$0xff]
      %786 = vset.pattern.permute.xlu0 0
      %787 = vperm.xlu0 %786, %v783
      %v788 = vpop.permute.xlu0 %787
      %791 = vset.pattern.permute.xlu0 0
      %792 = vperm.xlu0 %791, %v784
      %v793 = vpop.permute.xlu0 %792
      %v795 = vadd.f32 %v781, %v788
      %v796 = vadd.f32 %v782, %v793
      %vm797 = vcmp.ge.f32.partialorder %v795, 0.0
      %vm798 = vcmp.ge.f32.partialorder %v796, 0.0
      %v799 = vmul.f32 %v795, 0.2
      %v800 = vmul.f32 %v796, 0.2
      %v801 = vsel %vm797, %v795, %v799
      %v802 = vsel %vm798, %v796, %v800
      %v803 = vpack.c.bf16 %v801, %v801
      %v804 = vpack.c.bf16 %v802, %v802
      %805 = vst [vmem:[%s456] sm:$0xf] %v803
      %806 = vst [vmem:[%s456 + $0x4] sm:$0xf] %v804
      %v807 = vld [vmem:[%s4] sm:$0x7]
      %v808 = vld [vmem:[%s443] sm:$0x1]
      %v810 = vperm.slane %v808, 0
      %v812 = vmul.f32 %v807, %v810
      %v813 = vpack.c.bf16 %v812, %v812
      %v814 = vld [vmem:[%s6] sm:$0x7]
      %816 = vset.pattern.permute.xlu0 0
      %817 = vperm.xlu0 %816, %v814
      %v818 = vpop.permute.xlu0 %817
      %v822 = vunpack.c.l.b16 %v803
      %v823 = vunpack.c.l.b16 %v804
      %v824 = vpack.c.b16 %v823, %v822
      %v827 = vsel %vm510, %v813, 0
      %829 = vmatpush.bf16.msra.mxu0 0
      %830 = vmatpush.bf16.msra.mxu0 0
      %831 = vmatpush.bf16.msra.mxu0 0
      %832 = vmatpush.bf16.msra.mxu0 0
      %833 = vmatpush.bf16.msra.mxu0 0
      %834 = vmatpush.bf16.msra.mxu0 0
      %835 = vmatpush.bf16.msra.mxu0 0
      %836 = vmatpush.bf16.msra.mxu0 %v824
      %837 = vmatmul.bf16.gmra.mxu0 %v827
      %v838 = vpop.f32.mrf.mxu0
      %v839 = vadd.f32 %v818, %v838
      %v840 = vpop.f32.mrf.mxu0
      %841 = vdwg.mxu0
      %vm842 = vcmp.ge.f32.partialorder %v839, 0.0
      %v843 = vmul.f32 %v839, 0.2
      %v844 = vsel %vm842, %v839, %v843
      %845 = vst [vmem:[%s460] sm:$0x7] %v844
      %p846 = scmp.lt.s32.totalorder %s24, 1
      %s847 = scalar_select %p846, %s24, 1
      %s848 = smul.addr %s847, 2
      %s849 = smul.addr %s848, 4
      %s850 = scalar_lea.vmem %s10, %s849
      %p851 = scmp.lt.s32.totalorder %s24, 1
      %s852 = scalar_select %p851, %s24, 1
      %s853 = smul.addr %s852, 4
      %s854 = scalar_lea.vmem %s11, %s853
      // Predicated region
      $region61: #{generator_forward.7} parent=59 // pred_check
        %p855 = pneg %p277
      $region62: #{generator_forward.7} parent=59 // pred_check_branch
        %857 = sbr.rel (%p855) target = $region64
      $region63: #{generator_forward.7} parent=59 // pred_region
        _
      $region64: #{generator_forward.7} parent=59 // pred_fallthru
        _
      // Predicated region
      $region65: #{generator_forward.7} parent=59 // pred_check
        %p858 = pneg %p303
      $region66: #{generator_forward.7} parent=59 // pred_check_branch
        %860 = sbr.rel (%p858) target = $region68
      $region67: #{generator_forward.7} parent=59 // pred_region
        _
      $region68: #{generator_forward.7} parent=59 // pred_fallthru
        _
    $region60: #{generator_forward.7} parent=5 // pred_fallthru
      _
    %p861 = scmp.le.s32.totalorder 2, %s19
    // Predicated region
    $region69: #{generator_forward.7} parent=5 // pred_check
      %p862 = pneg %p861
    $region70: #{generator_forward.7} parent=5 // pred_check_branch
      %864 = sbr.rel (%p862) target = $region72
    $region71: #{generator_forward.7} parent=5 // pred_region
      %s865 = ssub.s32 %s19, 2
      // Predicated region
      $region73: #{generator_forward.7} parent=71 // pred_check
        %p866 = pneg %p283
      $region74: #{generator_forward.7} parent=71 // pred_check_branch
        %868 = sbr.rel (%p866) target = $region76
      $region75: #{generator_forward.7} parent=71 // pred_region
        %p869 = scmp.lt.s32.totalorder %s25, 1
        %s870 = scalar_select %p869, %s25, 1
        %s871 = smul.addr %s870, 2
        %s872 = smul.addr %s871, 4
        %s873 = scalar_lea.vmem %s10, %s872
      $region76: #{generator_forward.7} parent=71 // pred_fallthru
        _
      // Predicated region
      $region77: #{generator_forward.7} parent=71 // pred_check
        %p874 = pneg %p309
      $region78: #{generator_forward.7} parent=71 // pred_check_branch
        %876 = sbr.rel (%p874) target = $region80
      $region79: #{generator_forward.7} parent=71 // pred_region
        %p877 = scmp.lt.s32.totalorder %s25, 1
        %s878 = scalar_select %p877, %s25, 1
        %s879 = smul.addr %s878, 4
        %s880 = scalar_lea.vmem %s11, %s879
      $region80: #{generator_forward.7} parent=71 // pred_fallthru
        _
    $region72: #{generator_forward.7} parent=5 // pred_fallthru
      _
  $region6: #{generator_forward.7} parent=0 // loop_footer
    %s23 = sadd.s32 1, %s19
  $region7: #{generator_forward.7} parent=0 // loop_footer_branch
    %18 = sbr.rel target = $region3
  $region8: #{generator_forward.7} parent=0 // loop_exit
    _

// kernel: generator_forward.8
$region0: #{generator_forward.8}
  #allocation0 [shape = 'u32[]', space=smem, size = 0x4, offset = 0x4, fixed_abs, tag = 'smem constant byte address 0x4 - core index']
  #allocation1 [shape = 'u32[72,128]{1,0:T(1,128)}', space=vmem, size = 0x9000, scoped, tag = 'internal scratch']
  #allocation2 [shape = 'f32[1]{0:T(128)S(6)}', space=smem, size = 0x200, scoped, tag = 'scoped memory for generator_forward.8']
  %s0 = inlined_call_operand.vmem [shape: f32[9,8,16], index: 0, kind: input, shape index: {}]
  %s1 = inlined_call_operand.vmem [shape: f32[2,1,16], index: 1, kind: input, shape index: {}]
  %s2 = inlined_call_operand.vmem [shape: f32[2,8,1], index: 2, kind: input, shape index: {}]
  %s3 = inlined_call_operand.vmem [shape: f32[8,1], index: 3, kind: input, shape index: {}]
  %s4 = inlined_call_operand.vmem [shape: bf16[2,16,456], index: 4, kind: input, shape index: {}]
  %s5 = inlined_call_operand.vmem [shape: bf16[2,1,384], index: 5, kind: input, shape index: {}]
  %s6 = inlined_call_operand.<no memory space> [shape: f32[1], index: 6, kind: input, shape index: {}]
  %s7 = inlined_call_operand.vmem [shape: bf16[2,8,384], index: 7, kind: output, shape index: {}]
  %s8 = sld [smem:[#allocation0]]
  $region61: #{generator_forward.8} parent=0
    _
  %s10 = ssub.s32 1, %s8
  %s11 = scalar_select 0, %s10, %s8
  %12 = sst [smem:[#allocation2]] %s6
  loop: start=0, step=1, limit=4
  $region2: #{generator_forward.8} parent=0 // loop_pre_header
    _
  $region3: #{generator_forward.8} parent=0 // loop_header
    %s14 = sphi 0, %s18
    %p15 = scmp.ge.s32.totalorder %s14, 4
    %s22 = sphi 0, %s22
    %s24 = sphi 0, %s22
    %s25 = sphi 0, %s24
    %s39 = sphi 0, %s25
    %s45 = sphi 0, %s47
    %s48 = sphi 0, %s45
    %s49 = sphi 0, %s48
    %s65 = sphi 0, %s49
    %s71 = sphi 0, %s73
    %s74 = sphi 0, %s71
    %s75 = sphi 0, %s74
    %s91 = sphi 0, %s75
    %s95 = sphi 0, %s95
    %s97 = sphi 0, %s95
    %s98 = sphi 0, %s97
    %s112 = sphi 0, %s98
    %s118 = sphi 0, %s120
    %s121 = sphi 0, %s118
    %s122 = sphi 0, %s121
    %s138 = sphi 0, %s122
    %s144 = sphi 0, %s146
    %s147 = sphi 0, %s144
    %s148 = sphi 0, %s147
    %s164 = sphi 0, %s148
    %s168 = sphi 0, %s168
    %s170 = sphi 0, %s168
    %s171 = sphi 0, %s170
    %s185 = sphi 0, %s171
    %s191 = sphi 0, %s193
    %s194 = sphi 0, %s191
    %s195 = sphi 0, %s194
    %s211 = sphi 0, %s195
  $region4: #{generator_forward.8} parent=0 // loop_header_branch
    %17 = sbr.rel (%p15) target = $region8
  $region5: #{generator_forward.8} parent=0 // loop_body
    %s19 = ssub.s32 %s14, 1
    %s20 = ssub.s32 %s14, 2
    %s21 = sadd.s32 %s14, 1
    %s23 = sadd.s32 %s22, 1
    %p26 = scmp.eq.s32.totalorder %s14, 1
    %p27 = scmp.ne.s32.totalorder %s22, %s24
    %p28 = scmp.eq.s32.totalorder %s14, 0
    %p29 = por %p27, %p28
    %p30 = scmp.ne.s32.totalorder %s22, %s24
    %p31 = scmp.eq.s32.totalorder %s19, 1
    %p32 = por %p30, %p31
    %p33 = scmp.ne.s32.totalorder %s24, %s25
    %p34 = scmp.eq.s32.totalorder %s19, 0
    %p35 = por %p33, %p34
    %p36 = scmp.ne.s32.totalorder %s24, %s25
    %p37 = scmp.eq.s32.totalorder %s20, 1
    %p38 = por %p36, %p37
    %p40 = scmp.ne.s32.totalorder %s25, %s39
    %p41 = scmp.eq.s32.totalorder %s20, 0
    %p42 = por %p40, %p41
    %s43 = ssub.s32 %s14, %s21
    %p44 = scmp.eq.s32.totalorder %s43, 0
    %s46 = sadd.s32 %s45, 1
    %s47 = scalar_select %p44, %s45, %s46
    %p50 = pneg %p44
    %p51 = scmp.eq.s32.totalorder %s14, 1
    %p52 = por %p50, %p51
    %p53 = scmp.ne.s32.totalorder %s45, %s48
    %p54 = scmp.eq.s32.totalorder %s14, 0
    %p55 = por %p53, %p54
    %p56 = scmp.ne.s32.totalorder %s45, %s48
    %p57 = scmp.eq.s32.totalorder %s19, 1
    %p58 = por %p56, %p57
    %p59 = scmp.ne.s32.totalorder %s48, %s49
    %p60 = scmp.eq.s32.totalorder %s19, 0
    %p61 = por %p59, %p60
    %p62 = scmp.ne.s32.totalorder %s48, %s49
    %p63 = scmp.eq.s32.totalorder %s20, 1
    %p64 = por %p62, %p63
    %p66 = scmp.ne.s32.totalorder %s49, %s65
    %p67 = scmp.eq.s32.totalorder %s20, 0
    %p68 = por %p66, %p67
    %s69 = ssub.s32 %s14, %s21
    %p70 = scmp.eq.s32.totalorder %s69, 0
    %s72 = sadd.s32 %s71, 1
    %s73 = scalar_select %p70, %s71, %s72
    %p76 = pneg %p70
    %p77 = scmp.eq.s32.totalorder %s14, 1
    %p78 = por %p76, %p77
    %p79 = scmp.ne.s32.totalorder %s71, %s74
    %p80 = scmp.eq.s32.totalorder %s14, 0
    %p81 = por %p79, %p80
    %p82 = scmp.ne.s32.totalorder %s71, %s74
    %p83 = scmp.eq.s32.totalorder %s19, 1
    %p84 = por %p82, %p83
    %p85 = scmp.ne.s32.totalorder %s74, %s75
    %p86 = scmp.eq.s32.totalorder %s19, 0
    %p87 = por %p85, %p86
    %p88 = scmp.ne.s32.totalorder %s74, %s75
    %p89 = scmp.eq.s32.totalorder %s20, 1
    %p90 = por %p88, %p89
    %p92 = scmp.ne.s32.totalorder %s75, %s91
    %p93 = scmp.eq.s32.totalorder %s20, 0
    %p94 = por %p92, %p93
    %s96 = sadd.s32 %s95, 1
    %p99 = scmp.eq.s32.totalorder %s14, 1
    %p100 = scmp.ne.s32.totalorder %s95, %s97
    %p101 = scmp.eq.s32.totalorder %s14, 0
    %p102 = por %p100, %p101
    %p103 = scmp.ne.s32.totalorder %s95, %s97
    %p104 = scmp.eq.s32.totalorder %s19, 1
    %p105 = por %p103, %p104
    %p106 = scmp.ne.s32.totalorder %s97, %s98
    %p107 = scmp.eq.s32.totalorder %s19, 0
    %p108 = por %p106, %p107
    %p109 = scmp.ne.s32.totalorder %s97, %s98
    %p110 = scmp.eq.s32.totalorder %s20, 1
    %p111 = por %p109, %p110
    %p113 = scmp.ne.s32.totalorder %s98, %s112
    %p114 = scmp.eq.s32.totalorder %s20, 0
    %p115 = por %p113, %p114
    %s116 = ssub.s32 %s14, %s21
    %p117 = scmp.eq.s32.totalorder %s116, 0
    %s119 = sadd.s32 %s118, 1
    %s120 = scalar_select %p117, %s118, %s119
    %p123 = pneg %p117
    %p124 = scmp.eq.s32.totalorder %s14, 1
    %p125 = por %p123, %p124
    %p126 = scmp.ne.s32.totalorder %s118, %s121
    %p127 = scmp.eq.s32.totalorder %s14, 0
    %p128 = por %p126, %p127
    %p129 = scmp.ne.s32.totalorder %s118, %s121
    %p130 = scmp.eq.s32.totalorder %s19, 1
    %p131 = por %p129, %p130
    %p132 = scmp.ne.s32.totalorder %s121, %s122
    %p133 = scmp.eq.s32.totalorder %s19, 0
    %p134 = por %p132, %p133
    %p135 = scmp.ne.s32.totalorder %s121, %s122
    %p136 = scmp.eq.s32.totalorder %s20, 1
    %p137 = por %p135, %p136
    %p139 = scmp.ne.s32.totalorder %s122, %s138
    %p140 = scmp.eq.s32.totalorder %s20, 0
    %p141 = por %p139, %p140
    %s142 = ssub.s32 %s14, %s21
    %p143 = scmp.eq.s32.totalorder %s142, 0
    %s145 = sadd.s32 %s144, 1
    %s146 = scalar_select %p143, %s144, %s145
    %p149 = pneg %p143
    %p150 = scmp.eq.s32.totalorder %s14, 1
    %p151 = por %p149, %p150
    %p152 = scmp.ne.s32.totalorder %s144, %s147
    %p153 = scmp.eq.s32.totalorder %s14, 0
    %p154 = por %p152, %p153
    %p155 = scmp.ne.s32.totalorder %s144, %s147
    %p156 = scmp.eq.s32.totalorder %s19, 1
    %p157 = por %p155, %p156
    %p158 = scmp.ne.s32.totalorder %s147, %s148
    %p159 = scmp.eq.s32.totalorder %s19, 0
    %p160 = por %p158, %p159
    %p161 = scmp.ne.s32.totalorder %s147, %s148
    %p162 = scmp.eq.s32.totalorder %s20, 1
    %p163 = por %p161, %p162
    %p165 = scmp.ne.s32.totalorder %s148, %s164
    %p166 = scmp.eq.s32.totalorder %s20, 0
    %p167 = por %p165, %p166
    %s169 = sadd.s32 %s168, 1
    %p172 = scmp.eq.s32.totalorder %s14, 1
    %p173 = scmp.ne.s32.totalorder %s168, %s170
    %p174 = scmp.eq.s32.totalorder %s14, 0
    %p175 = por %p173, %p174
    %p176 = scmp.ne.s32.totalorder %s168, %s170
    %p177 = scmp.eq.s32.totalorder %s19, 1
    %p178 = por %p176, %p177
    %p179 = scmp.ne.s32.totalorder %s170, %s171
    %p180 = scmp.eq.s32.totalorder %s19, 0
    %p181 = por %p179, %p180
    %p182 = scmp.ne.s32.totalorder %s170, %s171
    %p183 = scmp.eq.s32.totalorder %s20, 1
    %p184 = por %p182, %p183
    %p186 = scmp.ne.s32.totalorder %s171, %s185
    %p187 = scmp.eq.s32.totalorder %s20, 0
    %p188 = por %p186, %p187
    %s189 = ssub.s32 %s14, %s21
    %p190 = scmp.eq.s32.totalorder %s189, 0
    %s192 = sadd.s32 %s191, 1
    %s193 = scalar_select %p190, %s191, %s192
    %p196 = pneg %p190
    %p197 = scmp.eq.s32.totalorder %s14, 1
    %p198 = por %p196, %p197
    %p199 = scmp.ne.s32.totalorder %s191, %s194
    %p200 = scmp.eq.s32.totalorder %s14, 0
    %p201 = por %p199, %p200
    %p202 = scmp.ne.s32.totalorder %s191, %s194
    %p203 = scmp.eq.s32.totalorder %s19, 1
    %p204 = por %p202, %p203
    %p205 = scmp.ne.s32.totalorder %s194, %s195
    %p206 = scmp.eq.s32.totalorder %s19, 0
    %p207 = por %p205, %p206
    %p208 = scmp.ne.s32.totalorder %s194, %s195
    %p209 = scmp.eq.s32.totalorder %s20, 1
    %p210 = por %p208, %p209
    %p212 = scmp.ne.s32.totalorder %s195, %s211
    %p213 = scmp.eq.s32.totalorder %s20, 0
    %p214 = por %p212, %p213
    %p215 = scmp.le.s32.totalorder 1, %s14
    %p216 = scmp.lt.s32.totalorder %s14, 3
    %p217 = pnand %p215, %p216
    %p218 = pneg %p217
    // Predicated region
    $region9: #{generator_forward.8} parent=5 // pred_check
      _
    $region10: #{generator_forward.8} parent=5 // pred_check_branch
      %220 = sbr.rel (%p217) target = $region12
    $region11: #{generator_forward.8} parent=5 // pred_region
      %s221 = ssub.s32 %s14, 1
      // Predicated region
      $region13: #{generator_forward.8} parent=11 // pred_check
        %p222 = pneg %p35
      $region14: #{generator_forward.8} parent=11 // pred_check_branch
        %224 = sbr.rel (%p222) target = $region16
      $region15: #{generator_forward.8} parent=11 // pred_region
        _
      $region16: #{generator_forward.8} parent=11 // pred_fallthru
        _
      // Predicated region
      $region17: #{generator_forward.8} parent=11 // pred_check
        %p225 = pneg %p108
      $region18: #{generator_forward.8} parent=11 // pred_check_branch
        %227 = sbr.rel (%p225) target = $region20
      $region19: #{generator_forward.8} parent=11 // pred_region
        _
      $region20: #{generator_forward.8} parent=11 // pred_fallthru
        _
      // Predicated region
      $region21: #{generator_forward.8} parent=11 // pred_check
        %p228 = pneg %p181
      $region22: #{generator_forward.8} parent=11 // pred_check_branch
        %230 = sbr.rel (%p228) target = $region24
      $region23: #{generator_forward.8} parent=11 // pred_region
        _
      $region24: #{generator_forward.8} parent=11 // pred_fallthru
        _
    $region12: #{generator_forward.8} parent=5 // pred_fallthru
      _
    %p231 = scmp.lt.s32.totalorder %s14, 2
    // Predicated region
    $region25: #{generator_forward.8} parent=5 // pred_check
      %p232 = pneg %p231
    $region26: #{generator_forward.8} parent=5 // pred_check_branch
      %234 = sbr.rel (%p232) target = $region28
    $region27: #{generator_forward.8} parent=5 // pred_region
      // Predicated region
      $region29: #{generator_forward.8} parent=27 // pred_check
        %p235 = pneg %p55
      $region30: #{generator_forward.8} parent=27 // pred_check_branch
        %237 = sbr.rel (%p235) target = $region32
      $region31: #{generator_forward.8} parent=27 // pred_region
        %p238 = scmp.lt.s32.totalorder %s14, 1
        %s239 = scalar_select %p238, %s14, 1
        %s240 = scalar_lea.vmem %s1, %s239
      $region32: #{generator_forward.8} parent=27 // pred_fallthru
        _
      // Predicated region
      $region33: #{generator_forward.8} parent=27 // pred_check
        %p241 = pneg %p81
      $region34: #{generator_forward.8} parent=27 // pred_check_branch
        %243 = sbr.rel (%p241) target = $region36
      $region35: #{generator_forward.8} parent=27 // pred_region
        %p244 = scmp.lt.s32.totalorder %s14, 1
        %s245 = scalar_select %p244, %s14, 1
        %s246 = smul.addr %s245, 8
        %s247 = scalar_lea.vmem %s2, %s246
      $region36: #{generator_forward.8} parent=27 // pred_fallthru
        _
      // Predicated region
      $region37: #{generator_forward.8} parent=27 // pred_check
        %p248 = pneg %p128
      $region38: #{generator_forward.8} parent=27 // pred_check_branch
        %250 = sbr.rel (%p248) target = $region40
      $region39: #{generator_forward.8} parent=27 // pred_region
        %p251 = scmp.lt.s32.totalorder %s14, 1
        %s252 = scalar_select %p251, %s14, 1
        %s253 = smul.addr %s252, 8
        %s254 = smul.addr %s253, 4
        %s255 = scalar_lea.vmem %s4, %s254
      $region40: #{generator_forward.8} parent=27 // pred_fallthru
        _
      // Predicated region
      $region41: #{generator_forward.8} parent=27 // pred_check
        %p256 = pneg %p154
      $region42: #{generator_forward.8} parent=27 // pred_check_branch
        %258 = sbr.rel (%p256) target = $region44
      $region43: #{generator_forward.8} parent=27 // pred_region
        %p259 = scmp.lt.s32.totalorder %s14, 1
        %s260 = scalar_select %p259, %s14, 1
        %s261 = smul.addr %s260, 3
        %s262 = scalar_lea.vmem %s5, %s261
      $region44: #{generator_forward.8} parent=27 // pred_fallthru
        _
    $region28: #{generator_forward.8} parent=5 // pred_fallthru
      _
    %p263 = scmp.le.s32.totalorder 1, %s14
    %p264 = scmp.lt.s32.totalorder %s14, 3
    %p265 = pnand %p263, %p264
    %p266 = pneg %p265
    // Predicated region
    $region45: #{generator_forward.8} parent=5 // pred_check
      _
    $region46: #{generator_forward.8} parent=5 // pred_check_branch
      %268 = sbr.rel (%p265) target = $region48
    $region47: #{generator_forward.8} parent=5 // pred_region
      %s269 = ssub.s32 %s14, 1
      %p270 = pneg %p35
      %p271 = pneg %p32
      %p272 = scmp.lt.s32.totalorder %s19, 1
      %s273 = scalar_select %p272, %s19, 1
      %s274 = scalar_lea.vmem %s1, %s273
      %p275 = pneg %p61
      %p276 = pneg %p58
      %p277 = scmp.lt.s32.totalorder %s19, 1
      %s278 = scalar_select %p277, %s19, 1
      %s279 = smul.addr %s278, 8
      %s280 = scalar_lea.vmem %s2, %s279
      %p281 = pneg %p87
      %p282 = pneg %p84
      %p283 = pneg %p108
      %p284 = pneg %p105
      %p285 = scmp.lt.s32.totalorder %s19, 1
      %s286 = scalar_select %p285, %s19, 1
      %s287 = smul.addr %s286, 8
      %s288 = smul.addr %s287, 4
      %s289 = scalar_lea.vmem %s4, %s288
      %p290 = pneg %p134
      %p291 = pneg %p131
      %p292 = scmp.lt.s32.totalorder %s19, 1
      %s293 = scalar_select %p292, %s19, 1
      %s294 = smul.addr %s293, 3
      %s295 = scalar_lea.vmem %s5, %s294
      %p296 = pneg %p160
      %p297 = pneg %p157
      %p298 = pneg %p181
      %p299 = pneg %p178
      %p300 = pneg %p207
      %p301 = pneg %p204
      %p302 = scmp.lt.s32.totalorder %s19, 1
      %s303 = scalar_select %p302, %s19, 1
      %s304 = smul.addr %s303, 3
      %s305 = smul.addr %s304, 4
      %s306 = scalar_lea.vmem %s7, %s305
      %p307 = scmp.lt.s32.totalorder %s19, 1
      %s308 = scalar_select %p307, %s19, 1
      %s309 = scalar_lea.vmem %s1, %s308
      %p310 = scmp.lt.s32.totalorder %s19, 1
      %s311 = scalar_select %p310, %s19, 1
      %s312 = smul.addr %s311, 8
      %s313 = scalar_lea.vmem %s2, %s312
      %p314 = scmp.lt.s32.totalorder %s19, 1
      %s315 = scalar_select %p314, %s19, 1
      %s316 = smul.addr %s315, 8
      %s317 = smul.addr %s316, 4
      %s318 = scalar_lea.vmem %s4, %s317
      %p319 = scmp.lt.s32.totalorder %s19, 1
      %s320 = scalar_select %p319, %s19, 1
      %s321 = smul.addr %s320, 3
      %s322 = scalar_lea.vmem %s5, %s321
      %p323 = scmp.lt.s32.totalorder %s19, 1
      %s324 = scalar_select %p323, %s19, 1
      %s325 = smul.addr %s324, 3
      %s326 = smul.addr %s325, 4
      %s327 = scalar_lea.vmem %s7, %s326
      %v329 = vld [vmem:[%s313] sm:$0xff]
      %v330 = vld [vmem:[%s309] sm:$0x1]
      %332 = vset.pattern.permute.xlu0 0
      %333 = vperm.xlu0 %332, %v329
      %v334 = vpop.permute.xlu0 %333
      %v337 = vperm.slane %v330, 0
      %v339 = vmul.f32 %v334, %v337
      %v340 = vld [vmem:[%s0] sm:$0xff]
      %v341 = vmul.f32 %v340, %v339
      %v342 = vpack.c.bf16 %v341, %v341
      %v343 = vld [vmem:[%s318] sm:$0xff]
      %v344 = vld [vmem:[%s318 + $0x8] sm:$0xf]
      %v345 = vld [vmem:[%s318 + $0x10] sm:$0xff]
      %v346 = vld [vmem:[%s318 + $0x18] sm:$0xf]
      %s347 = scalar_lea.vmem %s0, 8
      %v348 = vld [vmem:[%s347] sm:$0xff]
      %v349 = vmul.f32 %v348, %v339
      %v350 = vpack.c.bf16 %v349, %v349
      %v351 = vld [vmem:[%s318 + $0x8] sm:$0xff]
      %v352 = vld [vmem:[%s318 + $0x18] sm:$0xff]
      %v357 = vunpack.c.l.b16 %v343
      %v358 = vunpack.c.h.b16 %v343
      %v359 = vunpack.c.l.b16 %v351
      %v360 = vunpack.c.h.b16 %v351
      %v361 = vunpack.c.l.b16 %v345
      %v362 = vunpack.c.h.b16 %v345
      %v363 = vunpack.c.l.b16 %v352
      %v364 = vunpack.c.h.b16 %v352
      %v365 = vpack.c.b16 %v361, %v357
      %v366 = vpack.c.b16 %v362, %v358
      %v367 = vpack.c.b16 %v363, %v359
      %v368 = vpack.c.b16 %v364, %v360
      %369 = vrot.lane.b32.xlu0 %v365, 127
      %v370 = vpop.permute.xlu0 %369
      %371 = vrot.lane.b32.xlu0 %v366, 127
      %v372 = vpop.permute.xlu0 %371
      %373 = vrot.lane.b32.xlu0 %v367, 127
      %v374 = vpop.permute.xlu0 %373
      %375 = vrot.lane.b32.xlu0 %v368, 127
      %v376 = vpop.permute.xlu0 %375
      %vm377 = vcmask 1039360
      %v378 = vsel %vm377, %v370, %v372
      %v379 = vsel %vm377, %v372, %v374
      %v380 = vsel %vm377, %v374, %v376
      %vm384 = vcmask 130048
      %v386 = vsel %vm384, %v350, 0
      %388 = vmatpush.bf16.msra.mxu0 0
      %389 = vmatpush.bf16.msra.mxu0 0
      %390 = vmatpush.bf16.msra.mxu0 0
      %391 = vmatpush.bf16.msra.mxu0 0
      %392 = vmatpush.bf16.msra.mxu0 0
      %393 = vmatpush.bf16.msra.mxu0 0
      %394 = vmatpush.bf16.msra.mxu0 0
      %395 = vmatpush.bf16.msra.mxu0 %v378
      %396 = vmatmul.bf16.gmra.mxu0 %v386
      %v397 = vpop.f32.mrf.mxu0
      %v398 = vadd.f32 0.0, %v397
      %v399 = vpop.f32.mrf.mxu0
      %400 = vdwg.mxu0
      %401 = vmatpush.bf16.msra.mxu0 0
      %402 = vmatpush.bf16.msra.mxu0 0
      %403 = vmatpush.bf16.msra.mxu0 0
      %404 = vmatpush.bf16.msra.mxu0 0
      %405 = vmatpush.bf16.msra.mxu0 0
      %406 = vmatpush.bf16.msra.mxu0 0
      %407 = vmatpush.bf16.msra.mxu0 0
      %408 = vmatpush.bf16.msra.mxu0 %v379
      %409 = vmatmul.bf16.gmra.mxu0 %v386
      %v410 = vpop.f32.mrf.mxu0
      %v411 = vadd.f32 0.0, %v410
      %v412 = vpop.f32.mrf.mxu0
      %413 = vdwg.mxu0
      %414 = vmatpush.bf16.msra.mxu0 0
      %415 = vmatpush.bf16.msra.mxu0 0
      %416 = vmatpush.bf16.msra.mxu0 0
      %417 = vmatpush.bf16.msra.mxu0 0
      %418 = vmatpush.bf16.msra.mxu0 0
      %419 = vmatpush.bf16.msra.mxu0 0
      %420 = vmatpush.bf16.msra.mxu0 0
      %421 = vmatpush.bf16.msra.mxu0 %v380
      %422 = vmatmul.bf16.gmra.mxu0 %v386
      %v423 = vpop.f32.mrf.mxu0
      %v424 = vadd.f32 0.0, %v423
      %v425 = vpop.f32.mrf.mxu0
      %426 = vdwg.mxu0
      %v429 = vunpack.c.l.b16 %v344
      %v430 = vunpack.c.l.b16 %v346
      %v431 = vpack.c.b16 %v430, %v429
      %v436 = vsel %vm384, %v342, 0
      %438 = vmatpush.bf16.msra.mxu0 0
      %439 = vmatpush.bf16.msra.mxu0 0
      %440 = vmatpush.bf16.msra.mxu0 0
      %441 = vmatpush.bf16.msra.mxu0 0
      %442 = vmatpush.bf16.msra.mxu0 0
      %443 = vmatpush.bf16.msra.mxu0 0
      %444 = vmatpush.bf16.msra.mxu0 0
      %445 = vmatpush.bf16.msra.mxu0 %v365
      %446 = vmatmul.bf16.gmra.mxu0 %v436
      %v447 = vpop.f32.mrf.mxu0
      %v448 = vadd.f32 %v398, %v447
      %v449 = vpop.f32.mrf.mxu0
      %450 = vdwg.mxu0
      %451 = vmatpush.bf16.msra.mxu0 0
      %452 = vmatpush.bf16.msra.mxu0 0
      %453 = vmatpush.bf16.msra.mxu0 0
      %454 = vmatpush.bf16.msra.mxu0 0
      %455 = vmatpush.bf16.msra.mxu0 0
      %456 = vmatpush.bf16.msra.mxu0 0
      %457 = vmatpush.bf16.msra.mxu0 0
      %458 = vmatpush.bf16.msra.mxu0 %v366
      %459 = vmatmul.bf16.gmra.mxu0 %v436
      %v460 = vpop.f32.mrf.mxu0
      %v461 = vadd.f32 %v411, %v460
      %v462 = vpop.f32.mrf.mxu0
      %463 = vdwg.mxu0
      %464 = vmatpush.bf16.msra.mxu0 0
      %465 = vmatpush.bf16.msra.mxu0 0
      %466 = vmatpush.bf16.msra.mxu0 0
      %467 = vmatpush.bf16.msra.mxu0 0
      %468 = vmatpush.bf16.msra.mxu0 0
      %469 = vmatpush.bf16.msra.mxu0 0
      %470 = vmatpush.bf16.msra.mxu0 0
      %471 = vmatpush.bf16.msra.mxu0 %v431
      %472 = vmatmul.bf16.gmra.mxu0 %v436
      %v473 = vpop.f32.mrf.mxu0
      %v474 = vadd.f32 %v424, %v473
      %v475 = vpop.f32.mrf.mxu0
      %476 = vdwg.mxu0
      %s477 = scalar_lea.vmem %s0, 16
      %v478 = vld [vmem:[%s477] sm:$0xff]
      %v479 = vmul.f32 %v478, %v339
      %v480 = vpack.c.bf16 %v479, %v479
      %481 = vrot.lane.b32.xlu0 %v365, 126
      %v482 = vpop.permute.xlu0 %481
      %483 = vrot.lane.b32.xlu0 %v366, 126
      %v484 = vpop.permute.xlu0 %483
      %485 = vrot.lane.b32.xlu0 %v367, 126
      %v486 = vpop.permute.xlu0 %485
      %487 = vrot.lane.b32.xlu0 %v368, 126
      %v488 = vpop.permute.xlu0 %487
      %vm489 = vcmask 1031168
      %v490 = vsel %vm489, %v482, %v484
      %v491 = vsel %vm489, %v484, %v486
      %v492 = vsel %vm489, %v486, %v488
      %v497 = vsel %vm384, %v480, 0
      %499 = vmatpush.bf16.msra.mxu0 0
      %500 = vmatpush.bf16.msra.mxu0 0
      %501 = vmatpush.bf16.msra.mxu0 0
      %502 = vmatpush.bf16.msra.mxu0 0
      %503 = vmatpush.bf16.msra.mxu0 0
      %504 = vmatpush.bf16.msra.mxu0 0
      %505 = vmatpush.bf16.msra.mxu0 0
      %506 = vmatpush.bf16.msra.mxu0 %v490
      %507 = vmatmul.bf16.gmra.mxu0 %v497
      %v508 = vpop.f32.mrf.mxu0
      %v509 = vadd.f32 0.0, %v508
      %v510 = vpop.f32.mrf.mxu0
      %511 = vdwg.mxu0
      %512 = vmatpush.bf16.msra.mxu0 0
      %513 = vmatpush.bf16.msra.mxu0 0
      %514 = vmatpush.bf16.msra.mxu0 0
      %515 = vmatpush.bf16.msra.mxu0 0
      %516 = vmatpush.bf16.msra.mxu0 0
      %517 = vmatpush.bf16.msra.mxu0 0
      %518 = vmatpush.bf16.msra.mxu0 0
      %519 = vmatpush.bf16.msra.mxu0 %v491
      %520 = vmatmul.bf16.gmra.mxu0 %v497
      %v521 = vpop.f32.mrf.mxu0
      %v522 = vadd.f32 0.0, %v521
      %v523 = vpop.f32.mrf.mxu0
      %524 = vdwg.mxu0
      %525 = vmatpush.bf16.msra.mxu0 0
      %526 = vmatpush.bf16.msra.mxu0 0
      %527 = vmatpush.bf16.msra.mxu0 0
      %528 = vmatpush.bf16.msra.mxu0 0
      %529 = vmatpush.bf16.msra.mxu0 0
      %530 = vmatpush.bf16.msra.mxu0 0
      %531 = vmatpush.bf16.msra.mxu0 0
      %532 = vmatpush.bf16.msra.mxu0 %v492
      %533 = vmatmul.bf16.gmra.mxu0 %v497
      %v534 = vpop.f32.mrf.mxu0
      %v535 = vadd.f32 0.0, %v534
      %v536 = vpop.f32.mrf.mxu0
      %537 = vdwg.mxu0
      %v538 = vadd.f32 %v448, %v509
      %v539 = vadd.f32 %v461, %v522
      %v540 = vadd.f32 %v474, %v535
      %s541 = scalar_lea.vmem %s0, 24
      %v542 = vld [vmem:[%s541] sm:$0xff]
      %v543 = vmul.f32 %v542, %v339
      %v544 = vpack.c.bf16 %v543, %v543
      %545 = vrot.lane.b32.xlu0 %v365, 104
      %v546 = vpop.permute.xlu0 %545
      %547 = vrot.lane.b32.xlu0 %v366, 104
      %v548 = vpop.permute.xlu0 %547
      %549 = vrot.lane.b32.xlu0 %v367, 104
      %v550 = vpop.permute.xlu0 %549
      %551 = vrot.lane.b32.xlu0 %v368, 104
      %v552 = vpop.permute.xlu0 %551
      %vm553 = vcmask 850944
      %v554 = vsel %vm553, %v546, %v548
      %v555 = vsel %vm553, %v548, %v550
      %v556 = vsel %vm553, %v550, %v552
      %v561 = vsel %vm384, %v544, 0
      %563 = vmatpush.bf16.msra.mxu0 0
      %564 = vmatpush.bf16.msra.mxu0 0
      %565 = vmatpush.bf16.msra.mxu0 0
      %566 = vmatpush.bf16.msra.mxu0 0
      %567 = vmatpush.bf16.msra.mxu0 0
      %568 = vmatpush.bf16.msra.mxu0 0
      %569 = vmatpush.bf16.msra.mxu0 0
      %570 = vmatpush.bf16.msra.mxu0 %v554
      %571 = vmatmul.bf16.gmra.mxu0 %v561
      %v572 = vpop.f32.mrf.mxu0
      %v573 = vadd.f32 0.0, %v572
      %v574 = vpop.f32.mrf.mxu0
      %575 = vdwg.mxu0
      %576 = vmatpush.bf16.msra.mxu0 0
      %577 = vmatpush.bf16.msra.mxu0 0
      %578 = vmatpush.bf16.msra.mxu0 0
      %579 = vmatpush.bf16.msra.mxu0 0
      %580 = vmatpush.bf16.msra.mxu0 0
      %581 = vmatpush.bf16.msra.mxu0 0
      %582 = vmatpush.bf16.msra.mxu0 0
      %583 = vmatpush.bf16.msra.mxu0 %v555
      %584 = vmatmul.bf16.gmra.mxu0 %v561
      %v585 = vpop.f32.mrf.mxu0
      %v586 = vadd.f32 0.0, %v585
      %v587 = vpop.f32.mrf.mxu0
      %588 = vdwg.mxu0
      %589 = vmatpush.bf16.msra.mxu0 0
      %590 = vmatpush.bf16.msra.mxu0 0
      %591 = vmatpush.bf16.msra.mxu0 0
      %592 = vmatpush.bf16.msra.mxu0 0
      %593 = vmatpush.bf16.msra.mxu0 0
      %594 = vmatpush.bf16.msra.mxu0 0
      %595 = vmatpush.bf16.msra.mxu0 0
      %596 = vmatpush.bf16.msra.mxu0 %v556
      %597 = vmatmul.bf16.gmra.mxu0 %v561
      %v598 = vpop.f32.mrf.mxu0
      %v599 = vadd.f32 0.0, %v598
      %v600 = vpop.f32.mrf.mxu0
      %601 = vdwg.mxu0
      %v602 = vadd.f32 %v538, %v573
      %v603 = vadd.f32 %v539, %v586
      %v604 = vadd.f32 %v540, %v599
      %s605 = scalar_lea.vmem %s0, 32
      %v606 = vld [vmem:[%s605] sm:$0xff]
      %v607 = vmul.f32 %v606, %v339
      %v608 = vpack.c.bf16 %v607, %v607
      %609 = vrot.lane.b32.xlu0 %v365, 103
      %v610 = vpop.permute.xlu0 %609
      %611 = vrot.lane.b32.xlu0 %v366, 103
      %v612 = vpop.permute.xlu0 %611
      %613 = vrot.lane.b32.xlu0 %v367, 103
      %v614 = vpop.permute.xlu0 %613
      %615 = vrot.lane.b32.xlu0 %v368, 103
      %v616 = vpop.permute.xlu0 %615
      %vm617 = vcmask 842752
      %v618 = vsel %vm617, %v610, %v612
      %v619 = vsel %vm617, %v612, %v614
      %v620 = vsel %vm617, %v614, %v616
      %v625 = vsel %vm384, %v608, 0
      %627 = vmatpush.bf16.msra.mxu0 0
      %628 = vmatpush.bf16.msra.mxu0 0
      %629 = vmatpush.bf16.msra.mxu0 0
      %630 = vmatpush.bf16.msra.mxu0 0
      %631 = vmatpush.bf16.msra.mxu0 0
      %632 = vmatpush.bf16.msra.mxu0 0
      %633 = vmatpush.bf16.msra.mxu0 0
      %634 = vmatpush.bf16.msra.mxu0 %v618
      %635 = vmatmul.bf16.gmra.mxu0 %v625
      %v636 = vpop.f32.mrf.mxu0
      %v637 = vadd.f32 0.0, %v636
      %v638 = vpop.f32.mrf.mxu0
      %639 = vdwg.mxu0
      %640 = vmatpush.bf16.msra.mxu0 0
      %641 = vmatpush.bf16.msra.mxu0 0
      %642 = vmatpush.bf16.msra.mxu0 0
      %643 = vmatpush.bf16.msra.mxu0 0
      %644 = vmatpush.bf16.msra.mxu0 0
      %645 = vmatpush.bf16.msra.mxu0 0
      %646 = vmatpush.bf16.msra.mxu0 0
      %647 = vmatpush.bf16.msra.mxu0 %v619
      %648 = vmatmul.bf16.gmra.mxu0 %v625
      %v649 = vpop.f32.mrf.mxu0
      %v650 = vadd.f32 0.0, %v649
      %v651 = vpop.f32.mrf.mxu0
      %652 = vdwg.mxu0
      %653 = vmatpush.bf16.msra.mxu0 0
      %654 = vmatpush.bf16.msra.mxu0 0
      %655 = vmatpush.bf16.msra.mxu0 0
      %656 = vmatpush.bf16.msra.mxu0 0
      %657 = vmatpush.bf16.msra.mxu0 0
      %658 = vmatpush.bf16.msra.mxu0 0
      %659 = vmatpush.bf16.msra.mxu0 0
      %660 = vmatpush.bf16.msra.mxu0 %v620
      %661 = vmatmul.bf16.gmra.mxu0 %v625
      %v662 = vpop.f32.mrf.mxu0
      %v663 = vadd.f32 0.0, %v662
      %v664 = vpop.f32.mrf.mxu0
      %665 = vdwg.mxu0
      %v666 = vadd.f32 %v602, %v637
      %v667 = vadd.f32 %v603, %v650
      %v668 = vadd.f32 %v604, %v663
      %s669 = scalar_lea.vmem %s0, 40
      %v670 = vld [vmem:[%s669] sm:$0xff]
      %v671 = vmul.f32 %v670, %v339
      %v672 = vpack.c.bf16 %v671, %v671
      %673 = vrot.lane.b32.xlu0 %v365, 102
      %v674 = vpop.permute.xlu0 %673
      %675 = vrot.lane.b32.xlu0 %v366, 102
      %v676 = vpop.permute.xlu0 %675
      %677 = vrot.lane.b32.xlu0 %v367, 102
      %v678 = vpop.permute.xlu0 %677
      %679 = vrot.lane.b32.xlu0 %v368, 102
      %v680 = vpop.permute.xlu0 %679
      %vm681 = vcmask 834560
      %v682 = vsel %vm681, %v674, %v676
      %v683 = vsel %vm681, %v676, %v678
      %v684 = vsel %vm681, %v678, %v680
      %v689 = vsel %vm384, %v672, 0
      %691 = vmatpush.bf16.msra.mxu0 0
      %692 = vmatpush.bf16.msra.mxu0 0
      %693 = vmatpush.bf16.msra.mxu0 0
      %694 = vmatpush.bf16.msra.mxu0 0
      %695 = vmatpush.bf16.msra.mxu0 0
      %696 = vmatpush.bf16.msra.mxu0 0
      %697 = vmatpush.bf16.msra.mxu0 0
      %698 = vmatpush.bf16.msra.mxu0 %v682
      %699 = vmatmul.bf16.gmra.mxu0 %v689
      %v700 = vpop.f32.mrf.mxu0
      %v701 = vadd.f32 0.0, %v700
      %v702 = vpop.f32.mrf.mxu0
      %703 = vdwg.mxu0
      %704 = vmatpush.bf16.msra.mxu0 0
      %705 = vmatpush.bf16.msra.mxu0 0
      %706 = vmatpush.bf16.msra.mxu0 0
      %707 = vmatpush.bf16.msra.mxu0 0
      %708 = vmatpush.bf16.msra.mxu0 0
      %709 = vmatpush.bf16.msra.mxu0 0
      %710 = vmatpush.bf16.msra.mxu0 0
      %711 = vmatpush.bf16.msra.mxu0 %v683
      %712 = vmatmul.bf16.gmra.mxu0 %v689
      %v713 = vpop.f32.mrf.mxu0
      %v714 = vadd.f32 0.0, %v713
      %v715 = vpop.f32.mrf.mxu0
      %716 = vdwg.mxu0
      %717 = vmatpush.bf16.msra.mxu0 0
      %718 = vmatpush.bf16.msra.mxu0 0
      %719 = vmatpush.bf16.msra.mxu0 0
      %720 = vmatpush.bf16.msra.mxu0 0
      %721 = vmatpush.bf16.msra.mxu0 0
      %722 = vmatpush.bf16.msra.mxu0 0
      %723 = vmatpush.bf16.msra.mxu0 0
      %724 = vmatpush.bf16.msra.mxu0 %v684
      %725 = vmatmul.bf16.gmra.mxu0 %v689
      %v726 = vpop.f32.mrf.mxu0
      %v727 = vadd.f32 0.0, %v726
      %v728 = vpop.f32.mrf.mxu0
      %729 = vdwg.mxu0
      %v730 = vadd.f32 %v666, %v701
      %v731 = vadd.f32 %v667, %v714
      %v732 = vadd.f32 %v668, %v727
      %s733 = scalar_lea.vmem %s0, 48
      %v734 = vld [vmem:[%s733] sm:$0xff]
      %v735 = vmul.f32 %v734, %v339
      %v736 = vpack.c.bf16 %v735, %v735
      %737 = vrot.lane.b32.xlu0 %v365, 80
      %v738 = vpop.permute.xlu0 %737
      %739 = vrot.lane.b32.xlu0 %v366, 80
      %v740 = vpop.permute.xlu0 %739
      %741 = vrot.lane.b32.xlu0 %v367, 80
      %v742 = vpop.permute.xlu0 %741
      %743 = vrot.lane.b32.xlu0 %v368, 80
      %v744 = vpop.permute.xlu0 %743
      %vm745 = vcmask 654336
      %v746 = vsel %vm745, %v738, %v740
      %v747 = vsel %vm745, %v740, %v742
      %v748 = vsel %vm745, %v742, %v744
      %v753 = vsel %vm384, %v736, 0
      %755 = vmatpush.bf16.msra.mxu0 0
      %756 = vmatpush.bf16.msra.mxu0 0
      %757 = vmatpush.bf16.msra.mxu0 0
      %758 = vmatpush.bf16.msra.mxu0 0
      %759 = vmatpush.bf16.msra.mxu0 0
      %760 = vmatpush.bf16.msra.mxu0 0
      %761 = vmatpush.bf16.msra.mxu0 0
      %762 = vmatpush.bf16.msra.mxu0 %v746
      %763 = vmatmul.bf16.gmra.mxu0 %v753
      %v764 = vpop.f32.mrf.mxu0
      %v765 = vadd.f32 0.0, %v764
      %v766 = vpop.f32.mrf.mxu0
      %767 = vdwg.mxu0
      %768 = vmatpush.bf16.msra.mxu0 0
      %769 = vmatpush.bf16.msra.mxu0 0
      %770 = vmatpush.bf16.msra.mxu0 0
      %771 = vmatpush.bf16.msra.mxu0 0
      %772 = vmatpush.bf16.msra.mxu0 0
      %773 = vmatpush.bf16.msra.mxu0 0
      %774 = vmatpush.bf16.msra.mxu0 0
      %775 = vmatpush.bf16.msra.mxu0 %v747
      %776 = vmatmul.bf16.gmra.mxu0 %v753
      %v777 = vpop.f32.mrf.mxu0
      %v778 = vadd.f32 0.0, %v777
      %v779 = vpop.f32.mrf.mxu0
      %780 = vdwg.mxu0
      %781 = vmatpush.bf16.msra.mxu0 0
      %782 = vmatpush.bf16.msra.mxu0 0
      %783 = vmatpush.bf16.msra.mxu0 0
      %784 = vmatpush.bf16.msra.mxu0 0
      %785 = vmatpush.bf16.msra.mxu0 0
      %786 = vmatpush.bf16.msra.mxu0 0
      %787 = vmatpush.bf16.msra.mxu0 0
      %788 = vmatpush.bf16.msra.mxu0 %v748
      %789 = vmatmul.bf16.gmra.mxu0 %v753
      %v790 = vpop.f32.mrf.mxu0
      %v791 = vadd.f32 0.0, %v790
      %v792 = vpop.f32.mrf.mxu0
      %793 = vdwg.mxu0
      %v794 = vadd.f32 %v730, %v765
      %v795 = vadd.f32 %v731, %v778
      %v796 = vadd.f32 %v732, %v791
      %s797 = scalar_lea.vmem %s0, 56
      %v798 = vld [vmem:[%s797] sm:$0xff]
      %v799 = vmul.f32 %v798, %v339
      %v800 = vpack.c.bf16 %v799, %v799
      %801 = vrot.lane.b32.xlu0 %v365, 79
      %v802 = vpop.permute.xlu0 %801
      %803 = vrot.lane.b32.xlu0 %v366, 79
      %v804 = vpop.permute.xlu0 %803
      %805 = vrot.lane.b32.xlu0 %v367, 79
      %v806 = vpop.permute.xlu0 %805
      %807 = vrot.lane.b32.xlu0 %v368, 79
      %v808 = vpop.permute.xlu0 %807
      %vm809 = vcmask 646144
      %v810 = vsel %vm809, %v802, %v804
      %v811 = vsel %vm809, %v804, %v806
      %v812 = vsel %vm809, %v806, %v808
      %v817 = vsel %vm384, %v800, 0
      %819 = vmatpush.bf16.msra.mxu0 0
      %820 = vmatpush.bf16.msra.mxu0 0
      %821 = vmatpush.bf16.msra.mxu0 0
      %822 = vmatpush.bf16.msra.mxu0 0
      %823 = vmatpush.bf16.msra.mxu0 0
      %824 = vmatpush.bf16.msra.mxu0 0
      %825 = vmatpush.bf16.msra.mxu0 0
      %826 = vmatpush.bf16.msra.mxu0 %v810
      %827 = vmatmul.bf16.gmra.mxu0 %v817
      %v828 = vpop.f32.mrf.mxu0
      %v829 = vadd.f32 0.0, %v828
      %v830 = vpop.f32.mrf.mxu0
      %831 = vdwg.mxu0
      %832 = vmatpush.bf16.msra.mxu0 0
      %833 = vmatpush.bf16.msra.mxu0 0
      %834 = vmatpush.bf16.msra.mxu0 0
      %835 = vmatpush.bf16.msra.mxu0 0
      %836 = vmatpush.bf16.msra.mxu0 0
      %837 = vmatpush.bf16.msra.mxu0 0
      %838 = vmatpush.bf16.msra.mxu0 0
      %839 = vmatpush.bf16.msra.mxu0 %v811
      %840 = vmatmul.bf16.gmra.mxu0 %v817
      %v841 = vpop.f32.mrf.mxu0
      %v842 = vadd.f32 0.0, %v841
      %v843 = vpop.f32.mrf.mxu0
      %844 = vdwg.mxu0
      %845 = vmatpush.bf16.msra.mxu0 0
      %846 = vmatpush.bf16.msra.mxu0 0
      %847 = vmatpush.bf16.msra.mxu0 0
      %848 = vmatpush.bf16.msra.mxu0 0
      %849 = vmatpush.bf16.msra.mxu0 0
      %850 = vmatpush.bf16.msra.mxu0 0
      %851 = vmatpush.bf16.msra.mxu0 0
      %852 = vmatpush.bf16.msra.mxu0 %v812
      %853 = vmatmul.bf16.gmra.mxu0 %v817
      %v854 = vpop.f32.mrf.mxu0
      %v855 = vadd.f32 0.0, %v854
      %v856 = vpop.f32.mrf.mxu0
      %857 = vdwg.mxu0
      %v858 = vadd.f32 %v794, %v829
      %v859 = vadd.f32 %v795, %v842
      %v860 = vadd.f32 %v796, %v855
      %s861 = scalar_lea.vmem %s0, 64
      %v862 = vld [vmem:[%s861] sm:$0xff]
      %v863 = vmul.f32 %v862, %v339
      %v864 = vpack.c.bf16 %v863, %v863
      %865 = vrot.lane.b32.xlu0 %v365, 78
      %v866 = vpop.permute.xlu0 %865
      %867 = vrot.lane.b32.xlu0 %v366, 78
      %v868 = vpop.permute.xlu0 %867
      %869 = vrot.lane.b32.xlu0 %v367, 78
      %v870 = vpop.permute.xlu0 %869
      %871 = vrot.lane.b32.xlu0 %v368, 78
      %v872 = vpop.permute.xlu0 %871
      %vm873 = vcmask 637952
      %v874 = vsel %vm873, %v866, %v868
      %v875 = vsel %vm873, %v868, %v870
      %v876 = vsel %vm873, %v870, %v872
      %v881 = vsel %vm384, %v864, 0
      %883 = vmatpush.bf16.msra.mxu0 0
      %884 = vmatpush.bf16.msra.mxu0 0
      %885 = vmatpush.bf16.msra.mxu0 0
      %886 = vmatpush.bf16.msra.mxu0 0
      %887 = vmatpush.bf16.msra.mxu0 0
      %888 = vmatpush.bf16.msra.mxu0 0
      %889 = vmatpush.bf16.msra.mxu0 0
      %890 = vmatpush.bf16.msra.mxu0 %v874
      %891 = vmatmul.bf16.gmra.mxu0 %v881
      %v892 = vpop.f32.mrf.mxu0
      %v893 = vadd.f32 0.0, %v892
      %v894 = vpop.f32.mrf.mxu0
      %895 = vdwg.mxu0
      %896 = vmatpush.bf16.msra.mxu0 0
      %897 = vmatpush.bf16.msra.mxu0 0
      %898 = vmatpush.bf16.msra.mxu0 0
      %899 = vmatpush.bf16.msra.mxu0 0
      %900 = vmatpush.bf16.msra.mxu0 0
      %901 = vmatpush.bf16.msra.mxu0 0
      %902 = vmatpush.bf16.msra.mxu0 0
      %903 = vmatpush.bf16.msra.mxu0 %v875
      %904 = vmatmul.bf16.gmra.mxu0 %v881
      %v905 = vpop.f32.mrf.mxu0
      %v906 = vadd.f32 0.0, %v905
      %v907 = vpop.f32.mrf.mxu0
      %908 = vdwg.mxu0
      %909 = vmatpush.bf16.msra.mxu0 0
      %910 = vmatpush.bf16.msra.mxu0 0
      %911 = vmatpush.bf16.msra.mxu0 0
      %912 = vmatpush.bf16.msra.mxu0 0
      %913 = vmatpush.bf16.msra.mxu0 0
      %914 = vmatpush.bf16.msra.mxu0 0
      %915 = vmatpush.bf16.msra.mxu0 0
      %916 = vmatpush.bf16.msra.mxu0 %v876
      %917 = vmatmul.bf16.gmra.mxu0 %v881
      %v918 = vpop.f32.mrf.mxu0
      %v919 = vadd.f32 0.0, %v918
      %v920 = vpop.f32.mrf.mxu0
      %921 = vdwg.mxu0
      %v922 = vadd.f32 %v858, %v893
      %v923 = vadd.f32 %v859, %v906
      %v924 = vadd.f32 %v860, %v919
      %s925 = sld [smem:[#allocation2]]
      %v926 = vld [vmem:[%s322] sm:$0x7]
      %v927 = vunpack.c.l.bf16 %v926
      %v928 = vstv %s925
      %v929 = vmul.f32 %v928, %v927
      %v931 = vperm.slane %v929, 0
      %v932 = vperm.slane %v929, 2
      %v933 = vperm.slane %v929, 4
      %v937 = vperm.slane %v931, 0
      %v938 = vperm.slane %v932, 0
      %v939 = vperm.slane %v933, 0
      %v940 = vadd.f32 %v922, %v937
      %v941 = vadd.f32 %v923, %v938
      %v942 = vadd.f32 %v924, %v939
      %v943 = vld [vmem:[%s3] sm:$0xff]
      %945 = vset.pattern.permute.xlu0 0
      %946 = vperm.xlu0 %945, %v943
      %v947 = vpop.permute.xlu0 %946
      %v949 = vadd.f32 %v940, %v947
      %v950 = vadd.f32 %v941, %v947
      %v951 = vadd.f32 %v942, %v947
      %vm952 = vcmp.ge.f32.partialorder %v949, 0.0
      %vm953 = vcmp.ge.f32.partialorder %v950, 0.0
      %vm954 = vcmp.ge.f32.partialorder %v951, 0.0
      %v955 = vmul.f32 %v949, 0.2
      %v956 = vmul.f32 %v950, 0.2
      %v957 = vmul.f32 %v951, 0.2
      %v958 = vsel %vm952, %v949, %v955
      %v959 = vsel %vm953, %v950, %v956
      %v960 = vsel %vm954, %v951, %v957
      %v961 = vpack.c.bf16 %v959, %v958
      %v962 = vpack.c.bf16 %v960, %v960
      %963 = vst [vmem:[%s327] sm:$0xff] %v961
      %964 = vst [vmem:[%s327 + $0x8] sm:$0xf] %v962
      %p965 = scmp.lt.s32.totalorder %s19, 1
      %s966 = scalar_select %p965, %s19, 1
      %s967 = smul.addr %s966, 3
      %s968 = smul.addr %s967, 4
      %s969 = scalar_lea.vmem %s7, %s968
      // Predicated region
      $region49: #{generator_forward.8} parent=47 // pred_check
        %p970 = pneg %p204
      $region50: #{generator_forward.8} parent=47 // pred_check_branch
        %972 = sbr.rel (%p970) target = $region52
      $region51: #{generator_forward.8} parent=47 // pred_region
        _
      $region52: #{generator_forward.8} parent=47 // pred_fallthru
        _
    $region48: #{generator_forward.8} parent=5 // pred_fallthru
      _
    %p973 = scmp.le.s32.totalorder 2, %s14
    // Predicated region
    $region53: #{generator_forward.8} parent=5 // pred_check
      %p974 = pneg %p973
    $region54: #{generator_forward.8} parent=5 // pred_check_branch
      %976 = sbr.rel (%p974) target = $region56
    $region55: #{generator_forward.8} parent=5 // pred_region
      %s977 = ssub.s32 %s14, 2
      // Predicated region
      $region57: #{generator_forward.8} parent=55 // pred_check
        %p978 = pneg %p210
      $region58: #{generator_forward.8} parent=55 // pred_check_branch
        %980 = sbr.rel (%p978) target = $region60
      $region59: #{generator_forward.8} parent=55 // pred_region
        %p981 = scmp.lt.s32.totalorder %s20, 1
        %s982 = scalar_select %p981, %s20, 1
        %s983 = smul.addr %s982, 3
        %s984 = smul.addr %s983, 4
        %s985 = scalar_lea.vmem %s7, %s984
      $region60: #{generator_forward.8} parent=55 // pred_fallthru
        _
    $region56: #{generator_forward.8} parent=5 // pred_fallthru
      _
  $region6: #{generator_forward.8} parent=0 // loop_footer
    %s18 = sadd.s32 1, %s14
  $region7: #{generator_forward.8} parent=0 // loop_footer_branch
    %13 = sbr.rel target = $region3
  $region8: #{generator_forward.8} parent=0 // loop_exit
    _

// kernel: generator_forward.9
$region0: #{generator_forward.9}
  #allocation0 [shape = 'u32[]', space=smem, size = 0x4, offset = 0x4, fixed_abs, tag = 'smem constant byte address 0x4 - core index']
  #allocation1 [shape = 'u32[72,128]{1,0:T(1,128)}', space=vmem, size = 0x9000, scoped, tag = 'internal scratch']
  #allocation2 [shape = 'f32[1]{0:T(128)S(6)}', space=smem, size = 0x200, scoped, tag = 'scoped memory for generator_forward.9']
  %s0 = inlined_call_operand.vmem [shape: f32[9,8,8], index: 0, kind: input, shape index: {}]
  %s1 = inlined_call_operand.vmem [shape: f32[2,1,8], index: 1, kind: input, shape index: {}]
  %s2 = inlined_call_operand.vmem [shape: f32[2,8,1], index: 2, kind: input, shape index: {}]
  %s3 = inlined_call_operand.vmem [shape: f32[8,1], index: 3, kind: input, shape index: {}]
  %s4 = inlined_call_operand.vmem [shape: f32[3,8], index: 4, kind: input, shape index: {}]
  %s5 = inlined_call_operand.vmem [shape: f32[2,1,8], index: 5, kind: input, shape index: {}]
  %s6 = inlined_call_operand.vmem [shape: f32[3,1], index: 6, kind: input, shape index: {}]
  %s7 = inlined_call_operand.vmem [shape: bf16[2,8,456], index: 7, kind: input, shape index: {}]
  %s8 = inlined_call_operand.vmem [shape: bf16[2,1,384], index: 8, kind: input, shape index: {}]
  %s9 = inlined_call_operand.<no memory space> [shape: f32[1], index: 9, kind: input, shape index: {}]
  %s10 = inlined_call_operand.hbm [shape: bf16[2,8,384], index: 10, kind: output, shape index: {0}]
  %s11 = inlined_call_operand.vmem [shape: f32[2,3,384], index: 11, kind: output, shape index: {1}]
  %12 = xla_tuple %s10, %s11
  %s13 = sld [smem:[#allocation0]]
  $region81: #{generator_forward.9} parent=0
    _
  %s15 = ssub.s32 1, %s13
  %s16 = scalar_select 0, %s15, %s13
  %17 = sst [smem:[#allocation2]] %s9
  $region1: #{generator_forward.9} parent=0
    #allocation3 [shape = 'u8[12288]{0}', space=vmem, size = 0x3000, scoped, tag = 'output window, operand 0']
    #allocation4 [shape = 's32[2]{0}', space=sflag, size = 0x8, scoped, tag = 'scoped memory for generator_forward.9']
    %18 = vsyncpa [#allocation4], 0
    %s19 = scalar_lea.sflag [#allocation4], 1
    %20 = vsyncpa %s19, 0
    loop: start=0, step=1, limit=4
    $region2: #{generator_forward.9} parent=1 // loop_pre_header
      _
    $region3: #{generator_forward.9} parent=1 // loop_header
      %s22 = sphi 0, %s26
      %p23 = scmp.ge.s32.totalorder %s22, 4
      %s30 = sphi 0, %s30
      %s32 = sphi 0, %s30
      %s33 = sphi 0, %s32
      %s47 = sphi 0, %s33
      %s53 = sphi 0, %s55
      %s56 = sphi 0, %s53
      %s57 = sphi 0, %s56
      %s73 = sphi 0, %s57
      %s79 = sphi 0, %s81
      %s82 = sphi 0, %s79
      %s83 = sphi 0, %s82
      %s99 = sphi 0, %s83
      %s103 = sphi 0, %s103
      %s105 = sphi 0, %s103
      %s106 = sphi 0, %s105
      %s120 = sphi 0, %s106
      %s124 = sphi 0, %s124
      %s126 = sphi 0, %s124
      %s127 = sphi 0, %s126
      %s141 = sphi 0, %s127
      %s147 = sphi 0, %s149
      %s150 = sphi 0, %s147
      %s151 = sphi 0, %s150
      %s167 = sphi 0, %s151
      %s171 = sphi 0, %s171
      %s173 = sphi 0, %s171
      %s174 = sphi 0, %s173
      %s188 = sphi 0, %s174
      %s194 = sphi 0, %s196
      %s197 = sphi 0, %s194
      %s198 = sphi 0, %s197
      %s214 = sphi 0, %s198
      %s220 = sphi 0, %s222
      %s223 = sphi 0, %s220
      %s224 = sphi 0, %s223
      %s240 = sphi 0, %s224
      %s244 = sphi 0, %s244
      %s246 = sphi 0, %s244
      %s247 = sphi 0, %s246
      %s261 = sphi 0, %s247
      %s267 = sphi 0, %s269
      %s270 = sphi 0, %s267
      %s271 = sphi 0, %s270
      %s287 = sphi 0, %s271
      %s293 = sphi 0, %s295
      %s296 = sphi 0, %s293
      %s297 = sphi 0, %s296
      %s313 = sphi 0, %s297
    $region4: #{generator_forward.9} parent=1 // loop_header_branch
      %25 = sbr.rel (%p23) target = $region8
    $region5: #{generator_forward.9} parent=1 // loop_body
      %s27 = ssub.s32 %s22, 1
      %s28 = ssub.s32 %s22, 2
      %s29 = sadd.s32 %s22, 1
      %s31 = sadd.s32 %s30, 1
      %p34 = scmp.eq.s32.totalorder %s22, 1
      %p35 = scmp.ne.s32.totalorder %s30, %s32
      %p36 = scmp.eq.s32.totalorder %s22, 0
      %p37 = por %p35, %p36
      %p38 = scmp.ne.s32.totalorder %s30, %s32
      %p39 = scmp.eq.s32.totalorder %s27, 1
      %p40 = por %p38, %p39
      %p41 = scmp.ne.s32.totalorder %s32, %s33
      %p42 = scmp.eq.s32.totalorder %s27, 0
      %p43 = por %p41, %p42
      %p44 = scmp.ne.s32.totalorder %s32, %s33
      %p45 = scmp.eq.s32.totalorder %s28, 1
      %p46 = por %p44, %p45
      %p48 = scmp.ne.s32.totalorder %s33, %s47
      %p49 = scmp.eq.s32.totalorder %s28, 0
      %p50 = por %p48, %p49
      %s51 = ssub.s32 %s22, %s29
      %p52 = scmp.eq.s32.totalorder %s51, 0
      %s54 = sadd.s32 %s53, 1
      %s55 = scalar_select %p52, %s53, %s54
      %p58 = pneg %p52
      %p59 = scmp.eq.s32.totalorder %s22, 1
      %p60 = por %p58, %p59
      %p61 = scmp.ne.s32.totalorder %s53, %s56
      %p62 = scmp.eq.s32.totalorder %s22, 0
      %p63 = por %p61, %p62
      %p64 = scmp.ne.s32.totalorder %s53, %s56
      %p65 = scmp.eq.s32.totalorder %s27, 1
      %p66 = por %p64, %p65
      %p67 = scmp.ne.s32.totalorder %s56, %s57
      %p68 = scmp.eq.s32.totalorder %s27, 0
      %p69 = por %p67, %p68
      %p70 = scmp.ne.s32.totalorder %s56, %s57
      %p71 = scmp.eq.s32.totalorder %s28, 1
      %p72 = por %p70, %p71
      %p74 = scmp.ne.s32.totalorder %s57, %s73
      %p75 = scmp.eq.s32.totalorder %s28, 0
      %p76 = por %p74, %p75
      %s77 = ssub.s32 %s22, %s29
      %p78 = scmp.eq.s32.totalorder %s77, 0
      %s80 = sadd.s32 %s79, 1
      %s81 = scalar_select %p78, %s79, %s80
      %p84 = pneg %p78
      %p85 = scmp.eq.s32.totalorder %s22, 1
      %p86 = por %p84, %p85
      %p87 = scmp.ne.s32.totalorder %s79, %s82
      %p88 = scmp.eq.s32.totalorder %s22, 0
      %p89 = por %p87, %p88
      %p90 = scmp.ne.s32.totalorder %s79, %s82
      %p91 = scmp.eq.s32.totalorder %s27, 1
      %p92 = por %p90, %p91
      %p93 = scmp.ne.s32.totalorder %s82, %s83
      %p94 = scmp.eq.s32.totalorder %s27, 0
      %p95 = por %p93, %p94
      %p96 = scmp.ne.s32.totalorder %s82, %s83
      %p97 = scmp.eq.s32.totalorder %s28, 1
      %p98 = por %p96, %p97
      %p100 = scmp.ne.s32.totalorder %s83, %s99
      %p101 = scmp.eq.s32.totalorder %s28, 0
      %p102 = por %p100, %p101
      %s104 = sadd.s32 %s103, 1
      %p107 = scmp.eq.s32.totalorder %s22, 1
      %p108 = scmp.ne.s32.totalorder %s103, %s105
      %p109 = scmp.eq.s32.totalorder %s22, 0
      %p110 = por %p108, %p109
      %p111 = scmp.ne.s32.totalorder %s103, %s105
      %p112 = scmp.eq.s32.totalorder %s27, 1
      %p113 = por %p111, %p112
      %p114 = scmp.ne.s32.totalorder %s105, %s106
      %p115 = scmp.eq.s32.totalorder %s27, 0
      %p116 = por %p114, %p115
      %p117 = scmp.ne.s32.totalorder %s105, %s106
      %p118 = scmp.eq.s32.totalorder %s28, 1
      %p119 = por %p117, %p118
      %p121 = scmp.ne.s32.totalorder %s106, %s120
      %p122 = scmp.eq.s32.totalorder %s28, 0
      %p123 = por %p121, %p122
      %s125 = sadd.s32 %s124, 1
      %p128 = scmp.eq.s32.totalorder %s22, 1
      %p129 = scmp.ne.s32.totalorder %s124, %s126
      %p130 = scmp.eq.s32.totalorder %s22, 0
      %p131 = por %p129, %p130
      %p132 = scmp.ne.s32.totalorder %s124, %s126
      %p133 = scmp.eq.s32.totalorder %s27, 1
      %p134 = por %p132, %p133
      %p135 = scmp.ne.s32.totalorder %s126, %s127
      %p136 = scmp.eq.s32.totalorder %s27, 0
      %p137 = por %p135, %p136
      %p138 = scmp.ne.s32.totalorder %s126, %s127
      %p139 = scmp.eq.s32.totalorder %s28, 1
      %p140 = por %p138, %p139
      %p142 = scmp.ne.s32.totalorder %s127, %s141
      %p143 = scmp.eq.s32.totalorder %s28, 0
      %p144 = por %p142, %p143
      %s145 = ssub.s32 %s22, %s29
      %p146 = scmp.eq.s32.totalorder %s145, 0
      %s148 = sadd.s32 %s147, 1
      %s149 = scalar_select %p146, %s147, %s148
      %p152 = pneg %p146
      %p153 = scmp.eq.s32.totalorder %s22, 1
      %p154 = por %p152, %p153
      %p155 = scmp.ne.s32.totalorder %s147, %s150
      %p156 = scmp.eq.s32.totalorder %s22, 0
      %p157 = por %p155, %p156
      %p158 = scmp.ne.s32.totalorder %s147, %s150
      %p159 = scmp.eq.s32.totalorder %s27, 1
      %p160 = por %p158, %p159
      %p161 = scmp.ne.s32.totalorder %s150, %s151
      %p162 = scmp.eq.s32.totalorder %s27, 0
      %p163 = por %p161, %p162
      %p164 = scmp.ne.s32.totalorder %s150, %s151
      %p165 = scmp.eq.s32.totalorder %s28, 1
      %p166 = por %p164, %p165
      %p168 = scmp.ne.s32.totalorder %s151, %s167
      %p169 = scmp.eq.s32.totalorder %s28, 0
      %p170 = por %p168, %p169
      %s172 = sadd.s32 %s171, 1
      %p175 = scmp.eq.s32.totalorder %s22, 1
      %p176 = scmp.ne.s32.totalorder %s171, %s173
      %p177 = scmp.eq.s32.totalorder %s22, 0
      %p178 = por %p176, %p177
      %p179 = scmp.ne.s32.totalorder %s171, %s173
      %p180 = scmp.eq.s32.totalorder %s27, 1
      %p181 = por %p179, %p180
      %p182 = scmp.ne.s32.totalorder %s173, %s174
      %p183 = scmp.eq.s32.totalorder %s27, 0
      %p184 = por %p182, %p183
      %p185 = scmp.ne.s32.totalorder %s173, %s174
      %p186 = scmp.eq.s32.totalorder %s28, 1
      %p187 = por %p185, %p186
      %p189 = scmp.ne.s32.totalorder %s174, %s188
      %p190 = scmp.eq.s32.totalorder %s28, 0
      %p191 = por %p189, %p190
      %s192 = ssub.s32 %s22, %s29
      %p193 = scmp.eq.s32.totalorder %s192, 0
      %s195 = sadd.s32 %s194, 1
      %s196 = scalar_select %p193, %s194, %s195
      %p199 = pneg %p193
      %p200 = scmp.eq.s32.totalorder %s22, 1
      %p201 = por %p199, %p200
      %p202 = scmp.ne.s32.totalorder %s194, %s197
      %p203 = scmp.eq.s32.totalorder %s22, 0
      %p204 = por %p202, %p203
      %p205 = scmp.ne.s32.totalorder %s194, %s197
      %p206 = scmp.eq.s32.totalorder %s27, 1
      %p207 = por %p205, %p206
      %p208 = scmp.ne.s32.totalorder %s197, %s198
      %p209 = scmp.eq.s32.totalorder %s27, 0
      %p210 = por %p208, %p209
      %p211 = scmp.ne.s32.totalorder %s197, %s198
      %p212 = scmp.eq.s32.totalorder %s28, 1
      %p213 = por %p211, %p212
      %p215 = scmp.ne.s32.totalorder %s198, %s214
      %p216 = scmp.eq.s32.totalorder %s28, 0
      %p217 = por %p215, %p216
      %s218 = ssub.s32 %s22, %s29
      %p219 = scmp.eq.s32.totalorder %s218, 0
      %s221 = sadd.s32 %s220, 1
      %s222 = scalar_select %p219, %s220, %s221
      %p225 = pneg %p219
      %p226 = scmp.eq.s32.totalorder %s22, 1
      %p227 = por %p225, %p226
      %p228 = scmp.ne.s32.totalorder %s220, %s223
      %p229 = scmp.eq.s32.totalorder %s22, 0
      %p230 = por %p228, %p229
      %p231 = scmp.ne.s32.totalorder %s220, %s223
      %p232 = scmp.eq.s32.totalorder %s27, 1
      %p233 = por %p231, %p232
      %p234 = scmp.ne.s32.totalorder %s223, %s224
      %p235 = scmp.eq.s32.totalorder %s27, 0
      %p236 = por %p234, %p235
      %p237 = scmp.ne.s32.totalorder %s223, %s224
      %p238 = scmp.eq.s32.totalorder %s28, 1
      %p239 = por %p237, %p238
      %p241 = scmp.ne.s32.totalorder %s224, %s240
      %p242 = scmp.eq.s32.totalorder %s28, 0
      %p243 = por %p241, %p242
      %s245 = sadd.s32 %s244, 1
      %p248 = scmp.eq.s32.totalorder %s22, 1
      %p249 = scmp.ne.s32.totalorder %s244, %s246
      %p250 = scmp.eq.s32.totalorder %s22, 0
      %p251 = por %p249, %p250
      %p252 = scmp.ne.s32.totalorder %s244, %s246
      %p253 = scmp.eq.s32.totalorder %s27, 1
      %p254 = por %p252, %p253
      %p255 = scmp.ne.s32.totalorder %s246, %s247
      %p256 = scmp.eq.s32.totalorder %s27, 0
      %p257 = por %p255, %p256
      %p258 = scmp.ne.s32.totalorder %s246, %s247
      %p259 = scmp.eq.s32.totalorder %s28, 1
      %p260 = por %p258, %p259
      %p262 = scmp.ne.s32.totalorder %s247, %s261
      %p263 = scmp.eq.s32.totalorder %s28, 0
      %p264 = por %p262, %p263
      %s265 = ssub.s32 %s22, %s29
      %p266 = scmp.eq.s32.totalorder %s265, 0
      %s268 = sadd.s32 %s267, 1
      %s269 = scalar_select %p266, %s267, %s268
      %p272 = pneg %p266
      %p273 = scmp.eq.s32.totalorder %s22, 1
      %p274 = por %p272, %p273
      %p275 = scmp.ne.s32.totalorder %s267, %s270
      %p276 = scmp.eq.s32.totalorder %s22, 0
      %p277 = por %p275, %p276
      %p278 = scmp.ne.s32.totalorder %s267, %s270
      %p279 = scmp.eq.s32.totalorder %s27, 1
      %p280 = por %p278, %p279
      %p281 = scmp.ne.s32.totalorder %s270, %s271
      %p282 = scmp.eq.s32.totalorder %s27, 0
      %p283 = por %p281, %p282
      %p284 = scmp.ne.s32.totalorder %s270, %s271
      %p285 = scmp.eq.s32.totalorder %s28, 1
      %p286 = por %p284, %p285
      %p288 = scmp.ne.s32.totalorder %s271, %s287
      %p289 = scmp.eq.s32.totalorder %s28, 0
      %p290 = por %p288, %p289
      %s291 = ssub.s32 %s22, %s29
      %p292 = scmp.eq.s32.totalorder %s291, 0
      %s294 = sadd.s32 %s293, 1
      %s295 = scalar_select %p292, %s293, %s294
      %p298 = pneg %p292
      %p299 = scmp.eq.s32.totalorder %s22, 1
      %p300 = por %p298, %p299
      %p301 = scmp.ne.s32.totalorder %s293, %s296
      %p302 = scmp.eq.s32.totalorder %s22, 0
      %p303 = por %p301, %p302
      %p304 = scmp.ne.s32.totalorder %s293, %s296
      %p305 = scmp.eq.s32.totalorder %s27, 1
      %p306 = por %p304, %p305
      %p307 = scmp.ne.s32.totalorder %s296, %s297
      %p308 = scmp.eq.s32.totalorder %s27, 0
      %p309 = por %p307, %p308
      %p310 = scmp.ne.s32.totalorder %s296, %s297
      %p311 = scmp.eq.s32.totalorder %s28, 1
      %p312 = por %p310, %p311
      %p314 = scmp.ne.s32.totalorder %s297, %s313
      %p315 = scmp.eq.s32.totalorder %s28, 0
      %p316 = por %p314, %p315
      %p317 = scmp.le.s32.totalorder 1, %s22
      %p318 = scmp.lt.s32.totalorder %s22, 3
      %p319 = pnand %p317, %p318
      %p320 = pneg %p319
      // Predicated region
      $region9: #{generator_forward.9} parent=5 // pred_check
        _
      $region10: #{generator_forward.9} parent=5 // pred_check_branch
        %322 = sbr.rel (%p319) target = $region12
      $region11: #{generator_forward.9} parent=5 // pred_region
        %s323 = ssub.s32 %s22, 1
        // Predicated region
        $region13: #{generator_forward.9} parent=11 // pred_check
          %p324 = pneg %p43
        $region14: #{generator_forward.9} parent=11 // pred_check_branch
          %326 = sbr.rel (%p324) target = $region16
        $region15: #{generator_forward.9} parent=11 // pred_region
          _
        $region16: #{generator_forward.9} parent=11 // pred_fallthru
          _
        // Predicated region
        $region17: #{generator_forward.9} parent=11 // pred_check
          %p327 = pneg %p116
        $region18: #{generator_forward.9} parent=11 // pred_check_branch
          %329 = sbr.rel (%p327) target = $region20
        $region19: #{generator_forward.9} parent=11 // pred_region
          _
        $region20: #{generator_forward.9} parent=11 // pred_fallthru
          _
        // Predicated region
        $region21: #{generator_forward.9} parent=11 // pred_check
          %p330 = pneg %p137
        $region22: #{generator_forward.9} parent=11 // pred_check_branch
          %332 = sbr.rel (%p330) target = $region24
        $region23: #{generator_forward.9} parent=11 // pred_region
          _
        $region24: #{generator_forward.9} parent=11 // pred_fallthru
          _
        // Predicated region
        $region25: #{generator_forward.9} parent=11 // pred_check
          %p333 = pneg %p184
        $region26: #{generator_forward.9} parent=11 // pred_check_branch
          %335 = sbr.rel (%p333) target = $region28
        $region27: #{generator_forward.9} parent=11 // pred_region
          _
        $region28: #{generator_forward.9} parent=11 // pred_fallthru
          _
        // Predicated region
        $region29: #{generator_forward.9} parent=11 // pred_check
          %p336 = pneg %p257
        $region30: #{generator_forward.9} parent=11 // pred_check_branch
          %338 = sbr.rel (%p336) target = $region32
        $region31: #{generator_forward.9} parent=11 // pred_region
          _
        $region32: #{generator_forward.9} parent=11 // pred_fallthru
          _
      $region12: #{generator_forward.9} parent=5 // pred_fallthru
        _
      %p339 = scmp.lt.s32.totalorder %s22, 2
      // Predicated region
      $region33: #{generator_forward.9} parent=5 // pred_check
        %p340 = pneg %p339
      $region34: #{generator_forward.9} parent=5 // pred_check_branch
        %342 = sbr.rel (%p340) target = $region36
      $region35: #{generator_forward.9} parent=5 // pred_region
        // Predicated region
        $region37: #{generator_forward.9} parent=35 // pred_check
          %p343 = pneg %p63
        $region38: #{generator_forward.9} parent=35 // pred_check_branch
          %345 = sbr.rel (%p343) target = $region40
        $region39: #{generator_forward.9} parent=35 // pred_region
          %p346 = scmp.lt.s32.totalorder %s22, 1
          %s347 = scalar_select %p346, %s22, 1
          %s348 = scalar_lea.vmem %s1, %s347
        $region40: #{generator_forward.9} parent=35 // pred_fallthru
          _
        // Predicated region
        $region41: #{generator_forward.9} parent=35 // pred_check
          %p349 = pneg %p89
        $region42: #{generator_forward.9} parent=35 // pred_check_branch
          %351 = sbr.rel (%p349) target = $region44
        $region43: #{generator_forward.9} parent=35 // pred_region
          %p352 = scmp.lt.s32.totalorder %s22, 1
          %s353 = scalar_select %p352, %s22, 1
          %s354 = smul.addr %s353, 8
          %s355 = scalar_lea.vmem %s2, %s354
        $region44: #{generator_forward.9} parent=35 // pred_fallthru
          _
        // Predicated region
        $region45: #{generator_forward.9} parent=35 // pred_check
          %p356 = pneg %p157
        $region46: #{generator_forward.9} parent=35 // pred_check_branch
          %358 = sbr.rel (%p356) target = $region48
        $region47: #{generator_forward.9} parent=35 // pred_region
          %p359 = scmp.lt.s32.totalorder %s22, 1
          %s360 = scalar_select %p359, %s22, 1
          %s361 = scalar_lea.vmem %s5, %s360
        $region48: #{generator_forward.9} parent=35 // pred_fallthru
          _
        // Predicated region
        $region49: #{generator_forward.9} parent=35 // pred_check
          %p362 = pneg %p204
        $region50: #{generator_forward.9} parent=35 // pred_check_branch
          %364 = sbr.rel (%p362) target = $region52
        $region51: #{generator_forward.9} parent=35 // pred_region
          %p365 = scmp.lt.s32.totalorder %s22, 1
          %s366 = scalar_select %p365, %s22, 1
          %s367 = smul.addr %s366, 4
          %s368 = smul.addr %s367, 4
          %s369 = scalar_lea.vmem %s7, %s368
        $region52: #{generator_forward.9} parent=35 // pred_fallthru
          _
        // Predicated region
        $region53: #{generator_forward.9} parent=35 // pred_check
          %p370 = pneg %p230
        $region54: #{generator_forward.9} parent=35 // pred_check_branch
          %372 = sbr.rel (%p370) target = $region56
        $region55: #{generator_forward.9} parent=35 // pred_region
          %p373 = scmp.lt.s32.totalorder %s22, 1
          %s374 = scalar_select %p373, %s22, 1
          %s375 = smul.addr %s374, 3
          %s376 = scalar_lea.vmem %s8, %s375
        $region56: #{generator_forward.9} parent=35 // pred_fallthru
          _
      $region36: #{generator_forward.9} parent=5 // pred_fallthru
        _
      %p377 = scmp.le.s32.totalorder 1, %s22
      %p378 = scmp.lt.s32.totalorder %s22, 3
      %p379 = pnand %p377, %p378
      %p380 = pneg %p379
      // Predicated region
      $region57: #{generator_forward.9} parent=5 // pred_check
        _
      $region58: #{generator_forward.9} parent=5 // pred_check_branch
        %382 = sbr.rel (%p379) target = $region60
      $region59: #{generator_forward.9} parent=5 // pred_region
        %s383 = ssub.s32 %s22, 1
        %p384 = pneg %p43
        %p385 = pneg %p40
        %p386 = scmp.lt.s32.totalorder %s27, 1
        %s387 = scalar_select %p386, %s27, 1
        %s388 = scalar_lea.vmem %s1, %s387
        %p389 = pneg %p69
        %p390 = pneg %p66
        %p391 = scmp.lt.s32.totalorder %s27, 1
        %s392 = scalar_select %p391, %s27, 1
        %s393 = smul.addr %s392, 8
        %s394 = scalar_lea.vmem %s2, %s393
        %p395 = pneg %p95
        %p396 = pneg %p92
        %p397 = pneg %p116
        %p398 = pneg %p113
        %p399 = pneg %p137
        %p400 = pneg %p134
        %p401 = scmp.lt.s32.totalorder %s27, 1
        %s402 = scalar_select %p401, %s27, 1
        %s403 = scalar_lea.vmem %s5, %s402
        %p404 = pneg %p163
        %p405 = pneg %p160
        %p406 = pneg %p184
        %p407 = pneg %p181
        %p408 = scmp.lt.s32.totalorder %s27, 1
        %s409 = scalar_select %p408, %s27, 1
        %s410 = smul.addr %s409, 4
        %s411 = smul.addr %s410, 4
        %s412 = scalar_lea.vmem %s7, %s411
        %p413 = pneg %p210
        %p414 = pneg %p207
        %p415 = scmp.lt.s32.totalorder %s27, 1
        %s416 = scalar_select %p415, %s27, 1
        %s417 = smul.addr %s416, 3
        %s418 = scalar_lea.vmem %s8, %s417
        %p419 = pneg %p236
        %p420 = pneg %p233
        %p421 = pneg %p257
        %p422 = pneg %p254
        %p423 = pneg %p283
        %p424 = pneg %p280
        %s425 = sand.u32 %s270, 1
        %s426 = scalar_lea.sflag [#allocation4], %s425
        %s427 = sand.u32 %s270, 1
        %s428 = smul.addr %s427, 12
        %s429 = scalar_lea.vmem [#allocation3], %s428
        %p430 = pneg %p309
        %p431 = pneg %p306
        %p432 = scmp.lt.s32.totalorder %s27, 1
        %s433 = scalar_select %p432, %s27, 1
        %s434 = smul.addr %s433, 3
        %s435 = smul.addr %s434, 4
        %s436 = scalar_lea.vmem %s11, %s435
        %p437 = scmp.lt.s32.totalorder %s27, 1
        %s438 = scalar_select %p437, %s27, 1
        %s439 = scalar_lea.vmem %s1, %s438
        %p440 = scmp.lt.s32.totalorder %s27, 1
        %s441 = scalar_select %p440, %s27, 1
        %s442 = smul.addr %s441, 8
        %s443 = scalar_lea.vmem %s2, %s442
        %p444 = scmp.lt.s32.totalorder %s27, 1
        %s445 = scalar_select %p444, %s27, 1
        %s446 = scalar_lea.vmem %s5, %s445
        %p447 = scmp.lt.s32.totalorder %s27, 1
        %s448 = scalar_select %p447, %s27, 1
        %s449 = smul.addr %s448, 4
        %s450 = smul.addr %s449, 4
        %s451 = scalar_lea.vmem %s7, %s450
        %p452 = scmp.lt.s32.totalorder %s27, 1
        %s453 = scalar_select %p452, %s27, 1
        %s454 = smul.addr %s453, 3
        %s455 = scalar_lea.vmem %s8, %s454
        %p456 = scmp.lt.s32.totalorder %s27, 1
        %s457 = scalar_select %p456, %s27, 1
        %s458 = smul.addr %s457, 3
        %s459 = smul.addr %s458, 4
        %s460 = scalar_lea.vmem %s11, %s459
        %v462 = vld [vmem:[%s443] sm:$0xff]
        %v463 = vld [vmem:[%s439] sm:$0x1]
        %465 = vset.pattern.permute.xlu0 0
        %466 = vperm.xlu0 %465, %v462
        %v467 = vpop.permute.xlu0 %466
        %v470 = vperm.slane %v463, 0
        %v472 = vmul.f32 %v467, %v470
        %v473 = vld [vmem:[%s0] sm:$0xff]
        %v474 = vmul.f32 %v473, %v472
        %v475 = vpack.c.bf16 %v474, %v474
        %v476 = vld [vmem:[%s451] sm:$0xff]
        %v477 = vld [vmem:[%s451 + $0x8] sm:$0xf]
        %s478 = scalar_lea.vmem %s0, 8
        %v479 = vld [vmem:[%s478] sm:$0xff]
        %v480 = vmul.f32 %v479, %v472
        %v481 = vpack.c.bf16 %v480, %v480
        %v482 = vld [vmem:[%s451 + $0x8] sm:$0xff]
        %v485 = vunpack.c.l.b16 %v476
        %v486 = vunpack.c.h.b16 %v476
        %v487 = vunpack.c.l.b16 %v482
        %v488 = vunpack.c.h.b16 %v482
        %v489 = vpack.c.b16 %v485, %v485
        %v490 = vpack.c.b16 %v486, %v486
        %v491 = vpack.c.b16 %v487, %v487
        %v492 = vpack.c.b16 %v488, %v488
        %493 = vrot.lane.b32.xlu0 %v489, 127
        %v494 = vpop.permute.xlu0 %493
        %495 = vrot.lane.b32.xlu0 %v490, 127
        %v496 = vpop.permute.xlu0 %495
        %497 = vrot.lane.b32.xlu0 %v491, 127
        %v498 = vpop.permute.xlu0 %497
        %499 = vrot.lane.b32.xlu0 %v492, 127
        %v500 = vpop.permute.xlu0 %499
        %vm501 = vcmask 1039360
        %v502 = vsel %vm501, %v494, %v496
        %v503 = vsel %vm501, %v496, %v498
        %v504 = vsel %vm501, %v498, %v500
        %vm505 = vcmask 64512
        %v507 = vsel %vm505, %v481, 0
        %vm509 = vcmask 1043456
        %v511 = vsel %vm509, %v502, 0
        %v514 = vsel %vm509, %v503, 0
        %v517 = vsel %vm509, %v504, 0
        %519 = vmatpush.bf16.msra.mxu0 0
        %520 = vmatpush.bf16.msra.mxu0 0
        %521 = vmatpush.bf16.msra.mxu0 0
        %522 = vmatpush.bf16.msra.mxu0 0
        %523 = vmatpush.bf16.msra.mxu0 0
        %524 = vmatpush.bf16.msra.mxu0 0
        %525 = vmatpush.bf16.msra.mxu0 0
        %526 = vmatpush.bf16.msra.mxu0 %v511
        %527 = vmatmul.bf16.gmra.mxu0 %v507
        %v528 = vpop.f32.mrf.mxu0
        %v529 = vadd.f32 0.0, %v528
        %v530 = vpop.f32.mrf.mxu0
        %531 = vdwg.mxu0
        %532 = vmatpush.bf16.msra.mxu0 0
        %533 = vmatpush.bf16.msra.mxu0 0
        %534 = vmatpush.bf16.msra.mxu0 0
        %535 = vmatpush.bf16.msra.mxu0 0
        %536 = vmatpush.bf16.msra.mxu0 0
        %537 = vmatpush.bf16.msra.mxu0 0
        %538 = vmatpush.bf16.msra.mxu0 0
        %539 = vmatpush.bf16.msra.mxu0 %v514
        %540 = vmatmul.bf16.gmra.mxu0 %v507
        %v541 = vpop.f32.mrf.mxu0
        %v542 = vadd.f32 0.0, %v541
        %v543 = vpop.f32.mrf.mxu0
        %544 = vdwg.mxu0
        %545 = vmatpush.bf16.msra.mxu0 0
        %546 = vmatpush.bf16.msra.mxu0 0
        %547 = vmatpush.bf16.msra.mxu0 0
        %548 = vmatpush.bf16.msra.mxu0 0
        %549 = vmatpush.bf16.msra.mxu0 0
        %550 = vmatpush.bf16.msra.mxu0 0
        %551 = vmatpush.bf16.msra.mxu0 0
        %552 = vmatpush.bf16.msra.mxu0 %v517
        %553 = vmatmul.bf16.gmra.mxu0 %v507
        %v554 = vpop.f32.mrf.mxu0
        %v555 = vadd.f32 0.0, %v554
        %v556 = vpop.f32.mrf.mxu0
        %557 = vdwg.mxu0
        %v559 = vunpack.c.l.b16 %v477
        %v560 = vpack.c.b16 %v559, %v559
        %v562 = vsel %vm505, %v475, 0
        %v565 = vsel %vm509, %v489, 0
        %v568 = vsel %vm509, %v490, 0
        %v571 = vsel %vm509, %v560, 0
        %573 = vmatpush.bf16.msra.mxu0 0
        %574 = vmatpush.bf16.msra.mxu0 0
        %575 = vmatpush.bf16.msra.mxu0 0
        %576 = vmatpush.bf16.msra.mxu0 0
        %577 = vmatpush.bf16.msra.mxu0 0
        %578 = vmatpush.bf16.msra.mxu0 0
        %579 = vmatpush.bf16.msra.mxu0 0
        %580 = vmatpush.bf16.msra.mxu0 %v565
        %581 = vmatmul.bf16.gmra.mxu0 %v562
        %v582 = vpop.f32.mrf.mxu0
        %v583 = vadd.f32 %v529, %v582
        %v584 = vpop.f32.mrf.mxu0
        %585 = vdwg.mxu0
        %586 = vmatpush.bf16.msra.mxu0 0
        %587 = vmatpush.bf16.msra.mxu0 0
        %588 = vmatpush.bf16.msra.mxu0 0
        %589 = vmatpush.bf16.msra.mxu0 0
        %590 = vmatpush.bf16.msra.mxu0 0
        %591 = vmatpush.bf16.msra.mxu0 0
        %592 = vmatpush.bf16.msra.mxu0 0
        %593 = vmatpush.bf16.msra.mxu0 %v568
        %594 = vmatmul.bf16.gmra.mxu0 %v562
        %v595 = vpop.f32.mrf.mxu0
        %v596 = vadd.f32 %v542, %v595
        %v597 = vpop.f32.mrf.mxu0
        %598 = vdwg.mxu0
        %599 = vmatpush.bf16.msra.mxu0 0
        %600 = vmatpush.bf16.msra.mxu0 0
        %601 = vmatpush.bf16.msra.mxu0 0
        %602 = vmatpush.bf16.msra.mxu0 0
        %603 = vmatpush.bf16.msra.mxu0 0
        %604 = vmatpush.bf16.msra.mxu0 0
        %605 = vmatpush.bf16.msra.mxu0 0
        %606 = vmatpush.bf16.msra.mxu0 %v571
        %607 = vmatmul.bf16.gmra.mxu0 %v562
        %v608 = vpop.f32.mrf.mxu0
        %v609 = vadd.f32 %v555, %v608
        %v610 = vpop.f32.mrf.mxu0
        %611 = vdwg.mxu0
        %s612 = scalar_lea.vmem %s0, 16
        %v613 = vld [vmem:[%s612] sm:$0xff]
        %v614 = vmul.f32 %v613, %v472
        %v615 = vpack.c.bf16 %v614, %v614
        %616 = vrot.lane.b32.xlu0 %v489, 126
        %v617 = vpop.permute.xlu0 %616
        %618 = vrot.lane.b32.xlu0 %v490, 126
        %v619 = vpop.permute.xlu0 %618
        %620 = vrot.lane.b32.xlu0 %v491, 126
        %v621 = vpop.permute.xlu0 %620
        %622 = vrot.lane.b32.xlu0 %v492, 126
        %v623 = vpop.permute.xlu0 %622
        %vm624 = vcmask 1031168
        %v625 = vsel %vm624, %v617, %v619
        %v626 = vsel %vm624, %v619, %v621
        %v627 = vsel %vm624, %v621, %v623
        %v629 = vsel %vm505, %v615, 0
        %v632 = vsel %vm509, %v625, 0
        %v635 = vsel %vm509, %v626, 0
        %v638 = vsel %vm509, %v627, 0
        %640 = vmatpush.bf16.msra.mxu0 0
        %641 = vmatpush.bf16.msra.mxu0 0
        %642 = vmatpush.bf16.msra.mxu0 0
        %643 = vmatpush.bf16.msra.mxu0 0
        %644 = vmatpush.bf16.msra.mxu0 0
        %645 = vmatpush.bf16.msra.mxu0 0
        %646 = vmatpush.bf16.msra.mxu0 0
        %647 = vmatpush.bf16.msra.mxu0 %v632
        %648 = vmatmul.bf16.gmra.mxu0 %v629
        %v649 = vpop.f32.mrf.mxu0
        %v650 = vadd.f32 0.0, %v649
        %v651 = vpop.f32.mrf.mxu0
        %652 = vdwg.mxu0
        %653 = vmatpush.bf16.msra.mxu0 0
        %654 = vmatpush.bf16.msra.mxu0 0
        %655 = vmatpush.bf16.msra.mxu0 0
        %656 = vmatpush.bf16.msra.mxu0 0
        %657 = vmatpush.bf16.msra.mxu0 0
        %658 = vmatpush.bf16.msra.mxu0 0
        %659 = vmatpush.bf16.msra.mxu0 0
        %660 = vmatpush.bf16.msra.mxu0 %v635
        %661 = vmatmul.bf16.gmra.mxu0 %v629
        %v662 = vpop.f32.mrf.mxu0
        %v663 = vadd.f32 0.0, %v662
        %v664 = vpop.f32.mrf.mxu0
        %665 = vdwg.mxu0
        %666 = vmatpush.bf16.msra.mxu0 0
        %667 = vmatpush.bf16.msra.mxu0 0
        %668 = vmatpush.bf16.msra.mxu0 0
        %669 = vmatpush.bf16.msra.mxu0 0
        %670 = vmatpush.bf16.msra.mxu0 0
        %671 = vmatpush.bf16.msra.mxu0 0
        %672 = vmatpush.bf16.msra.mxu0 0
        %673 = vmatpush.bf16.msra.mxu0 %v638
        %674 = vmatmul.bf16.gmra.mxu0 %v629
        %v675 = vpop.f32.mrf.mxu0
        %v676 = vadd.f32 0.0, %v675
        %v677 = vpop.f32.mrf.mxu0
        %678 = vdwg.mxu0
        %v679 = vadd.f32 %v583, %v650
        %v680 = vadd.f32 %v596, %v663
        %v681 = vadd.f32 %v609, %v676
        %s682 = scalar_lea.vmem %s0, 24
        %v683 = vld [vmem:[%s682] sm:$0xff]
        %v684 = vmul.f32 %v683, %v472
        %v685 = vpack.c.bf16 %v684, %v684
        %686 = vrot.lane.b32.xlu0 %v489, 104
        %v687 = vpop.permute.xlu0 %686
        %688 = vrot.lane.b32.xlu0 %v490, 104
        %v689 = vpop.permute.xlu0 %688
        %690 = vrot.lane.b32.xlu0 %v491, 104
        %v691 = vpop.permute.xlu0 %690
        %692 = vrot.lane.b32.xlu0 %v492, 104
        %v693 = vpop.permute.xlu0 %692
        %vm694 = vcmask 850944
        %v695 = vsel %vm694, %v687, %v689
        %v696 = vsel %vm694, %v689, %v691
        %v697 = vsel %vm694, %v691, %v693
        %v699 = vsel %vm505, %v685, 0
        %v702 = vsel %vm509, %v695, 0
        %v705 = vsel %vm509, %v696, 0
        %v708 = vsel %vm509, %v697, 0
        %710 = vmatpush.bf16.msra.mxu0 0
        %711 = vmatpush.bf16.msra.mxu0 0
        %712 = vmatpush.bf16.msra.mxu0 0
        %713 = vmatpush.bf16.msra.mxu0 0
        %714 = vmatpush.bf16.msra.mxu0 0
        %715 = vmatpush.bf16.msra.mxu0 0
        %716 = vmatpush.bf16.msra.mxu0 0
        %717 = vmatpush.bf16.msra.mxu0 %v702
        %718 = vmatmul.bf16.gmra.mxu0 %v699
        %v719 = vpop.f32.mrf.mxu0
        %v720 = vadd.f32 0.0, %v719
        %v721 = vpop.f32.mrf.mxu0
        %722 = vdwg.mxu0
        %723 = vmatpush.bf16.msra.mxu0 0
        %724 = vmatpush.bf16.msra.mxu0 0
        %725 = vmatpush.bf16.msra.mxu0 0
        %726 = vmatpush.bf16.msra.mxu0 0
        %727 = vmatpush.bf16.msra.mxu0 0
        %728 = vmatpush.bf16.msra.mxu0 0
        %729 = vmatpush.bf16.msra.mxu0 0
        %730 = vmatpush.bf16.msra.mxu0 %v705
        %731 = vmatmul.bf16.gmra.mxu0 %v699
        %v732 = vpop.f32.mrf.mxu0
        %v733 = vadd.f32 0.0, %v732
        %v734 = vpop.f32.mrf.mxu0
        %735 = vdwg.mxu0
        %736 = vmatpush.bf16.msra.mxu0 0
        %737 = vmatpush.bf16.msra.mxu0 0
        %738 = vmatpush.bf16.msra.mxu0 0
        %739 = vmatpush.bf16.msra.mxu0 0
        %740 = vmatpush.bf16.msra.mxu0 0
        %741 = vmatpush.bf16.msra.mxu0 0
        %742 = vmatpush.bf16.msra.mxu0 0
        %743 = vmatpush.bf16.msra.mxu0 %v708
        %744 = vmatmul.bf16.gmra.mxu0 %v699
        %v745 = vpop.f32.mrf.mxu0
        %v746 = vadd.f32 0.0, %v745
        %v747 = vpop.f32.mrf.mxu0
        %748 = vdwg.mxu0
        %v749 = vadd.f32 %v679, %v720
        %v750 = vadd.f32 %v680, %v733
        %v751 = vadd.f32 %v681, %v746
        %s752 = scalar_lea.vmem %s0, 32
        %v753 = vld [vmem:[%s752] sm:$0xff]
        %v754 = vmul.f32 %v753, %v472
        %v755 = vpack.c.bf16 %v754, %v754
        %756 = vrot.lane.b32.xlu0 %v489, 103
        %v757 = vpop.permute.xlu0 %756
        %758 = vrot.lane.b32.xlu0 %v490, 103
        %v759 = vpop.permute.xlu0 %758
        %760 = vrot.lane.b32.xlu0 %v491, 103
        %v761 = vpop.permute.xlu0 %760
        %762 = vrot.lane.b32.xlu0 %v492, 103
        %v763 = vpop.permute.xlu0 %762
        %vm764 = vcmask 842752
        %v765 = vsel %vm764, %v757, %v759
        %v766 = vsel %vm764, %v759, %v761
        %v767 = vsel %vm764, %v761, %v763
        %v769 = vsel %vm505, %v755, 0
        %v772 = vsel %vm509, %v765, 0
        %v775 = vsel %vm509, %v766, 0
        %v778 = vsel %vm509, %v767, 0
        %780 = vmatpush.bf16.msra.mxu0 0
        %781 = vmatpush.bf16.msra.mxu0 0
        %782 = vmatpush.bf16.msra.mxu0 0
        %783 = vmatpush.bf16.msra.mxu0 0
        %784 = vmatpush.bf16.msra.mxu0 0
        %785 = vmatpush.bf16.msra.mxu0 0
        %786 = vmatpush.bf16.msra.mxu0 0
        %787 = vmatpush.bf16.msra.mxu0 %v772
        %788 = vmatmul.bf16.gmra.mxu0 %v769
        %v789 = vpop.f32.mrf.mxu0
        %v790 = vadd.f32 0.0, %v789
        %v791 = vpop.f32.mrf.mxu0
        %792 = vdwg.mxu0
        %793 = vmatpush.bf16.msra.mxu0 0
        %794 = vmatpush.bf16.msra.mxu0 0
        %795 = vmatpush.bf16.msra.mxu0 0
        %796 = vmatpush.bf16.msra.mxu0 0
        %797 = vmatpush.bf16.msra.mxu0 0
        %798 = vmatpush.bf16.msra.mxu0 0
        %799 = vmatpush.bf16.msra.mxu0 0
        %800 = vmatpush.bf16.msra.mxu0 %v775
        %801 = vmatmul.bf16.gmra.mxu0 %v769
        %v802 = vpop.f32.mrf.mxu0
        %v803 = vadd.f32 0.0, %v802
        %v804 = vpop.f32.mrf.mxu0
        %805 = vdwg.mxu0
        %806 = vmatpush.bf16.msra.mxu0 0
        %807 = vmatpush.bf16.msra.mxu0 0
        %808 = vmatpush.bf16.msra.mxu0 0
        %809 = vmatpush.bf16.msra.mxu0 0
        %810 = vmatpush.bf16.msra.mxu0 0
        %811 = vmatpush.bf16.msra.mxu0 0
        %812 = vmatpush.bf16.msra.mxu0 0
        %813 = vmatpush.bf16.msra.mxu0 %v778
        %814 = vmatmul.bf16.gmra.mxu0 %v769
        %v815 = vpop.f32.mrf.mxu0
        %v816 = vadd.f32 0.0, %v815
        %v817 = vpop.f32.mrf.mxu0
        %818 = vdwg.mxu0
        %v819 = vadd.f32 %v749, %v790
        %v820 = vadd.f32 %v750, %v803
        %v821 = vadd.f32 %v751, %v816
        %s822 = scalar_lea.vmem %s0, 40
        %v823 = vld [vmem:[%s822] sm:$0xff]
        %v824 = vmul.f32 %v823, %v472
        %v825 = vpack.c.bf16 %v824, %v824
        %826 = vrot.lane.b32.xlu0 %v489, 102
        %v827 = vpop.permute.xlu0 %826
        %828 = vrot.lane.b32.xlu0 %v490, 102
        %v829 = vpop.permute.xlu0 %828
        %830 = vrot.lane.b32.xlu0 %v491, 102
        %v831 = vpop.permute.xlu0 %830
        %832 = vrot.lane.b32.xlu0 %v492, 102
        %v833 = vpop.permute.xlu0 %832
        %vm834 = vcmask 834560
        %v835 = vsel %vm834, %v827, %v829
        %v836 = vsel %vm834, %v829, %v831
        %v837 = vsel %vm834, %v831, %v833
        %v839 = vsel %vm505, %v825, 0
        %v842 = vsel %vm509, %v835, 0
        %v845 = vsel %vm509, %v836, 0
        %v848 = vsel %vm509, %v837, 0
        %850 = vmatpush.bf16.msra.mxu0 0
        %851 = vmatpush.bf16.msra.mxu0 0
        %852 = vmatpush.bf16.msra.mxu0 0
        %853 = vmatpush.bf16.msra.mxu0 0
        %854 = vmatpush.bf16.msra.mxu0 0
        %855 = vmatpush.bf16.msra.mxu0 0
        %856 = vmatpush.bf16.msra.mxu0 0
        %857 = vmatpush.bf16.msra.mxu0 %v842
        %858 = vmatmul.bf16.gmra.mxu0 %v839
        %v859 = vpop.f32.mrf.mxu0
        %v860 = vadd.f32 0.0, %v859
        %v861 = vpop.f32.mrf.mxu0
        %862 = vdwg.mxu0
        %863 = vmatpush.bf16.msra.mxu0 0
        %864 = vmatpush.bf16.msra.mxu0 0
        %865 = vmatpush.bf16.msra.mxu0 0
        %866 = vmatpush.bf16.msra.mxu0 0
        %867 = vmatpush.bf16.msra.mxu0 0
        %868 = vmatpush.bf16.msra.mxu0 0
        %869 = vmatpush.bf16.msra.mxu0 0
        %870 = vmatpush.bf16.msra.mxu0 %v845
        %871 = vmatmul.bf16.gmra.mxu0 %v839
        %v872 = vpop.f32.mrf.mxu0
        %v873 = vadd.f32 0.0, %v872
        %v874 = vpop.f32.mrf.mxu0
        %875 = vdwg.mxu0
        %876 = vmatpush.bf16.msra.mxu0 0
        %877 = vmatpush.bf16.msra.mxu0 0
        %878 = vmatpush.bf16.msra.mxu0 0
        %879 = vmatpush.bf16.msra.mxu0 0
        %880 = vmatpush.bf16.msra.mxu0 0
        %881 = vmatpush.bf16.msra.mxu0 0
        %882 = vmatpush.bf16.msra.mxu0 0
        %883 = vmatpush.bf16.msra.mxu0 %v848
        %884 = vmatmul.bf16.gmra.mxu0 %v839
        %v885 = vpop.f32.mrf.mxu0
        %v886 = vadd.f32 0.0, %v885
        %v887 = vpop.f32.mrf.mxu0
        %888 = vdwg.mxu0
        %v889 = vadd.f32 %v819, %v860
        %v890 = vadd.f32 %v820, %v873
        %v891 = vadd.f32 %v821, %v886
        %s892 = scalar_lea.vmem %s0, 48
        %v893 = vld [vmem:[%s892] sm:$0xff]
        %v894 = vmul.f32 %v893, %v472
        %v895 = vpack.c.bf16 %v894, %v894
        %896 = vrot.lane.b32.xlu0 %v489, 80
        %v897 = vpop.permute.xlu0 %896
        %898 = vrot.lane.b32.xlu0 %v490, 80
        %v899 = vpop.permute.xlu0 %898
        %900 = vrot.lane.b32.xlu0 %v491, 80
        %v901 = vpop.permute.xlu0 %900
        %902 = vrot.lane.b32.xlu0 %v492, 80
        %v903 = vpop.permute.xlu0 %902
        %vm904 = vcmask 654336
        %v905 = vsel %vm904, %v897, %v899
        %v906 = vsel %vm904, %v899, %v901
        %v907 = vsel %vm904, %v901, %v903
        %v909 = vsel %vm505, %v895, 0
        %v912 = vsel %vm509, %v905, 0
        %v915 = vsel %vm509, %v906, 0
        %v918 = vsel %vm509, %v907, 0
        %920 = vmatpush.bf16.msra.mxu0 0
        %921 = vmatpush.bf16.msra.mxu0 0
        %922 = vmatpush.bf16.msra.mxu0 0
        %923 = vmatpush.bf16.msra.mxu0 0
        %924 = vmatpush.bf16.msra.mxu0 0
        %925 = vmatpush.bf16.msra.mxu0 0
        %926 = vmatpush.bf16.msra.mxu0 0
        %927 = vmatpush.bf16.msra.mxu0 %v912
        %928 = vmatmul.bf16.gmra.mxu0 %v909
        %v929 = vpop.f32.mrf.mxu0
        %v930 = vadd.f32 0.0, %v929
        %v931 = vpop.f32.mrf.mxu0
        %932 = vdwg.mxu0
        %933 = vmatpush.bf16.msra.mxu0 0
        %934 = vmatpush.bf16.msra.mxu0 0
        %935 = vmatpush.bf16.msra.mxu0 0
        %936 = vmatpush.bf16.msra.mxu0 0
        %937 = vmatpush.bf16.msra.mxu0 0
        %938 = vmatpush.bf16.msra.mxu0 0
        %939 = vmatpush.bf16.msra.mxu0 0
        %940 = vmatpush.bf16.msra.mxu0 %v915
        %941 = vmatmul.bf16.gmra.mxu0 %v909
        %v942 = vpop.f32.mrf.mxu0
        %v943 = vadd.f32 0.0, %v942
        %v944 = vpop.f32.mrf.mxu0
        %945 = vdwg.mxu0
        %946 = vmatpush.bf16.msra.mxu0 0
        %947 = vmatpush.bf16.msra.mxu0 0
        %948 = vmatpush.bf16.msra.mxu0 0
        %949 = vmatpush.bf16.msra.mxu0 0
        %950 = vmatpush.bf16.msra.mxu0 0
        %951 = vmatpush.bf16.msra.mxu0 0
        %952 = vmatpush.bf16.msra.mxu0 0
        %953 = vmatpush.bf16.msra.mxu0 %v918
        %954 = vmatmul.bf16.gmra.mxu0 %v909
        %v955 = vpop.f32.mrf.mxu0
        %v956 = vadd.f32 0.0, %v955
        %v957 = vpop.f32.mrf.mxu0
        %958 = vdwg.mxu0
        %v959 = vadd.f32 %v889, %v930
        %v960 = vadd.f32 %v890, %v943
        %v961 = vadd.f32 %v891, %v956
        %s962 = scalar_lea.vmem %s0, 56
        %v963 = vld [vmem:[%s962] sm:$0xff]
        %v964 = vmul.f32 %v963, %v472
        %v965 = vpack.c.bf16 %v964, %v964
        %966 = vrot.lane.b32.xlu0 %v489, 79
        %v967 = vpop.permute.xlu0 %966
        %968 = vrot.lane.b32.xlu0 %v490, 79
        %v969 = vpop.permute.xlu0 %968
        %970 = vrot.lane.b32.xlu0 %v491, 79
        %v971 = vpop.permute.xlu0 %970
        %972 = vrot.lane.b32.xlu0 %v492, 79
        %v973 = vpop.permute.xlu0 %972
        %vm974 = vcmask 646144
        %v975 = vsel %vm974, %v967, %v969
        %v976 = vsel %vm974, %v969, %v971
        %v977 = vsel %vm974, %v971, %v973
        %v979 = vsel %vm505, %v965, 0
        %v982 = vsel %vm509, %v975, 0
        %v985 = vsel %vm509, %v976, 0
        %v988 = vsel %vm509, %v977, 0
        %990 = vmatpush.bf16.msra.mxu0 0
        %991 = vmatpush.bf16.msra.mxu0 0
        %992 = vmatpush.bf16.msra.mxu0 0
        %993 = vmatpush.bf16.msra.mxu0 0
        %994 = vmatpush.bf16.msra.mxu0 0
        %995 = vmatpush.bf16.msra.mxu0 0
        %996 = vmatpush.bf16.msra.mxu0 0
        %997 = vmatpush.bf16.msra.mxu0 %v982
        %998 = vmatmul.bf16.gmra.mxu0 %v979
        %v999 = vpop.f32.mrf.mxu0
        %v1000 = vadd.f32 0.0, %v999
        %v1001 = vpop.f32.mrf.mxu0
        %1002 = vdwg.mxu0
        %1003 = vmatpush.bf16.msra.mxu0 0
        %1004 = vmatpush.bf16.msra.mxu0 0
        %1005 = vmatpush.bf16.msra.mxu0 0
        %1006 = vmatpush.bf16.msra.mxu0 0
        %1007 = vmatpush.bf16.msra.mxu0 0
        %1008 = vmatpush.bf16.msra.mxu0 0
        %1009 = vmatpush.bf16.msra.mxu0 0
        %1010 = vmatpush.bf16.msra.mxu0 %v985
        %1011 = vmatmul.bf16.gmra.mxu0 %v979
        %v1012 = vpop.f32.mrf.mxu0
        %v1013 = vadd.f32 0.0, %v1012
        %v1014 = vpop.f32.mrf.mxu0
        %1015 = vdwg.mxu0
        %1016 = vmatpush.bf16.msra.mxu0 0
        %1017 = vmatpush.bf16.msra.mxu0 0
        %1018 = vmatpush.bf16.msra.mxu0 0
        %1019 = vmatpush.bf16.msra.mxu0 0
        %1020 = vmatpush.bf16.msra.mxu0 0
        %1021 = vmatpush.bf16.msra.mxu0 0
        %1022 = vmatpush.bf16.msra.mxu0 0
        %1023 = vmatpush.bf16.msra.mxu0 %v988
        %1024 = vmatmul.bf16.gmra.mxu0 %v979
        %v1025 = vpop.f32.mrf.mxu0
        %v1026 = vadd.f32 0.0, %v1025
        %v1027 = vpop.f32.mrf.mxu0
        %1028 = vdwg.mxu0
        %v1029 = vadd.f32 %v959, %v1000
        %v1030 = vadd.f32 %v960, %v1013
        %v1031 = vadd.f32 %v961, %v1026
        %s1032 = scalar_lea.vmem %s0, 64
        %v1033 = vld [vmem:[%s1032] sm:$0xff]
        %v1034 = vmul.f32 %v1033, %v472
        %v1035 = vpack.c.bf16 %v1034, %v1034
        %1036 = vrot.lane.b32.xlu0 %v489, 78
        %v1037 = vpop.permute.xlu0 %1036
        %1038 = vrot.lane.b32.xlu0 %v490, 78
        %v1039 = vpop.permute.xlu0 %1038
        %1040 = vrot.lane.b32.xlu0 %v491, 78
        %v1041 = vpop.permute.xlu0 %1040
        %1042 = vrot.lane.b32.xlu0 %v492, 78
        %v1043 = vpop.permute.xlu0 %1042
        %vm1044 = vcmask 637952
        %v1045 = vsel %vm1044, %v1037, %v1039
        %v1046 = vsel %vm1044, %v1039, %v1041
        %v1047 = vsel %vm1044, %v1041, %v1043
        %v1049 = vsel %vm505, %v1035, 0
        %v1052 = vsel %vm509, %v1045, 0
        %v1055 = vsel %vm509, %v1046, 0
        %v1058 = vsel %vm509, %v1047, 0
        %1060 = vmatpush.bf16.msra.mxu0 0
        %1061 = vmatpush.bf16.msra.mxu0 0
        %1062 = vmatpush.bf16.msra.mxu0 0
        %1063 = vmatpush.bf16.msra.mxu0 0
        %1064 = vmatpush.bf16.msra.mxu0 0
        %1065 = vmatpush.bf16.msra.mxu0 0
        %1066 = vmatpush.bf16.msra.mxu0 0
        %1067 = vmatpush.bf16.msra.mxu0 %v1052
        %1068 = vmatmul.bf16.gmra.mxu0 %v1049
        %v1069 = vpop.f32.mrf.mxu0
        %v1070 = vadd.f32 0.0, %v1069
        %v1071 = vpop.f32.mrf.mxu0
        %1072 = vdwg.mxu0
        %1073 = vmatpush.bf16.msra.mxu0 0
        %1074 = vmatpush.bf16.msra.mxu0 0
        %1075 = vmatpush.bf16.msra.mxu0 0
        %1076 = vmatpush.bf16.msra.mxu0 0
        %1077 = vmatpush.bf16.msra.mxu0 0
        %1078 = vmatpush.bf16.msra.mxu0 0
        %1079 = vmatpush.bf16.msra.mxu0 0
        %1080 = vmatpush.bf16.msra.mxu0 %v1055
        %1081 = vmatmul.bf16.gmra.mxu0 %v1049
        %v1082 = vpop.f32.mrf.mxu0
        %v1083 = vadd.f32 0.0, %v1082
        %v1084 = vpop.f32.mrf.mxu0
        %1085 = vdwg.mxu0
        %1086 = vmatpush.bf16.msra.mxu0 0
        %1087 = vmatpush.bf16.msra.mxu0 0
        %1088 = vmatpush.bf16.msra.mxu0 0
        %1089 = vmatpush.bf16.msra.mxu0 0
        %1090 = vmatpush.bf16.msra.mxu0 0
        %1091 = vmatpush.bf16.msra.mxu0 0
        %1092 = vmatpush.bf16.msra.mxu0 0
        %1093 = vmatpush.bf16.msra.mxu0 %v1058
        %1094 = vmatmul.bf16.gmra.mxu0 %v1049
        %v1095 = vpop.f32.mrf.mxu0
        %v1096 = vadd.f32 0.0, %v1095
        %v1097 = vpop.f32.mrf.mxu0
        %1098 = vdwg.mxu0
        %v1099 = vadd.f32 %v1029, %v1070
        %v1100 = vadd.f32 %v1030, %v1083
        %v1101 = vadd.f32 %v1031, %v1096
        %s1102 = sld [smem:[#allocation2]]
        %v1103 = vld [vmem:[%s455] sm:$0x7]
        %v1104 = vunpack.c.l.bf16 %v1103
        %v1105 = vstv %s1102
        %v1106 = vmul.f32 %v1105, %v1104
        %v1108 = vperm.slane %v1106, 0
        %v1109 = vperm.slane %v1106, 2
        %v1110 = vperm.slane %v1106, 4
        %v1114 = vperm.slane %v1108, 0
        %v1115 = vperm.slane %v1109, 0
        %v1116 = vperm.slane %v1110, 0
        %v1117 = vadd.f32 %v1099, %v1114
        %v1118 = vadd.f32 %v1100, %v1115
        %v1119 = vadd.f32 %v1101, %v1116
        %v1120 = vld [vmem:[%s3] sm:$0xff]
        %1122 = vset.pattern.permute.xlu0 0
        %1123 = vperm.xlu0 %1122, %v1120
        %v1124 = vpop.permute.xlu0 %1123
        %v1126 = vadd.f32 %v1117, %v1124
        %v1127 = vadd.f32 %v1118, %v1124
        %v1128 = vadd.f32 %v1119, %v1124
        %vm1129 = vcmp.ge.f32.partialorder %v1126, 0.0
        %vm1130 = vcmp.ge.f32.partialorder %v1127, 0.0
        %vm1131 = vcmp.ge.f32.partialorder %v1128, 0.0
        %v1132 = vmul.f32 %v1126, 0.2
        %v1133 = vmul.f32 %v1127, 0.2
        %v1134 = vmul.f32 %v1128, 0.2
        %v1135 = vsel %vm1129, %v1126, %v1132
        %v1136 = vsel %vm1130, %v1127, %v1133
        %v1137 = vsel %vm1131, %v1128, %v1134
        %v1138 = vpack.c.bf16 %v1136, %v1135
        %v1139 = vpack.c.bf16 %v1137, %v1137
        %1140 = vst [vmem:[%s429] sm:$0xff] %v1138
        %1141 = vst [vmem:[%s429 + $0x8] sm:$0xf] %v1139
        %v1142 = vld [vmem:[%s4] sm:$0x7]
        %v1143 = vld [vmem:[%s446] sm:$0x1]
        %v1145 = vperm.slane %v1143, 0
        %v1147 = vmul.f32 %v1142, %v1145
        %v1148 = vpack.c.bf16 %v1147, %v1147
        %v1149 = vld [vmem:[%s6] sm:$0x7]
        %1151 = vset.pattern.permute.xlu0 0
        %1152 = vperm.xlu0 %1151, %v1149
        %v1153 = vpop.permute.xlu0 %1152
        %v1157 = vunpack.c.l.b16 %v1138
        %v1158 = vunpack.c.h.b16 %v1138
        %v1159 = vunpack.c.l.b16 %v1139
        %v1160 = vpack.c.b16 %v1157, %v1157
        %v1161 = vpack.c.b16 %v1158, %v1158
        %v1162 = vpack.c.b16 %v1159, %v1159
        %v1164 = vsel %vm505, %v1148, 0
        %v1167 = vsel %vm509, %v1160, 0
        %v1170 = vsel %vm509, %v1161, 0
        %v1173 = vsel %vm509, %v1162, 0
        %1175 = vmatpush.bf16.msra.mxu0 0
        %1176 = vmatpush.bf16.msra.mxu0 0
        %1177 = vmatpush.bf16.msra.mxu0 0
        %1178 = vmatpush.bf16.msra.mxu0 0
        %1179 = vmatpush.bf16.msra.mxu0 0
        %1180 = vmatpush.bf16.msra.mxu0 0
        %1181 = vmatpush.bf16.msra.mxu0 0
        %1182 = vmatpush.bf16.msra.mxu0 %v1167
        %1183 = vmatmul.bf16.gmra.mxu0 %v1164
        %v1184 = vpop.f32.mrf.mxu0
        %v1185 = vadd.f32 %v1153, %v1184
        %v1186 = vpop.f32.mrf.mxu0
        %1187 = vdwg.mxu0
        %1188 = vmatpush.bf16.msra.mxu0 0
        %1189 = vmatpush.bf16.msra.mxu0 0
        %1190 = vmatpush.bf16.msra.mxu0 0
        %1191 = vmatpush.bf16.msra.mxu0 0
        %1192 = vmatpush.bf16.msra.mxu0 0
        %1193 = vmatpush.bf16.msra.mxu0 0
        %1194 = vmatpush.bf16.msra.mxu0 0
        %1195 = vmatpush.bf16.msra.mxu0 %v1170
        %1196 = vmatmul.bf16.gmra.mxu0 %v1164
        %v1197 = vpop.f32.mrf.mxu0
        %v1198 = vadd.f32 %v1153, %v1197
        %v1199 = vpop.f32.mrf.mxu0
        %1200 = vdwg.mxu0
        %1201 = vmatpush.bf16.msra.mxu0 0
        %1202 = vmatpush.bf16.msra.mxu0 0
        %1203 = vmatpush.bf16.msra.mxu0 0
        %1204 = vmatpush.bf16.msra.mxu0 0
        %1205 = vmatpush.bf16.msra.mxu0 0
        %1206 = vmatpush.bf16.msra.mxu0 0
        %1207 = vmatpush.bf16.msra.mxu0 0
        %1208 = vmatpush.bf16.msra.mxu0 %v1173
        %1209 = vmatmul.bf16.gmra.mxu0 %v1164
        %v1210 = vpop.f32.mrf.mxu0
        %v1211 = vadd.f32 %v1153, %v1210
        %v1212 = vpop.f32.mrf.mxu0
        %1213 = vdwg.mxu0
        %vm1214 = vcmp.ge.f32.partialorder %v1185, 0.0
        %vm1215 = vcmp.ge.f32.partialorder %v1198, 0.0
        %vm1216 = vcmp.ge.f32.partialorder %v1211, 0.0
        %v1217 = vmul.f32 %v1185, 0.2
        %v1218 = vmul.f32 %v1198, 0.2
        %v1219 = vmul.f32 %v1211, 0.2
        %v1220 = vsel %vm1214, %v1185, %v1217
        %v1221 = vsel %vm1215, %v1198, %v1218
        %v1222 = vsel %vm1216, %v1211, %v1219
        %v1225 = vrot.slane %v1221, 4
        %v1226 = vsel %vm509, %v1220, %v1225
        %1228 = vst [vmem:[%s460] sm:$0x77] %v1226
        %1229 = vst [vmem:[%s460 + $0x8] sm:$0x7] %v1222
        %s1230 = sand.u32 %s270, 1
        %s1231 = scalar_lea.sflag [#allocation4], %s1230
        %s1232 = sand.u32 %s270, 1
        %s1233 = smul.addr %s1232, 12
        %s1234 = scalar_lea.vmem [#allocation3], %s1233
        %p1235 = scmp.lt.s32.totalorder %s27, 1
        %s1236 = scalar_select %p1235, %s27, 1
        %s1237 = smul.addr %s1236, 3
        %s1238 = smul.addr %s1237, 4
        %s1239 = scalar_lea.vmem %s11, %s1238
        // Predicated region
        $region61: #{generator_forward.9} parent=59 // pred_check
          %p1240 = pneg %p280
        $region62: #{generator_forward.9} parent=59 // pred_check_branch
          %1242 = sbr.rel (%p1240) target = $region64
        $region63: #{generator_forward.9} parent=59 // pred_region
          %1244 = vsyncadd %s1231, 0
          %s1245 = smul.addr %s27, 3
          %s1246 = smul.addr %s1245, 4
          %s1247 = scalar_lea.hbm %s10, %s1246
          %s1249 = sshll.u32 %s1234, 4
          %s1250 = int_to_ptr.vmem [resolvable:$true] %s1249
          %s1251 = sshll.u32 %s1247, 4
          %s1252 = int_to_ptr.hbm [resolvable:$true] %s1251
          %1254 = dma.vmem_to_hbm [thread:$0]  %s1250, 192, %s1252, %s1231
        $region64: #{generator_forward.9} parent=59 // pred_fallthru
          _
        // Predicated region
        $region65: #{generator_forward.9} parent=59 // pred_check
          %p1255 = pneg %p306
        $region66: #{generator_forward.9} parent=59 // pred_check_branch
          %1257 = sbr.rel (%p1255) target = $region68
        $region67: #{generator_forward.9} parent=59 // pred_region
          _
        $region68: #{generator_forward.9} parent=59 // pred_fallthru
          _
      $region60: #{generator_forward.9} parent=5 // pred_fallthru
        _
      %p1258 = scmp.le.s32.totalorder 2, %s22
      // Predicated region
      $region69: #{generator_forward.9} parent=5 // pred_check
        %p1259 = pneg %p1258
      $region70: #{generator_forward.9} parent=5 // pred_check_branch
        %1261 = sbr.rel (%p1259) target = $region72
      $region71: #{generator_forward.9} parent=5 // pred_region
        %s1262 = ssub.s32 %s22, 2
        // Predicated region
        $region73: #{generator_forward.9} parent=71 // pred_check
          %p1263 = pneg %p286
        $region74: #{generator_forward.9} parent=71 // pred_check_branch
          %1265 = sbr.rel (%p1263) target = $region76
        $region75: #{generator_forward.9} parent=71 // pred_region
          %s1266 = sand.u32 %s271, 1
          %s1267 = scalar_lea.sflag [#allocation4], %s1266
          %s1268 = sand.u32 %s271, 1
          %s1269 = smul.addr %s1268, 12
          %s1270 = scalar_lea.vmem [#allocation3], %s1269
          %1272 = dma.done %s1267, 192
        $region76: #{generator_forward.9} parent=71 // pred_fallthru
          _
        // Predicated region
        $region77: #{generator_forward.9} parent=71 // pred_check
          %p1273 = pneg %p312
        $region78: #{generator_forward.9} parent=71 // pred_check_branch
          %1275 = sbr.rel (%p1273) target = $region80
        $region79: #{generator_forward.9} parent=71 // pred_region
          %p1276 = scmp.lt.s32.totalorder %s28, 1
          %s1277 = scalar_select %p1276, %s28, 1
          %s1278 = smul.addr %s1277, 3
          %s1279 = smul.addr %s1278, 4
          %s1280 = scalar_lea.vmem %s11, %s1279
        $region80: #{generator_forward.9} parent=71 // pred_fallthru
          _
      $region72: #{generator_forward.9} parent=5 // pred_fallthru
        _
    $region6: #{generator_forward.9} parent=1 // loop_footer
      %s26 = sadd.s32 1, %s22
    $region7: #{generator_forward.9} parent=1 // loop_footer_branch
      %21 = sbr.rel target = $region3
    $region8: #{generator_forward.9} parent=1 // loop_exit
      _
    %1281 = vsyncpa [#allocation4], 1
    %s1282 = scalar_lea.sflag [#allocation4], 1
    %1283 = vsyncpa %s1282, 1

</llo_original>
